<compile_context>
chip_gen: v5e
topology: v5e:2x2
jax: 0.10.0
libtpu: 0.0.40
codegen_flags: <defaults>
</compile_context>

<pallas_src>
import functools

import numpy as np
import jax
import jax.numpy as jnp
from jax.experimental import pallas as pl
from jax.experimental.pallas import tpu as pltpu


_LANE = 128                 # lane width
_SUB = 16                   # bf16 sublane packing (pad Cin to this)
_STACK_MAX_DEPTH = 512      # use stacked-tap im2col when K*K*Cin_pad <= this
_HIGHEST = jax.lax.Precision.HIGHEST


def _round_up(a, m):
    return (a + m - 1) // m * m


def _cdiv(a, b):
    return (a + b - 1) // b


def _vmem_limit_bytes():
    """Generation-aware VMEM limit (~half of physical, capped at 96 MiB)."""
    try:
        cap = pltpu.get_tpu_info().vmem_capacity_bytes
    except Exception:
        cap = 64 * 1024 * 1024
    return int(min(96 * 1024 * 1024, cap // 2))


def _cout_tiling(cout):
    """(padded_cout, tile): pad Cout up instead of degrading the tile size."""
    if cout <= 256:
        return cout, cout
    for tco in (256, 128):
        if cout % tco == 0:
            return cout, tco
    return _round_up(cout, 128), 128


# ---------------------------------------------------------------------------
# Pallas kernels
# ---------------------------------------------------------------------------
def _conv_stacked_kernel(x_ref, w_ref, b_ref, o_ref, *,
                         K, Wp, L_TILE, win_len, neg_slope):
    """Small-Cin conv: one (TCO, K*K*Cin) @ (K*K*Cin, L_TILE) MXU matmul.

    x_ref: (1, Cin, Lx) bf16 slab;  w_ref: (TCO, K*K*Cin) bf16 (tap-major rows)
    b_ref: (TCO, 1) f32;            o_ref: (1, TCO, L_TILE) bf16
    """
    base = pl.multiple_of(pl.program_id(2) * L_TILE, _LANE)
    win = x_ref[0, :, pl.ds(base, win_len)]                 # lane-aligned window
    cols = [win[:, ki * Wp + kj: ki * Wp + kj + L_TILE]     # static tap slices
            for ki in range(K) for kj in range(K)]
    patch = jnp.concatenate(cols, axis=0)                   # (K*K*Cin, L_TILE)
    y = jnp.dot(w_ref[...], patch, preferred_element_type=jnp.float32)
    y = y + b_ref[...]                                      # f32 bias
    o_ref[0] = jnp.where(y >= 0, y, neg_slope * y).astype(o_ref.dtype)


def _conv_tap_kernel(x_ref, w_ref, b_ref, o_ref, acc_ref, *,
                     K, Wp, L_TILE, win_len, neg_slope):
    """Large-Cin conv: K*K (TCO, Cin) @ (Cin, L_TILE) matmuls into VMEM scratch.

    x_ref: (1, Cin, Lx) bf16;  w_ref: (K*K, TCO, Cin) bf16;  b_ref: (TCO, 1) f32
    o_ref: (1, TCO, L_TILE) bf16;  acc_ref: (TCO, L_TILE) f32 scratch
    """
    base = pl.multiple_of(pl.program_id(2) * L_TILE, _LANE)
    win = x_ref[0, :, pl.ds(base, win_len)]                 # lane-aligned window
    t = 0
    for ki in range(K):
        for kj in range(K):
            off = ki * Wp + kj
            d = jnp.dot(w_ref[t], win[:, off:off + L_TILE],
                        preferred_element_type=jnp.float32)
            if t == 0:
                acc_ref[...] = d
            else:
                acc_ref[...] += d
            t += 1
    y = acc_ref[...] + b_ref[...]
    o_ref[0] = jnp.where(y >= 0, y, neg_slope * y).astype(o_ref.dtype)


def _head_kernel(x_ref, w_ref, b_ref, o_ref, *, inv_hw):
    """Fused 1x1 conv + global average pool over a batch tile.

    x_ref: (NB, C, HW) bf16;  w_ref: (C, S) f32;  b_ref: (1, S) f32
    o_ref: (NB, S) f32  =  mean_hw(x) @ W.T + b   (lane-dense output)
    """
    m = jnp.sum(x_ref[...].astype(jnp.float32), axis=2) * inv_hw     # (NB, C)
    y = jnp.dot(m, w_ref[...], preferred_element_type=jnp.float32,
                precision=_HIGHEST)                                  # (NB, S)
    o_ref[...] = y + b_ref[...]


# ---------------------------------------------------------------------------
# Layer wrappers (XLA glue: pad, space-to-depth, crop; compute stays in Pallas)
# ---------------------------------------------------------------------------
def _stride2_rewrite(w):
    """Rewrite a stride-2 KxK weight as a stride-1 ceil(K/2) weight acting on a
    2x2 space-to-depth rearranged input.  (Cout,Cin,K,K) -> (Cout,4Cin,K',K')."""
    cout, cin, k, _ = w.shape
    kp = _round_up(k, 2)
    wp = jnp.pad(w, ((0, 0), (0, 0), (0, kp - k), (0, kp - k)))
    wp = wp.reshape(cout, cin, kp // 2, 2, kp // 2, 2)      # (co, ci, A, P, B, Q)
    wp = jnp.transpose(wp, (0, 1, 3, 5, 2, 4))              # (co, ci, P, Q, A, B)
    return wp.reshape(cout, cin * 4, kp // 2, kp // 2)


def _space_to_depth(xp):
    """(N, C, Hp, Wp) -> (N, 4C, ceil(Hp/2), ceil(Wp/2)); channel = (c, P, Q)."""
    n, c, hp, wp = xp.shape
    ph, pw = hp % 2, wp % 2
    if ph or pw:
        xp = jnp.pad(xp, ((0, 0), (0, 0), (0, ph), (0, pw)))
        hp, wp = hp + ph, wp + pw
    x = xp.reshape(n, c, hp // 2, 2, wp // 2, 2)            # (n, c, h, P, w, Q)
    x = jnp.transpose(x, (0, 1, 3, 5, 2, 4))                # (n, c, P, Q, h, w)
    return x.reshape(n, 4 * c, hp // 2, wp // 2)


def _conv_s1(x_pad, w, bias, *, neg_slope, l_tile=2048):
    """Stride-1 VALID KxK conv + bias + LeakyReLU, MXU matmuls in Pallas.

    x_pad: (N, Cin, Hp, Wp) bf16 (already spatially padded)
    w:     (Cout, Cin, K, K) f32;  bias: (Cout,) f32
    returns (N, Cout, Hp-K+1, Wp-K+1) bf16
    """
    n, cin, hp, wp = x_pad.shape
    cout, cin_w, K, _ = w.shape
    assert cin_w == cin
    oh, ow = hp - K + 1, wp - K + 1

    # --- spatial slab tiling (lane-dense, multiple-of-128 tiles) -------------
    l_tile = _round_up(max(l_tile, _LANE), _LANE)
    l_valid = oh * wp
    L1 = _round_up(l_valid, _LANE)
    L_TILE = min(L1, l_tile)
    n_l = _cdiv(L1, L_TILE)
    L_total = n_l * L_TILE
    max_off = (K - 1) * wp + (K - 1)
    over = _round_up(max_off, _LANE)
    win_len = L_TILE + over
    lx = L_total + over                                     # slab length (x128)

    # --- channel padding / Cout tiling ---------------------------------------
    cin_p = _round_up(cin, _SUB)
    cout_p, tco = _cout_tiling(cout)
    n_co = cout_p // tco

    wf = w.astype(jnp.float32)
    if cin_p != cin or cout_p != cout:
        wf = jnp.pad(wf, ((0, cout_p - cout), (0, cin_p - cin), (0, 0), (0, 0)))
    b_col = jnp.pad(bias.astype(jnp.float32), (0, cout_p - cout)).reshape(cout_p, 1)

    if cin_p != cin:
        x_pad = jnp.pad(x_pad, ((0, 0), (0, cin_p - cin), (0, 0), (0, 0)))
    x_flat = x_pad.reshape(n, cin_p, hp * wp)
    x_flat = jnp.pad(x_flat, ((0, 0), (0, 0), (0, lx - hp * wp))).astype(jnp.bfloat16)

    # --- kernel variant: stacked im2col (small Cin) vs per-tap accumulate ----
    use_stacked = K * K * cin_p <= _STACK_MAX_DEPTH
    if use_stacked:
        w_arr = jnp.transpose(wf, (0, 2, 3, 1)).reshape(cout_p, K * K * cin_p)
        w_arr = w_arr.astype(jnp.bfloat16)
        kernel = functools.partial(_conv_stacked_kernel, K=K, Wp=wp, L_TILE=L_TILE,
                                   win_len=win_len, neg_slope=neg_slope)
        scratch = []
    else:
        w_arr = jnp.transpose(wf, (2, 3, 0, 1)).reshape(K * K, cout_p, cin_p)
        w_arr = w_arr.astype(jnp.bfloat16)
        kernel = functools.partial(_conv_tap_kernel, K=K, Wp=wp, L_TILE=L_TILE,
                                   win_len=win_len, neg_slope=neg_slope)
        scratch = [pltpu.VMEM((tco, L_TILE), jnp.float32)]

    # --- grid order: reuse whichever block (weights vs. input slab) is bigger
    w_tile_bytes = tco * K * K * cin_p * 2
    slab_bytes = cin_p * lx * 2
    weight_outer = (n > 1) and (w_tile_bytes > slab_bytes)

    if weight_outer:
        grid = (n_co, n, n_l)
        x_map = lambda c, i, l: (i, 0, 0)
        b_map = lambda c, i, l: (c, 0)
        o_map = lambda c, i, l: (i, c, l)
        w_map2 = lambda c, i, l: (c, 0)
        w_map3 = lambda c, i, l: (0, c, 0)
    else:
        grid = (n, n_co, n_l)
        x_map = lambda i, c, l: (i, 0, 0)
        b_map = lambda i, c, l: (c, 0)
        o_map = lambda i, c, l: (i, c, l)
        w_map2 = lambda i, c, l: (c, 0)
        w_map3 = lambda i, c, l: (0, c, 0)

    if use_stacked:
        w_spec = pl.BlockSpec((tco, K * K * cin_p), w_map2)
    else:
        w_spec = pl.BlockSpec((K * K, tco, cin_p), w_map3)

    out = pl.pallas_call(
        kernel,
        out_shape=jax.ShapeDtypeStruct((n, cout_p, L_total), jnp.bfloat16),
        grid=grid,
        in_specs=[pl.BlockSpec((1, cin_p, lx), x_map), w_spec,
                  pl.BlockSpec((tco, 1), b_map)],
        out_specs=pl.BlockSpec((1, tco, L_TILE), o_map),
        scratch_shapes=scratch,
        compiler_params=pltpu.CompilerParams(
            dimension_semantics=("parallel", "parallel", "parallel"),
            vmem_limit_bytes=_vmem_limit_bytes(),
        ),
    )(x_flat, w_arr, b_col)

    # TODO(synk): fold this crop + the next layer's reflect-pad / s2d into the
    #             kernels' index math to avoid the extra HBM passes.
    out = out[:, :cout, :l_valid].reshape(n, cout, oh, wp)[:, :, :, :ow]
    return out


def _head(x, w_head, bias):
    """Fused 1x1 conv + global average pool.  x (N,C,H,W) bf16 -> (N,S) f32."""
    n, c, h, w = x.shape
    s_dim = w_head.shape[0]
    hw = h * w
    x_flat = x.reshape(n, c, hw)
    nb = n if n <= 8 else 8
    n_b = _cdiv(n, nb)
    wt = jnp.transpose(w_head).astype(jnp.float32)          # (C, S)
    return pl.pallas_call(
        functools.partial(_head_kernel, inv_hw=1.0 / hw),
        out_shape=jax.ShapeDtypeStruct((n, s_dim), jnp.float32),
        grid=(n_b,),
        in_specs=[pl.BlockSpec((nb, c, hw), lambda i: (i, 0, 0)),
                  pl.BlockSpec((c, s_dim), lambda i: (0, 0)),
                  pl.BlockSpec((1, s_dim), lambda i: (0, 0))],
        out_specs=pl.BlockSpec((nb, s_dim), lambda i: (i, 0)),
        compiler_params=pltpu.CompilerParams(
            dimension_semantics=("parallel",),
            vmem_limit_bytes=_vmem_limit_bytes(),
        ),
    )(x_flat, wt, bias.astype(jnp.float32).reshape(1, s_dim))


# ---------------------------------------------------------------------------
# AgeEncoder forward (Pallas path), parameters, and a pure-XLA reference
# ---------------------------------------------------------------------------
def age_encoder_forward(params, x, *, n_downsampling=4, padding_type='reflect',
                        actvn='lrelu', conv_weight_norm=False, l_tile=2048):
    """Pallas forward of AgeEncoder: x (N, input_nc, H, W) -> (N, style_dim)."""
    pad_mode = 'reflect' if padding_type == 'reflect' else 'constant'
    neg_slope = 0.2 if actvn == 'lrelu' else 0.0

    def scale(wt):
        if conv_weight_norm:                     # EqualLR: w * sqrt(2 / fan_in)
            fan_in = wt.shape[1] * wt.shape[2] * wt.shape[3]
            return wt * np.sqrt(2.0 / fan_in)
        return wt

    h = x.astype(jnp.bfloat16)

    # [ReflectionPad2d(3), Conv2d(input_nc, ngf, 7), LeakyReLU]
    h = jnp.pad(h, ((0, 0), (0, 0), (3, 3), (3, 3)), mode=pad_mode)
    h = _conv_s1(h, scale(params['w0']), params['b0'],
                 neg_slope=neg_slope, l_tile=l_tile)

    # n_downsampling x [ReflectionPad2d(1), Conv2d(c, 2c, 3, stride=2), LeakyReLU]
    for i in range(n_downsampling):
        h = jnp.pad(h, ((0, 0), (0, 0), (1, 1), (1, 1)), mode=pad_mode)
        h = _space_to_depth(h)                               # stride-2 -> stride-1
        w2 = _stride2_rewrite(scale(params[f'w_down{i}']))
        h = _conv_s1(h, w2, params[f'b_down{i}'],
                     neg_slope=neg_slope, l_tile=l_tile)

    # Conv2d(ngf * 2**n_downsampling, style_dim, 1)  then  .mean(3).mean(2)
    wh = scale(params['w_head'])[:, :, 0, 0]
    return _head(h, wh, params['b_head'])


def init_params(key, input_nc=3, ngf=64, n_downsampling=4, style_dim=50):
    """Deterministic stand-in for the torch Conv2d parameters (fan-in scaled)."""
    params = {}
    keys = jax.random.split(key, 2 * (n_downsampling + 2))

    def conv_params(kw, kb, cout, cin, ksz):
        fan_in = cin * ksz * ksz
        w = jax.random.normal(kw, (cout, cin, ksz, ksz), jnp.float32) / np.sqrt(fan_in)
        b = 0.1 * jax.random.normal(kb, (cout,), jnp.float32)
        return w, b

    params['w0'], params['b0'] = conv_params(keys[0], keys[1], ngf, input_nc, 7)
    cin = ngf
    for i in range(n_downsampling):
        cout = 2 * cin
        params[f'w_down{i}'], params[f'b_down{i}'] = conv_params(
            keys[2 * i + 2], keys[2 * i + 3], cout, cin, 3)
        cin = cout
    params['w_head'], params['b_head'] = conv_params(keys[-2], keys[-1],
                                                     style_dim, cin, 1)
    return params


def reference_forward(params, x, *, n_downsampling=4, padding_type='reflect',
                      actvn='lrelu', conv_weight_norm=False):
    """Pure-XLA reference with matching numerics (bf16 conv, f32 accumulate)."""
    pad_mode = 'reflect' if padding_type == 'reflect' else 'constant'
    ns = 0.2 if actvn == 'lrelu' else 0.0

    def scale(wt):
        if conv_weight_norm:
            fan_in = wt.shape[1] * wt.shape[2] * wt.shape[3]
            return wt * np.sqrt(2.0 / fan_in)
        return wt

    def conv(v, wt, b, stride, pad):
        wt = scale(wt).astype(jnp.bfloat16)
        if pad:
            v = jnp.pad(v, ((0, 0), (0, 0), (pad, pad), (pad, pad)), mode=pad_mode)
        y = jax.lax.conv_general_dilated(
            v, wt, window_strides=(stride, stride), padding='VALID',
            dimension_numbers=('NCHW', 'OIHW', 'NCHW'),
            preferred_element_type=jnp.float32)
        return y + b.reshape(1, -1, 1, 1)

    def act(v):
        return jnp.where(v >= 0, v, ns * v)

    h = x.astype(jnp.bfloat16)
    h = act(conv(h, params['w0'], params['b0'], 1, 3)).astype(jnp.bfloat16)
    for i in range(n_downsampling):
        h = act(conv(h, params[f'w_down{i}'], params[f'b_down{i}'], 2, 1))
        h = h.astype(jnp.bfloat16)
    feats = h.astype(jnp.float32).mean(axis=(2, 3))          # (N, C)
    wh = scale(params['w_head'])[:, :, 0, 0].astype(jnp.float32)
    return jnp.dot(feats, wh.T, precision=_HIGHEST) + params['b_head']


if __name__ == "__main__":
    key = jax.random.PRNGKey(0)
    k_x, k_p = jax.random.split(key)

    # Small config consistent with the module (ngf / n_downsampling scaled down),
    # chosen together with l_tile=256 so that the test exercises: the stacked
    # im2col kernel (layer 0, down0), the per-tap scratch kernel (down1),
    # multi-L-tile grids, and both grid orderings (batch-outer / weight-outer).
    N, input_nc, H, W = 2, 3, 32, 32
    ngf, n_down, style_dim = 32, 2, 8

    x = jax.random.normal(k_x, (N, input_nc, H, W), dtype=jnp.float32)
    params = init_params(k_p, input_nc=input_nc, ngf=ngf,
                         n_downsampling=n_down, style_dim=style_dim)

    fwd = jax.jit(functools.partial(age_encoder_forward,
                                    n_downsampling=n_down, l_tile=256))
    latent = jax.block_until_ready(fwd(params, x))
    assert latent.shape == (N, style_dim), latent.shape

    ref = jax.block_until_ready(
        reference_forward(params, x, n_downsampling=n_down))
    np.testing.assert_allclose(np.asarray(latent), np.asarray(ref),
                               rtol=2e-2, atol=2e-2)
    print("KERNEL_OK")
</pallas_src>

<mosaic_0001>
module attributes {stable_mosaic.version = 11 : i64} {
  func.func @_conv_tap_kernel(%arg0: i32, %arg1: i32, %arg2: i32, %arg3: memref<1x16x1536xbf16, #tpu.memory_space<vmem>>, %arg4: memref<49x32x16xbf16, #tpu.memory_space<vmem>>, %arg5: memref<32x1xf32, #tpu.memory_space<vmem>>, %arg6: memref<1x32x256xbf16, #tpu.memory_space<vmem>>, %arg7: memref<32x256xf32, #tpu.memory_space<vmem>>) attributes {dimension_semantics = [#tpu.dimension_semantics<parallel>, #tpu.dimension_semantics<parallel>, #tpu.dimension_semantics<parallel>], iteration_bounds = array<i64: 1, 2, 5>, scalar_prefetch = 0 : i64, scratch_operands = 1 : i64, tpu.core_type = #tpu.core_type<tc>, window_params = [{transform_indices = @transform_0, window_bounds = array<i64: 1, 16, 1536>}, {transform_indices = @transform_1, window_bounds = array<i64: 49, 32, 16>}, {transform_indices = @transform_2, window_bounds = array<i64: 32, 1>}, {transform_indices = @transform_3, window_bounds = array<i64: 1, 32, 256>}]} {
    %c256_i32 = arith.constant 256 : i32
    %0 = arith.muli %arg2, %c256_i32 : i32
    %1 = tpu.assume_multiple %0, 128 : i32
    %c0 = arith.constant 0 : index
    %c0_0 = arith.constant 0 : index
    %2 = arith.index_cast %1 : i32 to index
    %3 = vector.load %arg3[%c0, %c0_0, %2] : memref<1x16x1536xbf16, #tpu.memory_space<vmem>>, vector<1x16x512xbf16>
    %4 = vector.shape_cast %3 : vector<1x16x512xbf16> to vector<16x512xbf16>
    %c0_1 = arith.constant 0 : index
    %c0_2 = arith.constant 0 : index
    %c0_3 = arith.constant 0 : index
    %5 = vector.load %arg4[%c0_1, %c0_2, %c0_3] : memref<49x32x16xbf16, #tpu.memory_space<vmem>>, vector<1x32x16xbf16>
    %6 = vector.shape_cast %5 : vector<1x32x16xbf16> to vector<32x16xbf16>
    %7 = vector.extract_strided_slice %4 {offsets = [0, 0], sizes = [16, 256], strides = [1, 1]} : vector<16x512xbf16> to vector<16x256xbf16>
    %cst = arith.constant dense<0.000000e+00> : vector<32x256xf32>
    %8 = tpu.matmul %6, %7, %cst {dimension_numbers = #tpu.dot_dimension_numbers<[1], [0], [0], [1], [0, 0, 1, 1], [], []>} : vector<32x16xbf16>, vector<16x256xbf16>, vector<32x256xf32> -> vector<32x256xf32>
    %c0_4 = arith.constant 0 : index
    %c0_5 = arith.constant 0 : index
    %9 = vector.load %arg7[%c0_4, %c0_5] : memref<32x256xf32, #tpu.memory_space<vmem>>, vector<32x256xf32>
    tpu.vector_store %arg7[%c0_4, %c0_5], %8 {strides = array<i32>} : memref<32x256xf32, #tpu.memory_space<vmem>>, vector<32x256xf32>,
    %c1 = arith.constant 1 : index
    %c0_6 = arith.constant 0 : index
    %c0_7 = arith.constant 0 : index
    %10 = vector.load %arg4[%c1, %c0_6, %c0_7] : memref<49x32x16xbf16, #tpu.memory_space<vmem>>, vector<1x32x16xbf16>
    %11 = vector.shape_cast %10 : vector<1x32x16xbf16> to vector<32x16xbf16>
    %12 = vector.extract_strided_slice %4 {offsets = [0, 1], sizes = [16, 256], strides = [1, 1]} : vector<16x512xbf16> to vector<16x256xbf16>
    %cst_8 = arith.constant dense<0.000000e+00> : vector<32x256xf32>
    %13 = tpu.matmul %11, %12, %cst_8 {dimension_numbers = #tpu.dot_dimension_numbers<[1], [0], [0], [1], [0, 0, 1, 1], [], []>} : vector<32x16xbf16>, vector<16x256xbf16>, vector<32x256xf32> -> vector<32x256xf32>
    %c0_9 = arith.constant 0 : index
    %c0_10 = arith.constant 0 : index
    %14 = vector.load %arg7[%c0_9, %c0_10] : memref<32x256xf32, #tpu.memory_space<vmem>>, vector<32x256xf32>
    %15 = arith.addf %14, %13 : vector<32x256xf32>
    %c0_11 = arith.constant 0 : index
    %c0_12 = arith.constant 0 : index
    %16 = vector.load %arg7[%c0_11, %c0_12] : memref<32x256xf32, #tpu.memory_space<vmem>>, vector<32x256xf32>
    tpu.vector_store %arg7[%c0_11, %c0_12], %15 {strides = array<i32>} : memref<32x256xf32, #tpu.memory_space<vmem>>, vector<32x256xf32>,
    %c2 = arith.constant 2 : index
    %c0_13 = arith.constant 0 : index
    %c0_14 = arith.constant 0 : index
    %17 = vector.load %arg4[%c2, %c0_13, %c0_14] : memref<49x32x16xbf16, #tpu.memory_space<vmem>>, vector<1x32x16xbf16>
    %18 = vector.shape_cast %17 : vector<1x32x16xbf16> to vector<32x16xbf16>
    %19 = vector.extract_strided_slice %4 {offsets = [0, 2], sizes = [16, 256], strides = [1, 1]} : vector<16x512xbf16> to vector<16x256xbf16>
    %cst_15 = arith.constant dense<0.000000e+00> : vector<32x256xf32>
    %20 = tpu.matmul %18, %19, %cst_15 {dimension_numbers = #tpu.dot_dimension_numbers<[1], [0], [0], [1], [0, 0, 1, 1], [], []>} : vector<32x16xbf16>, vector<16x256xbf16>, vector<32x256xf32> -> vector<32x256xf32>
    %c0_16 = arith.constant 0 : index
    %c0_17 = arith.constant 0 : index
    %21 = vector.load %arg7[%c0_16, %c0_17] : memref<32x256xf32, #tpu.memory_space<vmem>>, vector<32x256xf32>
    %22 = arith.addf %21, %20 : vector<32x256xf32>
    %c0_18 = arith.constant 0 : index
    %c0_19 = arith.constant 0 : index
    %23 = vector.load %arg7[%c0_18, %c0_19] : memref<32x256xf32, #tpu.memory_space<vmem>>, vector<32x256xf32>
    tpu.vector_store %arg7[%c0_18, %c0_19], %22 {strides = array<i32>} : memref<32x256xf32, #tpu.memory_space<vmem>>, vector<32x256xf32>,
    %c3 = arith.constant 3 : index
    %c0_20 = arith.constant 0 : index
    %c0_21 = arith.constant 0 : index
    %24 = vector.load %arg4[%c3, %c0_20, %c0_21] : memref<49x32x16xbf16, #tpu.memory_space<vmem>>, vector<1x32x16xbf16>
    %25 = vector.shape_cast %24 : vector<1x32x16xbf16> to vector<32x16xbf16>
    %26 = vector.extract_strided_slice %4 {offsets = [0, 3], sizes = [16, 256], strides = [1, 1]} : vector<16x512xbf16> to vector<16x256xbf16>
    %cst_22 = arith.constant dense<0.000000e+00> : vector<32x256xf32>
    %27 = tpu.matmul %25, %26, %cst_22 {dimension_numbers = #tpu.dot_dimension_numbers<[1], [0], [0], [1], [0, 0, 1, 1], [], []>} : vector<32x16xbf16>, vector<16x256xbf16>, vector<32x256xf32> -> vector<32x256xf32>
    %c0_23 = arith.constant 0 : index
    %c0_24 = arith.constant 0 : index
    %28 = vector.load %arg7[%c0_23, %c0_24] : memref<32x256xf32, #tpu.memory_space<vmem>>, vector<32x256xf32>
    %29 = arith.addf %28, %27 : vector<32x256xf32>
    %c0_25 = arith.constant 0 : index
    %c0_26 = arith.constant 0 : index
    %30 = vector.load %arg7[%c0_25, %c0_26] : memref<32x256xf32, #tpu.memory_space<vmem>>, vector<32x256xf32>
    tpu.vector_store %arg7[%c0_25, %c0_26], %29 {strides = array<i32>} : memref<32x256xf32, #tpu.memory_space<vmem>>, vector<32x256xf32>,
    %c4 = arith.constant 4 : index
    %c0_27 = arith.constant 0 : index
    %c0_28 = arith.constant 0 : index
    %31 = vector.load %arg4[%c4, %c0_27, %c0_28] : memref<49x32x16xbf16, #tpu.memory_space<vmem>>, vector<1x32x16xbf16>
    %32 = vector.shape_cast %31 : vector<1x32x16xbf16> to vector<32x16xbf16>
    %33 = vector.extract_strided_slice %4 {offsets = [0, 4], sizes = [16, 256], strides = [1, 1]} : vector<16x512xbf16> to vector<16x256xbf16>
    %cst_29 = arith.constant dense<0.000000e+00> : vector<32x256xf32>
    %34 = tpu.matmul %32, %33, %cst_29 {dimension_numbers = #tpu.dot_dimension_numbers<[1], [0], [0], [1], [0, 0, 1, 1], [], []>} : vector<32x16xbf16>, vector<16x256xbf16>, vector<32x256xf32> -> vector<32x256xf32>
    %c0_30 = arith.constant 0 : index
    %c0_31 = arith.constant 0 : index
    %35 = vector.load %arg7[%c0_30, %c0_31] : memref<32x256xf32, #tpu.memory_space<vmem>>, vector<32x256xf32>
    %36 = arith.addf %35, %34 : vector<32x256xf32>
    %c0_32 = arith.constant 0 : index
    %c0_33 = arith.constant 0 : index
    %37 = vector.load %arg7[%c0_32, %c0_33] : memref<32x256xf32, #tpu.memory_space<vmem>>, vector<32x256xf32>
    tpu.vector_store %arg7[%c0_32, %c0_33], %36 {strides = array<i32>} : memref<32x256xf32, #tpu.memory_space<vmem>>, vector<32x256xf32>,
    %c5 = arith.constant 5 : index
    %c0_34 = arith.constant 0 : index
    %c0_35 = arith.constant 0 : index
    %38 = vector.load %arg4[%c5, %c0_34, %c0_35] : memref<49x32x16xbf16, #tpu.memory_space<vmem>>, vector<1x32x16xbf16>
    %39 = vector.shape_cast %38 : vector<1x32x16xbf16> to vector<32x16xbf16>
    %40 = vector.extract_strided_slice %4 {offsets = [0, 5], sizes = [16, 256], strides = [1, 1]} : vector<16x512xbf16> to vector<16x256xbf16>
    %cst_36 = arith.constant dense<0.000000e+00> : vector<32x256xf32>
    %41 = tpu.matmul %39, %40, %cst_36 {dimension_numbers = #tpu.dot_dimension_numbers<[1], [0], [0], [1], [0, 0, 1, 1], [], []>} : vector<32x16xbf16>, vector<16x256xbf16>, vector<32x256xf32> -> vector<32x256xf32>
    %c0_37 = arith.constant 0 : index
    %c0_38 = arith.constant 0 : index
    %42 = vector.load %arg7[%c0_37, %c0_38] : memref<32x256xf32, #tpu.memory_space<vmem>>, vector<32x256xf32>
    %43 = arith.addf %42, %41 : vector<32x256xf32>
    %c0_39 = arith.constant 0 : index
    %c0_40 = arith.constant 0 : index
    %44 = vector.load %arg7[%c0_39, %c0_40] : memref<32x256xf32, #tpu.memory_space<vmem>>, vector<32x256xf32>
    tpu.vector_store %arg7[%c0_39, %c0_40], %43 {strides = array<i32>} : memref<32x256xf32, #tpu.memory_space<vmem>>, vector<32x256xf32>,
    %c6 = arith.constant 6 : index
    %c0_41 = arith.constant 0 : index
    %c0_42 = arith.constant 0 : index
    %45 = vector.load %arg4[%c6, %c0_41, %c0_42] : memref<49x32x16xbf16, #tpu.memory_space<vmem>>, vector<1x32x16xbf16>
    %46 = vector.shape_cast %45 : vector<1x32x16xbf16> to vector<32x16xbf16>
    %47 = vector.extract_strided_slice %4 {offsets = [0, 6], sizes = [16, 256], strides = [1, 1]} : vector<16x512xbf16> to vector<16x256xbf16>
    %cst_43 = arith.constant dense<0.000000e+00> : vector<32x256xf32>
    %48 = tpu.matmul %46, %47, %cst_43 {dimension_numbers = #tpu.dot_dimension_numbers<[1], [0], [0], [1], [0, 0, 1, 1], [], []>} : vector<32x16xbf16>, vector<16x256xbf16>, vector<32x256xf32> -> vector<32x256xf32>
    %c0_44 = arith.constant 0 : index
    %c0_45 = arith.constant 0 : index
    %49 = vector.load %arg7[%c0_44, %c0_45] : memref<32x256xf32, #tpu.memory_space<vmem>>, vector<32x256xf32>
    %50 = arith.addf %49, %48 : vector<32x256xf32>
    %c0_46 = arith.constant 0 : index
    %c0_47 = arith.constant 0 : index
    %51 = vector.load %arg7[%c0_46, %c0_47] : memref<32x256xf32, #tpu.memory_space<vmem>>, vector<32x256xf32>
    tpu.vector_store %arg7[%c0_46, %c0_47], %50 {strides = array<i32>} : memref<32x256xf32, #tpu.memory_space<vmem>>, vector<32x256xf32>,
    %c7 = arith.constant 7 : index
    %c0_48 = arith.constant 0 : index
    %c0_49 = arith.constant 0 : index
    %52 = vector.load %arg4[%c7, %c0_48, %c0_49] : memref<49x32x16xbf16, #tpu.memory_space<vmem>>, vector<1x32x16xbf16>
    %53 = vector.shape_cast %52 : vector<1x32x16xbf16> to vector<32x16xbf16>
    %54 = vector.extract_strided_slice %4 {offsets = [0, 38], sizes = [16, 256], strides = [1, 1]} : vector<16x512xbf16> to vector<16x256xbf16>
    %cst_50 = arith.constant dense<0.000000e+00> : vector<32x256xf32>
    %55 = tpu.matmul %53, %54, %cst_50 {dimension_numbers = #tpu.dot_dimension_numbers<[1], [0], [0], [1], [0, 0, 1, 1], [], []>} : vector<32x16xbf16>, vector<16x256xbf16>, vector<32x256xf32> -> vector<32x256xf32>
    %c0_51 = arith.constant 0 : index
    %c0_52 = arith.constant 0 : index
    %56 = vector.load %arg7[%c0_51, %c0_52] : memref<32x256xf32, #tpu.memory_space<vmem>>, vector<32x256xf32>
    %57 = arith.addf %56, %55 : vector<32x256xf32>
    %c0_53 = arith.constant 0 : index
    %c0_54 = arith.constant 0 : index
    %58 = vector.load %arg7[%c0_53, %c0_54] : memref<32x256xf32, #tpu.memory_space<vmem>>, vector<32x256xf32>
    tpu.vector_store %arg7[%c0_53, %c0_54], %57 {strides = array<i32>} : memref<32x256xf32, #tpu.memory_space<vmem>>, vector<32x256xf32>,
    %c8 = arith.constant 8 : index
    %c0_55 = arith.constant 0 : index
    %c0_56 = arith.constant 0 : index
    %59 = vector.load %arg4[%c8, %c0_55, %c0_56] : memref<49x32x16xbf16, #tpu.memory_space<vmem>>, vector<1x32x16xbf16>
    %60 = vector.shape_cast %59 : vector<1x32x16xbf16> to vector<32x16xbf16>
    %61 = vector.extract_strided_slice %4 {offsets = [0, 39], sizes = [16, 256], strides = [1, 1]} : vector<16x512xbf16> to vector<16x256xbf16>
    %cst_57 = arith.constant dense<0.000000e+00> : vector<32x256xf32>
    %62 = tpu.matmul %60, %61, %cst_57 {dimension_numbers = #tpu.dot_dimension_numbers<[1], [0], [0], [1], [0, 0, 1, 1], [], []>} : vector<32x16xbf16>, vector<16x256xbf16>, vector<32x256xf32> -> vector<32x256xf32>
    %c0_58 = arith.constant 0 : index
    %c0_59 = arith.constant 0 : index
    %63 = vector.load %arg7[%c0_58, %c0_59] : memref<32x256xf32, #tpu.memory_space<vmem>>, vector<32x256xf32>
    %64 = arith.addf %63, %62 : vector<32x256xf32>
    %c0_60 = arith.constant 0 : index
    %c0_61 = arith.constant 0 : index
    %65 = vector.load %arg7[%c0_60, %c0_61] : memref<32x256xf32, #tpu.memory_space<vmem>>, vector<32x256xf32>
    tpu.vector_store %arg7[%c0_60, %c0_61], %64 {strides = array<i32>} : memref<32x256xf32, #tpu.memory_space<vmem>>, vector<32x256xf32>,
    %c9 = arith.constant 9 : index
    %c0_62 = arith.constant 0 : index
    %c0_63 = arith.constant 0 : index
    %66 = vector.load %arg4[%c9, %c0_62, %c0_63] : memref<49x32x16xbf16, #tpu.memory_space<vmem>>, vector<1x32x16xbf16>
    %67 = vector.shape_cast %66 : vector<1x32x16xbf16> to vector<32x16xbf16>
    %68 = vector.extract_strided_slice %4 {offsets = [0, 40], sizes = [16, 256], strides = [1, 1]} : vector<16x512xbf16> to vector<16x256xbf16>
    %cst_64 = arith.constant dense<0.000000e+00> : vector<32x256xf32>
    %69 = tpu.matmul %67, %68, %cst_64 {dimension_numbers = #tpu.dot_dimension_numbers<[1], [0], [0], [1], [0, 0, 1, 1], [], []>} : vector<32x16xbf16>, vector<16x256xbf16>, vector<32x256xf32> -> vector<32x256xf32>
    %c0_65 = arith.constant 0 : index
    %c0_66 = arith.constant 0 : index
    %70 = vector.load %arg7[%c0_65, %c0_66] : memref<32x256xf32, #tpu.memory_space<vmem>>, vector<32x256xf32>
    %71 = arith.addf %70, %69 : vector<32x256xf32>
    %c0_67 = arith.constant 0 : index
    %c0_68 = arith.constant 0 : index
    %72 = vector.load %arg7[%c0_67, %c0_68] : memref<32x256xf32, #tpu.memory_space<vmem>>, vector<32x256xf32>
    tpu.vector_store %arg7[%c0_67, %c0_68], %71 {strides = array<i32>} : memref<32x256xf32, #tpu.memory_space<vmem>>, vector<32x256xf32>,
    %c10 = arith.constant 10 : index
    %c0_69 = arith.constant 0 : index
    %c0_70 = arith.constant 0 : index
    %73 = vector.load %arg4[%c10, %c0_69, %c0_70] : memref<49x32x16xbf16, #tpu.memory_space<vmem>>, vector<1x32x16xbf16>
    %74 = vector.shape_cast %73 : vector<1x32x16xbf16> to vector<32x16xbf16>
    %75 = vector.extract_strided_slice %4 {offsets = [0, 41], sizes = [16, 256], strides = [1, 1]} : vector<16x512xbf16> to vector<16x256xbf16>
    %cst_71 = arith.constant dense<0.000000e+00> : vector<32x256xf32>
    %76 = tpu.matmul %74, %75, %cst_71 {dimension_numbers = #tpu.dot_dimension_numbers<[1], [0], [0], [1], [0, 0, 1, 1], [], []>} : vector<32x16xbf16>, vector<16x256xbf16>, vector<32x256xf32> -> vector<32x256xf32>
    %c0_72 = arith.constant 0 : index
    %c0_73 = arith.constant 0 : index
    %77 = vector.load %arg7[%c0_72, %c0_73] : memref<32x256xf32, #tpu.memory_space<vmem>>, vector<32x256xf32>
    %78 = arith.addf %77, %76 : vector<32x256xf32>
    %c0_74 = arith.constant 0 : index
    %c0_75 = arith.constant 0 : index
    %79 = vector.load %arg7[%c0_74, %c0_75] : memref<32x256xf32, #tpu.memory_space<vmem>>, vector<32x256xf32>
    tpu.vector_store %arg7[%c0_74, %c0_75], %78 {strides = array<i32>} : memref<32x256xf32, #tpu.memory_space<vmem>>, vector<32x256xf32>,
    %c11 = arith.constant 11 : index
    %c0_76 = arith.constant 0 : index
    %c0_77 = arith.constant 0 : index
    %80 = vector.load %arg4[%c11, %c0_76, %c0_77] : memref<49x32x16xbf16, #tpu.memory_space<vmem>>, vector<1x32x16xbf16>
    %81 = vector.shape_cast %80 : vector<1x32x16xbf16> to vector<32x16xbf16>
    %82 = vector.extract_strided_slice %4 {offsets = [0, 42], sizes = [16, 256], strides = [1, 1]} : vector<16x512xbf16> to vector<16x256xbf16>
    %cst_78 = arith.constant dense<0.000000e+00> : vector<32x256xf32>
    %83 = tpu.matmul %81, %82, %cst_78 {dimension_numbers = #tpu.dot_dimension_numbers<[1], [0], [0], [1], [0, 0, 1, 1], [], []>} : vector<32x16xbf16>, vector<16x256xbf16>, vector<32x256xf32> -> vector<32x256xf32>
    %c0_79 = arith.constant 0 : index
    %c0_80 = arith.constant 0 : index
    %84 = vector.load %arg7[%c0_79, %c0_80] : memref<32x256xf32, #tpu.memory_space<vmem>>, vector<32x256xf32>
    %85 = arith.addf %84, %83 : vector<32x256xf32>
    %c0_81 = arith.constant 0 : index
    %c0_82 = arith.constant 0 : index
    %86 = vector.load %arg7[%c0_81, %c0_82] : memref<32x256xf32, #tpu.memory_space<vmem>>, vector<32x256xf32>
    tpu.vector_store %arg7[%c0_81, %c0_82], %85 {strides = array<i32>} : memref<32x256xf32, #tpu.memory_space<vmem>>, vector<32x256xf32>,
    %c12 = arith.constant 12 : index
    %c0_83 = arith.constant 0 : index
    %c0_84 = arith.constant 0 : index
    %87 = vector.load %arg4[%c12, %c0_83, %c0_84] : memref<49x32x16xbf16, #tpu.memory_space<vmem>>, vector<1x32x16xbf16>
    %88 = vector.shape_cast %87 : vector<1x32x16xbf16> to vector<32x16xbf16>
    %89 = vector.extract_strided_slice %4 {offsets = [0, 43], sizes = [16, 256], strides = [1, 1]} : vector<16x512xbf16> to vector<16x256xbf16>
    %cst_85 = arith.constant dense<0.000000e+00> : vector<32x256xf32>
    %90 = tpu.matmul %88, %89, %cst_85 {dimension_numbers = #tpu.dot_dimension_numbers<[1], [0], [0], [1], [0, 0, 1, 1], [], []>} : vector<32x16xbf16>, vector<16x256xbf16>, vector<32x256xf32> -> vector<32x256xf32>
    %c0_86 = arith.constant 0 : index
    %c0_87 = arith.constant 0 : index
    %91 = vector.load %arg7[%c0_86, %c0_87] : memref<32x256xf32, #tpu.memory_space<vmem>>, vector<32x256xf32>
    %92 = arith.addf %91, %90 : vector<32x256xf32>
    %c0_88 = arith.constant 0 : index
    %c0_89 = arith.constant 0 : index
    %93 = vector.load %arg7[%c0_88, %c0_89] : memref<32x256xf32, #tpu.memory_space<vmem>>, vector<32x256xf32>
    tpu.vector_store %arg7[%c0_88, %c0_89], %92 {strides = array<i32>} : memref<32x256xf32, #tpu.memory_space<vmem>>, vector<32x256xf32>,
    %c13 = arith.constant 13 : index
    %c0_90 = arith.constant 0 : index
    %c0_91 = arith.constant 0 : index
    %94 = vector.load %arg4[%c13, %c0_90, %c0_91] : memref<49x32x16xbf16, #tpu.memory_space<vmem>>, vector<1x32x16xbf16>
    %95 = vector.shape_cast %94 : vector<1x32x16xbf16> to vector<32x16xbf16>
    %96 = vector.extract_strided_slice %4 {offsets = [0, 44], sizes = [16, 256], strides = [1, 1]} : vector<16x512xbf16> to vector<16x256xbf16>
    %cst_92 = arith.constant dense<0.000000e+00> : vector<32x256xf32>
    %97 = tpu.matmul %95, %96, %cst_92 {dimension_numbers = #tpu.dot_dimension_numbers<[1], [0], [0], [1], [0, 0, 1, 1], [], []>} : vector<32x16xbf16>, vector<16x256xbf16>, vector<32x256xf32> -> vector<32x256xf32>
    %c0_93 = arith.constant 0 : index
    %c0_94 = arith.constant 0 : index
    %98 = vector.load %arg7[%c0_93, %c0_94] : memref<32x256xf32, #tpu.memory_space<vmem>>, vector<32x256xf32>
    %99 = arith.addf %98, %97 : vector<32x256xf32>
    %c0_95 = arith.constant 0 : index
    %c0_96 = arith.constant 0 : index
    %100 = vector.load %arg7[%c0_95, %c0_96] : memref<32x256xf32, #tpu.memory_space<vmem>>, vector<32x256xf32>
    tpu.vector_store %arg7[%c0_95, %c0_96], %99 {strides = array<i32>} : memref<32x256xf32, #tpu.memory_space<vmem>>, vector<32x256xf32>,
    %c14 = arith.constant 14 : index
    %c0_97 = arith.constant 0 : index
    %c0_98 = arith.constant 0 : index
    %101 = vector.load %arg4[%c14, %c0_97, %c0_98] : memref<49x32x16xbf16, #tpu.memory_space<vmem>>, vector<1x32x16xbf16>
    %102 = vector.shape_cast %101 : vector<1x32x16xbf16> to vector<32x16xbf16>
    %103 = vector.extract_strided_slice %4 {offsets = [0, 76], sizes = [16, 256], strides = [1, 1]} : vector<16x512xbf16> to vector<16x256xbf16>
    %cst_99 = arith.constant dense<0.000000e+00> : vector<32x256xf32>
    %104 = tpu.matmul %102, %103, %cst_99 {dimension_numbers = #tpu.dot_dimension_numbers<[1], [0], [0], [1], [0, 0, 1, 1], [], []>} : vector<32x16xbf16>, vector<16x256xbf16>, vector<32x256xf32> -> vector<32x256xf32>
    %c0_100 = arith.constant 0 : index
    %c0_101 = arith.constant 0 : index
    %105 = vector.load %arg7[%c0_100, %c0_101] : memref<32x256xf32, #tpu.memory_space<vmem>>, vector<32x256xf32>
    %106 = arith.addf %105, %104 : vector<32x256xf32>
    %c0_102 = arith.constant 0 : index
    %c0_103 = arith.constant 0 : index
    %107 = vector.load %arg7[%c0_102, %c0_103] : memref<32x256xf32, #tpu.memory_space<vmem>>, vector<32x256xf32>
    tpu.vector_store %arg7[%c0_102, %c0_103], %106 {strides = array<i32>} : memref<32x256xf32, #tpu.memory_space<vmem>>, vector<32x256xf32>,
    %c15 = arith.constant 15 : index
    %c0_104 = arith.constant 0 : index
    %c0_105 = arith.constant 0 : index
    %108 = vector.load %arg4[%c15, %c0_104, %c0_105] : memref<49x32x16xbf16, #tpu.memory_space<vmem>>, vector<1x32x16xbf16>
    %109 = vector.shape_cast %108 : vector<1x32x16xbf16> to vector<32x16xbf16>
    %110 = vector.extract_strided_slice %4 {offsets = [0, 77], sizes = [16, 256], strides = [1, 1]} : vector<16x512xbf16> to vector<16x256xbf16>
    %cst_106 = arith.constant dense<0.000000e+00> : vector<32x256xf32>
    %111 = tpu.matmul %109, %110, %cst_106 {dimension_numbers = #tpu.dot_dimension_numbers<[1], [0], [0], [1], [0, 0, 1, 1], [], []>} : vector<32x16xbf16>, vector<16x256xbf16>, vector<32x256xf32> -> vector<32x256xf32>
    %c0_107 = arith.constant 0 : index
    %c0_108 = arith.constant 0 : index
    %112 = vector.load %arg7[%c0_107, %c0_108] : memref<32x256xf32, #tpu.memory_space<vmem>>, vector<32x256xf32>
    %113 = arith.addf %112, %111 : vector<32x256xf32>
    %c0_109 = arith.constant 0 : index
    %c0_110 = arith.constant 0 : index
    %114 = vector.load %arg7[%c0_109, %c0_110] : memref<32x256xf32, #tpu.memory_space<vmem>>, vector<32x256xf32>
    tpu.vector_store %arg7[%c0_109, %c0_110], %113 {strides = array<i32>} : memref<32x256xf32, #tpu.memory_space<vmem>>, vector<32x256xf32>,
    %c16 = arith.constant 16 : index
    %c0_111 = arith.constant 0 : index
    %c0_112 = arith.constant 0 : index
    %115 = vector.load %arg4[%c16, %c0_111, %c0_112] : memref<49x32x16xbf16, #tpu.memory_space<vmem>>, vector<1x32x16xbf16>
    %116 = vector.shape_cast %115 : vector<1x32x16xbf16> to vector<32x16xbf16>
    %117 = vector.extract_strided_slice %4 {offsets = [0, 78], sizes = [16, 256], strides = [1, 1]} : vector<16x512xbf16> to vector<16x256xbf16>
    %cst_113 = arith.constant dense<0.000000e+00> : vector<32x256xf32>
    %118 = tpu.matmul %116, %117, %cst_113 {dimension_numbers = #tpu.dot_dimension_numbers<[1], [0], [0], [1], [0, 0, 1, 1], [], []>} : vector<32x16xbf16>, vector<16x256xbf16>, vector<32x256xf32> -> vector<32x256xf32>
    %c0_114 = arith.constant 0 : index
    %c0_115 = arith.constant 0 : index
    %119 = vector.load %arg7[%c0_114, %c0_115] : memref<32x256xf32, #tpu.memory_space<vmem>>, vector<32x256xf32>
    %120 = arith.addf %119, %118 : vector<32x256xf32>
    %c0_116 = arith.constant 0 : index
    %c0_117 = arith.constant 0 : index
    %121 = vector.load %arg7[%c0_116, %c0_117] : memref<32x256xf32, #tpu.memory_space<vmem>>, vector<32x256xf32>
    tpu.vector_store %arg7[%c0_116, %c0_117], %120 {strides = array<i32>} : memref<32x256xf32, #tpu.memory_space<vmem>>, vector<32x256xf32>,
    %c17 = arith.constant 17 : index
    %c0_118 = arith.constant 0 : index
    %c0_119 = arith.constant 0 : index
    %122 = vector.load %arg4[%c17, %c0_118, %c0_119] : memref<49x32x16xbf16, #tpu.memory_space<vmem>>, vector<1x32x16xbf16>
    %123 = vector.shape_cast %122 : vector<1x32x16xbf16> to vector<32x16xbf16>
    %124 = vector.extract_strided_slice %4 {offsets = [0, 79], sizes = [16, 256], strides = [1, 1]} : vector<16x512xbf16> to vector<16x256xbf16>
    %cst_120 = arith.constant dense<0.000000e+00> : vector<32x256xf32>
    %125 = tpu.matmul %123, %124, %cst_120 {dimension_numbers = #tpu.dot_dimension_numbers<[1], [0], [0], [1], [0, 0, 1, 1], [], []>} : vector<32x16xbf16>, vector<16x256xbf16>, vector<32x256xf32> -> vector<32x256xf32>
    %c0_121 = arith.constant 0 : index
    %c0_122 = arith.constant 0 : index
    %126 = vector.load %arg7[%c0_121, %c0_122] : memref<32x256xf32, #tpu.memory_space<vmem>>, vector<32x256xf32>
    %127 = arith.addf %126, %125 : vector<32x256xf32>
    %c0_123 = arith.constant 0 : index
    %c0_124 = arith.constant 0 : index
    %128 = vector.load %arg7[%c0_123, %c0_124] : memref<32x256xf32, #tpu.memory_space<vmem>>, vector<32x256xf32>
    tpu.vector_store %arg7[%c0_123, %c0_124], %127 {strides = array<i32>} : memref<32x256xf32, #tpu.memory_space<vmem>>, vector<32x256xf32>,
    %c18 = arith.constant 18 : index
    %c0_125 = arith.constant 0 : index
    %c0_126 = arith.constant 0 : index
    %129 = vector.load %arg4[%c18, %c0_125, %c0_126] : memref<49x32x16xbf16, #tpu.memory_space<vmem>>, vector<1x32x16xbf16>
    %130 = vector.shape_cast %129 : vector<1x32x16xbf16> to vector<32x16xbf16>
    %131 = vector.extract_strided_slice %4 {offsets = [0, 80], sizes = [16, 256], strides = [1, 1]} : vector<16x512xbf16> to vector<16x256xbf16>
    %cst_127 = arith.constant dense<0.000000e+00> : vector<32x256xf32>
    %132 = tpu.matmul %130, %131, %cst_127 {dimension_numbers = #tpu.dot_dimension_numbers<[1], [0], [0], [1], [0, 0, 1, 1], [], []>} : vector<32x16xbf16>, vector<16x256xbf16>, vector<32x256xf32> -> vector<32x256xf32>
    %c0_128 = arith.constant 0 : index
    %c0_129 = arith.constant 0 : index
    %133 = vector.load %arg7[%c0_128, %c0_129] : memref<32x256xf32, #tpu.memory_space<vmem>>, vector<32x256xf32>
    %134 = arith.addf %133, %132 : vector<32x256xf32>
    %c0_130 = arith.constant 0 : index
    %c0_131 = arith.constant 0 : index
    %135 = vector.load %arg7[%c0_130, %c0_131] : memref<32x256xf32, #tpu.memory_space<vmem>>, vector<32x256xf32>
    tpu.vector_store %arg7[%c0_130, %c0_131], %134 {strides = array<i32>} : memref<32x256xf32, #tpu.memory_space<vmem>>, vector<32x256xf32>,
    %c19 = arith.constant 19 : index
    %c0_132 = arith.constant 0 : index
    %c0_133 = arith.constant 0 : index
    %136 = vector.load %arg4[%c19, %c0_132, %c0_133] : memref<49x32x16xbf16, #tpu.memory_space<vmem>>, vector<1x32x16xbf16>
    %137 = vector.shape_cast %136 : vector<1x32x16xbf16> to vector<32x16xbf16>
    %138 = vector.extract_strided_slice %4 {offsets = [0, 81], sizes = [16, 256], strides = [1, 1]} : vector<16x512xbf16> to vector<16x256xbf16>
    %cst_134 = arith.constant dense<0.000000e+00> : vector<32x256xf32>
    %139 = tpu.matmul %137, %138, %cst_134 {dimension_numbers = #tpu.dot_dimension_numbers<[1], [0], [0], [1], [0, 0, 1, 1], [], []>} : vector<32x16xbf16>, vector<16x256xbf16>, vector<32x256xf32> -> vector<32x256xf32>
    %c0_135 = arith.constant 0 : index
    %c0_136 = arith.constant 0 : index
    %140 = vector.load %arg7[%c0_135, %c0_136] : memref<32x256xf32, #tpu.memory_space<vmem>>, vector<32x256xf32>
    %141 = arith.addf %140, %139 : vector<32x256xf32>
    %c0_137 = arith.constant 0 : index
    %c0_138 = arith.constant 0 : index
    %142 = vector.load %arg7[%c0_137, %c0_138] : memref<32x256xf32, #tpu.memory_space<vmem>>, vector<32x256xf32>
    tpu.vector_store %arg7[%c0_137, %c0_138], %141 {strides = array<i32>} : memref<32x256xf32, #tpu.memory_space<vmem>>, vector<32x256xf32>,
    %c20 = arith.constant 20 : index
    %c0_139 = arith.constant 0 : index
    %c0_140 = arith.constant 0 : index
    %143 = vector.load %arg4[%c20, %c0_139, %c0_140] : memref<49x32x16xbf16, #tpu.memory_space<vmem>>, vector<1x32x16xbf16>
    %144 = vector.shape_cast %143 : vector<1x32x16xbf16> to vector<32x16xbf16>
    %145 = vector.extract_strided_slice %4 {offsets = [0, 82], sizes = [16, 256], strides = [1, 1]} : vector<16x512xbf16> to vector<16x256xbf16>
    %cst_141 = arith.constant dense<0.000000e+00> : vector<32x256xf32>
    %146 = tpu.matmul %144, %145, %cst_141 {dimension_numbers = #tpu.dot_dimension_numbers<[1], [0], [0], [1], [0, 0, 1, 1], [], []>} : vector<32x16xbf16>, vector<16x256xbf16>, vector<32x256xf32> -> vector<32x256xf32>
    %c0_142 = arith.constant 0 : index
    %c0_143 = arith.constant 0 : index
    %147 = vector.load %arg7[%c0_142, %c0_143] : memref<32x256xf32, #tpu.memory_space<vmem>>, vector<32x256xf32>
    %148 = arith.addf %147, %146 : vector<32x256xf32>
    %c0_144 = arith.constant 0 : index
    %c0_145 = arith.constant 0 : index
    %149 = vector.load %arg7[%c0_144, %c0_145] : memref<32x256xf32, #tpu.memory_space<vmem>>, vector<32x256xf32>
    tpu.vector_store %arg7[%c0_144, %c0_145], %148 {strides = array<i32>} : memref<32x256xf32, #tpu.memory_space<vmem>>, vector<32x256xf32>,
    %c21 = arith.constant 21 : index
    %c0_146 = arith.constant 0 : index
    %c0_147 = arith.constant 0 : index
    %150 = vector.load %arg4[%c21, %c0_146, %c0_147] : memref<49x32x16xbf16, #tpu.memory_space<vmem>>, vector<1x32x16xbf16>
    %151 = vector.shape_cast %150 : vector<1x32x16xbf16> to vector<32x16xbf16>
    %152 = vector.extract_strided_slice %4 {offsets = [0, 114], sizes = [16, 256], strides = [1, 1]} : vector<16x512xbf16> to vector<16x256xbf16>
    %cst_148 = arith.constant dense<0.000000e+00> : vector<32x256xf32>
    %153 = tpu.matmul %151, %152, %cst_148 {dimension_numbers = #tpu.dot_dimension_numbers<[1], [0], [0], [1], [0, 0, 1, 1], [], []>} : vector<32x16xbf16>, vector<16x256xbf16>, vector<32x256xf32> -> vector<32x256xf32>
    %c0_149 = arith.constant 0 : index
    %c0_150 = arith.constant 0 : index
    %154 = vector.load %arg7[%c0_149, %c0_150] : memref<32x256xf32, #tpu.memory_space<vmem>>, vector<32x256xf32>
    %155 = arith.addf %154, %153 : vector<32x256xf32>
    %c0_151 = arith.constant 0 : index
    %c0_152 = arith.constant 0 : index
    %156 = vector.load %arg7[%c0_151, %c0_152] : memref<32x256xf32, #tpu.memory_space<vmem>>, vector<32x256xf32>
    tpu.vector_store %arg7[%c0_151, %c0_152], %155 {strides = array<i32>} : memref<32x256xf32, #tpu.memory_space<vmem>>, vector<32x256xf32>,
    %c22 = arith.constant 22 : index
    %c0_153 = arith.constant 0 : index
    %c0_154 = arith.constant 0 : index
    %157 = vector.load %arg4[%c22, %c0_153, %c0_154] : memref<49x32x16xbf16, #tpu.memory_space<vmem>>, vector<1x32x16xbf16>
    %158 = vector.shape_cast %157 : vector<1x32x16xbf16> to vector<32x16xbf16>
    %159 = vector.extract_strided_slice %4 {offsets = [0, 115], sizes = [16, 256], strides = [1, 1]} : vector<16x512xbf16> to vector<16x256xbf16>
    %cst_155 = arith.constant dense<0.000000e+00> : vector<32x256xf32>
    %160 = tpu.matmul %158, %159, %cst_155 {dimension_numbers = #tpu.dot_dimension_numbers<[1], [0], [0], [1], [0, 0, 1, 1], [], []>} : vector<32x16xbf16>, vector<16x256xbf16>, vector<32x256xf32> -> vector<32x256xf32>
    %c0_156 = arith.constant 0 : index
    %c0_157 = arith.constant 0 : index
    %161 = vector.load %arg7[%c0_156, %c0_157] : memref<32x256xf32, #tpu.memory_space<vmem>>, vector<32x256xf32>
    %162 = arith.addf %161, %160 : vector<32x256xf32>
    %c0_158 = arith.constant 0 : index
    %c0_159 = arith.constant 0 : index
    %163 = vector.load %arg7[%c0_158, %c0_159] : memref<32x256xf32, #tpu.memory_space<vmem>>, vector<32x256xf32>
    tpu.vector_store %arg7[%c0_158, %c0_159], %162 {strides = array<i32>} : memref<32x256xf32, #tpu.memory_space<vmem>>, vector<32x256xf32>,
    %c23 = arith.constant 23 : index
    %c0_160 = arith.constant 0 : index
    %c0_161 = arith.constant 0 : index
    %164 = vector.load %arg4[%c23, %c0_160, %c0_161] : memref<49x32x16xbf16, #tpu.memory_space<vmem>>, vector<1x32x16xbf16>
    %165 = vector.shape_cast %164 : vector<1x32x16xbf16> to vector<32x16xbf16>
    %166 = vector.extract_strided_slice %4 {offsets = [0, 116], sizes = [16, 256], strides = [1, 1]} : vector<16x512xbf16> to vector<16x256xbf16>
    %cst_162 = arith.constant dense<0.000000e+00> : vector<32x256xf32>
    %167 = tpu.matmul %165, %166, %cst_162 {dimension_numbers = #tpu.dot_dimension_numbers<[1], [0], [0], [1], [0, 0, 1, 1], [], []>} : vector<32x16xbf16>, vector<16x256xbf16>, vector<32x256xf32> -> vector<32x256xf32>
    %c0_163 = arith.constant 0 : index
    %c0_164 = arith.constant 0 : index
    %168 = vector.load %arg7[%c0_163, %c0_164] : memref<32x256xf32, #tpu.memory_space<vmem>>, vector<32x256xf32>
    %169 = arith.addf %168, %167 : vector<32x256xf32>
    %c0_165 = arith.constant 0 : index
    %c0_166 = arith.constant 0 : index
    %170 = vector.load %arg7[%c0_165, %c0_166] : memref<32x256xf32, #tpu.memory_space<vmem>>, vector<32x256xf32>
    tpu.vector_store %arg7[%c0_165, %c0_166], %169 {strides = array<i32>} : memref<32x256xf32, #tpu.memory_space<vmem>>, vector<32x256xf32>,
    %c24 = arith.constant 24 : index
    %c0_167 = arith.constant 0 : index
    %c0_168 = arith.constant 0 : index
    %171 = vector.load %arg4[%c24, %c0_167, %c0_168] : memref<49x32x16xbf16, #tpu.memory_space<vmem>>, vector<1x32x16xbf16>
    %172 = vector.shape_cast %171 : vector<1x32x16xbf16> to vector<32x16xbf16>
    %173 = vector.extract_strided_slice %4 {offsets = [0, 117], sizes = [16, 256], strides = [1, 1]} : vector<16x512xbf16> to vector<16x256xbf16>
    %cst_169 = arith.constant dense<0.000000e+00> : vector<32x256xf32>
    %174 = tpu.matmul %172, %173, %cst_169 {dimension_numbers = #tpu.dot_dimension_numbers<[1], [0], [0], [1], [0, 0, 1, 1], [], []>} : vector<32x16xbf16>, vector<16x256xbf16>, vector<32x256xf32> -> vector<32x256xf32>
    %c0_170 = arith.constant 0 : index
    %c0_171 = arith.constant 0 : index
    %175 = vector.load %arg7[%c0_170, %c0_171] : memref<32x256xf32, #tpu.memory_space<vmem>>, vector<32x256xf32>
    %176 = arith.addf %175, %174 : vector<32x256xf32>
    %c0_172 = arith.constant 0 : index
    %c0_173 = arith.constant 0 : index
    %177 = vector.load %arg7[%c0_172, %c0_173] : memref<32x256xf32, #tpu.memory_space<vmem>>, vector<32x256xf32>
    tpu.vector_store %arg7[%c0_172, %c0_173], %176 {strides = array<i32>} : memref<32x256xf32, #tpu.memory_space<vmem>>, vector<32x256xf32>,
    %c25 = arith.constant 25 : index
    %c0_174 = arith.constant 0 : index
    %c0_175 = arith.constant 0 : index
    %178 = vector.load %arg4[%c25, %c0_174, %c0_175] : memref<49x32x16xbf16, #tpu.memory_space<vmem>>, vector<1x32x16xbf16>
    %179 = vector.shape_cast %178 : vector<1x32x16xbf16> to vector<32x16xbf16>
    %180 = vector.extract_strided_slice %4 {offsets = [0, 118], sizes = [16, 256], strides = [1, 1]} : vector<16x512xbf16> to vector<16x256xbf16>
    %cst_176 = arith.constant dense<0.000000e+00> : vector<32x256xf32>
    %181 = tpu.matmul %179, %180, %cst_176 {dimension_numbers = #tpu.dot_dimension_numbers<[1], [0], [0], [1], [0, 0, 1, 1], [], []>} : vector<32x16xbf16>, vector<16x256xbf16>, vector<32x256xf32> -> vector<32x256xf32>
    %c0_177 = arith.constant 0 : index
    %c0_178 = arith.constant 0 : index
    %182 = vector.load %arg7[%c0_177, %c0_178] : memref<32x256xf32, #tpu.memory_space<vmem>>, vector<32x256xf32>
    %183 = arith.addf %182, %181 : vector<32x256xf32>
    %c0_179 = arith.constant 0 : index
    %c0_180 = arith.constant 0 : index
    %184 = vector.load %arg7[%c0_179, %c0_180] : memref<32x256xf32, #tpu.memory_space<vmem>>, vector<32x256xf32>
    tpu.vector_store %arg7[%c0_179, %c0_180], %183 {strides = array<i32>} : memref<32x256xf32, #tpu.memory_space<vmem>>, vector<32x256xf32>,
    %c26 = arith.constant 26 : index
    %c0_181 = arith.constant 0 : index
    %c0_182 = arith.constant 0 : index
    %185 = vector.load %arg4[%c26, %c0_181, %c0_182] : memref<49x32x16xbf16, #tpu.memory_space<vmem>>, vector<1x32x16xbf16>
    %186 = vector.shape_cast %185 : vector<1x32x16xbf16> to vector<32x16xbf16>
    %187 = vector.extract_strided_slice %4 {offsets = [0, 119], sizes = [16, 256], strides = [1, 1]} : vector<16x512xbf16> to vector<16x256xbf16>
    %cst_183 = arith.constant dense<0.000000e+00> : vector<32x256xf32>
    %188 = tpu.matmul %186, %187, %cst_183 {dimension_numbers = #tpu.dot_dimension_numbers<[1], [0], [0], [1], [0, 0, 1, 1], [], []>} : vector<32x16xbf16>, vector<16x256xbf16>, vector<32x256xf32> -> vector<32x256xf32>
    %c0_184 = arith.constant 0 : index
    %c0_185 = arith.constant 0 : index
    %189 = vector.load %arg7[%c0_184, %c0_185] : memref<32x256xf32, #tpu.memory_space<vmem>>, vector<32x256xf32>
    %190 = arith.addf %189, %188 : vector<32x256xf32>
    %c0_186 = arith.constant 0 : index
    %c0_187 = arith.constant 0 : index
    %191 = vector.load %arg7[%c0_186, %c0_187] : memref<32x256xf32, #tpu.memory_space<vmem>>, vector<32x256xf32>
    tpu.vector_store %arg7[%c0_186, %c0_187], %190 {strides = array<i32>} : memref<32x256xf32, #tpu.memory_space<vmem>>, vector<32x256xf32>,
    %c27 = arith.constant 27 : index
    %c0_188 = arith.constant 0 : index
    %c0_189 = arith.constant 0 : index
    %192 = vector.load %arg4[%c27, %c0_188, %c0_189] : memref<49x32x16xbf16, #tpu.memory_space<vmem>>, vector<1x32x16xbf16>
    %193 = vector.shape_cast %192 : vector<1x32x16xbf16> to vector<32x16xbf16>
    %194 = vector.extract_strided_slice %4 {offsets = [0, 120], sizes = [16, 256], strides = [1, 1]} : vector<16x512xbf16> to vector<16x256xbf16>
    %cst_190 = arith.constant dense<0.000000e+00> : vector<32x256xf32>
    %195 = tpu.matmul %193, %194, %cst_190 {dimension_numbers = #tpu.dot_dimension_numbers<[1], [0], [0], [1], [0, 0, 1, 1], [], []>} : vector<32x16xbf16>, vector<16x256xbf16>, vector<32x256xf32> -> vector<32x256xf32>
    %c0_191 = arith.constant 0 : index
    %c0_192 = arith.constant 0 : index
    %196 = vector.load %arg7[%c0_191, %c0_192] : memref<32x256xf32, #tpu.memory_space<vmem>>, vector<32x256xf32>
    %197 = arith.addf %196, %195 : vector<32x256xf32>
    %c0_193 = arith.constant 0 : index
    %c0_194 = arith.constant 0 : index
    %198 = vector.load %arg7[%c0_193, %c0_194] : memref<32x256xf32, #tpu.memory_space<vmem>>, vector<32x256xf32>
    tpu.vector_store %arg7[%c0_193, %c0_194], %197 {strides = array<i32>} : memref<32x256xf32, #tpu.memory_space<vmem>>, vector<32x256xf32>,
    %c28 = arith.constant 28 : index
    %c0_195 = arith.constant 0 : index
    %c0_196 = arith.constant 0 : index
    %199 = vector.load %arg4[%c28, %c0_195, %c0_196] : memref<49x32x16xbf16, #tpu.memory_space<vmem>>, vector<1x32x16xbf16>
    %200 = vector.shape_cast %199 : vector<1x32x16xbf16> to vector<32x16xbf16>
    %201 = vector.extract_strided_slice %4 {offsets = [0, 152], sizes = [16, 256], strides = [1, 1]} : vector<16x512xbf16> to vector<16x256xbf16>
    %cst_197 = arith.constant dense<0.000000e+00> : vector<32x256xf32>
    %202 = tpu.matmul %200, %201, %cst_197 {dimension_numbers = #tpu.dot_dimension_numbers<[1], [0], [0], [1], [0, 0, 1, 1], [], []>} : vector<32x16xbf16>, vector<16x256xbf16>, vector<32x256xf32> -> vector<32x256xf32>
    %c0_198 = arith.constant 0 : index
    %c0_199 = arith.constant 0 : index
    %203 = vector.load %arg7[%c0_198, %c0_199] : memref<32x256xf32, #tpu.memory_space<vmem>>, vector<32x256xf32>
    %204 = arith.addf %203, %202 : vector<32x256xf32>
    %c0_200 = arith.constant 0 : index
    %c0_201 = arith.constant 0 : index
    %205 = vector.load %arg7[%c0_200, %c0_201] : memref<32x256xf32, #tpu.memory_space<vmem>>, vector<32x256xf32>
    tpu.vector_store %arg7[%c0_200, %c0_201], %204 {strides = array<i32>} : memref<32x256xf32, #tpu.memory_space<vmem>>, vector<32x256xf32>,
    %c29 = arith.constant 29 : index
    %c0_202 = arith.constant 0 : index
    %c0_203 = arith.constant 0 : index
    %206 = vector.load %arg4[%c29, %c0_202, %c0_203] : memref<49x32x16xbf16, #tpu.memory_space<vmem>>, vector<1x32x16xbf16>
    %207 = vector.shape_cast %206 : vector<1x32x16xbf16> to vector<32x16xbf16>
    %208 = vector.extract_strided_slice %4 {offsets = [0, 153], sizes = [16, 256], strides = [1, 1]} : vector<16x512xbf16> to vector<16x256xbf16>
    %cst_204 = arith.constant dense<0.000000e+00> : vector<32x256xf32>
    %209 = tpu.matmul %207, %208, %cst_204 {dimension_numbers = #tpu.dot_dimension_numbers<[1], [0], [0], [1], [0, 0, 1, 1], [], []>} : vector<32x16xbf16>, vector<16x256xbf16>, vector<32x256xf32> -> vector<32x256xf32>
    %c0_205 = arith.constant 0 : index
    %c0_206 = arith.constant 0 : index
    %210 = vector.load %arg7[%c0_205, %c0_206] : memref<32x256xf32, #tpu.memory_space<vmem>>, vector<32x256xf32>
    %211 = arith.addf %210, %209 : vector<32x256xf32>
    %c0_207 = arith.constant 0 : index
    %c0_208 = arith.constant 0 : index
    %212 = vector.load %arg7[%c0_207, %c0_208] : memref<32x256xf32, #tpu.memory_space<vmem>>, vector<32x256xf32>
    tpu.vector_store %arg7[%c0_207, %c0_208], %211 {strides = array<i32>} : memref<32x256xf32, #tpu.memory_space<vmem>>, vector<32x256xf32>,
    %c30 = arith.constant 30 : index
    %c0_209 = arith.constant 0 : index
    %c0_210 = arith.constant 0 : index
    %213 = vector.load %arg4[%c30, %c0_209, %c0_210] : memref<49x32x16xbf16, #tpu.memory_space<vmem>>, vector<1x32x16xbf16>
    %214 = vector.shape_cast %213 : vector<1x32x16xbf16> to vector<32x16xbf16>
    %215 = vector.extract_strided_slice %4 {offsets = [0, 154], sizes = [16, 256], strides = [1, 1]} : vector<16x512xbf16> to vector<16x256xbf16>
    %cst_211 = arith.constant dense<0.000000e+00> : vector<32x256xf32>
    %216 = tpu.matmul %214, %215, %cst_211 {dimension_numbers = #tpu.dot_dimension_numbers<[1], [0], [0], [1], [0, 0, 1, 1], [], []>} : vector<32x16xbf16>, vector<16x256xbf16>, vector<32x256xf32> -> vector<32x256xf32>
    %c0_212 = arith.constant 0 : index
    %c0_213 = arith.constant 0 : index
    %217 = vector.load %arg7[%c0_212, %c0_213] : memref<32x256xf32, #tpu.memory_space<vmem>>, vector<32x256xf32>
    %218 = arith.addf %217, %216 : vector<32x256xf32>
    %c0_214 = arith.constant 0 : index
    %c0_215 = arith.constant 0 : index
    %219 = vector.load %arg7[%c0_214, %c0_215] : memref<32x256xf32, #tpu.memory_space<vmem>>, vector<32x256xf32>
    tpu.vector_store %arg7[%c0_214, %c0_215], %218 {strides = array<i32>} : memref<32x256xf32, #tpu.memory_space<vmem>>, vector<32x256xf32>,
    %c31 = arith.constant 31 : index
    %c0_216 = arith.constant 0 : index
    %c0_217 = arith.constant 0 : index
    %220 = vector.load %arg4[%c31, %c0_216, %c0_217] : memref<49x32x16xbf16, #tpu.memory_space<vmem>>, vector<1x32x16xbf16>
    %221 = vector.shape_cast %220 : vector<1x32x16xbf16> to vector<32x16xbf16>
    %222 = vector.extract_strided_slice %4 {offsets = [0, 155], sizes = [16, 256], strides = [1, 1]} : vector<16x512xbf16> to vector<16x256xbf16>
    %cst_218 = arith.constant dense<0.000000e+00> : vector<32x256xf32>
    %223 = tpu.matmul %221, %222, %cst_218 {dimension_numbers = #tpu.dot_dimension_numbers<[1], [0], [0], [1], [0, 0, 1, 1], [], []>} : vector<32x16xbf16>, vector<16x256xbf16>, vector<32x256xf32> -> vector<32x256xf32>
    %c0_219 = arith.constant 0 : index
    %c0_220 = arith.constant 0 : index
    %224 = vector.load %arg7[%c0_219, %c0_220] : memref<32x256xf32, #tpu.memory_space<vmem>>, vector<32x256xf32>
    %225 = arith.addf %224, %223 : vector<32x256xf32>
    %c0_221 = arith.constant 0 : index
    %c0_222 = arith.constant 0 : index
    %226 = vector.load %arg7[%c0_221, %c0_222] : memref<32x256xf32, #tpu.memory_space<vmem>>, vector<32x256xf32>
    tpu.vector_store %arg7[%c0_221, %c0_222], %225 {strides = array<i32>} : memref<32x256xf32, #tpu.memory_space<vmem>>, vector<32x256xf32>,
    %c32 = arith.constant 32 : index
    %c0_223 = arith.constant 0 : index
    %c0_224 = arith.constant 0 : index
    %227 = vector.load %arg4[%c32, %c0_223, %c0_224] : memref<49x32x16xbf16, #tpu.memory_space<vmem>>, vector<1x32x16xbf16>
    %228 = vector.shape_cast %227 : vector<1x32x16xbf16> to vector<32x16xbf16>
    %229 = vector.extract_strided_slice %4 {offsets = [0, 156], sizes = [16, 256], strides = [1, 1]} : vector<16x512xbf16> to vector<16x256xbf16>
    %cst_225 = arith.constant dense<0.000000e+00> : vector<32x256xf32>
    %230 = tpu.matmul %228, %229, %cst_225 {dimension_numbers = #tpu.dot_dimension_numbers<[1], [0], [0], [1], [0, 0, 1, 1], [], []>} : vector<32x16xbf16>, vector<16x256xbf16>, vector<32x256xf32> -> vector<32x256xf32>
    %c0_226 = arith.constant 0 : index
    %c0_227 = arith.constant 0 : index
    %231 = vector.load %arg7[%c0_226, %c0_227] : memref<32x256xf32, #tpu.memory_space<vmem>>, vector<32x256xf32>
    %232 = arith.addf %231, %230 : vector<32x256xf32>
    %c0_228 = arith.constant 0 : index
    %c0_229 = arith.constant 0 : index
    %233 = vector.load %arg7[%c0_228, %c0_229] : memref<32x256xf32, #tpu.memory_space<vmem>>, vector<32x256xf32>
    tpu.vector_store %arg7[%c0_228, %c0_229], %232 {strides = array<i32>} : memref<32x256xf32, #tpu.memory_space<vmem>>, vector<32x256xf32>,
    %c33 = arith.constant 33 : index
    %c0_230 = arith.constant 0 : index
    %c0_231 = arith.constant 0 : index
    %234 = vector.load %arg4[%c33, %c0_230, %c0_231] : memref<49x32x16xbf16, #tpu.memory_space<vmem>>, vector<1x32x16xbf16>
    %235 = vector.shape_cast %234 : vector<1x32x16xbf16> to vector<32x16xbf16>
    %236 = vector.extract_strided_slice %4 {offsets = [0, 157], sizes = [16, 256], strides = [1, 1]} : vector<16x512xbf16> to vector<16x256xbf16>
    %cst_232 = arith.constant dense<0.000000e+00> : vector<32x256xf32>
    %237 = tpu.matmul %235, %236, %cst_232 {dimension_numbers = #tpu.dot_dimension_numbers<[1], [0], [0], [1], [0, 0, 1, 1], [], []>} : vector<32x16xbf16>, vector<16x256xbf16>, vector<32x256xf32> -> vector<32x256xf32>
    %c0_233 = arith.constant 0 : index
    %c0_234 = arith.constant 0 : index
    %238 = vector.load %arg7[%c0_233, %c0_234] : memref<32x256xf32, #tpu.memory_space<vmem>>, vector<32x256xf32>
    %239 = arith.addf %238, %237 : vector<32x256xf32>
    %c0_235 = arith.constant 0 : index
    %c0_236 = arith.constant 0 : index
    %240 = vector.load %arg7[%c0_235, %c0_236] : memref<32x256xf32, #tpu.memory_space<vmem>>, vector<32x256xf32>
    tpu.vector_store %arg7[%c0_235, %c0_236], %239 {strides = array<i32>} : memref<32x256xf32, #tpu.memory_space<vmem>>, vector<32x256xf32>,
    %c34 = arith.constant 34 : index
    %c0_237 = arith.constant 0 : index
    %c0_238 = arith.constant 0 : index
    %241 = vector.load %arg4[%c34, %c0_237, %c0_238] : memref<49x32x16xbf16, #tpu.memory_space<vmem>>, vector<1x32x16xbf16>
    %242 = vector.shape_cast %241 : vector<1x32x16xbf16> to vector<32x16xbf16>
    %243 = vector.extract_strided_slice %4 {offsets = [0, 158], sizes = [16, 256], strides = [1, 1]} : vector<16x512xbf16> to vector<16x256xbf16>
    %cst_239 = arith.constant dense<0.000000e+00> : vector<32x256xf32>
    %244 = tpu.matmul %242, %243, %cst_239 {dimension_numbers = #tpu.dot_dimension_numbers<[1], [0], [0], [1], [0, 0, 1, 1], [], []>} : vector<32x16xbf16>, vector<16x256xbf16>, vector<32x256xf32> -> vector<32x256xf32>
    %c0_240 = arith.constant 0 : index
    %c0_241 = arith.constant 0 : index
    %245 = vector.load %arg7[%c0_240, %c0_241] : memref<32x256xf32, #tpu.memory_space<vmem>>, vector<32x256xf32>
    %246 = arith.addf %245, %244 : vector<32x256xf32>
    %c0_242 = arith.constant 0 : index
    %c0_243 = arith.constant 0 : index
    %247 = vector.load %arg7[%c0_242, %c0_243] : memref<32x256xf32, #tpu.memory_space<vmem>>, vector<32x256xf32>
    tpu.vector_store %arg7[%c0_242, %c0_243], %246 {strides = array<i32>} : memref<32x256xf32, #tpu.memory_space<vmem>>, vector<32x256xf32>,
    %c35 = arith.constant 35 : index
    %c0_244 = arith.constant 0 : index
    %c0_245 = arith.constant 0 : index
    %248 = vector.load %arg4[%c35, %c0_244, %c0_245] : memref<49x32x16xbf16, #tpu.memory_space<vmem>>, vector<1x32x16xbf16>
    %249 = vector.shape_cast %248 : vector<1x32x16xbf16> to vector<32x16xbf16>
    %250 = vector.extract_strided_slice %4 {offsets = [0, 190], sizes = [16, 256], strides = [1, 1]} : vector<16x512xbf16> to vector<16x256xbf16>
    %cst_246 = arith.constant dense<0.000000e+00> : vector<32x256xf32>
    %251 = tpu.matmul %249, %250, %cst_246 {dimension_numbers = #tpu.dot_dimension_numbers<[1], [0], [0], [1], [0, 0, 1, 1], [], []>} : vector<32x16xbf16>, vector<16x256xbf16>, vector<32x256xf32> -> vector<32x256xf32>
    %c0_247 = arith.constant 0 : index
    %c0_248 = arith.constant 0 : index
    %252 = vector.load %arg7[%c0_247, %c0_248] : memref<32x256xf32, #tpu.memory_space<vmem>>, vector<32x256xf32>
    %253 = arith.addf %252, %251 : vector<32x256xf32>
    %c0_249 = arith.constant 0 : index
    %c0_250 = arith.constant 0 : index
    %254 = vector.load %arg7[%c0_249, %c0_250] : memref<32x256xf32, #tpu.memory_space<vmem>>, vector<32x256xf32>
    tpu.vector_store %arg7[%c0_249, %c0_250], %253 {strides = array<i32>} : memref<32x256xf32, #tpu.memory_space<vmem>>, vector<32x256xf32>,
    %c36 = arith.constant 36 : index
    %c0_251 = arith.constant 0 : index
    %c0_252 = arith.constant 0 : index
    %255 = vector.load %arg4[%c36, %c0_251, %c0_252] : memref<49x32x16xbf16, #tpu.memory_space<vmem>>, vector<1x32x16xbf16>
    %256 = vector.shape_cast %255 : vector<1x32x16xbf16> to vector<32x16xbf16>
    %257 = vector.extract_strided_slice %4 {offsets = [0, 191], sizes = [16, 256], strides = [1, 1]} : vector<16x512xbf16> to vector<16x256xbf16>
    %cst_253 = arith.constant dense<0.000000e+00> : vector<32x256xf32>
    %258 = tpu.matmul %256, %257, %cst_253 {dimension_numbers = #tpu.dot_dimension_numbers<[1], [0], [0], [1], [0, 0, 1, 1], [], []>} : vector<32x16xbf16>, vector<16x256xbf16>, vector<32x256xf32> -> vector<32x256xf32>
    %c0_254 = arith.constant 0 : index
    %c0_255 = arith.constant 0 : index
    %259 = vector.load %arg7[%c0_254, %c0_255] : memref<32x256xf32, #tpu.memory_space<vmem>>, vector<32x256xf32>
    %260 = arith.addf %259, %258 : vector<32x256xf32>
    %c0_256 = arith.constant 0 : index
    %c0_257 = arith.constant 0 : index
    %261 = vector.load %arg7[%c0_256, %c0_257] : memref<32x256xf32, #tpu.memory_space<vmem>>, vector<32x256xf32>
    tpu.vector_store %arg7[%c0_256, %c0_257], %260 {strides = array<i32>} : memref<32x256xf32, #tpu.memory_space<vmem>>, vector<32x256xf32>,
    %c37 = arith.constant 37 : index
    %c0_258 = arith.constant 0 : index
    %c0_259 = arith.constant 0 : index
    %262 = vector.load %arg4[%c37, %c0_258, %c0_259] : memref<49x32x16xbf16, #tpu.memory_space<vmem>>, vector<1x32x16xbf16>
    %263 = vector.shape_cast %262 : vector<1x32x16xbf16> to vector<32x16xbf16>
    %264 = vector.extract_strided_slice %4 {offsets = [0, 192], sizes = [16, 256], strides = [1, 1]} : vector<16x512xbf16> to vector<16x256xbf16>
    %cst_260 = arith.constant dense<0.000000e+00> : vector<32x256xf32>
    %265 = tpu.matmul %263, %264, %cst_260 {dimension_numbers = #tpu.dot_dimension_numbers<[1], [0], [0], [1], [0, 0, 1, 1], [], []>} : vector<32x16xbf16>, vector<16x256xbf16>, vector<32x256xf32> -> vector<32x256xf32>
    %c0_261 = arith.constant 0 : index
    %c0_262 = arith.constant 0 : index
    %266 = vector.load %arg7[%c0_261, %c0_262] : memref<32x256xf32, #tpu.memory_space<vmem>>, vector<32x256xf32>
    %267 = arith.addf %266, %265 : vector<32x256xf32>
    %c0_263 = arith.constant 0 : index
    %c0_264 = arith.constant 0 : index
    %268 = vector.load %arg7[%c0_263, %c0_264] : memref<32x256xf32, #tpu.memory_space<vmem>>, vector<32x256xf32>
    tpu.vector_store %arg7[%c0_263, %c0_264], %267 {strides = array<i32>} : memref<32x256xf32, #tpu.memory_space<vmem>>, vector<32x256xf32>,
    %c38 = arith.constant 38 : index
    %c0_265 = arith.constant 0 : index
    %c0_266 = arith.constant 0 : index
    %269 = vector.load %arg4[%c38, %c0_265, %c0_266] : memref<49x32x16xbf16, #tpu.memory_space<vmem>>, vector<1x32x16xbf16>
    %270 = vector.shape_cast %269 : vector<1x32x16xbf16> to vector<32x16xbf16>
    %271 = vector.extract_strided_slice %4 {offsets = [0, 193], sizes = [16, 256], strides = [1, 1]} : vector<16x512xbf16> to vector<16x256xbf16>
    %cst_267 = arith.constant dense<0.000000e+00> : vector<32x256xf32>
    %272 = tpu.matmul %270, %271, %cst_267 {dimension_numbers = #tpu.dot_dimension_numbers<[1], [0], [0], [1], [0, 0, 1, 1], [], []>} : vector<32x16xbf16>, vector<16x256xbf16>, vector<32x256xf32> -> vector<32x256xf32>
    %c0_268 = arith.constant 0 : index
    %c0_269 = arith.constant 0 : index
    %273 = vector.load %arg7[%c0_268, %c0_269] : memref<32x256xf32, #tpu.memory_space<vmem>>, vector<32x256xf32>
    %274 = arith.addf %273, %272 : vector<32x256xf32>
    %c0_270 = arith.constant 0 : index
    %c0_271 = arith.constant 0 : index
    %275 = vector.load %arg7[%c0_270, %c0_271] : memref<32x256xf32, #tpu.memory_space<vmem>>, vector<32x256xf32>
    tpu.vector_store %arg7[%c0_270, %c0_271], %274 {strides = array<i32>} : memref<32x256xf32, #tpu.memory_space<vmem>>, vector<32x256xf32>,
    %c39 = arith.constant 39 : index
    %c0_272 = arith.constant 0 : index
    %c0_273 = arith.constant 0 : index
    %276 = vector.load %arg4[%c39, %c0_272, %c0_273] : memref<49x32x16xbf16, #tpu.memory_space<vmem>>, vector<1x32x16xbf16>
    %277 = vector.shape_cast %276 : vector<1x32x16xbf16> to vector<32x16xbf16>
    %278 = vector.extract_strided_slice %4 {offsets = [0, 194], sizes = [16, 256], strides = [1, 1]} : vector<16x512xbf16> to vector<16x256xbf16>
    %cst_274 = arith.constant dense<0.000000e+00> : vector<32x256xf32>
    %279 = tpu.matmul %277, %278, %cst_274 {dimension_numbers = #tpu.dot_dimension_numbers<[1], [0], [0], [1], [0, 0, 1, 1], [], []>} : vector<32x16xbf16>, vector<16x256xbf16>, vector<32x256xf32> -> vector<32x256xf32>
    %c0_275 = arith.constant 0 : index
    %c0_276 = arith.constant 0 : index
    %280 = vector.load %arg7[%c0_275, %c0_276] : memref<32x256xf32, #tpu.memory_space<vmem>>, vector<32x256xf32>
    %281 = arith.addf %280, %279 : vector<32x256xf32>
    %c0_277 = arith.constant 0 : index
    %c0_278 = arith.constant 0 : index
    %282 = vector.load %arg7[%c0_277, %c0_278] : memref<32x256xf32, #tpu.memory_space<vmem>>, vector<32x256xf32>
    tpu.vector_store %arg7[%c0_277, %c0_278], %281 {strides = array<i32>} : memref<32x256xf32, #tpu.memory_space<vmem>>, vector<32x256xf32>,
    %c40 = arith.constant 40 : index
    %c0_279 = arith.constant 0 : index
    %c0_280 = arith.constant 0 : index
    %283 = vector.load %arg4[%c40, %c0_279, %c0_280] : memref<49x32x16xbf16, #tpu.memory_space<vmem>>, vector<1x32x16xbf16>
    %284 = vector.shape_cast %283 : vector<1x32x16xbf16> to vector<32x16xbf16>
    %285 = vector.extract_strided_slice %4 {offsets = [0, 195], sizes = [16, 256], strides = [1, 1]} : vector<16x512xbf16> to vector<16x256xbf16>
    %cst_281 = arith.constant dense<0.000000e+00> : vector<32x256xf32>
    %286 = tpu.matmul %284, %285, %cst_281 {dimension_numbers = #tpu.dot_dimension_numbers<[1], [0], [0], [1], [0, 0, 1, 1], [], []>} : vector<32x16xbf16>, vector<16x256xbf16>, vector<32x256xf32> -> vector<32x256xf32>
    %c0_282 = arith.constant 0 : index
    %c0_283 = arith.constant 0 : index
    %287 = vector.load %arg7[%c0_282, %c0_283] : memref<32x256xf32, #tpu.memory_space<vmem>>, vector<32x256xf32>
    %288 = arith.addf %287, %286 : vector<32x256xf32>
    %c0_284 = arith.constant 0 : index
    %c0_285 = arith.constant 0 : index
    %289 = vector.load %arg7[%c0_284, %c0_285] : memref<32x256xf32, #tpu.memory_space<vmem>>, vector<32x256xf32>
    tpu.vector_store %arg7[%c0_284, %c0_285], %288 {strides = array<i32>} : memref<32x256xf32, #tpu.memory_space<vmem>>, vector<32x256xf32>,
    %c41 = arith.constant 41 : index
    %c0_286 = arith.constant 0 : index
    %c0_287 = arith.constant 0 : index
    %290 = vector.load %arg4[%c41, %c0_286, %c0_287] : memref<49x32x16xbf16, #tpu.memory_space<vmem>>, vector<1x32x16xbf16>
    %291 = vector.shape_cast %290 : vector<1x32x16xbf16> to vector<32x16xbf16>
    %292 = vector.extract_strided_slice %4 {offsets = [0, 196], sizes = [16, 256], strides = [1, 1]} : vector<16x512xbf16> to vector<16x256xbf16>
    %cst_288 = arith.constant dense<0.000000e+00> : vector<32x256xf32>
    %293 = tpu.matmul %291, %292, %cst_288 {dimension_numbers = #tpu.dot_dimension_numbers<[1], [0], [0], [1], [0, 0, 1, 1], [], []>} : vector<32x16xbf16>, vector<16x256xbf16>, vector<32x256xf32> -> vector<32x256xf32>
    %c0_289 = arith.constant 0 : index
    %c0_290 = arith.constant 0 : index
    %294 = vector.load %arg7[%c0_289, %c0_290] : memref<32x256xf32, #tpu.memory_space<vmem>>, vector<32x256xf32>
    %295 = arith.addf %294, %293 : vector<32x256xf32>
    %c0_291 = arith.constant 0 : index
    %c0_292 = arith.constant 0 : index
    %296 = vector.load %arg7[%c0_291, %c0_292] : memref<32x256xf32, #tpu.memory_space<vmem>>, vector<32x256xf32>
    tpu.vector_store %arg7[%c0_291, %c0_292], %295 {strides = array<i32>} : memref<32x256xf32, #tpu.memory_space<vmem>>, vector<32x256xf32>,
    %c42 = arith.constant 42 : index
    %c0_293 = arith.constant 0 : index
    %c0_294 = arith.constant 0 : index
    %297 = vector.load %arg4[%c42, %c0_293, %c0_294] : memref<49x32x16xbf16, #tpu.memory_space<vmem>>, vector<1x32x16xbf16>
    %298 = vector.shape_cast %297 : vector<1x32x16xbf16> to vector<32x16xbf16>
    %299 = vector.extract_strided_slice %4 {offsets = [0, 228], sizes = [16, 256], strides = [1, 1]} : vector<16x512xbf16> to vector<16x256xbf16>
    %cst_295 = arith.constant dense<0.000000e+00> : vector<32x256xf32>
    %300 = tpu.matmul %298, %299, %cst_295 {dimension_numbers = #tpu.dot_dimension_numbers<[1], [0], [0], [1], [0, 0, 1, 1], [], []>} : vector<32x16xbf16>, vector<16x256xbf16>, vector<32x256xf32> -> vector<32x256xf32>
    %c0_296 = arith.constant 0 : index
    %c0_297 = arith.constant 0 : index
    %301 = vector.load %arg7[%c0_296, %c0_297] : memref<32x256xf32, #tpu.memory_space<vmem>>, vector<32x256xf32>
    %302 = arith.addf %301, %300 : vector<32x256xf32>
    %c0_298 = arith.constant 0 : index
    %c0_299 = arith.constant 0 : index
    %303 = vector.load %arg7[%c0_298, %c0_299] : memref<32x256xf32, #tpu.memory_space<vmem>>, vector<32x256xf32>
    tpu.vector_store %arg7[%c0_298, %c0_299], %302 {strides = array<i32>} : memref<32x256xf32, #tpu.memory_space<vmem>>, vector<32x256xf32>,
    %c43 = arith.constant 43 : index
    %c0_300 = arith.constant 0 : index
    %c0_301 = arith.constant 0 : index
    %304 = vector.load %arg4[%c43, %c0_300, %c0_301] : memref<49x32x16xbf16, #tpu.memory_space<vmem>>, vector<1x32x16xbf16>
    %305 = vector.shape_cast %304 : vector<1x32x16xbf16> to vector<32x16xbf16>
    %306 = vector.extract_strided_slice %4 {offsets = [0, 229], sizes = [16, 256], strides = [1, 1]} : vector<16x512xbf16> to vector<16x256xbf16>
    %cst_302 = arith.constant dense<0.000000e+00> : vector<32x256xf32>
    %307 = tpu.matmul %305, %306, %cst_302 {dimension_numbers = #tpu.dot_dimension_numbers<[1], [0], [0], [1], [0, 0, 1, 1], [], []>} : vector<32x16xbf16>, vector<16x256xbf16>, vector<32x256xf32> -> vector<32x256xf32>
    %c0_303 = arith.constant 0 : index
    %c0_304 = arith.constant 0 : index
    %308 = vector.load %arg7[%c0_303, %c0_304] : memref<32x256xf32, #tpu.memory_space<vmem>>, vector<32x256xf32>
    %309 = arith.addf %308, %307 : vector<32x256xf32>
    %c0_305 = arith.constant 0 : index
    %c0_306 = arith.constant 0 : index
    %310 = vector.load %arg7[%c0_305, %c0_306] : memref<32x256xf32, #tpu.memory_space<vmem>>, vector<32x256xf32>
    tpu.vector_store %arg7[%c0_305, %c0_306], %309 {strides = array<i32>} : memref<32x256xf32, #tpu.memory_space<vmem>>, vector<32x256xf32>,
    %c44 = arith.constant 44 : index
    %c0_307 = arith.constant 0 : index
    %c0_308 = arith.constant 0 : index
    %311 = vector.load %arg4[%c44, %c0_307, %c0_308] : memref<49x32x16xbf16, #tpu.memory_space<vmem>>, vector<1x32x16xbf16>
    %312 = vector.shape_cast %311 : vector<1x32x16xbf16> to vector<32x16xbf16>
    %313 = vector.extract_strided_slice %4 {offsets = [0, 230], sizes = [16, 256], strides = [1, 1]} : vector<16x512xbf16> to vector<16x256xbf16>
    %cst_309 = arith.constant dense<0.000000e+00> : vector<32x256xf32>
    %314 = tpu.matmul %312, %313, %cst_309 {dimension_numbers = #tpu.dot_dimension_numbers<[1], [0], [0], [1], [0, 0, 1, 1], [], []>} : vector<32x16xbf16>, vector<16x256xbf16>, vector<32x256xf32> -> vector<32x256xf32>
    %c0_310 = arith.constant 0 : index
    %c0_311 = arith.constant 0 : index
    %315 = vector.load %arg7[%c0_310, %c0_311] : memref<32x256xf32, #tpu.memory_space<vmem>>, vector<32x256xf32>
    %316 = arith.addf %315, %314 : vector<32x256xf32>
    %c0_312 = arith.constant 0 : index
    %c0_313 = arith.constant 0 : index
    %317 = vector.load %arg7[%c0_312, %c0_313] : memref<32x256xf32, #tpu.memory_space<vmem>>, vector<32x256xf32>
    tpu.vector_store %arg7[%c0_312, %c0_313], %316 {strides = array<i32>} : memref<32x256xf32, #tpu.memory_space<vmem>>, vector<32x256xf32>,
    %c45 = arith.constant 45 : index
    %c0_314 = arith.constant 0 : index
    %c0_315 = arith.constant 0 : index
    %318 = vector.load %arg4[%c45, %c0_314, %c0_315] : memref<49x32x16xbf16, #tpu.memory_space<vmem>>, vector<1x32x16xbf16>
    %319 = vector.shape_cast %318 : vector<1x32x16xbf16> to vector<32x16xbf16>
    %320 = vector.extract_strided_slice %4 {offsets = [0, 231], sizes = [16, 256], strides = [1, 1]} : vector<16x512xbf16> to vector<16x256xbf16>
    %cst_316 = arith.constant dense<0.000000e+00> : vector<32x256xf32>
    %321 = tpu.matmul %319, %320, %cst_316 {dimension_numbers = #tpu.dot_dimension_numbers<[1], [0], [0], [1], [0, 0, 1, 1], [], []>} : vector<32x16xbf16>, vector<16x256xbf16>, vector<32x256xf32> -> vector<32x256xf32>
    %c0_317 = arith.constant 0 : index
    %c0_318 = arith.constant 0 : index
    %322 = vector.load %arg7[%c0_317, %c0_318] : memref<32x256xf32, #tpu.memory_space<vmem>>, vector<32x256xf32>
    %323 = arith.addf %322, %321 : vector<32x256xf32>
    %c0_319 = arith.constant 0 : index
    %c0_320 = arith.constant 0 : index
    %324 = vector.load %arg7[%c0_319, %c0_320] : memref<32x256xf32, #tpu.memory_space<vmem>>, vector<32x256xf32>
    tpu.vector_store %arg7[%c0_319, %c0_320], %323 {strides = array<i32>} : memref<32x256xf32, #tpu.memory_space<vmem>>, vector<32x256xf32>,
    %c46 = arith.constant 46 : index
    %c0_321 = arith.constant 0 : index
    %c0_322 = arith.constant 0 : index
    %325 = vector.load %arg4[%c46, %c0_321, %c0_322] : memref<49x32x16xbf16, #tpu.memory_space<vmem>>, vector<1x32x16xbf16>
    %326 = vector.shape_cast %325 : vector<1x32x16xbf16> to vector<32x16xbf16>
    %327 = vector.extract_strided_slice %4 {offsets = [0, 232], sizes = [16, 256], strides = [1, 1]} : vector<16x512xbf16> to vector<16x256xbf16>
    %cst_323 = arith.constant dense<0.000000e+00> : vector<32x256xf32>
    %328 = tpu.matmul %326, %327, %cst_323 {dimension_numbers = #tpu.dot_dimension_numbers<[1], [0], [0], [1], [0, 0, 1, 1], [], []>} : vector<32x16xbf16>, vector<16x256xbf16>, vector<32x256xf32> -> vector<32x256xf32>
    %c0_324 = arith.constant 0 : index
    %c0_325 = arith.constant 0 : index
    %329 = vector.load %arg7[%c0_324, %c0_325] : memref<32x256xf32, #tpu.memory_space<vmem>>, vector<32x256xf32>
    %330 = arith.addf %329, %328 : vector<32x256xf32>
    %c0_326 = arith.constant 0 : index
    %c0_327 = arith.constant 0 : index
    %331 = vector.load %arg7[%c0_326, %c0_327] : memref<32x256xf32, #tpu.memory_space<vmem>>, vector<32x256xf32>
    tpu.vector_store %arg7[%c0_326, %c0_327], %330 {strides = array<i32>} : memref<32x256xf32, #tpu.memory_space<vmem>>, vector<32x256xf32>,
    %c47 = arith.constant 47 : index
    %c0_328 = arith.constant 0 : index
    %c0_329 = arith.constant 0 : index
    %332 = vector.load %arg4[%c47, %c0_328, %c0_329] : memref<49x32x16xbf16, #tpu.memory_space<vmem>>, vector<1x32x16xbf16>
    %333 = vector.shape_cast %332 : vector<1x32x16xbf16> to vector<32x16xbf16>
    %334 = vector.extract_strided_slice %4 {offsets = [0, 233], sizes = [16, 256], strides = [1, 1]} : vector<16x512xbf16> to vector<16x256xbf16>
    %cst_330 = arith.constant dense<0.000000e+00> : vector<32x256xf32>
    %335 = tpu.matmul %333, %334, %cst_330 {dimension_numbers = #tpu.dot_dimension_numbers<[1], [0], [0], [1], [0, 0, 1, 1], [], []>} : vector<32x16xbf16>, vector<16x256xbf16>, vector<32x256xf32> -> vector<32x256xf32>
    %c0_331 = arith.constant 0 : index
    %c0_332 = arith.constant 0 : index
    %336 = vector.load %arg7[%c0_331, %c0_332] : memref<32x256xf32, #tpu.memory_space<vmem>>, vector<32x256xf32>
    %337 = arith.addf %336, %335 : vector<32x256xf32>
    %c0_333 = arith.constant 0 : index
    %c0_334 = arith.constant 0 : index
    %338 = vector.load %arg7[%c0_333, %c0_334] : memref<32x256xf32, #tpu.memory_space<vmem>>, vector<32x256xf32>
    tpu.vector_store %arg7[%c0_333, %c0_334], %337 {strides = array<i32>} : memref<32x256xf32, #tpu.memory_space<vmem>>, vector<32x256xf32>,
    %c48 = arith.constant 48 : index
    %c0_335 = arith.constant 0 : index
    %c0_336 = arith.constant 0 : index
    %339 = vector.load %arg4[%c48, %c0_335, %c0_336] : memref<49x32x16xbf16, #tpu.memory_space<vmem>>, vector<1x32x16xbf16>
    %340 = vector.shape_cast %339 : vector<1x32x16xbf16> to vector<32x16xbf16>
    %341 = vector.extract_strided_slice %4 {offsets = [0, 234], sizes = [16, 256], strides = [1, 1]} : vector<16x512xbf16> to vector<16x256xbf16>
    %cst_337 = arith.constant dense<0.000000e+00> : vector<32x256xf32>
    %342 = tpu.matmul %340, %341, %cst_337 {dimension_numbers = #tpu.dot_dimension_numbers<[1], [0], [0], [1], [0, 0, 1, 1], [], []>} : vector<32x16xbf16>, vector<16x256xbf16>, vector<32x256xf32> -> vector<32x256xf32>
    %c0_338 = arith.constant 0 : index
    %c0_339 = arith.constant 0 : index
    %343 = vector.load %arg7[%c0_338, %c0_339] : memref<32x256xf32, #tpu.memory_space<vmem>>, vector<32x256xf32>
    %344 = arith.addf %343, %342 : vector<32x256xf32>
    %c0_340 = arith.constant 0 : index
    %c0_341 = arith.constant 0 : index
    %345 = vector.load %arg7[%c0_340, %c0_341] : memref<32x256xf32, #tpu.memory_space<vmem>>, vector<32x256xf32>
    tpu.vector_store %arg7[%c0_340, %c0_341], %344 {strides = array<i32>} : memref<32x256xf32, #tpu.memory_space<vmem>>, vector<32x256xf32>,
    %c0_342 = arith.constant 0 : index
    %c0_343 = arith.constant 0 : index
    %346 = vector.load %arg7[%c0_342, %c0_343] : memref<32x256xf32, #tpu.memory_space<vmem>>, vector<32x256xf32>
    %c0_344 = arith.constant 0 : index
    %c0_345 = arith.constant 0 : index
    %347 = vector.load %arg5[%c0_344, %c0_345] : memref<32x1xf32, #tpu.memory_space<vmem>>, vector<32x1xf32>
    %348 = vector.broadcast %347 : vector<32x1xf32> to vector<32x256xf32>
    %349 = arith.addf %346, %348 : vector<32x256xf32>
    %cst_346 = arith.constant 0.000000e+00 : f32
    %350 = vector.broadcast %cst_346 : f32 to vector<32x256xf32>
    %351 = arith.cmpf oge, %349, %350 : vector<32x256xf32>
    %cst_347 = arith.constant 2.000000e-01 : f32
    %352 = vector.broadcast %cst_347 : f32 to vector<32x256xf32>
    %353 = arith.mulf %352, %349 : vector<32x256xf32>
    %354 = arith.select %351, %349, %353 : vector<32x256xi1>, vector<32x256xf32>
    %355 = arith.truncf %354 : vector<32x256xf32> to vector<32x256xbf16>
    %c0_348 = arith.constant 0 : index
    %c0_349 = arith.constant 0 : index
    %c0_350 = arith.constant 0 : index
    %356 = vector.load %arg6[%c0_348, %c0_349, %c0_350] : memref<1x32x256xbf16, #tpu.memory_space<vmem>>, vector<1x32x256xbf16>
    %357 = vector.shape_cast %356 : vector<1x32x256xbf16> to vector<32x256xbf16>
    %358 = vector.shape_cast %355 : vector<32x256xbf16> to vector<1x32x256xbf16>
    tpu.vector_store %arg6[%c0_348, %c0_349, %c0_350], %358 {strides = array<i32>} : memref<1x32x256xbf16, #tpu.memory_space<vmem>>, vector<1x32x256xbf16>,
    return
  }
  func.func @transform_0(%arg0: i32, %arg1: i32, %arg2: i32) -> (i32, i32, i32) {
    %c0_i32 = arith.constant 0 : i32
    %c0_i32_0 = arith.constant 0 : i32
    %c0_i32_1 = arith.constant 0 : i32
    return %arg1, %c0_i32, %c0_i32_0 : i32, i32, i32
  }
  func.func @transform_1(%arg0: i32, %arg1: i32, %arg2: i32) -> (i32, i32, i32) {
    %c0_i32 = arith.constant 0 : i32
    %c0_i32_0 = arith.constant 0 : i32
    %c0_i32_1 = arith.constant 0 : i32
    return %c0_i32, %arg0, %c0_i32_0 : i32, i32, i32
  }
  func.func @transform_2(%arg0: i32, %arg1: i32, %arg2: i32) -> (i32, i32) {
    %c0_i32 = arith.constant 0 : i32
    %c0_i32_0 = arith.constant 0 : i32
    return %arg0, %c0_i32 : i32, i32
  }
  func.func @transform_3(%arg0: i32, %arg1: i32, %arg2: i32) -> (i32, i32, i32) {
    %c0_i32 = arith.constant 0 : i32
    return %arg1, %arg0, %arg2 : i32, i32, i32
  }
}

module attributes {stable_mosaic.version = 11 : i64} {
  func.func @_conv_stacked_kernel(%arg0: i32, %arg1: i32, %arg2: i32, %arg3: memref<1x128x640xbf16, #tpu.memory_space<vmem>>, %arg4: memref<64x512xbf16, #tpu.memory_space<vmem>>, %arg5: memref<64x1xf32, #tpu.memory_space<vmem>>, %arg6: memref<1x64x256xbf16, #tpu.memory_space<vmem>>) attributes {dimension_semantics = [#tpu.dimension_semantics<parallel>, #tpu.dimension_semantics<parallel>, #tpu.dimension_semantics<parallel>], iteration_bounds = array<i64: 2, 1, 2>, scalar_prefetch = 0 : i64, scratch_operands = 0 : i64, tpu.core_type = #tpu.core_type<tc>, window_params = [{transform_indices = @transform_0, window_bounds = array<i64: 1, 128, 640>}, {transform_indices = @transform_1, window_bounds = array<i64: 64, 512>}, {transform_indices = @transform_2, window_bounds = array<i64: 64, 1>}, {transform_indices = @transform_3, window_bounds = array<i64: 1, 64, 256>}]} {
    %c256_i32 = arith.constant 256 : i32
    %0 = arith.muli %arg2, %c256_i32 : i32
    %1 = tpu.assume_multiple %0, 128 : i32
    %c0 = arith.constant 0 : index
    %c0_0 = arith.constant 0 : index
    %2 = arith.index_cast %1 : i32 to index
    %3 = vector.load %arg3[%c0, %c0_0, %2] : memref<1x128x640xbf16, #tpu.memory_space<vmem>>, vector<1x128x384xbf16>
    %4 = vector.shape_cast %3 : vector<1x128x384xbf16> to vector<128x384xbf16>
    %5 = vector.extract_strided_slice %4 {offsets = [0, 0], sizes = [128, 256], strides = [1, 1]} : vector<128x384xbf16> to vector<128x256xbf16>
    %6 = vector.extract_strided_slice %4 {offsets = [0, 1], sizes = [128, 256], strides = [1, 1]} : vector<128x384xbf16> to vector<128x256xbf16>
    %7 = vector.extract_strided_slice %4 {offsets = [0, 17], sizes = [128, 256], strides = [1, 1]} : vector<128x384xbf16> to vector<128x256xbf16>
    %8 = vector.extract_strided_slice %4 {offsets = [0, 18], sizes = [128, 256], strides = [1, 1]} : vector<128x384xbf16> to vector<128x256xbf16>
    %9 = tpu.concatenate %5, %6, %7, %8 in 0 : vector<128x256xbf16>, vector<128x256xbf16>, vector<128x256xbf16>, vector<128x256xbf16> -> vector<512x256xbf16>
    %c0_1 = arith.constant 0 : index
    %c0_2 = arith.constant 0 : index
    %10 = vector.load %arg4[%c0_1, %c0_2] : memref<64x512xbf16, #tpu.memory_space<vmem>>, vector<64x512xbf16>
    %cst = arith.constant dense<0.000000e+00> : vector<64x256xf32>
    %11 = tpu.matmul %10, %9, %cst {dimension_numbers = #tpu.dot_dimension_numbers<[1], [0], [0], [1], [0, 0, 1, 1], [], []>} : vector<64x512xbf16>, vector<512x256xbf16>, vector<64x256xf32> -> vector<64x256xf32>
    %c0_3 = arith.constant 0 : index
    %c0_4 = arith.constant 0 : index
    %12 = vector.load %arg5[%c0_3, %c0_4] : memref<64x1xf32, #tpu.memory_space<vmem>>, vector<64x1xf32>
    %13 = vector.broadcast %12 : vector<64x1xf32> to vector<64x256xf32>
    %14 = arith.addf %11, %13 : vector<64x256xf32>
    %cst_5 = arith.constant 0.000000e+00 : f32
    %15 = vector.broadcast %cst_5 : f32 to vector<64x256xf32>
    %16 = arith.cmpf oge, %14, %15 : vector<64x256xf32>
    %cst_6 = arith.constant 2.000000e-01 : f32
    %17 = vector.broadcast %cst_6 : f32 to vector<64x256xf32>
    %18 = arith.mulf %17, %14 : vector<64x256xf32>
    %19 = arith.select %16, %14, %18 : vector<64x256xi1>, vector<64x256xf32>
    %20 = arith.truncf %19 : vector<64x256xf32> to vector<64x256xbf16>
    %c0_7 = arith.constant 0 : index
    %c0_8 = arith.constant 0 : index
    %c0_9 = arith.constant 0 : index
    %21 = vector.load %arg6[%c0_7, %c0_8, %c0_9] : memref<1x64x256xbf16, #tpu.memory_space<vmem>>, vector<1x64x256xbf16>
    %22 = vector.shape_cast %21 : vector<1x64x256xbf16> to vector<64x256xbf16>
    %23 = vector.shape_cast %20 : vector<64x256xbf16> to vector<1x64x256xbf16>
    tpu.vector_store %arg6[%c0_7, %c0_8, %c0_9], %23 {strides = array<i32>} : memref<1x64x256xbf16, #tpu.memory_space<vmem>>, vector<1x64x256xbf16>,
    return
  }
  func.func @transform_0(%arg0: i32, %arg1: i32, %arg2: i32) -> (i32, i32, i32) {
    %c0_i32 = arith.constant 0 : i32
    %c0_i32_0 = arith.constant 0 : i32
    %c0_i32_1 = arith.constant 0 : i32
    return %arg0, %c0_i32, %c0_i32_0 : i32, i32, i32
  }
  func.func @transform_1(%arg0: i32, %arg1: i32, %arg2: i32) -> (i32, i32) {
    %c0_i32 = arith.constant 0 : i32
    %c0_i32_0 = arith.constant 0 : i32
    return %arg1, %c0_i32 : i32, i32
  }
  func.func @transform_2(%arg0: i32, %arg1: i32, %arg2: i32) -> (i32, i32) {
    %c0_i32 = arith.constant 0 : i32
    %c0_i32_0 = arith.constant 0 : i32
    return %arg1, %c0_i32 : i32, i32
  }
  func.func @transform_3(%arg0: i32, %arg1: i32, %arg2: i32) -> (i32, i32, i32) {
    %c0_i32 = arith.constant 0 : i32
    return %arg0, %arg1, %arg2 : i32, i32, i32
  }
}

module attributes {stable_mosaic.version = 11 : i64} {
  func.func @_conv_tap_kernel(%arg0: i32, %arg1: i32, %arg2: i32, %arg3: memref<1x256x256xbf16, #tpu.memory_space<vmem>>, %arg4: memref<4x128x256xbf16, #tpu.memory_space<vmem>>, %arg5: memref<128x1xf32, #tpu.memory_space<vmem>>, %arg6: memref<1x128x128xbf16, #tpu.memory_space<vmem>>, %arg7: memref<128x128xf32, #tpu.memory_space<vmem>>) attributes {dimension_semantics = [#tpu.dimension_semantics<parallel>, #tpu.dimension_semantics<parallel>, #tpu.dimension_semantics<parallel>], iteration_bounds = array<i64: 1, 2, 1>, scalar_prefetch = 0 : i64, scratch_operands = 1 : i64, tpu.core_type = #tpu.core_type<tc>, window_params = [{transform_indices = @transform_0, window_bounds = array<i64: 1, 256, 256>}, {transform_indices = @transform_1, window_bounds = array<i64: 4, 128, 256>}, {transform_indices = @transform_2, window_bounds = array<i64: 128, 1>}, {transform_indices = @transform_3, window_bounds = array<i64: 1, 128, 128>}]} {
    %c128_i32 = arith.constant 128 : i32
    %0 = arith.muli %arg2, %c128_i32 : i32
    %1 = tpu.assume_multiple %0, 128 : i32
    %c0 = arith.constant 0 : index
    %c0_0 = arith.constant 0 : index
    %2 = arith.index_cast %1 : i32 to index
    %3 = vector.load %arg3[%c0, %c0_0, %2] : memref<1x256x256xbf16, #tpu.memory_space<vmem>>, vector<1x256x256xbf16>
    %4 = vector.shape_cast %3 : vector<1x256x256xbf16> to vector<256x256xbf16>
    %c0_1 = arith.constant 0 : index
    %c0_2 = arith.constant 0 : index
    %c0_3 = arith.constant 0 : index
    %5 = vector.load %arg4[%c0_1, %c0_2, %c0_3] : memref<4x128x256xbf16, #tpu.memory_space<vmem>>, vector<1x128x256xbf16>
    %6 = vector.shape_cast %5 : vector<1x128x256xbf16> to vector<128x256xbf16>
    %7 = vector.extract_strided_slice %4 {offsets = [0, 0], sizes = [256, 128], strides = [1, 1]} : vector<256x256xbf16> to vector<256x128xbf16>
    %cst = arith.constant dense<0.000000e+00> : vector<128x128xf32>
    %8 = tpu.matmul %6, %7, %cst {dimension_numbers = #tpu.dot_dimension_numbers<[1], [0], [0], [1], [0, 0, 1, 1], [], []>} : vector<128x256xbf16>, vector<256x128xbf16>, vector<128x128xf32> -> vector<128x128xf32>
    %c0_4 = arith.constant 0 : index
    %c0_5 = arith.constant 0 : index
    %9 = vector.load %arg7[%c0_4, %c0_5] : memref<128x128xf32, #tpu.memory_space<vmem>>, vector<128x128xf32>
    tpu.vector_store %arg7[%c0_4, %c0_5], %8 {strides = array<i32>} : memref<128x128xf32, #tpu.memory_space<vmem>>, vector<128x128xf32>,
    %c1 = arith.constant 1 : index
    %c0_6 = arith.constant 0 : index
    %c0_7 = arith.constant 0 : index
    %10 = vector.load %arg4[%c1, %c0_6, %c0_7] : memref<4x128x256xbf16, #tpu.memory_space<vmem>>, vector<1x128x256xbf16>
    %11 = vector.shape_cast %10 : vector<1x128x256xbf16> to vector<128x256xbf16>
    %12 = vector.extract_strided_slice %4 {offsets = [0, 1], sizes = [256, 128], strides = [1, 1]} : vector<256x256xbf16> to vector<256x128xbf16>
    %cst_8 = arith.constant dense<0.000000e+00> : vector<128x128xf32>
    %13 = tpu.matmul %11, %12, %cst_8 {dimension_numbers = #tpu.dot_dimension_numbers<[1], [0], [0], [1], [0, 0, 1, 1], [], []>} : vector<128x256xbf16>, vector<256x128xbf16>, vector<128x128xf32> -> vector<128x128xf32>
    %c0_9 = arith.constant 0 : index
    %c0_10 = arith.constant 0 : index
    %14 = vector.load %arg7[%c0_9, %c0_10] : memref<128x128xf32, #tpu.memory_space<vmem>>, vector<128x128xf32>
    %15 = arith.addf %14, %13 : vector<128x128xf32>
    %c0_11 = arith.constant 0 : index
    %c0_12 = arith.constant 0 : index
    %16 = vector.load %arg7[%c0_11, %c0_12] : memref<128x128xf32, #tpu.memory_space<vmem>>, vector<128x128xf32>
    tpu.vector_store %arg7[%c0_11, %c0_12], %15 {strides = array<i32>} : memref<128x128xf32, #tpu.memory_space<vmem>>, vector<128x128xf32>,
    %c2 = arith.constant 2 : index
    %c0_13 = arith.constant 0 : index
    %c0_14 = arith.constant 0 : index
    %17 = vector.load %arg4[%c2, %c0_13, %c0_14] : memref<4x128x256xbf16, #tpu.memory_space<vmem>>, vector<1x128x256xbf16>
    %18 = vector.shape_cast %17 : vector<1x128x256xbf16> to vector<128x256xbf16>
    %19 = vector.extract_strided_slice %4 {offsets = [0, 9], sizes = [256, 128], strides = [1, 1]} : vector<256x256xbf16> to vector<256x128xbf16>
    %cst_15 = arith.constant dense<0.000000e+00> : vector<128x128xf32>
    %20 = tpu.matmul %18, %19, %cst_15 {dimension_numbers = #tpu.dot_dimension_numbers<[1], [0], [0], [1], [0, 0, 1, 1], [], []>} : vector<128x256xbf16>, vector<256x128xbf16>, vector<128x128xf32> -> vector<128x128xf32>
    %c0_16 = arith.constant 0 : index
    %c0_17 = arith.constant 0 : index
    %21 = vector.load %arg7[%c0_16, %c0_17] : memref<128x128xf32, #tpu.memory_space<vmem>>, vector<128x128xf32>
    %22 = arith.addf %21, %20 : vector<128x128xf32>
    %c0_18 = arith.constant 0 : index
    %c0_19 = arith.constant 0 : index
    %23 = vector.load %arg7[%c0_18, %c0_19] : memref<128x128xf32, #tpu.memory_space<vmem>>, vector<128x128xf32>
    tpu.vector_store %arg7[%c0_18, %c0_19], %22 {strides = array<i32>} : memref<128x128xf32, #tpu.memory_space<vmem>>, vector<128x128xf32>,
    %c3 = arith.constant 3 : index
    %c0_20 = arith.constant 0 : index
    %c0_21 = arith.constant 0 : index
    %24 = vector.load %arg4[%c3, %c0_20, %c0_21] : memref<4x128x256xbf16, #tpu.memory_space<vmem>>, vector<1x128x256xbf16>
    %25 = vector.shape_cast %24 : vector<1x128x256xbf16> to vector<128x256xbf16>
    %26 = vector.extract_strided_slice %4 {offsets = [0, 10], sizes = [256, 128], strides = [1, 1]} : vector<256x256xbf16> to vector<256x128xbf16>
    %cst_22 = arith.constant dense<0.000000e+00> : vector<128x128xf32>
    %27 = tpu.matmul %25, %26, %cst_22 {dimension_numbers = #tpu.dot_dimension_numbers<[1], [0], [0], [1], [0, 0, 1, 1], [], []>} : vector<128x256xbf16>, vector<256x128xbf16>, vector<128x128xf32> -> vector<128x128xf32>
    %c0_23 = arith.constant 0 : index
    %c0_24 = arith.constant 0 : index
    %28 = vector.load %arg7[%c0_23, %c0_24] : memref<128x128xf32, #tpu.memory_space<vmem>>, vector<128x128xf32>
    %29 = arith.addf %28, %27 : vector<128x128xf32>
    %c0_25 = arith.constant 0 : index
    %c0_26 = arith.constant 0 : index
    %30 = vector.load %arg7[%c0_25, %c0_26] : memref<128x128xf32, #tpu.memory_space<vmem>>, vector<128x128xf32>
    tpu.vector_store %arg7[%c0_25, %c0_26], %29 {strides = array<i32>} : memref<128x128xf32, #tpu.memory_space<vmem>>, vector<128x128xf32>,
    %c0_27 = arith.constant 0 : index
    %c0_28 = arith.constant 0 : index
    %31 = vector.load %arg7[%c0_27, %c0_28] : memref<128x128xf32, #tpu.memory_space<vmem>>, vector<128x128xf32>
    %c0_29 = arith.constant 0 : index
    %c0_30 = arith.constant 0 : index
    %32 = vector.load %arg5[%c0_29, %c0_30] : memref<128x1xf32, #tpu.memory_space<vmem>>, vector<128x1xf32>
    %33 = vector.broadcast %32 : vector<128x1xf32> to vector<128x128xf32>
    %34 = arith.addf %31, %33 : vector<128x128xf32>
    %cst_31 = arith.constant 0.000000e+00 : f32
    %35 = vector.broadcast %cst_31 : f32 to vector<128x128xf32>
    %36 = arith.cmpf oge, %34, %35 : vector<128x128xf32>
    %cst_32 = arith.constant 2.000000e-01 : f32
    %37 = vector.broadcast %cst_32 : f32 to vector<128x128xf32>
    %38 = arith.mulf %37, %34 : vector<128x128xf32>
    %39 = arith.select %36, %34, %38 : vector<128x128xi1>, vector<128x128xf32>
    %40 = arith.truncf %39 : vector<128x128xf32> to vector<128x128xbf16>
    %c0_33 = arith.constant 0 : index
    %c0_34 = arith.constant 0 : index
    %c0_35 = arith.constant 0 : index
    %41 = vector.load %arg6[%c0_33, %c0_34, %c0_35] : memref<1x128x128xbf16, #tpu.memory_space<vmem>>, vector<1x128x128xbf16>
    %42 = vector.shape_cast %41 : vector<1x128x128xbf16> to vector<128x128xbf16>
    %43 = vector.shape_cast %40 : vector<128x128xbf16> to vector<1x128x128xbf16>
    tpu.vector_store %arg6[%c0_33, %c0_34, %c0_35], %43 {strides = array<i32>} : memref<1x128x128xbf16, #tpu.memory_space<vmem>>, vector<1x128x128xbf16>,
    return
  }
  func.func @transform_0(%arg0: i32, %arg1: i32, %arg2: i32) -> (i32, i32, i32) {
    %c0_i32 = arith.constant 0 : i32
    %c0_i32_0 = arith.constant 0 : i32
    %c0_i32_1 = arith.constant 0 : i32
    return %arg1, %c0_i32, %c0_i32_0 : i32, i32, i32
  }
  func.func @transform_1(%arg0: i32, %arg1: i32, %arg2: i32) -> (i32, i32, i32) {
    %c0_i32 = arith.constant 0 : i32
    %c0_i32_0 = arith.constant 0 : i32
    %c0_i32_1 = arith.constant 0 : i32
    return %c0_i32, %arg0, %c0_i32_0 : i32, i32, i32
  }
  func.func @transform_2(%arg0: i32, %arg1: i32, %arg2: i32) -> (i32, i32) {
    %c0_i32 = arith.constant 0 : i32
    %c0_i32_0 = arith.constant 0 : i32
    return %arg0, %c0_i32 : i32, i32
  }
  func.func @transform_3(%arg0: i32, %arg1: i32, %arg2: i32) -> (i32, i32, i32) {
    %c0_i32 = arith.constant 0 : i32
    return %arg1, %arg0, %arg2 : i32, i32, i32
  }
}

module attributes {stable_mosaic.version = 11 : i64} {
  func.func @_head_kernel(%arg0: i32, %arg1: memref<2x128x64xbf16, #tpu.memory_space<vmem>>, %arg2: memref<128x8xf32, #tpu.memory_space<vmem>>, %arg3: memref<1x8xf32, #tpu.memory_space<vmem>>, %arg4: memref<2x8xf32, #tpu.memory_space<vmem>>) attributes {dimension_semantics = [#tpu.dimension_semantics<parallel>], iteration_bounds = array<i64: 1>, scalar_prefetch = 0 : i64, scratch_operands = 0 : i64, tpu.core_type = #tpu.core_type<tc>, window_params = [{transform_indices = @transform_0, window_bounds = array<i64: 2, 128, 64>}, {pipeline_mode = #tpu.pipeline_mode<synchronous>, transform_indices = @transform_1, window_bounds = array<i64: 128, 8>}, {pipeline_mode = #tpu.pipeline_mode<synchronous>, transform_indices = @transform_2, window_bounds = array<i64: 1, 8>}, {transform_indices = @transform_3, window_bounds = array<i64: 2, 8>}]} {
    %c0 = arith.constant 0 : index
    %c0_0 = arith.constant 0 : index
    %c0_1 = arith.constant 0 : index
    %0 = vector.load %arg1[%c0, %c0_0, %c0_1] : memref<2x128x64xbf16, #tpu.memory_space<vmem>>, vector<2x128x64xbf16>
    %1 = arith.extf %0 : vector<2x128x64xbf16> to vector<2x128x64xf32>
    %cst = arith.constant dense<0.000000e+00> : vector<2x128xf32>
    %2 = vector.multi_reduction <add>, %1, %cst [2] : vector<2x128x64xf32> to vector<2x128xf32>
    %cst_2 = arith.constant 1.562500e-02 : f32
    %3 = vector.broadcast %cst_2 : f32 to vector<2x128xf32>
    %4 = arith.mulf %2, %3 : vector<2x128xf32>
    %c0_3 = arith.constant 0 : index
    %c0_4 = arith.constant 0 : index
    %5 = vector.load %arg2[%c0_3, %c0_4] : memref<128x8xf32, #tpu.memory_space<vmem>>, vector<128x8xf32>
    %cst_5 = arith.constant dense<0.000000e+00> : vector<2x8xf32>
    %6 = tpu.matmul %4, %5, %cst_5 {dimension_numbers = #tpu.dot_dimension_numbers<[1], [0], [0], [1], [0, 0, 1, 1], [], []>, precision = #tpu.contract_precision<fp32>} : vector<2x128xf32>, vector<128x8xf32>, vector<2x8xf32> -> vector<2x8xf32>
    %c0_6 = arith.constant 0 : index
    %c0_7 = arith.constant 0 : index
    %7 = vector.load %arg3[%c0_6, %c0_7] : memref<1x8xf32, #tpu.memory_space<vmem>>, vector<1x8xf32>
    %8 = vector.broadcast %7 : vector<1x8xf32> to vector<2x8xf32>
    %9 = arith.addf %6, %8 : vector<2x8xf32>
    %c0_8 = arith.constant 0 : index
    %c0_9 = arith.constant 0 : index
    %10 = vector.load %arg4[%c0_8, %c0_9] : memref<2x8xf32, #tpu.memory_space<vmem>>, vector<2x8xf32>
    tpu.vector_store %arg4[%c0_8, %c0_9], %9 {strides = array<i32>} : memref<2x8xf32, #tpu.memory_space<vmem>>, vector<2x8xf32>,
    return
  }
  func.func @transform_0(%arg0: i32) -> (i32, i32, i32) {
    %c0_i32 = arith.constant 0 : i32
    %c0_i32_0 = arith.constant 0 : i32
    %c0_i32_1 = arith.constant 0 : i32
    return %arg0, %c0_i32, %c0_i32_0 : i32, i32, i32
  }
  func.func @transform_1(%arg0: i32) -> (i32, i32) {
    %c0_i32 = arith.constant 0 : i32
    %c0_i32_0 = arith.constant 0 : i32
    %c0_i32_1 = arith.constant 0 : i32
    return %c0_i32, %c0_i32_0 : i32, i32
  }
  func.func @transform_2(%arg0: i32) -> (i32, i32) {
    %c0_i32 = arith.constant 0 : i32
    %c0_i32_0 = arith.constant 0 : i32
    %c0_i32_1 = arith.constant 0 : i32
    return %c0_i32, %c0_i32_0 : i32, i32
  }
  func.func @transform_3(%arg0: i32) -> (i32, i32) {
    %c0_i32 = arith.constant 0 : i32
    %c0_i32_0 = arith.constant 0 : i32
    return %arg0, %c0_i32 : i32, i32
  }
}

</mosaic_0001>

<llo_original>
// kernel: age_encoder_forward.4
$region0: #{age_encoder_forward.4}
  #allocation0 [shape = 'u32[]', space=smem, size = 0x4, offset = 0x4, fixed_abs, tag = 'smem constant byte address 0x4 - core index']
  #allocation1 [shape = 'u32[72,128]{1,0:T(1,128)}', space=vmem, size = 0x9000, scoped, tag = 'internal scratch']
  #allocation2 [shape = 'f32[32,256]{1,0:T(8,128)}', space=vmem, size = 0x8000, scoped, tag = 'scratch operand']
  %s0 = inlined_call_operand.vmem [shape: bf16[2,16,1536], index: 0, kind: input, shape index: {}]
  %s1 = inlined_call_operand.vmem [shape: bf16[49,32,16], index: 1, kind: input, shape index: {}]
  %s2 = inlined_call_operand.vmem [shape: f32[32,1], index: 2, kind: input, shape index: {}]
  %s3 = inlined_call_operand.vmem [shape: bf16[2,32,1280], index: 3, kind: output, shape index: {}]
  %s4 = sld [smem:[#allocation0]]
  $region79: #{age_encoder_forward.4} parent=0
    _
  %s6 = ssub.s32 1, %s4
  %s7 = scalar_select 0, %s6, %s4
  $region1: #{age_encoder_forward.4} parent=0
    #allocation3 [shape = 'u8[32768]{0}', space=vmem, size = 0x8000, scoped, tag = 'output window, operand 0']
    loop: start=0, step=1, limit=12
    $region2: #{age_encoder_forward.4} parent=1 // loop_pre_header
      _
    $region3: #{age_encoder_forward.4} parent=1 // loop_header
      %s9 = sphi 0, %s13
      %p10 = scmp.ge.s32.totalorder %s9, 12
      %s16 = sphi 0, %s35
      %s17 = sphi 0, %s31
      %s18 = sphi 0, %s27
      %s19 = sphi 0, %s16
      %s20 = sphi 0, %s17
      %s21 = sphi 0, %s18
      %s22 = sphi 0, %s19
      %s23 = sphi 0, %s20
      %s24 = sphi 0, %s21
      %s38 = sphi 0, %s40
      %s41 = sphi 0, %s38
      %s42 = sphi 0, %s41
      %s58 = sphi 0, %s42
      %s64 = sphi 0, %s66
      %s67 = sphi 0, %s64
      %s68 = sphi 0, %s67
      %s84 = sphi 0, %s68
      %s90 = sphi 0, %s92
      %s93 = sphi 0, %s90
      %s94 = sphi 0, %s93
      %s110 = sphi 0, %s94
      %s120 = sphi 0, %s122
      %s123 = sphi 0, %s120
      %s124 = sphi 0, %s123
      %s140 = sphi 0, %s124
    $region4: #{age_encoder_forward.4} parent=1 // loop_header_branch
      %12 = sbr.rel (%p10) target = $region8
    $region5: #{age_encoder_forward.4} parent=1 // loop_body
      %s14 = ssub.s32 %s9, 1
      %s15 = ssub.s32 %s9, 2
      %s25 = sadd.s32 1, %s18
      %p26 = scmp.ge.s32.totalorder %s25, 5
      %s27 = scalar_select %p26, 0, %s25
      %s28 = sadd.s32 1, %s17
      %s29 = scalar_select %p26, %s28, %s17
      %p30 = scmp.ge.s32.totalorder %s29, 2
      %s31 = scalar_select %p30, 0, %s29
      %s32 = sadd.s32 1, %s16
      %s33 = scalar_select %p30, %s32, %s16
      %p34 = scmp.ge.s32.totalorder %s33, 1
      %s35 = scalar_select %p34, 0, %s33
      %s36 = ssub.s32 %s17, %s31
      %p37 = scmp.eq.s32.totalorder %s36, 0
      %s39 = sadd.s32 %s38, 1
      %s40 = scalar_select %p37, %s38, %s39
      %p43 = pneg %p37
      %p44 = scmp.eq.s32.totalorder %s9, 9
      %p45 = por %p43, %p44
      %p46 = scmp.ne.s32.totalorder %s38, %s41
      %p47 = scmp.eq.s32.totalorder %s9, 0
      %p48 = por %p46, %p47
      %p49 = scmp.ne.s32.totalorder %s38, %s41
      %p50 = scmp.eq.s32.totalorder %s14, 9
      %p51 = por %p49, %p50
      %p52 = scmp.ne.s32.totalorder %s41, %s42
      %p53 = scmp.eq.s32.totalorder %s14, 0
      %p54 = por %p52, %p53
      %p55 = scmp.ne.s32.totalorder %s41, %s42
      %p56 = scmp.eq.s32.totalorder %s15, 9
      %p57 = por %p55, %p56
      %p59 = scmp.ne.s32.totalorder %s42, %s58
      %p60 = scmp.eq.s32.totalorder %s15, 0
      %p61 = por %p59, %p60
      %s62 = ssub.s32 %s16, %s35
      %p63 = scmp.eq.s32.totalorder %s62, 0
      %s65 = sadd.s32 %s64, 1
      %s66 = scalar_select %p63, %s64, %s65
      %p69 = pneg %p63
      %p70 = scmp.eq.s32.totalorder %s9, 9
      %p71 = por %p69, %p70
      %p72 = scmp.ne.s32.totalorder %s64, %s67
      %p73 = scmp.eq.s32.totalorder %s9, 0
      %p74 = por %p72, %p73
      %p75 = scmp.ne.s32.totalorder %s64, %s67
      %p76 = scmp.eq.s32.totalorder %s14, 9
      %p77 = por %p75, %p76
      %p78 = scmp.ne.s32.totalorder %s67, %s68
      %p79 = scmp.eq.s32.totalorder %s14, 0
      %p80 = por %p78, %p79
      %p81 = scmp.ne.s32.totalorder %s67, %s68
      %p82 = scmp.eq.s32.totalorder %s15, 9
      %p83 = por %p81, %p82
      %p85 = scmp.ne.s32.totalorder %s68, %s84
      %p86 = scmp.eq.s32.totalorder %s15, 0
      %p87 = por %p85, %p86
      %s88 = ssub.s32 %s16, %s35
      %p89 = scmp.eq.s32.totalorder %s88, 0
      %s91 = sadd.s32 %s90, 1
      %s92 = scalar_select %p89, %s90, %s91
      %p95 = pneg %p89
      %p96 = scmp.eq.s32.totalorder %s9, 9
      %p97 = por %p95, %p96
      %p98 = scmp.ne.s32.totalorder %s90, %s93
      %p99 = scmp.eq.s32.totalorder %s9, 0
      %p100 = por %p98, %p99
      %p101 = scmp.ne.s32.totalorder %s90, %s93
      %p102 = scmp.eq.s32.totalorder %s14, 9
      %p103 = por %p101, %p102
      %p104 = scmp.ne.s32.totalorder %s93, %s94
      %p105 = scmp.eq.s32.totalorder %s14, 0
      %p106 = por %p104, %p105
      %p107 = scmp.ne.s32.totalorder %s93, %s94
      %p108 = scmp.eq.s32.totalorder %s15, 9
      %p109 = por %p107, %p108
      %p111 = scmp.ne.s32.totalorder %s94, %s110
      %p112 = scmp.eq.s32.totalorder %s15, 0
      %p113 = por %p111, %p112
      %s114 = ssub.s32 %s17, %s31
      %s115 = ssub.s32 %s16, %s35
      %s116 = sor.u32 %s114, %s115
      %s117 = ssub.s32 %s18, %s27
      %s118 = sor.u32 %s116, %s117
      %p119 = scmp.eq.s32.totalorder %s118, 0
      %s121 = sadd.s32 %s120, 1
      %s122 = scalar_select %p119, %s120, %s121
      %p125 = pneg %p119
      %p126 = scmp.eq.s32.totalorder %s9, 9
      %p127 = por %p125, %p126
      %p128 = scmp.ne.s32.totalorder %s120, %s123
      %p129 = scmp.eq.s32.totalorder %s9, 0
      %p130 = por %p128, %p129
      %p131 = scmp.ne.s32.totalorder %s120, %s123
      %p132 = scmp.eq.s32.totalorder %s14, 9
      %p133 = por %p131, %p132
      %p134 = scmp.ne.s32.totalorder %s123, %s124
      %p135 = scmp.eq.s32.totalorder %s14, 0
      %p136 = por %p134, %p135
      %p137 = scmp.ne.s32.totalorder %s123, %s124
      %p138 = scmp.eq.s32.totalorder %s15, 9
      %p139 = por %p137, %p138
      %p141 = scmp.ne.s32.totalorder %s124, %s140
      %p142 = scmp.eq.s32.totalorder %s15, 0
      %p143 = por %p141, %p142
      %p144 = scmp.le.s32.totalorder 1, %s9
      %p145 = scmp.lt.s32.totalorder %s9, 11
      %p146 = pnand %p144, %p145
      %p147 = pneg %p146
      // Predicated region
      $region9: #{age_encoder_forward.4} parent=5 // pred_check
        _
      $region10: #{age_encoder_forward.4} parent=5 // pred_check_branch
        %149 = sbr.rel (%p146) target = $region12
      $region11: #{age_encoder_forward.4} parent=5 // pred_region
        %s150 = ssub.s32 %s9, 1
        // Predicated region
        $region13: #{age_encoder_forward.4} parent=11 // pred_check
          %p151 = pneg %p80
        $region14: #{age_encoder_forward.4} parent=11 // pred_check_branch
          %153 = sbr.rel (%p151) target = $region16
        $region15: #{age_encoder_forward.4} parent=11 // pred_region
          %s154 = smul.u32 4, %s19
          %p155 = scmp.lt.s32.totalorder %s154, 3
          %s156 = scalar_select %p155, %s154, 3
          %s157 = smul.addr %s156, 4
          %s158 = scalar_lea.vmem %s1, %s157
          %s159 = smul.u32 4, %s19
        $region16: #{age_encoder_forward.4} parent=11 // pred_fallthru
          _
        // Predicated region
        $region17: #{age_encoder_forward.4} parent=11 // pred_check
          %p160 = pneg %p106
        $region18: #{age_encoder_forward.4} parent=11 // pred_check_branch
          %162 = sbr.rel (%p160) target = $region20
        $region19: #{age_encoder_forward.4} parent=11 // pred_region
          %s163 = smul.u32 4, %s19
          %p164 = scmp.lt.s32.totalorder %s163, 3
          %s165 = scalar_select %p164, %s163, 3
          %s166 = smul.addr %s165, 8
          %s167 = scalar_lea.vmem %s2, %s166
          %s168 = smul.u32 4, %s19
        $region20: #{age_encoder_forward.4} parent=11 // pred_fallthru
          _
      $region12: #{age_encoder_forward.4} parent=5 // pred_fallthru
        _
      %p169 = scmp.lt.s32.totalorder %s9, 10
      // Predicated region
      $region21: #{age_encoder_forward.4} parent=5 // pred_check
        %p170 = pneg %p169
      $region22: #{age_encoder_forward.4} parent=5 // pred_check_branch
        %172 = sbr.rel (%p170) target = $region24
      $region23: #{age_encoder_forward.4} parent=5 // pred_region
        // Predicated region
        $region25: #{age_encoder_forward.4} parent=23 // pred_check
          %p173 = pneg %p48
        $region26: #{age_encoder_forward.4} parent=23 // pred_check_branch
          %175 = sbr.rel (%p173) target = $region28
        $region27: #{age_encoder_forward.4} parent=23 // pred_region
          %p176 = scmp.lt.s32.totalorder %s17, 1
          %s177 = scalar_select %p176, %s17, 1
          %s178 = smul.addr %s177, 24
          %s179 = smul.addr %s178, 4
          %s180 = scalar_lea.vmem %s0, %s179
        $region28: #{age_encoder_forward.4} parent=23 // pred_fallthru
          _
      $region24: #{age_encoder_forward.4} parent=5 // pred_fallthru
        _
      %p181 = scmp.le.s32.totalorder 1, %s9
      %p182 = scmp.lt.s32.totalorder %s9, 11
      %p183 = pnand %p181, %p182
      %p184 = pneg %p183
      // Predicated region
      $region29: #{age_encoder_forward.4} parent=5 // pred_check
        _
      $region30: #{age_encoder_forward.4} parent=5 // pred_check_branch
        %186 = sbr.rel (%p183) target = $region32
      $region31: #{age_encoder_forward.4} parent=5 // pred_region
        %s187 = ssub.s32 %s9, 1
        %p188 = scmp.lt.s32.totalorder %s20, 1
        %s189 = scalar_select %p188, %s20, 1
        %s190 = smul.addr %s189, 24
        %s191 = smul.addr %s190, 4
        %s192 = scalar_lea.vmem %s0, %s191
        %p193 = pneg %p54
        %p194 = pneg %p51
        %s195 = smul.u32 4, %s19
        %p196 = scmp.lt.s32.totalorder %s195, 3
        %s197 = scalar_select %p196, %s195, 3
        %s198 = smul.addr %s197, 4
        %s199 = scalar_lea.vmem %s1, %s198
        %p200 = pneg %p80
        %p201 = pneg %p77
        %s202 = smul.u32 4, %s19
        %p203 = scmp.lt.s32.totalorder %s202, 3
        %s204 = scalar_select %p203, %s202, 3
        %s205 = smul.addr %s204, 8
        %s206 = scalar_lea.vmem %s2, %s205
        %p207 = pneg %p106
        %p208 = pneg %p103
        %p209 = pneg %p136
        %p210 = pneg %p133
        %s211 = sand.u32 %s123, 1
        %s212 = sand.u32 %s123, 1
        %s213 = smul.addr %s212, 32
        %s214 = scalar_lea.vmem [#allocation3], %s213
        %p215 = scmp.lt.s32.totalorder %s20, 1
        %s216 = scalar_select %p215, %s20, 1
        %s217 = smul.addr %s216, 24
        %s218 = smul.addr %s217, 4
        %s219 = scalar_lea.vmem %s0, %s218
        %s220 = smul.u32 4, %s19
        %p221 = scmp.lt.s32.totalorder %s220, 3
        %s222 = scalar_select %p221, %s220, 3
        %s223 = smul.addr %s222, 4
        %s224 = scalar_lea.vmem %s1, %s223
        %s225 = smul.u32 4, %s19
        %s226 = smul.u32 4, %s19
        %p227 = scmp.lt.s32.totalorder %s226, 3
        %s228 = scalar_select %p227, %s226, 3
        %s229 = smul.addr %s228, 8
        %s230 = scalar_lea.vmem %s2, %s229
        %s231 = smul.u32 4, %s19
        %s232 = smul.u32 4, %s19
        %s233 = smul.u32 2, %s21
        %s235 = smul.u32 %s21, 256
        %s236 = sshra.s32 %s235, 7
        %s237 = sand.u32 %s235, 127
        %s238 = smul.addr %s236, 4
        %s239 = scalar_lea.vmem %s219, %s238
        %v240 = vld [vmem:[%s239] sm:$0xff]
        %v241 = vld [vmem:[%s239 + $0x8] sm:$0xff]
        %v242 = vld [vmem:[%s239 + $0x30] sm:$0xff]
        %v243 = vld [vmem:[%s239 + $0x38] sm:$0xff]
        %v244 = vld [vmem:[%s224] sm:$0xf]
        %v245 = vld [vmem:[%s224 + $0x4] sm:$0xf]
        %v246 = vld [vmem:[%s224 + $0x8] sm:$0xf]
        %v247 = vld [vmem:[%s224 + $0xc] sm:$0xf]
        %v252 = vunpack.c.l.b16 %v244
        %v253 = vunpack.c.l.b16 %v245
        %v254 = vunpack.c.l.b16 %v246
        %v255 = vunpack.c.l.b16 %v247
        %v256 = vpack.c.b16 %v253, %v252
        %v257 = vpack.c.b16 %v255, %v254
        %v260 = vunpack.c.l.b16 %v240
        %v261 = vunpack.c.h.b16 %v240
        %v262 = vunpack.c.l.b16 %v242
        %v263 = vunpack.c.h.b16 %v242
        %v264 = vpack.c.b16 %v262, %v260
        %v265 = vpack.c.b16 %v263, %v261
        %vm268 = vcmask 130048
        %v270 = vsel %vm268, %v256, 0
        %v273 = vsel %vm268, %v257, 0
        %275 = vmatpush.bf16.msra.mxu0 0
        %276 = vmatpush.bf16.msra.mxu0 0
        %277 = vmatpush.bf16.msra.mxu0 0
        %278 = vmatpush.bf16.msra.mxu0 0
        %279 = vmatpush.bf16.msra.mxu0 0
        %280 = vmatpush.bf16.msra.mxu0 0
        %281 = vmatpush.bf16.msra.mxu0 0
        %282 = vmatpush.bf16.msra.mxu0 %v264
        %283 = vmatmul.bf16.gmra.mxu0 %v270
        %v284 = vpop.f32.mrf.mxu0
        %v285 = vadd.f32 0.0, %v284
        %v286 = vpop.f32.mrf.mxu0
        %v287 = vadd.f32 0.0, %v286
        %288 = vmatmul.bf16.gmra.mxu0 %v273
        %v289 = vpop.f32.mrf.mxu0
        %v290 = vadd.f32 0.0, %v289
        %v291 = vpop.f32.mrf.mxu0
        %v292 = vadd.f32 0.0, %v291
        %293 = vdwg.mxu0
        %294 = vmatpush.bf16.msra.mxu0 0
        %295 = vmatpush.bf16.msra.mxu0 0
        %296 = vmatpush.bf16.msra.mxu0 0
        %297 = vmatpush.bf16.msra.mxu0 0
        %298 = vmatpush.bf16.msra.mxu0 0
        %299 = vmatpush.bf16.msra.mxu0 0
        %300 = vmatpush.bf16.msra.mxu0 0
        %301 = vmatpush.bf16.msra.mxu0 %v265
        %302 = vmatmul.bf16.gmra.mxu0 %v270
        %v303 = vpop.f32.mrf.mxu0
        %v304 = vadd.f32 0.0, %v303
        %v305 = vpop.f32.mrf.mxu0
        %v306 = vadd.f32 0.0, %v305
        %307 = vmatmul.bf16.gmra.mxu0 %v273
        %v308 = vpop.f32.mrf.mxu0
        %v309 = vadd.f32 0.0, %v308
        %v310 = vpop.f32.mrf.mxu0
        %v311 = vadd.f32 0.0, %v310
        %312 = vdwg.mxu0
        %313 = vst [vmem:[#allocation2] sm:$0xff] %v285
        %314 = vst [vmem:[#allocation2 + $0x8] sm:$0xff] %v304
        %315 = vst [vmem:[#allocation2 + $0x10] sm:$0xff] %v287
        %316 = vst [vmem:[#allocation2 + $0x18] sm:$0xff] %v306
        %317 = vst [vmem:[#allocation2 + $0x20] sm:$0xff] %v290
        %318 = vst [vmem:[#allocation2 + $0x28] sm:$0xff] %v309
        %319 = vst [vmem:[#allocation2 + $0x30] sm:$0xff] %v292
        %320 = vst [vmem:[#allocation2 + $0x38] sm:$0xff] %v311
        %s321 = scalar_lea.vmem %s224, 16
        %v322 = vld [vmem:[%s321] sm:$0xf]
        %v323 = vld [vmem:[%s321 + $0x4] sm:$0xf]
        %v324 = vld [vmem:[%s321 + $0x8] sm:$0xf]
        %v325 = vld [vmem:[%s321 + $0xc] sm:$0xf]
        %v330 = vunpack.c.l.b16 %v322
        %v331 = vunpack.c.l.b16 %v323
        %v332 = vunpack.c.l.b16 %v324
        %v333 = vunpack.c.l.b16 %v325
        %v334 = vpack.c.b16 %v331, %v330
        %v335 = vpack.c.b16 %v333, %v332
        %v338 = vunpack.c.l.b16 %v241
        %v339 = vunpack.c.l.b16 %v243
        %v340 = vpack.c.b16 %v339, %v338
        %341 = vrot.lane.b32.xlu0 %v264, 127
        %v342 = vpop.permute.xlu0 %341
        %343 = vrot.lane.b32.xlu0 %v265, 127
        %v344 = vpop.permute.xlu0 %343
        %345 = vrot.lane.b32.xlu0 %v340, 127
        %v346 = vpop.permute.xlu0 %345
        %vm347 = vcmask 1039360
        %v348 = vsel %vm347, %v342, %v344
        %v349 = vsel %vm347, %v344, %v346
        %v353 = vsel %vm268, %v334, 0
        %v356 = vsel %vm268, %v335, 0
        %358 = vmatpush.bf16.msra.mxu0 0
        %359 = vmatpush.bf16.msra.mxu0 0
        %360 = vmatpush.bf16.msra.mxu0 0
        %361 = vmatpush.bf16.msra.mxu0 0
        %362 = vmatpush.bf16.msra.mxu0 0
        %363 = vmatpush.bf16.msra.mxu0 0
        %364 = vmatpush.bf16.msra.mxu0 0
        %365 = vmatpush.bf16.msra.mxu0 %v348
        %366 = vmatmul.bf16.gmra.mxu0 %v353
        %v367 = vpop.f32.mrf.mxu0
        %v368 = vadd.f32 0.0, %v367
        %v369 = vpop.f32.mrf.mxu0
        %v370 = vadd.f32 0.0, %v369
        %371 = vmatmul.bf16.gmra.mxu0 %v356
        %v372 = vpop.f32.mrf.mxu0
        %v373 = vadd.f32 0.0, %v372
        %v374 = vpop.f32.mrf.mxu0
        %v375 = vadd.f32 0.0, %v374
        %376 = vdwg.mxu0
        %377 = vmatpush.bf16.msra.mxu0 0
        %378 = vmatpush.bf16.msra.mxu0 0
        %379 = vmatpush.bf16.msra.mxu0 0
        %380 = vmatpush.bf16.msra.mxu0 0
        %381 = vmatpush.bf16.msra.mxu0 0
        %382 = vmatpush.bf16.msra.mxu0 0
        %383 = vmatpush.bf16.msra.mxu0 0
        %384 = vmatpush.bf16.msra.mxu0 %v349
        %385 = vmatmul.bf16.gmra.mxu0 %v353
        %v386 = vpop.f32.mrf.mxu0
        %v387 = vadd.f32 0.0, %v386
        %v388 = vpop.f32.mrf.mxu0
        %v389 = vadd.f32 0.0, %v388
        %390 = vmatmul.bf16.gmra.mxu0 %v356
        %v391 = vpop.f32.mrf.mxu0
        %v392 = vadd.f32 0.0, %v391
        %v393 = vpop.f32.mrf.mxu0
        %v394 = vadd.f32 0.0, %v393
        %395 = vdwg.mxu0
        %v396 = vld [vmem:[#allocation2] sm:$0xff]
        %v397 = vld [vmem:[#allocation2 + $0x8] sm:$0xff]
        %v398 = vld [vmem:[#allocation2 + $0x10] sm:$0xff]
        %v399 = vld [vmem:[#allocation2 + $0x18] sm:$0xff]
        %v400 = vld [vmem:[#allocation2 + $0x20] sm:$0xff]
        %v401 = vld [vmem:[#allocation2 + $0x28] sm:$0xff]
        %v402 = vld [vmem:[#allocation2 + $0x30] sm:$0xff]
        %v403 = vld [vmem:[#allocation2 + $0x38] sm:$0xff]
        %v404 = vadd.f32 %v396, %v368
        %v405 = vadd.f32 %v397, %v387
        %v406 = vadd.f32 %v398, %v370
        %v407 = vadd.f32 %v399, %v389
        %v408 = vadd.f32 %v400, %v373
        %v409 = vadd.f32 %v401, %v392
        %v410 = vadd.f32 %v402, %v375
        %v411 = vadd.f32 %v403, %v394
        %412 = vst [vmem:[#allocation2] sm:$0xff] %v404
        %413 = vst [vmem:[#allocation2 + $0x8] sm:$0xff] %v405
        %414 = vst [vmem:[#allocation2 + $0x10] sm:$0xff] %v406
        %415 = vst [vmem:[#allocation2 + $0x18] sm:$0xff] %v407
        %416 = vst [vmem:[#allocation2 + $0x20] sm:$0xff] %v408
        %417 = vst [vmem:[#allocation2 + $0x28] sm:$0xff] %v409
        %418 = vst [vmem:[#allocation2 + $0x30] sm:$0xff] %v410
        %419 = vst [vmem:[#allocation2 + $0x38] sm:$0xff] %v411
        %s420 = scalar_lea.vmem %s224, 32
        %v421 = vld [vmem:[%s420] sm:$0xf]
        %v422 = vld [vmem:[%s420 + $0x4] sm:$0xf]
        %v423 = vld [vmem:[%s420 + $0x8] sm:$0xf]
        %v424 = vld [vmem:[%s420 + $0xc] sm:$0xf]
        %v429 = vunpack.c.l.b16 %v421
        %v430 = vunpack.c.l.b16 %v422
        %v431 = vunpack.c.l.b16 %v423
        %v432 = vunpack.c.l.b16 %v424
        %v433 = vpack.c.b16 %v430, %v429
        %v434 = vpack.c.b16 %v432, %v431
        %435 = vrot.lane.b32.xlu0 %v264, 126
        %v436 = vpop.permute.xlu0 %435
        %437 = vrot.lane.b32.xlu0 %v265, 126
        %v438 = vpop.permute.xlu0 %437
        %439 = vrot.lane.b32.xlu0 %v340, 126
        %v440 = vpop.permute.xlu0 %439
        %vm441 = vcmask 1031168
        %v442 = vsel %vm441, %v436, %v438
        %v443 = vsel %vm441, %v438, %v440
        %v447 = vsel %vm268, %v433, 0
        %v450 = vsel %vm268, %v434, 0
        %452 = vmatpush.bf16.msra.mxu0 0
        %453 = vmatpush.bf16.msra.mxu0 0
        %454 = vmatpush.bf16.msra.mxu0 0
        %455 = vmatpush.bf16.msra.mxu0 0
        %456 = vmatpush.bf16.msra.mxu0 0
        %457 = vmatpush.bf16.msra.mxu0 0
        %458 = vmatpush.bf16.msra.mxu0 0
        %459 = vmatpush.bf16.msra.mxu0 %v442
        %460 = vmatmul.bf16.gmra.mxu0 %v447
        %v461 = vpop.f32.mrf.mxu0
        %v462 = vadd.f32 0.0, %v461
        %v463 = vpop.f32.mrf.mxu0
        %v464 = vadd.f32 0.0, %v463
        %465 = vmatmul.bf16.gmra.mxu0 %v450
        %v466 = vpop.f32.mrf.mxu0
        %v467 = vadd.f32 0.0, %v466
        %v468 = vpop.f32.mrf.mxu0
        %v469 = vadd.f32 0.0, %v468
        %470 = vdwg.mxu0
        %471 = vmatpush.bf16.msra.mxu0 0
        %472 = vmatpush.bf16.msra.mxu0 0
        %473 = vmatpush.bf16.msra.mxu0 0
        %474 = vmatpush.bf16.msra.mxu0 0
        %475 = vmatpush.bf16.msra.mxu0 0
        %476 = vmatpush.bf16.msra.mxu0 0
        %477 = vmatpush.bf16.msra.mxu0 0
        %478 = vmatpush.bf16.msra.mxu0 %v443
        %479 = vmatmul.bf16.gmra.mxu0 %v447
        %v480 = vpop.f32.mrf.mxu0
        %v481 = vadd.f32 0.0, %v480
        %v482 = vpop.f32.mrf.mxu0
        %v483 = vadd.f32 0.0, %v482
        %484 = vmatmul.bf16.gmra.mxu0 %v450
        %v485 = vpop.f32.mrf.mxu0
        %v486 = vadd.f32 0.0, %v485
        %v487 = vpop.f32.mrf.mxu0
        %v488 = vadd.f32 0.0, %v487
        %489 = vdwg.mxu0
        %v490 = vld [vmem:[#allocation2] sm:$0xff]
        %v491 = vld [vmem:[#allocation2 + $0x8] sm:$0xff]
        %v492 = vld [vmem:[#allocation2 + $0x10] sm:$0xff]
        %v493 = vld [vmem:[#allocation2 + $0x18] sm:$0xff]
        %v494 = vld [vmem:[#allocation2 + $0x20] sm:$0xff]
        %v495 = vld [vmem:[#allocation2 + $0x28] sm:$0xff]
        %v496 = vld [vmem:[#allocation2 + $0x30] sm:$0xff]
        %v497 = vld [vmem:[#allocation2 + $0x38] sm:$0xff]
        %v498 = vadd.f32 %v490, %v462
        %v499 = vadd.f32 %v491, %v481
        %v500 = vadd.f32 %v492, %v464
        %v501 = vadd.f32 %v493, %v483
        %v502 = vadd.f32 %v494, %v467
        %v503 = vadd.f32 %v495, %v486
        %v504 = vadd.f32 %v496, %v469
        %v505 = vadd.f32 %v497, %v488
        %506 = vst [vmem:[#allocation2] sm:$0xff] %v498
        %507 = vst [vmem:[#allocation2 + $0x8] sm:$0xff] %v499
        %508 = vst [vmem:[#allocation2 + $0x10] sm:$0xff] %v500
        %509 = vst [vmem:[#allocation2 + $0x18] sm:$0xff] %v501
        %510 = vst [vmem:[#allocation2 + $0x20] sm:$0xff] %v502
        %511 = vst [vmem:[#allocation2 + $0x28] sm:$0xff] %v503
        %512 = vst [vmem:[#allocation2 + $0x30] sm:$0xff] %v504
        %513 = vst [vmem:[#allocation2 + $0x38] sm:$0xff] %v505
        %s514 = scalar_lea.vmem %s224, 48
        %v515 = vld [vmem:[%s514] sm:$0xf]
        %v516 = vld [vmem:[%s514 + $0x4] sm:$0xf]
        %v517 = vld [vmem:[%s514 + $0x8] sm:$0xf]
        %v518 = vld [vmem:[%s514 + $0xc] sm:$0xf]
        %v523 = vunpack.c.l.b16 %v515
        %v524 = vunpack.c.l.b16 %v516
        %v525 = vunpack.c.l.b16 %v517
        %v526 = vunpack.c.l.b16 %v518
        %v527 = vpack.c.b16 %v524, %v523
        %v528 = vpack.c.b16 %v526, %v525
        %529 = vrot.lane.b32.xlu0 %v264, 125
        %v530 = vpop.permute.xlu0 %529
        %531 = vrot.lane.b32.xlu0 %v265, 125
        %v532 = vpop.permute.xlu0 %531
        %533 = vrot.lane.b32.xlu0 %v340, 125
        %v534 = vpop.permute.xlu0 %533
        %vm535 = vcmask 1022976
        %v536 = vsel %vm535, %v530, %v532
        %v537 = vsel %vm535, %v532, %v534
        %v541 = vsel %vm268, %v527, 0
        %v544 = vsel %vm268, %v528, 0
        %546 = vmatpush.bf16.msra.mxu0 0
        %547 = vmatpush.bf16.msra.mxu0 0
        %548 = vmatpush.bf16.msra.mxu0 0
        %549 = vmatpush.bf16.msra.mxu0 0
        %550 = vmatpush.bf16.msra.mxu0 0
        %551 = vmatpush.bf16.msra.mxu0 0
        %552 = vmatpush.bf16.msra.mxu0 0
        %553 = vmatpush.bf16.msra.mxu0 %v536
        %554 = vmatmul.bf16.gmra.mxu0 %v541
        %v555 = vpop.f32.mrf.mxu0
        %v556 = vadd.f32 0.0, %v555
        %v557 = vpop.f32.mrf.mxu0
        %v558 = vadd.f32 0.0, %v557
        %559 = vmatmul.bf16.gmra.mxu0 %v544
        %v560 = vpop.f32.mrf.mxu0
        %v561 = vadd.f32 0.0, %v560
        %v562 = vpop.f32.mrf.mxu0
        %v563 = vadd.f32 0.0, %v562
        %564 = vdwg.mxu0
        %565 = vmatpush.bf16.msra.mxu0 0
        %566 = vmatpush.bf16.msra.mxu0 0
        %567 = vmatpush.bf16.msra.mxu0 0
        %568 = vmatpush.bf16.msra.mxu0 0
        %569 = vmatpush.bf16.msra.mxu0 0
        %570 = vmatpush.bf16.msra.mxu0 0
        %571 = vmatpush.bf16.msra.mxu0 0
        %572 = vmatpush.bf16.msra.mxu0 %v537
        %573 = vmatmul.bf16.gmra.mxu0 %v541
        %v574 = vpop.f32.mrf.mxu0
        %v575 = vadd.f32 0.0, %v574
        %v576 = vpop.f32.mrf.mxu0
        %v577 = vadd.f32 0.0, %v576
        %578 = vmatmul.bf16.gmra.mxu0 %v544
        %v579 = vpop.f32.mrf.mxu0
        %v580 = vadd.f32 0.0, %v579
        %v581 = vpop.f32.mrf.mxu0
        %v582 = vadd.f32 0.0, %v581
        %583 = vdwg.mxu0
        %v584 = vld [vmem:[#allocation2] sm:$0xff]
        %v585 = vld [vmem:[#allocation2 + $0x8] sm:$0xff]
        %v586 = vld [vmem:[#allocation2 + $0x10] sm:$0xff]
        %v587 = vld [vmem:[#allocation2 + $0x18] sm:$0xff]
        %v588 = vld [vmem:[#allocation2 + $0x20] sm:$0xff]
        %v589 = vld [vmem:[#allocation2 + $0x28] sm:$0xff]
        %v590 = vld [vmem:[#allocation2 + $0x30] sm:$0xff]
        %v591 = vld [vmem:[#allocation2 + $0x38] sm:$0xff]
        %v592 = vadd.f32 %v584, %v556
        %v593 = vadd.f32 %v585, %v575
        %v594 = vadd.f32 %v586, %v558
        %v595 = vadd.f32 %v587, %v577
        %v596 = vadd.f32 %v588, %v561
        %v597 = vadd.f32 %v589, %v580
        %v598 = vadd.f32 %v590, %v563
        %v599 = vadd.f32 %v591, %v582
        %600 = vst [vmem:[#allocation2] sm:$0xff] %v592
        %601 = vst [vmem:[#allocation2 + $0x8] sm:$0xff] %v593
        %602 = vst [vmem:[#allocation2 + $0x10] sm:$0xff] %v594
        %603 = vst [vmem:[#allocation2 + $0x18] sm:$0xff] %v595
        %604 = vst [vmem:[#allocation2 + $0x20] sm:$0xff] %v596
        %605 = vst [vmem:[#allocation2 + $0x28] sm:$0xff] %v597
        %606 = vst [vmem:[#allocation2 + $0x30] sm:$0xff] %v598
        %607 = vst [vmem:[#allocation2 + $0x38] sm:$0xff] %v599
        %s608 = scalar_lea.vmem %s224, 64
        %v609 = vld [vmem:[%s608] sm:$0xf]
        %v610 = vld [vmem:[%s608 + $0x4] sm:$0xf]
        %v611 = vld [vmem:[%s608 + $0x8] sm:$0xf]
        %v612 = vld [vmem:[%s608 + $0xc] sm:$0xf]
        %v617 = vunpack.c.l.b16 %v609
        %v618 = vunpack.c.l.b16 %v610
        %v619 = vunpack.c.l.b16 %v611
        %v620 = vunpack.c.l.b16 %v612
        %v621 = vpack.c.b16 %v618, %v617
        %v622 = vpack.c.b16 %v620, %v619
        %623 = vrot.lane.b32.xlu0 %v264, 124
        %v624 = vpop.permute.xlu0 %623
        %625 = vrot.lane.b32.xlu0 %v265, 124
        %v626 = vpop.permute.xlu0 %625
        %627 = vrot.lane.b32.xlu0 %v340, 124
        %v628 = vpop.permute.xlu0 %627
        %vm629 = vcmask 1014784
        %v630 = vsel %vm629, %v624, %v626
        %v631 = vsel %vm629, %v626, %v628
        %v635 = vsel %vm268, %v621, 0
        %v638 = vsel %vm268, %v622, 0
        %640 = vmatpush.bf16.msra.mxu0 0
        %641 = vmatpush.bf16.msra.mxu0 0
        %642 = vmatpush.bf16.msra.mxu0 0
        %643 = vmatpush.bf16.msra.mxu0 0
        %644 = vmatpush.bf16.msra.mxu0 0
        %645 = vmatpush.bf16.msra.mxu0 0
        %646 = vmatpush.bf16.msra.mxu0 0
        %647 = vmatpush.bf16.msra.mxu0 %v630
        %648 = vmatmul.bf16.gmra.mxu0 %v635
        %v649 = vpop.f32.mrf.mxu0
        %v650 = vadd.f32 0.0, %v649
        %v651 = vpop.f32.mrf.mxu0
        %v652 = vadd.f32 0.0, %v651
        %653 = vmatmul.bf16.gmra.mxu0 %v638
        %v654 = vpop.f32.mrf.mxu0
        %v655 = vadd.f32 0.0, %v654
        %v656 = vpop.f32.mrf.mxu0
        %v657 = vadd.f32 0.0, %v656
        %658 = vdwg.mxu0
        %659 = vmatpush.bf16.msra.mxu0 0
        %660 = vmatpush.bf16.msra.mxu0 0
        %661 = vmatpush.bf16.msra.mxu0 0
        %662 = vmatpush.bf16.msra.mxu0 0
        %663 = vmatpush.bf16.msra.mxu0 0
        %664 = vmatpush.bf16.msra.mxu0 0
        %665 = vmatpush.bf16.msra.mxu0 0
        %666 = vmatpush.bf16.msra.mxu0 %v631
        %667 = vmatmul.bf16.gmra.mxu0 %v635
        %v668 = vpop.f32.mrf.mxu0
        %v669 = vadd.f32 0.0, %v668
        %v670 = vpop.f32.mrf.mxu0
        %v671 = vadd.f32 0.0, %v670
        %672 = vmatmul.bf16.gmra.mxu0 %v638
        %v673 = vpop.f32.mrf.mxu0
        %v674 = vadd.f32 0.0, %v673
        %v675 = vpop.f32.mrf.mxu0
        %v676 = vadd.f32 0.0, %v675
        %677 = vdwg.mxu0
        %v678 = vld [vmem:[#allocation2] sm:$0xff]
        %v679 = vld [vmem:[#allocation2 + $0x8] sm:$0xff]
        %v680 = vld [vmem:[#allocation2 + $0x10] sm:$0xff]
        %v681 = vld [vmem:[#allocation2 + $0x18] sm:$0xff]
        %v682 = vld [vmem:[#allocation2 + $0x20] sm:$0xff]
        %v683 = vld [vmem:[#allocation2 + $0x28] sm:$0xff]
        %v684 = vld [vmem:[#allocation2 + $0x30] sm:$0xff]
        %v685 = vld [vmem:[#allocation2 + $0x38] sm:$0xff]
        %v686 = vadd.f32 %v678, %v650
        %v687 = vadd.f32 %v679, %v669
        %v688 = vadd.f32 %v680, %v652
        %v689 = vadd.f32 %v681, %v671
        %v690 = vadd.f32 %v682, %v655
        %v691 = vadd.f32 %v683, %v674
        %v692 = vadd.f32 %v684, %v657
        %v693 = vadd.f32 %v685, %v676
        %694 = vst [vmem:[#allocation2] sm:$0xff] %v686
        %695 = vst [vmem:[#allocation2 + $0x8] sm:$0xff] %v687
        %696 = vst [vmem:[#allocation2 + $0x10] sm:$0xff] %v688
        %697 = vst [vmem:[#allocation2 + $0x18] sm:$0xff] %v689
        %698 = vst [vmem:[#allocation2 + $0x20] sm:$0xff] %v690
        %699 = vst [vmem:[#allocation2 + $0x28] sm:$0xff] %v691
        %700 = vst [vmem:[#allocation2 + $0x30] sm:$0xff] %v692
        %701 = vst [vmem:[#allocation2 + $0x38] sm:$0xff] %v693
        %s702 = scalar_lea.vmem %s224, 80
        %v703 = vld [vmem:[%s702] sm:$0xf]
        %v704 = vld [vmem:[%s702 + $0x4] sm:$0xf]
        %v705 = vld [vmem:[%s702 + $0x8] sm:$0xf]
        %v706 = vld [vmem:[%s702 + $0xc] sm:$0xf]
        %v711 = vunpack.c.l.b16 %v703
        %v712 = vunpack.c.l.b16 %v704
        %v713 = vunpack.c.l.b16 %v705
        %v714 = vunpack.c.l.b16 %v706
        %v715 = vpack.c.b16 %v712, %v711
        %v716 = vpack.c.b16 %v714, %v713
        %717 = vrot.lane.b32.xlu0 %v264, 123
        %v718 = vpop.permute.xlu0 %717
        %719 = vrot.lane.b32.xlu0 %v265, 123
        %v720 = vpop.permute.xlu0 %719
        %721 = vrot.lane.b32.xlu0 %v340, 123
        %v722 = vpop.permute.xlu0 %721
        %vm723 = vcmask 1006592
        %v724 = vsel %vm723, %v718, %v720
        %v725 = vsel %vm723, %v720, %v722
        %v729 = vsel %vm268, %v715, 0
        %v732 = vsel %vm268, %v716, 0
        %734 = vmatpush.bf16.msra.mxu0 0
        %735 = vmatpush.bf16.msra.mxu0 0
        %736 = vmatpush.bf16.msra.mxu0 0
        %737 = vmatpush.bf16.msra.mxu0 0
        %738 = vmatpush.bf16.msra.mxu0 0
        %739 = vmatpush.bf16.msra.mxu0 0
        %740 = vmatpush.bf16.msra.mxu0 0
        %741 = vmatpush.bf16.msra.mxu0 %v724
        %742 = vmatmul.bf16.gmra.mxu0 %v729
        %v743 = vpop.f32.mrf.mxu0
        %v744 = vadd.f32 0.0, %v743
        %v745 = vpop.f32.mrf.mxu0
        %v746 = vadd.f32 0.0, %v745
        %747 = vmatmul.bf16.gmra.mxu0 %v732
        %v748 = vpop.f32.mrf.mxu0
        %v749 = vadd.f32 0.0, %v748
        %v750 = vpop.f32.mrf.mxu0
        %v751 = vadd.f32 0.0, %v750
        %752 = vdwg.mxu0
        %753 = vmatpush.bf16.msra.mxu0 0
        %754 = vmatpush.bf16.msra.mxu0 0
        %755 = vmatpush.bf16.msra.mxu0 0
        %756 = vmatpush.bf16.msra.mxu0 0
        %757 = vmatpush.bf16.msra.mxu0 0
        %758 = vmatpush.bf16.msra.mxu0 0
        %759 = vmatpush.bf16.msra.mxu0 0
        %760 = vmatpush.bf16.msra.mxu0 %v725
        %761 = vmatmul.bf16.gmra.mxu0 %v729
        %v762 = vpop.f32.mrf.mxu0
        %v763 = vadd.f32 0.0, %v762
        %v764 = vpop.f32.mrf.mxu0
        %v765 = vadd.f32 0.0, %v764
        %766 = vmatmul.bf16.gmra.mxu0 %v732
        %v767 = vpop.f32.mrf.mxu0
        %v768 = vadd.f32 0.0, %v767
        %v769 = vpop.f32.mrf.mxu0
        %v770 = vadd.f32 0.0, %v769
        %771 = vdwg.mxu0
        %v772 = vld [vmem:[#allocation2] sm:$0xff]
        %v773 = vld [vmem:[#allocation2 + $0x8] sm:$0xff]
        %v774 = vld [vmem:[#allocation2 + $0x10] sm:$0xff]
        %v775 = vld [vmem:[#allocation2 + $0x18] sm:$0xff]
        %v776 = vld [vmem:[#allocation2 + $0x20] sm:$0xff]
        %v777 = vld [vmem:[#allocation2 + $0x28] sm:$0xff]
        %v778 = vld [vmem:[#allocation2 + $0x30] sm:$0xff]
        %v779 = vld [vmem:[#allocation2 + $0x38] sm:$0xff]
        %v780 = vadd.f32 %v772, %v744
        %v781 = vadd.f32 %v773, %v763
        %v782 = vadd.f32 %v774, %v746
        %v783 = vadd.f32 %v775, %v765
        %v784 = vadd.f32 %v776, %v749
        %v785 = vadd.f32 %v777, %v768
        %v786 = vadd.f32 %v778, %v751
        %v787 = vadd.f32 %v779, %v770
        %788 = vst [vmem:[#allocation2] sm:$0xff] %v780
        %789 = vst [vmem:[#allocation2 + $0x8] sm:$0xff] %v781
        %790 = vst [vmem:[#allocation2 + $0x10] sm:$0xff] %v782
        %791 = vst [vmem:[#allocation2 + $0x18] sm:$0xff] %v783
        %792 = vst [vmem:[#allocation2 + $0x20] sm:$0xff] %v784
        %793 = vst [vmem:[#allocation2 + $0x28] sm:$0xff] %v785
        %794 = vst [vmem:[#allocation2 + $0x30] sm:$0xff] %v786
        %795 = vst [vmem:[#allocation2 + $0x38] sm:$0xff] %v787
        %s796 = scalar_lea.vmem %s224, 96
        %v797 = vld [vmem:[%s796] sm:$0xf]
        %v798 = vld [vmem:[%s796 + $0x4] sm:$0xf]
        %v799 = vld [vmem:[%s796 + $0x8] sm:$0xf]
        %v800 = vld [vmem:[%s796 + $0xc] sm:$0xf]
        %v805 = vunpack.c.l.b16 %v797
        %v806 = vunpack.c.l.b16 %v798
        %v807 = vunpack.c.l.b16 %v799
        %v808 = vunpack.c.l.b16 %v800
        %v809 = vpack.c.b16 %v806, %v805
        %v810 = vpack.c.b16 %v808, %v807
        %811 = vrot.lane.b32.xlu0 %v264, 122
        %v812 = vpop.permute.xlu0 %811
        %813 = vrot.lane.b32.xlu0 %v265, 122
        %v814 = vpop.permute.xlu0 %813
        %815 = vrot.lane.b32.xlu0 %v340, 122
        %v816 = vpop.permute.xlu0 %815
        %vm817 = vcmask 998400
        %v818 = vsel %vm817, %v812, %v814
        %v819 = vsel %vm817, %v814, %v816
        %v823 = vsel %vm268, %v809, 0
        %v826 = vsel %vm268, %v810, 0
        %828 = vmatpush.bf16.msra.mxu0 0
        %829 = vmatpush.bf16.msra.mxu0 0
        %830 = vmatpush.bf16.msra.mxu0 0
        %831 = vmatpush.bf16.msra.mxu0 0
        %832 = vmatpush.bf16.msra.mxu0 0
        %833 = vmatpush.bf16.msra.mxu0 0
        %834 = vmatpush.bf16.msra.mxu0 0
        %835 = vmatpush.bf16.msra.mxu0 %v818
        %836 = vmatmul.bf16.gmra.mxu0 %v823
        %v837 = vpop.f32.mrf.mxu0
        %v838 = vadd.f32 0.0, %v837
        %v839 = vpop.f32.mrf.mxu0
        %v840 = vadd.f32 0.0, %v839
        %841 = vmatmul.bf16.gmra.mxu0 %v826
        %v842 = vpop.f32.mrf.mxu0
        %v843 = vadd.f32 0.0, %v842
        %v844 = vpop.f32.mrf.mxu0
        %v845 = vadd.f32 0.0, %v844
        %846 = vdwg.mxu0
        %847 = vmatpush.bf16.msra.mxu0 0
        %848 = vmatpush.bf16.msra.mxu0 0
        %849 = vmatpush.bf16.msra.mxu0 0
        %850 = vmatpush.bf16.msra.mxu0 0
        %851 = vmatpush.bf16.msra.mxu0 0
        %852 = vmatpush.bf16.msra.mxu0 0
        %853 = vmatpush.bf16.msra.mxu0 0
        %854 = vmatpush.bf16.msra.mxu0 %v819
        %855 = vmatmul.bf16.gmra.mxu0 %v823
        %v856 = vpop.f32.mrf.mxu0
        %v857 = vadd.f32 0.0, %v856
        %v858 = vpop.f32.mrf.mxu0
        %v859 = vadd.f32 0.0, %v858
        %860 = vmatmul.bf16.gmra.mxu0 %v826
        %v861 = vpop.f32.mrf.mxu0
        %v862 = vadd.f32 0.0, %v861
        %v863 = vpop.f32.mrf.mxu0
        %v864 = vadd.f32 0.0, %v863
        %865 = vdwg.mxu0
        %v866 = vld [vmem:[#allocation2] sm:$0xff]
        %v867 = vld [vmem:[#allocation2 + $0x8] sm:$0xff]
        %v868 = vld [vmem:[#allocation2 + $0x10] sm:$0xff]
        %v869 = vld [vmem:[#allocation2 + $0x18] sm:$0xff]
        %v870 = vld [vmem:[#allocation2 + $0x20] sm:$0xff]
        %v871 = vld [vmem:[#allocation2 + $0x28] sm:$0xff]
        %v872 = vld [vmem:[#allocation2 + $0x30] sm:$0xff]
        %v873 = vld [vmem:[#allocation2 + $0x38] sm:$0xff]
        %v874 = vadd.f32 %v866, %v838
        %v875 = vadd.f32 %v867, %v857
        %v876 = vadd.f32 %v868, %v840
        %v877 = vadd.f32 %v869, %v859
        %v878 = vadd.f32 %v870, %v843
        %v879 = vadd.f32 %v871, %v862
        %v880 = vadd.f32 %v872, %v845
        %v881 = vadd.f32 %v873, %v864
        %882 = vst [vmem:[#allocation2] sm:$0xff] %v874
        %883 = vst [vmem:[#allocation2 + $0x8] sm:$0xff] %v875
        %884 = vst [vmem:[#allocation2 + $0x10] sm:$0xff] %v876
        %885 = vst [vmem:[#allocation2 + $0x18] sm:$0xff] %v877
        %886 = vst [vmem:[#allocation2 + $0x20] sm:$0xff] %v878
        %887 = vst [vmem:[#allocation2 + $0x28] sm:$0xff] %v879
        %888 = vst [vmem:[#allocation2 + $0x30] sm:$0xff] %v880
        %889 = vst [vmem:[#allocation2 + $0x38] sm:$0xff] %v881
        %s890 = scalar_lea.vmem %s224, 112
        %v891 = vld [vmem:[%s890] sm:$0xf]
        %v892 = vld [vmem:[%s890 + $0x4] sm:$0xf]
        %v893 = vld [vmem:[%s890 + $0x8] sm:$0xf]
        %v894 = vld [vmem:[%s890 + $0xc] sm:$0xf]
        %v899 = vunpack.c.l.b16 %v891
        %v900 = vunpack.c.l.b16 %v892
        %v901 = vunpack.c.l.b16 %v893
        %v902 = vunpack.c.l.b16 %v894
        %v903 = vpack.c.b16 %v900, %v899
        %v904 = vpack.c.b16 %v902, %v901
        %905 = vrot.lane.b32.xlu0 %v264, 90
        %v906 = vpop.permute.xlu0 %905
        %907 = vrot.lane.b32.xlu0 %v265, 90
        %v908 = vpop.permute.xlu0 %907
        %909 = vrot.lane.b32.xlu0 %v340, 90
        %v910 = vpop.permute.xlu0 %909
        %vm911 = vcmask 736256
        %v912 = vsel %vm911, %v906, %v908
        %v913 = vsel %vm911, %v908, %v910
        %v917 = vsel %vm268, %v903, 0
        %v920 = vsel %vm268, %v904, 0
        %922 = vmatpush.bf16.msra.mxu0 0
        %923 = vmatpush.bf16.msra.mxu0 0
        %924 = vmatpush.bf16.msra.mxu0 0
        %925 = vmatpush.bf16.msra.mxu0 0
        %926 = vmatpush.bf16.msra.mxu0 0
        %927 = vmatpush.bf16.msra.mxu0 0
        %928 = vmatpush.bf16.msra.mxu0 0
        %929 = vmatpush.bf16.msra.mxu0 %v912
        %930 = vmatmul.bf16.gmra.mxu0 %v917
        %v931 = vpop.f32.mrf.mxu0
        %v932 = vadd.f32 0.0, %v931
        %v933 = vpop.f32.mrf.mxu0
        %v934 = vadd.f32 0.0, %v933
        %935 = vmatmul.bf16.gmra.mxu0 %v920
        %v936 = vpop.f32.mrf.mxu0
        %v937 = vadd.f32 0.0, %v936
        %v938 = vpop.f32.mrf.mxu0
        %v939 = vadd.f32 0.0, %v938
        %940 = vdwg.mxu0
        %941 = vmatpush.bf16.msra.mxu0 0
        %942 = vmatpush.bf16.msra.mxu0 0
        %943 = vmatpush.bf16.msra.mxu0 0
        %944 = vmatpush.bf16.msra.mxu0 0
        %945 = vmatpush.bf16.msra.mxu0 0
        %946 = vmatpush.bf16.msra.mxu0 0
        %947 = vmatpush.bf16.msra.mxu0 0
        %948 = vmatpush.bf16.msra.mxu0 %v913
        %949 = vmatmul.bf16.gmra.mxu0 %v917
        %v950 = vpop.f32.mrf.mxu0
        %v951 = vadd.f32 0.0, %v950
        %v952 = vpop.f32.mrf.mxu0
        %v953 = vadd.f32 0.0, %v952
        %954 = vmatmul.bf16.gmra.mxu0 %v920
        %v955 = vpop.f32.mrf.mxu0
        %v956 = vadd.f32 0.0, %v955
        %v957 = vpop.f32.mrf.mxu0
        %v958 = vadd.f32 0.0, %v957
        %959 = vdwg.mxu0
        %v960 = vld [vmem:[#allocation2] sm:$0xff]
        %v961 = vld [vmem:[#allocation2 + $0x8] sm:$0xff]
        %v962 = vld [vmem:[#allocation2 + $0x10] sm:$0xff]
        %v963 = vld [vmem:[#allocation2 + $0x18] sm:$0xff]
        %v964 = vld [vmem:[#allocation2 + $0x20] sm:$0xff]
        %v965 = vld [vmem:[#allocation2 + $0x28] sm:$0xff]
        %v966 = vld [vmem:[#allocation2 + $0x30] sm:$0xff]
        %v967 = vld [vmem:[#allocation2 + $0x38] sm:$0xff]
        %v968 = vadd.f32 %v960, %v932
        %v969 = vadd.f32 %v961, %v951
        %v970 = vadd.f32 %v962, %v934
        %v971 = vadd.f32 %v963, %v953
        %v972 = vadd.f32 %v964, %v937
        %v973 = vadd.f32 %v965, %v956
        %v974 = vadd.f32 %v966, %v939
        %v975 = vadd.f32 %v967, %v958
        %976 = vst [vmem:[#allocation2] sm:$0xff] %v968
        %977 = vst [vmem:[#allocation2 + $0x8] sm:$0xff] %v969
        %978 = vst [vmem:[#allocation2 + $0x10] sm:$0xff] %v970
        %979 = vst [vmem:[#allocation2 + $0x18] sm:$0xff] %v971
        %980 = vst [vmem:[#allocation2 + $0x20] sm:$0xff] %v972
        %981 = vst [vmem:[#allocation2 + $0x28] sm:$0xff] %v973
        %982 = vst [vmem:[#allocation2 + $0x30] sm:$0xff] %v974
        %983 = vst [vmem:[#allocation2 + $0x38] sm:$0xff] %v975
        %s984 = scalar_lea.vmem %s224, 128
        %v985 = vld [vmem:[%s984] sm:$0xf]
        %v986 = vld [vmem:[%s984 + $0x4] sm:$0xf]
        %v987 = vld [vmem:[%s984 + $0x8] sm:$0xf]
        %v988 = vld [vmem:[%s984 + $0xc] sm:$0xf]
        %v993 = vunpack.c.l.b16 %v985
        %v994 = vunpack.c.l.b16 %v986
        %v995 = vunpack.c.l.b16 %v987
        %v996 = vunpack.c.l.b16 %v988
        %v997 = vpack.c.b16 %v994, %v993
        %v998 = vpack.c.b16 %v996, %v995
        %999 = vrot.lane.b32.xlu0 %v264, 89
        %v1000 = vpop.permute.xlu0 %999
        %1001 = vrot.lane.b32.xlu0 %v265, 89
        %v1002 = vpop.permute.xlu0 %1001
        %1003 = vrot.lane.b32.xlu0 %v340, 89
        %v1004 = vpop.permute.xlu0 %1003
        %vm1005 = vcmask 728064
        %v1006 = vsel %vm1005, %v1000, %v1002
        %v1007 = vsel %vm1005, %v1002, %v1004
        %v1011 = vsel %vm268, %v997, 0
        %v1014 = vsel %vm268, %v998, 0
        %1016 = vmatpush.bf16.msra.mxu0 0
        %1017 = vmatpush.bf16.msra.mxu0 0
        %1018 = vmatpush.bf16.msra.mxu0 0
        %1019 = vmatpush.bf16.msra.mxu0 0
        %1020 = vmatpush.bf16.msra.mxu0 0
        %1021 = vmatpush.bf16.msra.mxu0 0
        %1022 = vmatpush.bf16.msra.mxu0 0
        %1023 = vmatpush.bf16.msra.mxu0 %v1006
        %1024 = vmatmul.bf16.gmra.mxu0 %v1011
        %v1025 = vpop.f32.mrf.mxu0
        %v1026 = vadd.f32 0.0, %v1025
        %v1027 = vpop.f32.mrf.mxu0
        %v1028 = vadd.f32 0.0, %v1027
        %1029 = vmatmul.bf16.gmra.mxu0 %v1014
        %v1030 = vpop.f32.mrf.mxu0
        %v1031 = vadd.f32 0.0, %v1030
        %v1032 = vpop.f32.mrf.mxu0
        %v1033 = vadd.f32 0.0, %v1032
        %1034 = vdwg.mxu0
        %1035 = vmatpush.bf16.msra.mxu0 0
        %1036 = vmatpush.bf16.msra.mxu0 0
        %1037 = vmatpush.bf16.msra.mxu0 0
        %1038 = vmatpush.bf16.msra.mxu0 0
        %1039 = vmatpush.bf16.msra.mxu0 0
        %1040 = vmatpush.bf16.msra.mxu0 0
        %1041 = vmatpush.bf16.msra.mxu0 0
        %1042 = vmatpush.bf16.msra.mxu0 %v1007
        %1043 = vmatmul.bf16.gmra.mxu0 %v1011
        %v1044 = vpop.f32.mrf.mxu0
        %v1045 = vadd.f32 0.0, %v1044
        %v1046 = vpop.f32.mrf.mxu0
        %v1047 = vadd.f32 0.0, %v1046
        %1048 = vmatmul.bf16.gmra.mxu0 %v1014
        %v1049 = vpop.f32.mrf.mxu0
        %v1050 = vadd.f32 0.0, %v1049
        %v1051 = vpop.f32.mrf.mxu0
        %v1052 = vadd.f32 0.0, %v1051
        %1053 = vdwg.mxu0
        %v1054 = vld [vmem:[#allocation2] sm:$0xff]
        %v1055 = vld [vmem:[#allocation2 + $0x8] sm:$0xff]
        %v1056 = vld [vmem:[#allocation2 + $0x10] sm:$0xff]
        %v1057 = vld [vmem:[#allocation2 + $0x18] sm:$0xff]
        %v1058 = vld [vmem:[#allocation2 + $0x20] sm:$0xff]
        %v1059 = vld [vmem:[#allocation2 + $0x28] sm:$0xff]
        %v1060 = vld [vmem:[#allocation2 + $0x30] sm:$0xff]
        %v1061 = vld [vmem:[#allocation2 + $0x38] sm:$0xff]
        %v1062 = vadd.f32 %v1054, %v1026
        %v1063 = vadd.f32 %v1055, %v1045
        %v1064 = vadd.f32 %v1056, %v1028
        %v1065 = vadd.f32 %v1057, %v1047
        %v1066 = vadd.f32 %v1058, %v1031
        %v1067 = vadd.f32 %v1059, %v1050
        %v1068 = vadd.f32 %v1060, %v1033
        %v1069 = vadd.f32 %v1061, %v1052
        %1070 = vst [vmem:[#allocation2] sm:$0xff] %v1062
        %1071 = vst [vmem:[#allocation2 + $0x8] sm:$0xff] %v1063
        %1072 = vst [vmem:[#allocation2 + $0x10] sm:$0xff] %v1064
        %1073 = vst [vmem:[#allocation2 + $0x18] sm:$0xff] %v1065
        %1074 = vst [vmem:[#allocation2 + $0x20] sm:$0xff] %v1066
        %1075 = vst [vmem:[#allocation2 + $0x28] sm:$0xff] %v1067
        %1076 = vst [vmem:[#allocation2 + $0x30] sm:$0xff] %v1068
        %1077 = vst [vmem:[#allocation2 + $0x38] sm:$0xff] %v1069
        %s1078 = scalar_lea.vmem %s224, 144
        %v1079 = vld [vmem:[%s1078] sm:$0xf]
        %v1080 = vld [vmem:[%s1078 + $0x4] sm:$0xf]
        %v1081 = vld [vmem:[%s1078 + $0x8] sm:$0xf]
        %v1082 = vld [vmem:[%s1078 + $0xc] sm:$0xf]
        %v1087 = vunpack.c.l.b16 %v1079
        %v1088 = vunpack.c.l.b16 %v1080
        %v1089 = vunpack.c.l.b16 %v1081
        %v1090 = vunpack.c.l.b16 %v1082
        %v1091 = vpack.c.b16 %v1088, %v1087
        %v1092 = vpack.c.b16 %v1090, %v1089
        %1093 = vrot.lane.b32.xlu0 %v264, 88
        %v1094 = vpop.permute.xlu0 %1093
        %1095 = vrot.lane.b32.xlu0 %v265, 88
        %v1096 = vpop.permute.xlu0 %1095
        %1097 = vrot.lane.b32.xlu0 %v340, 88
        %v1098 = vpop.permute.xlu0 %1097
        %vm1099 = vcmask 719872
        %v1100 = vsel %vm1099, %v1094, %v1096
        %v1101 = vsel %vm1099, %v1096, %v1098
        %v1105 = vsel %vm268, %v1091, 0
        %v1108 = vsel %vm268, %v1092, 0
        %1110 = vmatpush.bf16.msra.mxu0 0
        %1111 = vmatpush.bf16.msra.mxu0 0
        %1112 = vmatpush.bf16.msra.mxu0 0
        %1113 = vmatpush.bf16.msra.mxu0 0
        %1114 = vmatpush.bf16.msra.mxu0 0
        %1115 = vmatpush.bf16.msra.mxu0 0
        %1116 = vmatpush.bf16.msra.mxu0 0
        %1117 = vmatpush.bf16.msra.mxu0 %v1100
        %1118 = vmatmul.bf16.gmra.mxu0 %v1105
        %v1119 = vpop.f32.mrf.mxu0
        %v1120 = vadd.f32 0.0, %v1119
        %v1121 = vpop.f32.mrf.mxu0
        %v1122 = vadd.f32 0.0, %v1121
        %1123 = vmatmul.bf16.gmra.mxu0 %v1108
        %v1124 = vpop.f32.mrf.mxu0
        %v1125 = vadd.f32 0.0, %v1124
        %v1126 = vpop.f32.mrf.mxu0
        %v1127 = vadd.f32 0.0, %v1126
        %1128 = vdwg.mxu0
        %1129 = vmatpush.bf16.msra.mxu0 0
        %1130 = vmatpush.bf16.msra.mxu0 0
        %1131 = vmatpush.bf16.msra.mxu0 0
        %1132 = vmatpush.bf16.msra.mxu0 0
        %1133 = vmatpush.bf16.msra.mxu0 0
        %1134 = vmatpush.bf16.msra.mxu0 0
        %1135 = vmatpush.bf16.msra.mxu0 0
        %1136 = vmatpush.bf16.msra.mxu0 %v1101
        %1137 = vmatmul.bf16.gmra.mxu0 %v1105
        %v1138 = vpop.f32.mrf.mxu0
        %v1139 = vadd.f32 0.0, %v1138
        %v1140 = vpop.f32.mrf.mxu0
        %v1141 = vadd.f32 0.0, %v1140
        %1142 = vmatmul.bf16.gmra.mxu0 %v1108
        %v1143 = vpop.f32.mrf.mxu0
        %v1144 = vadd.f32 0.0, %v1143
        %v1145 = vpop.f32.mrf.mxu0
        %v1146 = vadd.f32 0.0, %v1145
        %1147 = vdwg.mxu0
        %v1148 = vld [vmem:[#allocation2] sm:$0xff]
        %v1149 = vld [vmem:[#allocation2 + $0x8] sm:$0xff]
        %v1150 = vld [vmem:[#allocation2 + $0x10] sm:$0xff]
        %v1151 = vld [vmem:[#allocation2 + $0x18] sm:$0xff]
        %v1152 = vld [vmem:[#allocation2 + $0x20] sm:$0xff]
        %v1153 = vld [vmem:[#allocation2 + $0x28] sm:$0xff]
        %v1154 = vld [vmem:[#allocation2 + $0x30] sm:$0xff]
        %v1155 = vld [vmem:[#allocation2 + $0x38] sm:$0xff]
        %v1156 = vadd.f32 %v1148, %v1120
        %v1157 = vadd.f32 %v1149, %v1139
        %v1158 = vadd.f32 %v1150, %v1122
        %v1159 = vadd.f32 %v1151, %v1141
        %v1160 = vadd.f32 %v1152, %v1125
        %v1161 = vadd.f32 %v1153, %v1144
        %v1162 = vadd.f32 %v1154, %v1127
        %v1163 = vadd.f32 %v1155, %v1146
        %1164 = vst [vmem:[#allocation2] sm:$0xff] %v1156
        %1165 = vst [vmem:[#allocation2 + $0x8] sm:$0xff] %v1157
        %1166 = vst [vmem:[#allocation2 + $0x10] sm:$0xff] %v1158
        %1167 = vst [vmem:[#allocation2 + $0x18] sm:$0xff] %v1159
        %1168 = vst [vmem:[#allocation2 + $0x20] sm:$0xff] %v1160
        %1169 = vst [vmem:[#allocation2 + $0x28] sm:$0xff] %v1161
        %1170 = vst [vmem:[#allocation2 + $0x30] sm:$0xff] %v1162
        %1171 = vst [vmem:[#allocation2 + $0x38] sm:$0xff] %v1163
        %s1172 = scalar_lea.vmem %s224, 160
        %v1173 = vld [vmem:[%s1172] sm:$0xf]
        %v1174 = vld [vmem:[%s1172 + $0x4] sm:$0xf]
        %v1175 = vld [vmem:[%s1172 + $0x8] sm:$0xf]
        %v1176 = vld [vmem:[%s1172 + $0xc] sm:$0xf]
        %v1181 = vunpack.c.l.b16 %v1173
        %v1182 = vunpack.c.l.b16 %v1174
        %v1183 = vunpack.c.l.b16 %v1175
        %v1184 = vunpack.c.l.b16 %v1176
        %v1185 = vpack.c.b16 %v1182, %v1181
        %v1186 = vpack.c.b16 %v1184, %v1183
        %1187 = vrot.lane.b32.xlu0 %v264, 87
        %v1188 = vpop.permute.xlu0 %1187
        %1189 = vrot.lane.b32.xlu0 %v265, 87
        %v1190 = vpop.permute.xlu0 %1189
        %1191 = vrot.lane.b32.xlu0 %v340, 87
        %v1192 = vpop.permute.xlu0 %1191
        %vm1193 = vcmask 711680
        %v1194 = vsel %vm1193, %v1188, %v1190
        %v1195 = vsel %vm1193, %v1190, %v1192
        %v1199 = vsel %vm268, %v1185, 0
        %v1202 = vsel %vm268, %v1186, 0
        %1204 = vmatpush.bf16.msra.mxu0 0
        %1205 = vmatpush.bf16.msra.mxu0 0
        %1206 = vmatpush.bf16.msra.mxu0 0
        %1207 = vmatpush.bf16.msra.mxu0 0
        %1208 = vmatpush.bf16.msra.mxu0 0
        %1209 = vmatpush.bf16.msra.mxu0 0
        %1210 = vmatpush.bf16.msra.mxu0 0
        %1211 = vmatpush.bf16.msra.mxu0 %v1194
        %1212 = vmatmul.bf16.gmra.mxu0 %v1199
        %v1213 = vpop.f32.mrf.mxu0
        %v1214 = vadd.f32 0.0, %v1213
        %v1215 = vpop.f32.mrf.mxu0
        %v1216 = vadd.f32 0.0, %v1215
        %1217 = vmatmul.bf16.gmra.mxu0 %v1202
        %v1218 = vpop.f32.mrf.mxu0
        %v1219 = vadd.f32 0.0, %v1218
        %v1220 = vpop.f32.mrf.mxu0
        %v1221 = vadd.f32 0.0, %v1220
        %1222 = vdwg.mxu0
        %1223 = vmatpush.bf16.msra.mxu0 0
        %1224 = vmatpush.bf16.msra.mxu0 0
        %1225 = vmatpush.bf16.msra.mxu0 0
        %1226 = vmatpush.bf16.msra.mxu0 0
        %1227 = vmatpush.bf16.msra.mxu0 0
        %1228 = vmatpush.bf16.msra.mxu0 0
        %1229 = vmatpush.bf16.msra.mxu0 0
        %1230 = vmatpush.bf16.msra.mxu0 %v1195
        %1231 = vmatmul.bf16.gmra.mxu0 %v1199
        %v1232 = vpop.f32.mrf.mxu0
        %v1233 = vadd.f32 0.0, %v1232
        %v1234 = vpop.f32.mrf.mxu0
        %v1235 = vadd.f32 0.0, %v1234
        %1236 = vmatmul.bf16.gmra.mxu0 %v1202
        %v1237 = vpop.f32.mrf.mxu0
        %v1238 = vadd.f32 0.0, %v1237
        %v1239 = vpop.f32.mrf.mxu0
        %v1240 = vadd.f32 0.0, %v1239
        %1241 = vdwg.mxu0
        %v1242 = vld [vmem:[#allocation2] sm:$0xff]
        %v1243 = vld [vmem:[#allocation2 + $0x8] sm:$0xff]
        %v1244 = vld [vmem:[#allocation2 + $0x10] sm:$0xff]
        %v1245 = vld [vmem:[#allocation2 + $0x18] sm:$0xff]
        %v1246 = vld [vmem:[#allocation2 + $0x20] sm:$0xff]
        %v1247 = vld [vmem:[#allocation2 + $0x28] sm:$0xff]
        %v1248 = vld [vmem:[#allocation2 + $0x30] sm:$0xff]
        %v1249 = vld [vmem:[#allocation2 + $0x38] sm:$0xff]
        %v1250 = vadd.f32 %v1242, %v1214
        %v1251 = vadd.f32 %v1243, %v1233
        %v1252 = vadd.f32 %v1244, %v1216
        %v1253 = vadd.f32 %v1245, %v1235
        %v1254 = vadd.f32 %v1246, %v1219
        %v1255 = vadd.f32 %v1247, %v1238
        %v1256 = vadd.f32 %v1248, %v1221
        %v1257 = vadd.f32 %v1249, %v1240
        %1258 = vst [vmem:[#allocation2] sm:$0xff] %v1250
        %1259 = vst [vmem:[#allocation2 + $0x8] sm:$0xff] %v1251
        %1260 = vst [vmem:[#allocation2 + $0x10] sm:$0xff] %v1252
        %1261 = vst [vmem:[#allocation2 + $0x18] sm:$0xff] %v1253
        %1262 = vst [vmem:[#allocation2 + $0x20] sm:$0xff] %v1254
        %1263 = vst [vmem:[#allocation2 + $0x28] sm:$0xff] %v1255
        %1264 = vst [vmem:[#allocation2 + $0x30] sm:$0xff] %v1256
        %1265 = vst [vmem:[#allocation2 + $0x38] sm:$0xff] %v1257
        %s1266 = scalar_lea.vmem %s224, 176
        %v1267 = vld [vmem:[%s1266] sm:$0xf]
        %v1268 = vld [vmem:[%s1266 + $0x4] sm:$0xf]
        %v1269 = vld [vmem:[%s1266 + $0x8] sm:$0xf]
        %v1270 = vld [vmem:[%s1266 + $0xc] sm:$0xf]
        %v1275 = vunpack.c.l.b16 %v1267
        %v1276 = vunpack.c.l.b16 %v1268
        %v1277 = vunpack.c.l.b16 %v1269
        %v1278 = vunpack.c.l.b16 %v1270
        %v1279 = vpack.c.b16 %v1276, %v1275
        %v1280 = vpack.c.b16 %v1278, %v1277
        %1281 = vrot.lane.b32.xlu0 %v264, 86
        %v1282 = vpop.permute.xlu0 %1281
        %1283 = vrot.lane.b32.xlu0 %v265, 86
        %v1284 = vpop.permute.xlu0 %1283
        %1285 = vrot.lane.b32.xlu0 %v340, 86
        %v1286 = vpop.permute.xlu0 %1285
        %vm1287 = vcmask 703488
        %v1288 = vsel %vm1287, %v1282, %v1284
        %v1289 = vsel %vm1287, %v1284, %v1286
        %v1293 = vsel %vm268, %v1279, 0
        %v1296 = vsel %vm268, %v1280, 0
        %1298 = vmatpush.bf16.msra.mxu0 0
        %1299 = vmatpush.bf16.msra.mxu0 0
        %1300 = vmatpush.bf16.msra.mxu0 0
        %1301 = vmatpush.bf16.msra.mxu0 0
        %1302 = vmatpush.bf16.msra.mxu0 0
        %1303 = vmatpush.bf16.msra.mxu0 0
        %1304 = vmatpush.bf16.msra.mxu0 0
        %1305 = vmatpush.bf16.msra.mxu0 %v1288
        %1306 = vmatmul.bf16.gmra.mxu0 %v1293
        %v1307 = vpop.f32.mrf.mxu0
        %v1308 = vadd.f32 0.0, %v1307
        %v1309 = vpop.f32.mrf.mxu0
        %v1310 = vadd.f32 0.0, %v1309
        %1311 = vmatmul.bf16.gmra.mxu0 %v1296
        %v1312 = vpop.f32.mrf.mxu0
        %v1313 = vadd.f32 0.0, %v1312
        %v1314 = vpop.f32.mrf.mxu0
        %v1315 = vadd.f32 0.0, %v1314
        %1316 = vdwg.mxu0
        %1317 = vmatpush.bf16.msra.mxu0 0
        %1318 = vmatpush.bf16.msra.mxu0 0
        %1319 = vmatpush.bf16.msra.mxu0 0
        %1320 = vmatpush.bf16.msra.mxu0 0
        %1321 = vmatpush.bf16.msra.mxu0 0
        %1322 = vmatpush.bf16.msra.mxu0 0
        %1323 = vmatpush.bf16.msra.mxu0 0
        %1324 = vmatpush.bf16.msra.mxu0 %v1289
        %1325 = vmatmul.bf16.gmra.mxu0 %v1293
        %v1326 = vpop.f32.mrf.mxu0
        %v1327 = vadd.f32 0.0, %v1326
        %v1328 = vpop.f32.mrf.mxu0
        %v1329 = vadd.f32 0.0, %v1328
        %1330 = vmatmul.bf16.gmra.mxu0 %v1296
        %v1331 = vpop.f32.mrf.mxu0
        %v1332 = vadd.f32 0.0, %v1331
        %v1333 = vpop.f32.mrf.mxu0
        %v1334 = vadd.f32 0.0, %v1333
        %1335 = vdwg.mxu0
        %v1336 = vld [vmem:[#allocation2] sm:$0xff]
        %v1337 = vld [vmem:[#allocation2 + $0x8] sm:$0xff]
        %v1338 = vld [vmem:[#allocation2 + $0x10] sm:$0xff]
        %v1339 = vld [vmem:[#allocation2 + $0x18] sm:$0xff]
        %v1340 = vld [vmem:[#allocation2 + $0x20] sm:$0xff]
        %v1341 = vld [vmem:[#allocation2 + $0x28] sm:$0xff]
        %v1342 = vld [vmem:[#allocation2 + $0x30] sm:$0xff]
        %v1343 = vld [vmem:[#allocation2 + $0x38] sm:$0xff]
        %v1344 = vadd.f32 %v1336, %v1308
        %v1345 = vadd.f32 %v1337, %v1327
        %v1346 = vadd.f32 %v1338, %v1310
        %v1347 = vadd.f32 %v1339, %v1329
        %v1348 = vadd.f32 %v1340, %v1313
        %v1349 = vadd.f32 %v1341, %v1332
        %v1350 = vadd.f32 %v1342, %v1315
        %v1351 = vadd.f32 %v1343, %v1334
        %1352 = vst [vmem:[#allocation2] sm:$0xff] %v1344
        %1353 = vst [vmem:[#allocation2 + $0x8] sm:$0xff] %v1345
        %1354 = vst [vmem:[#allocation2 + $0x10] sm:$0xff] %v1346
        %1355 = vst [vmem:[#allocation2 + $0x18] sm:$0xff] %v1347
        %1356 = vst [vmem:[#allocation2 + $0x20] sm:$0xff] %v1348
        %1357 = vst [vmem:[#allocation2 + $0x28] sm:$0xff] %v1349
        %1358 = vst [vmem:[#allocation2 + $0x30] sm:$0xff] %v1350
        %1359 = vst [vmem:[#allocation2 + $0x38] sm:$0xff] %v1351
        %s1360 = scalar_lea.vmem %s224, 192
        %v1361 = vld [vmem:[%s1360] sm:$0xf]
        %v1362 = vld [vmem:[%s1360 + $0x4] sm:$0xf]
        %v1363 = vld [vmem:[%s1360 + $0x8] sm:$0xf]
        %v1364 = vld [vmem:[%s1360 + $0xc] sm:$0xf]
        %v1369 = vunpack.c.l.b16 %v1361
        %v1370 = vunpack.c.l.b16 %v1362
        %v1371 = vunpack.c.l.b16 %v1363
        %v1372 = vunpack.c.l.b16 %v1364
        %v1373 = vpack.c.b16 %v1370, %v1369
        %v1374 = vpack.c.b16 %v1372, %v1371
        %1375 = vrot.lane.b32.xlu0 %v264, 85
        %v1376 = vpop.permute.xlu0 %1375
        %1377 = vrot.lane.b32.xlu0 %v265, 85
        %v1378 = vpop.permute.xlu0 %1377
        %1379 = vrot.lane.b32.xlu0 %v340, 85
        %v1380 = vpop.permute.xlu0 %1379
        %vm1381 = vcmask 695296
        %v1382 = vsel %vm1381, %v1376, %v1378
        %v1383 = vsel %vm1381, %v1378, %v1380
        %v1387 = vsel %vm268, %v1373, 0
        %v1390 = vsel %vm268, %v1374, 0
        %1392 = vmatpush.bf16.msra.mxu0 0
        %1393 = vmatpush.bf16.msra.mxu0 0
        %1394 = vmatpush.bf16.msra.mxu0 0
        %1395 = vmatpush.bf16.msra.mxu0 0
        %1396 = vmatpush.bf16.msra.mxu0 0
        %1397 = vmatpush.bf16.msra.mxu0 0
        %1398 = vmatpush.bf16.msra.mxu0 0
        %1399 = vmatpush.bf16.msra.mxu0 %v1382
        %1400 = vmatmul.bf16.gmra.mxu0 %v1387
        %v1401 = vpop.f32.mrf.mxu0
        %v1402 = vadd.f32 0.0, %v1401
        %v1403 = vpop.f32.mrf.mxu0
        %v1404 = vadd.f32 0.0, %v1403
        %1405 = vmatmul.bf16.gmra.mxu0 %v1390
        %v1406 = vpop.f32.mrf.mxu0
        %v1407 = vadd.f32 0.0, %v1406
        %v1408 = vpop.f32.mrf.mxu0
        %v1409 = vadd.f32 0.0, %v1408
        %1410 = vdwg.mxu0
        %1411 = vmatpush.bf16.msra.mxu0 0
        %1412 = vmatpush.bf16.msra.mxu0 0
        %1413 = vmatpush.bf16.msra.mxu0 0
        %1414 = vmatpush.bf16.msra.mxu0 0
        %1415 = vmatpush.bf16.msra.mxu0 0
        %1416 = vmatpush.bf16.msra.mxu0 0
        %1417 = vmatpush.bf16.msra.mxu0 0
        %1418 = vmatpush.bf16.msra.mxu0 %v1383
        %1419 = vmatmul.bf16.gmra.mxu0 %v1387
        %v1420 = vpop.f32.mrf.mxu0
        %v1421 = vadd.f32 0.0, %v1420
        %v1422 = vpop.f32.mrf.mxu0
        %v1423 = vadd.f32 0.0, %v1422
        %1424 = vmatmul.bf16.gmra.mxu0 %v1390
        %v1425 = vpop.f32.mrf.mxu0
        %v1426 = vadd.f32 0.0, %v1425
        %v1427 = vpop.f32.mrf.mxu0
        %v1428 = vadd.f32 0.0, %v1427
        %1429 = vdwg.mxu0
        %v1430 = vld [vmem:[#allocation2] sm:$0xff]
        %v1431 = vld [vmem:[#allocation2 + $0x8] sm:$0xff]
        %v1432 = vld [vmem:[#allocation2 + $0x10] sm:$0xff]
        %v1433 = vld [vmem:[#allocation2 + $0x18] sm:$0xff]
        %v1434 = vld [vmem:[#allocation2 + $0x20] sm:$0xff]
        %v1435 = vld [vmem:[#allocation2 + $0x28] sm:$0xff]
        %v1436 = vld [vmem:[#allocation2 + $0x30] sm:$0xff]
        %v1437 = vld [vmem:[#allocation2 + $0x38] sm:$0xff]
        %v1438 = vadd.f32 %v1430, %v1402
        %v1439 = vadd.f32 %v1431, %v1421
        %v1440 = vadd.f32 %v1432, %v1404
        %v1441 = vadd.f32 %v1433, %v1423
        %v1442 = vadd.f32 %v1434, %v1407
        %v1443 = vadd.f32 %v1435, %v1426
        %v1444 = vadd.f32 %v1436, %v1409
        %v1445 = vadd.f32 %v1437, %v1428
        %1446 = vst [vmem:[#allocation2] sm:$0xff] %v1438
        %1447 = vst [vmem:[#allocation2 + $0x8] sm:$0xff] %v1439
        %1448 = vst [vmem:[#allocation2 + $0x10] sm:$0xff] %v1440
        %1449 = vst [vmem:[#allocation2 + $0x18] sm:$0xff] %v1441
        %1450 = vst [vmem:[#allocation2 + $0x20] sm:$0xff] %v1442
        %1451 = vst [vmem:[#allocation2 + $0x28] sm:$0xff] %v1443
        %1452 = vst [vmem:[#allocation2 + $0x30] sm:$0xff] %v1444
        %1453 = vst [vmem:[#allocation2 + $0x38] sm:$0xff] %v1445
        %s1454 = scalar_lea.vmem %s224, 208
        %v1455 = vld [vmem:[%s1454] sm:$0xf]
        %v1456 = vld [vmem:[%s1454 + $0x4] sm:$0xf]
        %v1457 = vld [vmem:[%s1454 + $0x8] sm:$0xf]
        %v1458 = vld [vmem:[%s1454 + $0xc] sm:$0xf]
        %v1463 = vunpack.c.l.b16 %v1455
        %v1464 = vunpack.c.l.b16 %v1456
        %v1465 = vunpack.c.l.b16 %v1457
        %v1466 = vunpack.c.l.b16 %v1458
        %v1467 = vpack.c.b16 %v1464, %v1463
        %v1468 = vpack.c.b16 %v1466, %v1465
        %1469 = vrot.lane.b32.xlu0 %v264, 84
        %v1470 = vpop.permute.xlu0 %1469
        %1471 = vrot.lane.b32.xlu0 %v265, 84
        %v1472 = vpop.permute.xlu0 %1471
        %1473 = vrot.lane.b32.xlu0 %v340, 84
        %v1474 = vpop.permute.xlu0 %1473
        %vm1475 = vcmask 687104
        %v1476 = vsel %vm1475, %v1470, %v1472
        %v1477 = vsel %vm1475, %v1472, %v1474
        %v1481 = vsel %vm268, %v1467, 0
        %v1484 = vsel %vm268, %v1468, 0
        %1486 = vmatpush.bf16.msra.mxu0 0
        %1487 = vmatpush.bf16.msra.mxu0 0
        %1488 = vmatpush.bf16.msra.mxu0 0
        %1489 = vmatpush.bf16.msra.mxu0 0
        %1490 = vmatpush.bf16.msra.mxu0 0
        %1491 = vmatpush.bf16.msra.mxu0 0
        %1492 = vmatpush.bf16.msra.mxu0 0
        %1493 = vmatpush.bf16.msra.mxu0 %v1476
        %1494 = vmatmul.bf16.gmra.mxu0 %v1481
        %v1495 = vpop.f32.mrf.mxu0
        %v1496 = vadd.f32 0.0, %v1495
        %v1497 = vpop.f32.mrf.mxu0
        %v1498 = vadd.f32 0.0, %v1497
        %1499 = vmatmul.bf16.gmra.mxu0 %v1484
        %v1500 = vpop.f32.mrf.mxu0
        %v1501 = vadd.f32 0.0, %v1500
        %v1502 = vpop.f32.mrf.mxu0
        %v1503 = vadd.f32 0.0, %v1502
        %1504 = vdwg.mxu0
        %1505 = vmatpush.bf16.msra.mxu0 0
        %1506 = vmatpush.bf16.msra.mxu0 0
        %1507 = vmatpush.bf16.msra.mxu0 0
        %1508 = vmatpush.bf16.msra.mxu0 0
        %1509 = vmatpush.bf16.msra.mxu0 0
        %1510 = vmatpush.bf16.msra.mxu0 0
        %1511 = vmatpush.bf16.msra.mxu0 0
        %1512 = vmatpush.bf16.msra.mxu0 %v1477
        %1513 = vmatmul.bf16.gmra.mxu0 %v1481
        %v1514 = vpop.f32.mrf.mxu0
        %v1515 = vadd.f32 0.0, %v1514
        %v1516 = vpop.f32.mrf.mxu0
        %v1517 = vadd.f32 0.0, %v1516
        %1518 = vmatmul.bf16.gmra.mxu0 %v1484
        %v1519 = vpop.f32.mrf.mxu0
        %v1520 = vadd.f32 0.0, %v1519
        %v1521 = vpop.f32.mrf.mxu0
        %v1522 = vadd.f32 0.0, %v1521
        %1523 = vdwg.mxu0
        %v1524 = vld [vmem:[#allocation2] sm:$0xff]
        %v1525 = vld [vmem:[#allocation2 + $0x8] sm:$0xff]
        %v1526 = vld [vmem:[#allocation2 + $0x10] sm:$0xff]
        %v1527 = vld [vmem:[#allocation2 + $0x18] sm:$0xff]
        %v1528 = vld [vmem:[#allocation2 + $0x20] sm:$0xff]
        %v1529 = vld [vmem:[#allocation2 + $0x28] sm:$0xff]
        %v1530 = vld [vmem:[#allocation2 + $0x30] sm:$0xff]
        %v1531 = vld [vmem:[#allocation2 + $0x38] sm:$0xff]
        %v1532 = vadd.f32 %v1524, %v1496
        %v1533 = vadd.f32 %v1525, %v1515
        %v1534 = vadd.f32 %v1526, %v1498
        %v1535 = vadd.f32 %v1527, %v1517
        %v1536 = vadd.f32 %v1528, %v1501
        %v1537 = vadd.f32 %v1529, %v1520
        %v1538 = vadd.f32 %v1530, %v1503
        %v1539 = vadd.f32 %v1531, %v1522
        %1540 = vst [vmem:[#allocation2] sm:$0xff] %v1532
        %1541 = vst [vmem:[#allocation2 + $0x8] sm:$0xff] %v1533
        %1542 = vst [vmem:[#allocation2 + $0x10] sm:$0xff] %v1534
        %1543 = vst [vmem:[#allocation2 + $0x18] sm:$0xff] %v1535
        %1544 = vst [vmem:[#allocation2 + $0x20] sm:$0xff] %v1536
        %1545 = vst [vmem:[#allocation2 + $0x28] sm:$0xff] %v1537
        %1546 = vst [vmem:[#allocation2 + $0x30] sm:$0xff] %v1538
        %1547 = vst [vmem:[#allocation2 + $0x38] sm:$0xff] %v1539
        %s1548 = scalar_lea.vmem %s224, 224
        %v1549 = vld [vmem:[%s1548] sm:$0xf]
        %v1550 = vld [vmem:[%s1548 + $0x4] sm:$0xf]
        %v1551 = vld [vmem:[%s1548 + $0x8] sm:$0xf]
        %v1552 = vld [vmem:[%s1548 + $0xc] sm:$0xf]
        %v1557 = vunpack.c.l.b16 %v1549
        %v1558 = vunpack.c.l.b16 %v1550
        %v1559 = vunpack.c.l.b16 %v1551
        %v1560 = vunpack.c.l.b16 %v1552
        %v1561 = vpack.c.b16 %v1558, %v1557
        %v1562 = vpack.c.b16 %v1560, %v1559
        %1563 = vrot.lane.b32.xlu0 %v264, 52
        %v1564 = vpop.permute.xlu0 %1563
        %1565 = vrot.lane.b32.xlu0 %v265, 52
        %v1566 = vpop.permute.xlu0 %1565
        %1567 = vrot.lane.b32.xlu0 %v340, 52
        %v1568 = vpop.permute.xlu0 %1567
        %vm1569 = vcmask 424960
        %v1570 = vsel %vm1569, %v1564, %v1566
        %v1571 = vsel %vm1569, %v1566, %v1568
        %v1575 = vsel %vm268, %v1561, 0
        %v1578 = vsel %vm268, %v1562, 0
        %1580 = vmatpush.bf16.msra.mxu0 0
        %1581 = vmatpush.bf16.msra.mxu0 0
        %1582 = vmatpush.bf16.msra.mxu0 0
        %1583 = vmatpush.bf16.msra.mxu0 0
        %1584 = vmatpush.bf16.msra.mxu0 0
        %1585 = vmatpush.bf16.msra.mxu0 0
        %1586 = vmatpush.bf16.msra.mxu0 0
        %1587 = vmatpush.bf16.msra.mxu0 %v1570
        %1588 = vmatmul.bf16.gmra.mxu0 %v1575
        %v1589 = vpop.f32.mrf.mxu0
        %v1590 = vadd.f32 0.0, %v1589
        %v1591 = vpop.f32.mrf.mxu0
        %v1592 = vadd.f32 0.0, %v1591
        %1593 = vmatmul.bf16.gmra.mxu0 %v1578
        %v1594 = vpop.f32.mrf.mxu0
        %v1595 = vadd.f32 0.0, %v1594
        %v1596 = vpop.f32.mrf.mxu0
        %v1597 = vadd.f32 0.0, %v1596
        %1598 = vdwg.mxu0
        %1599 = vmatpush.bf16.msra.mxu0 0
        %1600 = vmatpush.bf16.msra.mxu0 0
        %1601 = vmatpush.bf16.msra.mxu0 0
        %1602 = vmatpush.bf16.msra.mxu0 0
        %1603 = vmatpush.bf16.msra.mxu0 0
        %1604 = vmatpush.bf16.msra.mxu0 0
        %1605 = vmatpush.bf16.msra.mxu0 0
        %1606 = vmatpush.bf16.msra.mxu0 %v1571
        %1607 = vmatmul.bf16.gmra.mxu0 %v1575
        %v1608 = vpop.f32.mrf.mxu0
        %v1609 = vadd.f32 0.0, %v1608
        %v1610 = vpop.f32.mrf.mxu0
        %v1611 = vadd.f32 0.0, %v1610
        %1612 = vmatmul.bf16.gmra.mxu0 %v1578
        %v1613 = vpop.f32.mrf.mxu0
        %v1614 = vadd.f32 0.0, %v1613
        %v1615 = vpop.f32.mrf.mxu0
        %v1616 = vadd.f32 0.0, %v1615
        %1617 = vdwg.mxu0
        %v1618 = vld [vmem:[#allocation2] sm:$0xff]
        %v1619 = vld [vmem:[#allocation2 + $0x8] sm:$0xff]
        %v1620 = vld [vmem:[#allocation2 + $0x10] sm:$0xff]
        %v1621 = vld [vmem:[#allocation2 + $0x18] sm:$0xff]
        %v1622 = vld [vmem:[#allocation2 + $0x20] sm:$0xff]
        %v1623 = vld [vmem:[#allocation2 + $0x28] sm:$0xff]
        %v1624 = vld [vmem:[#allocation2 + $0x30] sm:$0xff]
        %v1625 = vld [vmem:[#allocation2 + $0x38] sm:$0xff]
        %v1626 = vadd.f32 %v1618, %v1590
        %v1627 = vadd.f32 %v1619, %v1609
        %v1628 = vadd.f32 %v1620, %v1592
        %v1629 = vadd.f32 %v1621, %v1611
        %v1630 = vadd.f32 %v1622, %v1595
        %v1631 = vadd.f32 %v1623, %v1614
        %v1632 = vadd.f32 %v1624, %v1597
        %v1633 = vadd.f32 %v1625, %v1616
        %1634 = vst [vmem:[#allocation2] sm:$0xff] %v1626
        %1635 = vst [vmem:[#allocation2 + $0x8] sm:$0xff] %v1627
        %1636 = vst [vmem:[#allocation2 + $0x10] sm:$0xff] %v1628
        %1637 = vst [vmem:[#allocation2 + $0x18] sm:$0xff] %v1629
        %1638 = vst [vmem:[#allocation2 + $0x20] sm:$0xff] %v1630
        %1639 = vst [vmem:[#allocation2 + $0x28] sm:$0xff] %v1631
        %1640 = vst [vmem:[#allocation2 + $0x30] sm:$0xff] %v1632
        %1641 = vst [vmem:[#allocation2 + $0x38] sm:$0xff] %v1633
        %s1642 = scalar_lea.vmem %s224, 240
        %v1643 = vld [vmem:[%s1642] sm:$0xf]
        %v1644 = vld [vmem:[%s1642 + $0x4] sm:$0xf]
        %v1645 = vld [vmem:[%s1642 + $0x8] sm:$0xf]
        %v1646 = vld [vmem:[%s1642 + $0xc] sm:$0xf]
        %v1651 = vunpack.c.l.b16 %v1643
        %v1652 = vunpack.c.l.b16 %v1644
        %v1653 = vunpack.c.l.b16 %v1645
        %v1654 = vunpack.c.l.b16 %v1646
        %v1655 = vpack.c.b16 %v1652, %v1651
        %v1656 = vpack.c.b16 %v1654, %v1653
        %1657 = vrot.lane.b32.xlu0 %v264, 51
        %v1658 = vpop.permute.xlu0 %1657
        %1659 = vrot.lane.b32.xlu0 %v265, 51
        %v1660 = vpop.permute.xlu0 %1659
        %1661 = vrot.lane.b32.xlu0 %v340, 51
        %v1662 = vpop.permute.xlu0 %1661
        %vm1663 = vcmask 416768
        %v1664 = vsel %vm1663, %v1658, %v1660
        %v1665 = vsel %vm1663, %v1660, %v1662
        %v1669 = vsel %vm268, %v1655, 0
        %v1672 = vsel %vm268, %v1656, 0
        %1674 = vmatpush.bf16.msra.mxu0 0
        %1675 = vmatpush.bf16.msra.mxu0 0
        %1676 = vmatpush.bf16.msra.mxu0 0
        %1677 = vmatpush.bf16.msra.mxu0 0
        %1678 = vmatpush.bf16.msra.mxu0 0
        %1679 = vmatpush.bf16.msra.mxu0 0
        %1680 = vmatpush.bf16.msra.mxu0 0
        %1681 = vmatpush.bf16.msra.mxu0 %v1664
        %1682 = vmatmul.bf16.gmra.mxu0 %v1669
        %v1683 = vpop.f32.mrf.mxu0
        %v1684 = vadd.f32 0.0, %v1683
        %v1685 = vpop.f32.mrf.mxu0
        %v1686 = vadd.f32 0.0, %v1685
        %1687 = vmatmul.bf16.gmra.mxu0 %v1672
        %v1688 = vpop.f32.mrf.mxu0
        %v1689 = vadd.f32 0.0, %v1688
        %v1690 = vpop.f32.mrf.mxu0
        %v1691 = vadd.f32 0.0, %v1690
        %1692 = vdwg.mxu0
        %1693 = vmatpush.bf16.msra.mxu0 0
        %1694 = vmatpush.bf16.msra.mxu0 0
        %1695 = vmatpush.bf16.msra.mxu0 0
        %1696 = vmatpush.bf16.msra.mxu0 0
        %1697 = vmatpush.bf16.msra.mxu0 0
        %1698 = vmatpush.bf16.msra.mxu0 0
        %1699 = vmatpush.bf16.msra.mxu0 0
        %1700 = vmatpush.bf16.msra.mxu0 %v1665
        %1701 = vmatmul.bf16.gmra.mxu0 %v1669
        %v1702 = vpop.f32.mrf.mxu0
        %v1703 = vadd.f32 0.0, %v1702
        %v1704 = vpop.f32.mrf.mxu0
        %v1705 = vadd.f32 0.0, %v1704
        %1706 = vmatmul.bf16.gmra.mxu0 %v1672
        %v1707 = vpop.f32.mrf.mxu0
        %v1708 = vadd.f32 0.0, %v1707
        %v1709 = vpop.f32.mrf.mxu0
        %v1710 = vadd.f32 0.0, %v1709
        %1711 = vdwg.mxu0
        %v1712 = vld [vmem:[#allocation2] sm:$0xff]
        %v1713 = vld [vmem:[#allocation2 + $0x8] sm:$0xff]
        %v1714 = vld [vmem:[#allocation2 + $0x10] sm:$0xff]
        %v1715 = vld [vmem:[#allocation2 + $0x18] sm:$0xff]
        %v1716 = vld [vmem:[#allocation2 + $0x20] sm:$0xff]
        %v1717 = vld [vmem:[#allocation2 + $0x28] sm:$0xff]
        %v1718 = vld [vmem:[#allocation2 + $0x30] sm:$0xff]
        %v1719 = vld [vmem:[#allocation2 + $0x38] sm:$0xff]
        %v1720 = vadd.f32 %v1712, %v1684
        %v1721 = vadd.f32 %v1713, %v1703
        %v1722 = vadd.f32 %v1714, %v1686
        %v1723 = vadd.f32 %v1715, %v1705
        %v1724 = vadd.f32 %v1716, %v1689
        %v1725 = vadd.f32 %v1717, %v1708
        %v1726 = vadd.f32 %v1718, %v1691
        %v1727 = vadd.f32 %v1719, %v1710
        %1728 = vst [vmem:[#allocation2] sm:$0xff] %v1720
        %1729 = vst [vmem:[#allocation2 + $0x8] sm:$0xff] %v1721
        %1730 = vst [vmem:[#allocation2 + $0x10] sm:$0xff] %v1722
        %1731 = vst [vmem:[#allocation2 + $0x18] sm:$0xff] %v1723
        %1732 = vst [vmem:[#allocation2 + $0x20] sm:$0xff] %v1724
        %1733 = vst [vmem:[#allocation2 + $0x28] sm:$0xff] %v1725
        %1734 = vst [vmem:[#allocation2 + $0x30] sm:$0xff] %v1726
        %1735 = vst [vmem:[#allocation2 + $0x38] sm:$0xff] %v1727
        %s1736 = scalar_lea.vmem %s224, 256
        %v1737 = vld [vmem:[%s1736] sm:$0xf]
        %v1738 = vld [vmem:[%s1736 + $0x4] sm:$0xf]
        %v1739 = vld [vmem:[%s1736 + $0x8] sm:$0xf]
        %v1740 = vld [vmem:[%s1736 + $0xc] sm:$0xf]
        %v1745 = vunpack.c.l.b16 %v1737
        %v1746 = vunpack.c.l.b16 %v1738
        %v1747 = vunpack.c.l.b16 %v1739
        %v1748 = vunpack.c.l.b16 %v1740
        %v1749 = vpack.c.b16 %v1746, %v1745
        %v1750 = vpack.c.b16 %v1748, %v1747
        %1751 = vrot.lane.b32.xlu0 %v264, 50
        %v1752 = vpop.permute.xlu0 %1751
        %1753 = vrot.lane.b32.xlu0 %v265, 50
        %v1754 = vpop.permute.xlu0 %1753
        %1755 = vrot.lane.b32.xlu0 %v340, 50
        %v1756 = vpop.permute.xlu0 %1755
        %vm1757 = vcmask 408576
        %v1758 = vsel %vm1757, %v1752, %v1754
        %v1759 = vsel %vm1757, %v1754, %v1756
        %v1763 = vsel %vm268, %v1749, 0
        %v1766 = vsel %vm268, %v1750, 0
        %1768 = vmatpush.bf16.msra.mxu0 0
        %1769 = vmatpush.bf16.msra.mxu0 0
        %1770 = vmatpush.bf16.msra.mxu0 0
        %1771 = vmatpush.bf16.msra.mxu0 0
        %1772 = vmatpush.bf16.msra.mxu0 0
        %1773 = vmatpush.bf16.msra.mxu0 0
        %1774 = vmatpush.bf16.msra.mxu0 0
        %1775 = vmatpush.bf16.msra.mxu0 %v1758
        %1776 = vmatmul.bf16.gmra.mxu0 %v1763
        %v1777 = vpop.f32.mrf.mxu0
        %v1778 = vadd.f32 0.0, %v1777
        %v1779 = vpop.f32.mrf.mxu0
        %v1780 = vadd.f32 0.0, %v1779
        %1781 = vmatmul.bf16.gmra.mxu0 %v1766
        %v1782 = vpop.f32.mrf.mxu0
        %v1783 = vadd.f32 0.0, %v1782
        %v1784 = vpop.f32.mrf.mxu0
        %v1785 = vadd.f32 0.0, %v1784
        %1786 = vdwg.mxu0
        %1787 = vmatpush.bf16.msra.mxu0 0
        %1788 = vmatpush.bf16.msra.mxu0 0
        %1789 = vmatpush.bf16.msra.mxu0 0
        %1790 = vmatpush.bf16.msra.mxu0 0
        %1791 = vmatpush.bf16.msra.mxu0 0
        %1792 = vmatpush.bf16.msra.mxu0 0
        %1793 = vmatpush.bf16.msra.mxu0 0
        %1794 = vmatpush.bf16.msra.mxu0 %v1759
        %1795 = vmatmul.bf16.gmra.mxu0 %v1763
        %v1796 = vpop.f32.mrf.mxu0
        %v1797 = vadd.f32 0.0, %v1796
        %v1798 = vpop.f32.mrf.mxu0
        %v1799 = vadd.f32 0.0, %v1798
        %1800 = vmatmul.bf16.gmra.mxu0 %v1766
        %v1801 = vpop.f32.mrf.mxu0
        %v1802 = vadd.f32 0.0, %v1801
        %v1803 = vpop.f32.mrf.mxu0
        %v1804 = vadd.f32 0.0, %v1803
        %1805 = vdwg.mxu0
        %v1806 = vld [vmem:[#allocation2] sm:$0xff]
        %v1807 = vld [vmem:[#allocation2 + $0x8] sm:$0xff]
        %v1808 = vld [vmem:[#allocation2 + $0x10] sm:$0xff]
        %v1809 = vld [vmem:[#allocation2 + $0x18] sm:$0xff]
        %v1810 = vld [vmem:[#allocation2 + $0x20] sm:$0xff]
        %v1811 = vld [vmem:[#allocation2 + $0x28] sm:$0xff]
        %v1812 = vld [vmem:[#allocation2 + $0x30] sm:$0xff]
        %v1813 = vld [vmem:[#allocation2 + $0x38] sm:$0xff]
        %v1814 = vadd.f32 %v1806, %v1778
        %v1815 = vadd.f32 %v1807, %v1797
        %v1816 = vadd.f32 %v1808, %v1780
        %v1817 = vadd.f32 %v1809, %v1799
        %v1818 = vadd.f32 %v1810, %v1783
        %v1819 = vadd.f32 %v1811, %v1802
        %v1820 = vadd.f32 %v1812, %v1785
        %v1821 = vadd.f32 %v1813, %v1804
        %1822 = vst [vmem:[#allocation2] sm:$0xff] %v1814
        %1823 = vst [vmem:[#allocation2 + $0x8] sm:$0xff] %v1815
        %1824 = vst [vmem:[#allocation2 + $0x10] sm:$0xff] %v1816
        %1825 = vst [vmem:[#allocation2 + $0x18] sm:$0xff] %v1817
        %1826 = vst [vmem:[#allocation2 + $0x20] sm:$0xff] %v1818
        %1827 = vst [vmem:[#allocation2 + $0x28] sm:$0xff] %v1819
        %1828 = vst [vmem:[#allocation2 + $0x30] sm:$0xff] %v1820
        %1829 = vst [vmem:[#allocation2 + $0x38] sm:$0xff] %v1821
        %s1830 = scalar_lea.vmem %s224, 272
        %v1831 = vld [vmem:[%s1830] sm:$0xf]
        %v1832 = vld [vmem:[%s1830 + $0x4] sm:$0xf]
        %v1833 = vld [vmem:[%s1830 + $0x8] sm:$0xf]
        %v1834 = vld [vmem:[%s1830 + $0xc] sm:$0xf]
        %v1839 = vunpack.c.l.b16 %v1831
        %v1840 = vunpack.c.l.b16 %v1832
        %v1841 = vunpack.c.l.b16 %v1833
        %v1842 = vunpack.c.l.b16 %v1834
        %v1843 = vpack.c.b16 %v1840, %v1839
        %v1844 = vpack.c.b16 %v1842, %v1841
        %1845 = vrot.lane.b32.xlu0 %v264, 49
        %v1846 = vpop.permute.xlu0 %1845
        %1847 = vrot.lane.b32.xlu0 %v265, 49
        %v1848 = vpop.permute.xlu0 %1847
        %1849 = vrot.lane.b32.xlu0 %v340, 49
        %v1850 = vpop.permute.xlu0 %1849
        %vm1851 = vcmask 400384
        %v1852 = vsel %vm1851, %v1846, %v1848
        %v1853 = vsel %vm1851, %v1848, %v1850
        %v1857 = vsel %vm268, %v1843, 0
        %v1860 = vsel %vm268, %v1844, 0
        %1862 = vmatpush.bf16.msra.mxu0 0
        %1863 = vmatpush.bf16.msra.mxu0 0
        %1864 = vmatpush.bf16.msra.mxu0 0
        %1865 = vmatpush.bf16.msra.mxu0 0
        %1866 = vmatpush.bf16.msra.mxu0 0
        %1867 = vmatpush.bf16.msra.mxu0 0
        %1868 = vmatpush.bf16.msra.mxu0 0
        %1869 = vmatpush.bf16.msra.mxu0 %v1852
        %1870 = vmatmul.bf16.gmra.mxu0 %v1857
        %v1871 = vpop.f32.mrf.mxu0
        %v1872 = vadd.f32 0.0, %v1871
        %v1873 = vpop.f32.mrf.mxu0
        %v1874 = vadd.f32 0.0, %v1873
        %1875 = vmatmul.bf16.gmra.mxu0 %v1860
        %v1876 = vpop.f32.mrf.mxu0
        %v1877 = vadd.f32 0.0, %v1876
        %v1878 = vpop.f32.mrf.mxu0
        %v1879 = vadd.f32 0.0, %v1878
        %1880 = vdwg.mxu0
        %1881 = vmatpush.bf16.msra.mxu0 0
        %1882 = vmatpush.bf16.msra.mxu0 0
        %1883 = vmatpush.bf16.msra.mxu0 0
        %1884 = vmatpush.bf16.msra.mxu0 0
        %1885 = vmatpush.bf16.msra.mxu0 0
        %1886 = vmatpush.bf16.msra.mxu0 0
        %1887 = vmatpush.bf16.msra.mxu0 0
        %1888 = vmatpush.bf16.msra.mxu0 %v1853
        %1889 = vmatmul.bf16.gmra.mxu0 %v1857
        %v1890 = vpop.f32.mrf.mxu0
        %v1891 = vadd.f32 0.0, %v1890
        %v1892 = vpop.f32.mrf.mxu0
        %v1893 = vadd.f32 0.0, %v1892
        %1894 = vmatmul.bf16.gmra.mxu0 %v1860
        %v1895 = vpop.f32.mrf.mxu0
        %v1896 = vadd.f32 0.0, %v1895
        %v1897 = vpop.f32.mrf.mxu0
        %v1898 = vadd.f32 0.0, %v1897
        %1899 = vdwg.mxu0
        %v1900 = vld [vmem:[#allocation2] sm:$0xff]
        %v1901 = vld [vmem:[#allocation2 + $0x8] sm:$0xff]
        %v1902 = vld [vmem:[#allocation2 + $0x10] sm:$0xff]
        %v1903 = vld [vmem:[#allocation2 + $0x18] sm:$0xff]
        %v1904 = vld [vmem:[#allocation2 + $0x20] sm:$0xff]
        %v1905 = vld [vmem:[#allocation2 + $0x28] sm:$0xff]
        %v1906 = vld [vmem:[#allocation2 + $0x30] sm:$0xff]
        %v1907 = vld [vmem:[#allocation2 + $0x38] sm:$0xff]
        %v1908 = vadd.f32 %v1900, %v1872
        %v1909 = vadd.f32 %v1901, %v1891
        %v1910 = vadd.f32 %v1902, %v1874
        %v1911 = vadd.f32 %v1903, %v1893
        %v1912 = vadd.f32 %v1904, %v1877
        %v1913 = vadd.f32 %v1905, %v1896
        %v1914 = vadd.f32 %v1906, %v1879
        %v1915 = vadd.f32 %v1907, %v1898
        %1916 = vst [vmem:[#allocation2] sm:$0xff] %v1908
        %1917 = vst [vmem:[#allocation2 + $0x8] sm:$0xff] %v1909
        %1918 = vst [vmem:[#allocation2 + $0x10] sm:$0xff] %v1910
        %1919 = vst [vmem:[#allocation2 + $0x18] sm:$0xff] %v1911
        %1920 = vst [vmem:[#allocation2 + $0x20] sm:$0xff] %v1912
        %1921 = vst [vmem:[#allocation2 + $0x28] sm:$0xff] %v1913
        %1922 = vst [vmem:[#allocation2 + $0x30] sm:$0xff] %v1914
        %1923 = vst [vmem:[#allocation2 + $0x38] sm:$0xff] %v1915
        %s1924 = scalar_lea.vmem %s224, 288
        %v1925 = vld [vmem:[%s1924] sm:$0xf]
        %v1926 = vld [vmem:[%s1924 + $0x4] sm:$0xf]
        %v1927 = vld [vmem:[%s1924 + $0x8] sm:$0xf]
        %v1928 = vld [vmem:[%s1924 + $0xc] sm:$0xf]
        %v1933 = vunpack.c.l.b16 %v1925
        %v1934 = vunpack.c.l.b16 %v1926
        %v1935 = vunpack.c.l.b16 %v1927
        %v1936 = vunpack.c.l.b16 %v1928
        %v1937 = vpack.c.b16 %v1934, %v1933
        %v1938 = vpack.c.b16 %v1936, %v1935
        %1939 = vrot.lane.b32.xlu0 %v264, 48
        %v1940 = vpop.permute.xlu0 %1939
        %1941 = vrot.lane.b32.xlu0 %v265, 48
        %v1942 = vpop.permute.xlu0 %1941
        %1943 = vrot.lane.b32.xlu0 %v340, 48
        %v1944 = vpop.permute.xlu0 %1943
        %vm1945 = vcmask 392192
        %v1946 = vsel %vm1945, %v1940, %v1942
        %v1947 = vsel %vm1945, %v1942, %v1944
        %v1951 = vsel %vm268, %v1937, 0
        %v1954 = vsel %vm268, %v1938, 0
        %1956 = vmatpush.bf16.msra.mxu0 0
        %1957 = vmatpush.bf16.msra.mxu0 0
        %1958 = vmatpush.bf16.msra.mxu0 0
        %1959 = vmatpush.bf16.msra.mxu0 0
        %1960 = vmatpush.bf16.msra.mxu0 0
        %1961 = vmatpush.bf16.msra.mxu0 0
        %1962 = vmatpush.bf16.msra.mxu0 0
        %1963 = vmatpush.bf16.msra.mxu0 %v1946
        %1964 = vmatmul.bf16.gmra.mxu0 %v1951
        %v1965 = vpop.f32.mrf.mxu0
        %v1966 = vadd.f32 0.0, %v1965
        %v1967 = vpop.f32.mrf.mxu0
        %v1968 = vadd.f32 0.0, %v1967
        %1969 = vmatmul.bf16.gmra.mxu0 %v1954
        %v1970 = vpop.f32.mrf.mxu0
        %v1971 = vadd.f32 0.0, %v1970
        %v1972 = vpop.f32.mrf.mxu0
        %v1973 = vadd.f32 0.0, %v1972
        %1974 = vdwg.mxu0
        %1975 = vmatpush.bf16.msra.mxu0 0
        %1976 = vmatpush.bf16.msra.mxu0 0
        %1977 = vmatpush.bf16.msra.mxu0 0
        %1978 = vmatpush.bf16.msra.mxu0 0
        %1979 = vmatpush.bf16.msra.mxu0 0
        %1980 = vmatpush.bf16.msra.mxu0 0
        %1981 = vmatpush.bf16.msra.mxu0 0
        %1982 = vmatpush.bf16.msra.mxu0 %v1947
        %1983 = vmatmul.bf16.gmra.mxu0 %v1951
        %v1984 = vpop.f32.mrf.mxu0
        %v1985 = vadd.f32 0.0, %v1984
        %v1986 = vpop.f32.mrf.mxu0
        %v1987 = vadd.f32 0.0, %v1986
        %1988 = vmatmul.bf16.gmra.mxu0 %v1954
        %v1989 = vpop.f32.mrf.mxu0
        %v1990 = vadd.f32 0.0, %v1989
        %v1991 = vpop.f32.mrf.mxu0
        %v1992 = vadd.f32 0.0, %v1991
        %1993 = vdwg.mxu0
        %v1994 = vld [vmem:[#allocation2] sm:$0xff]
        %v1995 = vld [vmem:[#allocation2 + $0x8] sm:$0xff]
        %v1996 = vld [vmem:[#allocation2 + $0x10] sm:$0xff]
        %v1997 = vld [vmem:[#allocation2 + $0x18] sm:$0xff]
        %v1998 = vld [vmem:[#allocation2 + $0x20] sm:$0xff]
        %v1999 = vld [vmem:[#allocation2 + $0x28] sm:$0xff]
        %v2000 = vld [vmem:[#allocation2 + $0x30] sm:$0xff]
        %v2001 = vld [vmem:[#allocation2 + $0x38] sm:$0xff]
        %v2002 = vadd.f32 %v1994, %v1966
        %v2003 = vadd.f32 %v1995, %v1985
        %v2004 = vadd.f32 %v1996, %v1968
        %v2005 = vadd.f32 %v1997, %v1987
        %v2006 = vadd.f32 %v1998, %v1971
        %v2007 = vadd.f32 %v1999, %v1990
        %v2008 = vadd.f32 %v2000, %v1973
        %v2009 = vadd.f32 %v2001, %v1992
        %2010 = vst [vmem:[#allocation2] sm:$0xff] %v2002
        %2011 = vst [vmem:[#allocation2 + $0x8] sm:$0xff] %v2003
        %2012 = vst [vmem:[#allocation2 + $0x10] sm:$0xff] %v2004
        %2013 = vst [vmem:[#allocation2 + $0x18] sm:$0xff] %v2005
        %2014 = vst [vmem:[#allocation2 + $0x20] sm:$0xff] %v2006
        %2015 = vst [vmem:[#allocation2 + $0x28] sm:$0xff] %v2007
        %2016 = vst [vmem:[#allocation2 + $0x30] sm:$0xff] %v2008
        %2017 = vst [vmem:[#allocation2 + $0x38] sm:$0xff] %v2009
        %s2018 = scalar_lea.vmem %s224, 304
        %v2019 = vld [vmem:[%s2018] sm:$0xf]
        %v2020 = vld [vmem:[%s2018 + $0x4] sm:$0xf]
        %v2021 = vld [vmem:[%s2018 + $0x8] sm:$0xf]
        %v2022 = vld [vmem:[%s2018 + $0xc] sm:$0xf]
        %v2027 = vunpack.c.l.b16 %v2019
        %v2028 = vunpack.c.l.b16 %v2020
        %v2029 = vunpack.c.l.b16 %v2021
        %v2030 = vunpack.c.l.b16 %v2022
        %v2031 = vpack.c.b16 %v2028, %v2027
        %v2032 = vpack.c.b16 %v2030, %v2029
        %2033 = vrot.lane.b32.xlu0 %v264, 47
        %v2034 = vpop.permute.xlu0 %2033
        %2035 = vrot.lane.b32.xlu0 %v265, 47
        %v2036 = vpop.permute.xlu0 %2035
        %2037 = vrot.lane.b32.xlu0 %v340, 47
        %v2038 = vpop.permute.xlu0 %2037
        %vm2039 = vcmask 384000
        %v2040 = vsel %vm2039, %v2034, %v2036
        %v2041 = vsel %vm2039, %v2036, %v2038
        %v2045 = vsel %vm268, %v2031, 0
        %v2048 = vsel %vm268, %v2032, 0
        %2050 = vmatpush.bf16.msra.mxu0 0
        %2051 = vmatpush.bf16.msra.mxu0 0
        %2052 = vmatpush.bf16.msra.mxu0 0
        %2053 = vmatpush.bf16.msra.mxu0 0
        %2054 = vmatpush.bf16.msra.mxu0 0
        %2055 = vmatpush.bf16.msra.mxu0 0
        %2056 = vmatpush.bf16.msra.mxu0 0
        %2057 = vmatpush.bf16.msra.mxu0 %v2040
        %2058 = vmatmul.bf16.gmra.mxu0 %v2045
        %v2059 = vpop.f32.mrf.mxu0
        %v2060 = vadd.f32 0.0, %v2059
        %v2061 = vpop.f32.mrf.mxu0
        %v2062 = vadd.f32 0.0, %v2061
        %2063 = vmatmul.bf16.gmra.mxu0 %v2048
        %v2064 = vpop.f32.mrf.mxu0
        %v2065 = vadd.f32 0.0, %v2064
        %v2066 = vpop.f32.mrf.mxu0
        %v2067 = vadd.f32 0.0, %v2066
        %2068 = vdwg.mxu0
        %2069 = vmatpush.bf16.msra.mxu0 0
        %2070 = vmatpush.bf16.msra.mxu0 0
        %2071 = vmatpush.bf16.msra.mxu0 0
        %2072 = vmatpush.bf16.msra.mxu0 0
        %2073 = vmatpush.bf16.msra.mxu0 0
        %2074 = vmatpush.bf16.msra.mxu0 0
        %2075 = vmatpush.bf16.msra.mxu0 0
        %2076 = vmatpush.bf16.msra.mxu0 %v2041
        %2077 = vmatmul.bf16.gmra.mxu0 %v2045
        %v2078 = vpop.f32.mrf.mxu0
        %v2079 = vadd.f32 0.0, %v2078
        %v2080 = vpop.f32.mrf.mxu0
        %v2081 = vadd.f32 0.0, %v2080
        %2082 = vmatmul.bf16.gmra.mxu0 %v2048
        %v2083 = vpop.f32.mrf.mxu0
        %v2084 = vadd.f32 0.0, %v2083
        %v2085 = vpop.f32.mrf.mxu0
        %v2086 = vadd.f32 0.0, %v2085
        %2087 = vdwg.mxu0
        %v2088 = vld [vmem:[#allocation2] sm:$0xff]
        %v2089 = vld [vmem:[#allocation2 + $0x8] sm:$0xff]
        %v2090 = vld [vmem:[#allocation2 + $0x10] sm:$0xff]
        %v2091 = vld [vmem:[#allocation2 + $0x18] sm:$0xff]
        %v2092 = vld [vmem:[#allocation2 + $0x20] sm:$0xff]
        %v2093 = vld [vmem:[#allocation2 + $0x28] sm:$0xff]
        %v2094 = vld [vmem:[#allocation2 + $0x30] sm:$0xff]
        %v2095 = vld [vmem:[#allocation2 + $0x38] sm:$0xff]
        %v2096 = vadd.f32 %v2088, %v2060
        %v2097 = vadd.f32 %v2089, %v2079
        %v2098 = vadd.f32 %v2090, %v2062
        %v2099 = vadd.f32 %v2091, %v2081
        %v2100 = vadd.f32 %v2092, %v2065
        %v2101 = vadd.f32 %v2093, %v2084
        %v2102 = vadd.f32 %v2094, %v2067
        %v2103 = vadd.f32 %v2095, %v2086
        %2104 = vst [vmem:[#allocation2] sm:$0xff] %v2096
        %2105 = vst [vmem:[#allocation2 + $0x8] sm:$0xff] %v2097
        %2106 = vst [vmem:[#allocation2 + $0x10] sm:$0xff] %v2098
        %2107 = vst [vmem:[#allocation2 + $0x18] sm:$0xff] %v2099
        %2108 = vst [vmem:[#allocation2 + $0x20] sm:$0xff] %v2100
        %2109 = vst [vmem:[#allocation2 + $0x28] sm:$0xff] %v2101
        %2110 = vst [vmem:[#allocation2 + $0x30] sm:$0xff] %v2102
        %2111 = vst [vmem:[#allocation2 + $0x38] sm:$0xff] %v2103
        %s2112 = scalar_lea.vmem %s224, 320
        %v2113 = vld [vmem:[%s2112] sm:$0xf]
        %v2114 = vld [vmem:[%s2112 + $0x4] sm:$0xf]
        %v2115 = vld [vmem:[%s2112 + $0x8] sm:$0xf]
        %v2116 = vld [vmem:[%s2112 + $0xc] sm:$0xf]
        %v2121 = vunpack.c.l.b16 %v2113
        %v2122 = vunpack.c.l.b16 %v2114
        %v2123 = vunpack.c.l.b16 %v2115
        %v2124 = vunpack.c.l.b16 %v2116
        %v2125 = vpack.c.b16 %v2122, %v2121
        %v2126 = vpack.c.b16 %v2124, %v2123
        %2127 = vrot.lane.b32.xlu0 %v264, 46
        %v2128 = vpop.permute.xlu0 %2127
        %2129 = vrot.lane.b32.xlu0 %v265, 46
        %v2130 = vpop.permute.xlu0 %2129
        %2131 = vrot.lane.b32.xlu0 %v340, 46
        %v2132 = vpop.permute.xlu0 %2131
        %vm2133 = vcmask 375808
        %v2134 = vsel %vm2133, %v2128, %v2130
        %v2135 = vsel %vm2133, %v2130, %v2132
        %v2139 = vsel %vm268, %v2125, 0
        %v2142 = vsel %vm268, %v2126, 0
        %2144 = vmatpush.bf16.msra.mxu0 0
        %2145 = vmatpush.bf16.msra.mxu0 0
        %2146 = vmatpush.bf16.msra.mxu0 0
        %2147 = vmatpush.bf16.msra.mxu0 0
        %2148 = vmatpush.bf16.msra.mxu0 0
        %2149 = vmatpush.bf16.msra.mxu0 0
        %2150 = vmatpush.bf16.msra.mxu0 0
        %2151 = vmatpush.bf16.msra.mxu0 %v2134
        %2152 = vmatmul.bf16.gmra.mxu0 %v2139
        %v2153 = vpop.f32.mrf.mxu0
        %v2154 = vadd.f32 0.0, %v2153
        %v2155 = vpop.f32.mrf.mxu0
        %v2156 = vadd.f32 0.0, %v2155
        %2157 = vmatmul.bf16.gmra.mxu0 %v2142
        %v2158 = vpop.f32.mrf.mxu0
        %v2159 = vadd.f32 0.0, %v2158
        %v2160 = vpop.f32.mrf.mxu0
        %v2161 = vadd.f32 0.0, %v2160
        %2162 = vdwg.mxu0
        %2163 = vmatpush.bf16.msra.mxu0 0
        %2164 = vmatpush.bf16.msra.mxu0 0
        %2165 = vmatpush.bf16.msra.mxu0 0
        %2166 = vmatpush.bf16.msra.mxu0 0
        %2167 = vmatpush.bf16.msra.mxu0 0
        %2168 = vmatpush.bf16.msra.mxu0 0
        %2169 = vmatpush.bf16.msra.mxu0 0
        %2170 = vmatpush.bf16.msra.mxu0 %v2135
        %2171 = vmatmul.bf16.gmra.mxu0 %v2139
        %v2172 = vpop.f32.mrf.mxu0
        %v2173 = vadd.f32 0.0, %v2172
        %v2174 = vpop.f32.mrf.mxu0
        %v2175 = vadd.f32 0.0, %v2174
        %2176 = vmatmul.bf16.gmra.mxu0 %v2142
        %v2177 = vpop.f32.mrf.mxu0
        %v2178 = vadd.f32 0.0, %v2177
        %v2179 = vpop.f32.mrf.mxu0
        %v2180 = vadd.f32 0.0, %v2179
        %2181 = vdwg.mxu0
        %v2182 = vld [vmem:[#allocation2] sm:$0xff]
        %v2183 = vld [vmem:[#allocation2 + $0x8] sm:$0xff]
        %v2184 = vld [vmem:[#allocation2 + $0x10] sm:$0xff]
        %v2185 = vld [vmem:[#allocation2 + $0x18] sm:$0xff]
        %v2186 = vld [vmem:[#allocation2 + $0x20] sm:$0xff]
        %v2187 = vld [vmem:[#allocation2 + $0x28] sm:$0xff]
        %v2188 = vld [vmem:[#allocation2 + $0x30] sm:$0xff]
        %v2189 = vld [vmem:[#allocation2 + $0x38] sm:$0xff]
        %v2190 = vadd.f32 %v2182, %v2154
        %v2191 = vadd.f32 %v2183, %v2173
        %v2192 = vadd.f32 %v2184, %v2156
        %v2193 = vadd.f32 %v2185, %v2175
        %v2194 = vadd.f32 %v2186, %v2159
        %v2195 = vadd.f32 %v2187, %v2178
        %v2196 = vadd.f32 %v2188, %v2161
        %v2197 = vadd.f32 %v2189, %v2180
        %2198 = vst [vmem:[#allocation2] sm:$0xff] %v2190
        %2199 = vst [vmem:[#allocation2 + $0x8] sm:$0xff] %v2191
        %2200 = vst [vmem:[#allocation2 + $0x10] sm:$0xff] %v2192
        %2201 = vst [vmem:[#allocation2 + $0x18] sm:$0xff] %v2193
        %2202 = vst [vmem:[#allocation2 + $0x20] sm:$0xff] %v2194
        %2203 = vst [vmem:[#allocation2 + $0x28] sm:$0xff] %v2195
        %2204 = vst [vmem:[#allocation2 + $0x30] sm:$0xff] %v2196
        %2205 = vst [vmem:[#allocation2 + $0x38] sm:$0xff] %v2197
        %s2206 = scalar_lea.vmem %s224, 336
        %v2207 = vld [vmem:[%s2206] sm:$0xf]
        %v2208 = vld [vmem:[%s2206 + $0x4] sm:$0xf]
        %v2209 = vld [vmem:[%s2206 + $0x8] sm:$0xf]
        %v2210 = vld [vmem:[%s2206 + $0xc] sm:$0xf]
        %v2215 = vunpack.c.l.b16 %v2207
        %v2216 = vunpack.c.l.b16 %v2208
        %v2217 = vunpack.c.l.b16 %v2209
        %v2218 = vunpack.c.l.b16 %v2210
        %v2219 = vpack.c.b16 %v2216, %v2215
        %v2220 = vpack.c.b16 %v2218, %v2217
        %2221 = vrot.lane.b32.xlu0 %v264, 14
        %v2222 = vpop.permute.xlu0 %2221
        %2223 = vrot.lane.b32.xlu0 %v265, 14
        %v2224 = vpop.permute.xlu0 %2223
        %2225 = vrot.lane.b32.xlu0 %v340, 14
        %v2226 = vpop.permute.xlu0 %2225
        %vm2227 = vcmask 113664
        %v2228 = vsel %vm2227, %v2222, %v2224
        %v2229 = vsel %vm2227, %v2224, %v2226
        %v2233 = vsel %vm268, %v2219, 0
        %v2236 = vsel %vm268, %v2220, 0
        %2238 = vmatpush.bf16.msra.mxu0 0
        %2239 = vmatpush.bf16.msra.mxu0 0
        %2240 = vmatpush.bf16.msra.mxu0 0
        %2241 = vmatpush.bf16.msra.mxu0 0
        %2242 = vmatpush.bf16.msra.mxu0 0
        %2243 = vmatpush.bf16.msra.mxu0 0
        %2244 = vmatpush.bf16.msra.mxu0 0
        %2245 = vmatpush.bf16.msra.mxu0 %v2228
        %2246 = vmatmul.bf16.gmra.mxu0 %v2233
        %v2247 = vpop.f32.mrf.mxu0
        %v2248 = vadd.f32 0.0, %v2247
        %v2249 = vpop.f32.mrf.mxu0
        %v2250 = vadd.f32 0.0, %v2249
        %2251 = vmatmul.bf16.gmra.mxu0 %v2236
        %v2252 = vpop.f32.mrf.mxu0
        %v2253 = vadd.f32 0.0, %v2252
        %v2254 = vpop.f32.mrf.mxu0
        %v2255 = vadd.f32 0.0, %v2254
        %2256 = vdwg.mxu0
        %2257 = vmatpush.bf16.msra.mxu0 0
        %2258 = vmatpush.bf16.msra.mxu0 0
        %2259 = vmatpush.bf16.msra.mxu0 0
        %2260 = vmatpush.bf16.msra.mxu0 0
        %2261 = vmatpush.bf16.msra.mxu0 0
        %2262 = vmatpush.bf16.msra.mxu0 0
        %2263 = vmatpush.bf16.msra.mxu0 0
        %2264 = vmatpush.bf16.msra.mxu0 %v2229
        %2265 = vmatmul.bf16.gmra.mxu0 %v2233
        %v2266 = vpop.f32.mrf.mxu0
        %v2267 = vadd.f32 0.0, %v2266
        %v2268 = vpop.f32.mrf.mxu0
        %v2269 = vadd.f32 0.0, %v2268
        %2270 = vmatmul.bf16.gmra.mxu0 %v2236
        %v2271 = vpop.f32.mrf.mxu0
        %v2272 = vadd.f32 0.0, %v2271
        %v2273 = vpop.f32.mrf.mxu0
        %v2274 = vadd.f32 0.0, %v2273
        %2275 = vdwg.mxu0
        %v2276 = vld [vmem:[#allocation2] sm:$0xff]
        %v2277 = vld [vmem:[#allocation2 + $0x8] sm:$0xff]
        %v2278 = vld [vmem:[#allocation2 + $0x10] sm:$0xff]
        %v2279 = vld [vmem:[#allocation2 + $0x18] sm:$0xff]
        %v2280 = vld [vmem:[#allocation2 + $0x20] sm:$0xff]
        %v2281 = vld [vmem:[#allocation2 + $0x28] sm:$0xff]
        %v2282 = vld [vmem:[#allocation2 + $0x30] sm:$0xff]
        %v2283 = vld [vmem:[#allocation2 + $0x38] sm:$0xff]
        %v2284 = vadd.f32 %v2276, %v2248
        %v2285 = vadd.f32 %v2277, %v2267
        %v2286 = vadd.f32 %v2278, %v2250
        %v2287 = vadd.f32 %v2279, %v2269
        %v2288 = vadd.f32 %v2280, %v2253
        %v2289 = vadd.f32 %v2281, %v2272
        %v2290 = vadd.f32 %v2282, %v2255
        %v2291 = vadd.f32 %v2283, %v2274
        %2292 = vst [vmem:[#allocation2] sm:$0xff] %v2284
        %2293 = vst [vmem:[#allocation2 + $0x8] sm:$0xff] %v2285
        %2294 = vst [vmem:[#allocation2 + $0x10] sm:$0xff] %v2286
        %2295 = vst [vmem:[#allocation2 + $0x18] sm:$0xff] %v2287
        %2296 = vst [vmem:[#allocation2 + $0x20] sm:$0xff] %v2288
        %2297 = vst [vmem:[#allocation2 + $0x28] sm:$0xff] %v2289
        %2298 = vst [vmem:[#allocation2 + $0x30] sm:$0xff] %v2290
        %2299 = vst [vmem:[#allocation2 + $0x38] sm:$0xff] %v2291
        %s2300 = scalar_lea.vmem %s224, 352
        %v2301 = vld [vmem:[%s2300] sm:$0xf]
        %v2302 = vld [vmem:[%s2300 + $0x4] sm:$0xf]
        %v2303 = vld [vmem:[%s2300 + $0x8] sm:$0xf]
        %v2304 = vld [vmem:[%s2300 + $0xc] sm:$0xf]
        %v2309 = vunpack.c.l.b16 %v2301
        %v2310 = vunpack.c.l.b16 %v2302
        %v2311 = vunpack.c.l.b16 %v2303
        %v2312 = vunpack.c.l.b16 %v2304
        %v2313 = vpack.c.b16 %v2310, %v2309
        %v2314 = vpack.c.b16 %v2312, %v2311
        %2315 = vrot.lane.b32.xlu0 %v264, 13
        %v2316 = vpop.permute.xlu0 %2315
        %2317 = vrot.lane.b32.xlu0 %v265, 13
        %v2318 = vpop.permute.xlu0 %2317
        %2319 = vrot.lane.b32.xlu0 %v340, 13
        %v2320 = vpop.permute.xlu0 %2319
        %vm2321 = vcmask 105472
        %v2322 = vsel %vm2321, %v2316, %v2318
        %v2323 = vsel %vm2321, %v2318, %v2320
        %v2327 = vsel %vm268, %v2313, 0
        %v2330 = vsel %vm268, %v2314, 0
        %2332 = vmatpush.bf16.msra.mxu0 0
        %2333 = vmatpush.bf16.msra.mxu0 0
        %2334 = vmatpush.bf16.msra.mxu0 0
        %2335 = vmatpush.bf16.msra.mxu0 0
        %2336 = vmatpush.bf16.msra.mxu0 0
        %2337 = vmatpush.bf16.msra.mxu0 0
        %2338 = vmatpush.bf16.msra.mxu0 0
        %2339 = vmatpush.bf16.msra.mxu0 %v2322
        %2340 = vmatmul.bf16.gmra.mxu0 %v2327
        %v2341 = vpop.f32.mrf.mxu0
        %v2342 = vadd.f32 0.0, %v2341
        %v2343 = vpop.f32.mrf.mxu0
        %v2344 = vadd.f32 0.0, %v2343
        %2345 = vmatmul.bf16.gmra.mxu0 %v2330
        %v2346 = vpop.f32.mrf.mxu0
        %v2347 = vadd.f32 0.0, %v2346
        %v2348 = vpop.f32.mrf.mxu0
        %v2349 = vadd.f32 0.0, %v2348
        %2350 = vdwg.mxu0
        %2351 = vmatpush.bf16.msra.mxu0 0
        %2352 = vmatpush.bf16.msra.mxu0 0
        %2353 = vmatpush.bf16.msra.mxu0 0
        %2354 = vmatpush.bf16.msra.mxu0 0
        %2355 = vmatpush.bf16.msra.mxu0 0
        %2356 = vmatpush.bf16.msra.mxu0 0
        %2357 = vmatpush.bf16.msra.mxu0 0
        %2358 = vmatpush.bf16.msra.mxu0 %v2323
        %2359 = vmatmul.bf16.gmra.mxu0 %v2327
        %v2360 = vpop.f32.mrf.mxu0
        %v2361 = vadd.f32 0.0, %v2360
        %v2362 = vpop.f32.mrf.mxu0
        %v2363 = vadd.f32 0.0, %v2362
        %2364 = vmatmul.bf16.gmra.mxu0 %v2330
        %v2365 = vpop.f32.mrf.mxu0
        %v2366 = vadd.f32 0.0, %v2365
        %v2367 = vpop.f32.mrf.mxu0
        %v2368 = vadd.f32 0.0, %v2367
        %2369 = vdwg.mxu0
        %v2370 = vld [vmem:[#allocation2] sm:$0xff]
        %v2371 = vld [vmem:[#allocation2 + $0x8] sm:$0xff]
        %v2372 = vld [vmem:[#allocation2 + $0x10] sm:$0xff]
        %v2373 = vld [vmem:[#allocation2 + $0x18] sm:$0xff]
        %v2374 = vld [vmem:[#allocation2 + $0x20] sm:$0xff]
        %v2375 = vld [vmem:[#allocation2 + $0x28] sm:$0xff]
        %v2376 = vld [vmem:[#allocation2 + $0x30] sm:$0xff]
        %v2377 = vld [vmem:[#allocation2 + $0x38] sm:$0xff]
        %v2378 = vadd.f32 %v2370, %v2342
        %v2379 = vadd.f32 %v2371, %v2361
        %v2380 = vadd.f32 %v2372, %v2344
        %v2381 = vadd.f32 %v2373, %v2363
        %v2382 = vadd.f32 %v2374, %v2347
        %v2383 = vadd.f32 %v2375, %v2366
        %v2384 = vadd.f32 %v2376, %v2349
        %v2385 = vadd.f32 %v2377, %v2368
        %2386 = vst [vmem:[#allocation2] sm:$0xff] %v2378
        %2387 = vst [vmem:[#allocation2 + $0x8] sm:$0xff] %v2379
        %2388 = vst [vmem:[#allocation2 + $0x10] sm:$0xff] %v2380
        %2389 = vst [vmem:[#allocation2 + $0x18] sm:$0xff] %v2381
        %2390 = vst [vmem:[#allocation2 + $0x20] sm:$0xff] %v2382
        %2391 = vst [vmem:[#allocation2 + $0x28] sm:$0xff] %v2383
        %2392 = vst [vmem:[#allocation2 + $0x30] sm:$0xff] %v2384
        %2393 = vst [vmem:[#allocation2 + $0x38] sm:$0xff] %v2385
        %s2394 = scalar_lea.vmem %s224, 368
        %v2395 = vld [vmem:[%s2394] sm:$0xf]
        %v2396 = vld [vmem:[%s2394 + $0x4] sm:$0xf]
        %v2397 = vld [vmem:[%s2394 + $0x8] sm:$0xf]
        %v2398 = vld [vmem:[%s2394 + $0xc] sm:$0xf]
        %v2403 = vunpack.c.l.b16 %v2395
        %v2404 = vunpack.c.l.b16 %v2396
        %v2405 = vunpack.c.l.b16 %v2397
        %v2406 = vunpack.c.l.b16 %v2398
        %v2407 = vpack.c.b16 %v2404, %v2403
        %v2408 = vpack.c.b16 %v2406, %v2405
        %2409 = vrot.lane.b32.xlu0 %v264, 12
        %v2410 = vpop.permute.xlu0 %2409
        %2411 = vrot.lane.b32.xlu0 %v265, 12
        %v2412 = vpop.permute.xlu0 %2411
        %2413 = vrot.lane.b32.xlu0 %v340, 12
        %v2414 = vpop.permute.xlu0 %2413
        %vm2415 = vcmask 97280
        %v2416 = vsel %vm2415, %v2410, %v2412
        %v2417 = vsel %vm2415, %v2412, %v2414
        %v2421 = vsel %vm268, %v2407, 0
        %v2424 = vsel %vm268, %v2408, 0
        %2426 = vmatpush.bf16.msra.mxu0 0
        %2427 = vmatpush.bf16.msra.mxu0 0
        %2428 = vmatpush.bf16.msra.mxu0 0
        %2429 = vmatpush.bf16.msra.mxu0 0
        %2430 = vmatpush.bf16.msra.mxu0 0
        %2431 = vmatpush.bf16.msra.mxu0 0
        %2432 = vmatpush.bf16.msra.mxu0 0
        %2433 = vmatpush.bf16.msra.mxu0 %v2416
        %2434 = vmatmul.bf16.gmra.mxu0 %v2421
        %v2435 = vpop.f32.mrf.mxu0
        %v2436 = vadd.f32 0.0, %v2435
        %v2437 = vpop.f32.mrf.mxu0
        %v2438 = vadd.f32 0.0, %v2437
        %2439 = vmatmul.bf16.gmra.mxu0 %v2424
        %v2440 = vpop.f32.mrf.mxu0
        %v2441 = vadd.f32 0.0, %v2440
        %v2442 = vpop.f32.mrf.mxu0
        %v2443 = vadd.f32 0.0, %v2442
        %2444 = vdwg.mxu0
        %2445 = vmatpush.bf16.msra.mxu0 0
        %2446 = vmatpush.bf16.msra.mxu0 0
        %2447 = vmatpush.bf16.msra.mxu0 0
        %2448 = vmatpush.bf16.msra.mxu0 0
        %2449 = vmatpush.bf16.msra.mxu0 0
        %2450 = vmatpush.bf16.msra.mxu0 0
        %2451 = vmatpush.bf16.msra.mxu0 0
        %2452 = vmatpush.bf16.msra.mxu0 %v2417
        %2453 = vmatmul.bf16.gmra.mxu0 %v2421
        %v2454 = vpop.f32.mrf.mxu0
        %v2455 = vadd.f32 0.0, %v2454
        %v2456 = vpop.f32.mrf.mxu0
        %v2457 = vadd.f32 0.0, %v2456
        %2458 = vmatmul.bf16.gmra.mxu0 %v2424
        %v2459 = vpop.f32.mrf.mxu0
        %v2460 = vadd.f32 0.0, %v2459
        %v2461 = vpop.f32.mrf.mxu0
        %v2462 = vadd.f32 0.0, %v2461
        %2463 = vdwg.mxu0
        %v2464 = vld [vmem:[#allocation2] sm:$0xff]
        %v2465 = vld [vmem:[#allocation2 + $0x8] sm:$0xff]
        %v2466 = vld [vmem:[#allocation2 + $0x10] sm:$0xff]
        %v2467 = vld [vmem:[#allocation2 + $0x18] sm:$0xff]
        %v2468 = vld [vmem:[#allocation2 + $0x20] sm:$0xff]
        %v2469 = vld [vmem:[#allocation2 + $0x28] sm:$0xff]
        %v2470 = vld [vmem:[#allocation2 + $0x30] sm:$0xff]
        %v2471 = vld [vmem:[#allocation2 + $0x38] sm:$0xff]
        %v2472 = vadd.f32 %v2464, %v2436
        %v2473 = vadd.f32 %v2465, %v2455
        %v2474 = vadd.f32 %v2466, %v2438
        %v2475 = vadd.f32 %v2467, %v2457
        %v2476 = vadd.f32 %v2468, %v2441
        %v2477 = vadd.f32 %v2469, %v2460
        %v2478 = vadd.f32 %v2470, %v2443
        %v2479 = vadd.f32 %v2471, %v2462
        %2480 = vst [vmem:[#allocation2] sm:$0xff] %v2472
        %2481 = vst [vmem:[#allocation2 + $0x8] sm:$0xff] %v2473
        %2482 = vst [vmem:[#allocation2 + $0x10] sm:$0xff] %v2474
        %2483 = vst [vmem:[#allocation2 + $0x18] sm:$0xff] %v2475
        %2484 = vst [vmem:[#allocation2 + $0x20] sm:$0xff] %v2476
        %2485 = vst [vmem:[#allocation2 + $0x28] sm:$0xff] %v2477
        %2486 = vst [vmem:[#allocation2 + $0x30] sm:$0xff] %v2478
        %2487 = vst [vmem:[#allocation2 + $0x38] sm:$0xff] %v2479
        %s2488 = scalar_lea.vmem %s224, 384
        %v2489 = vld [vmem:[%s2488] sm:$0xf]
        %v2490 = vld [vmem:[%s2488 + $0x4] sm:$0xf]
        %v2491 = vld [vmem:[%s2488 + $0x8] sm:$0xf]
        %v2492 = vld [vmem:[%s2488 + $0xc] sm:$0xf]
        %v2497 = vunpack.c.l.b16 %v2489
        %v2498 = vunpack.c.l.b16 %v2490
        %v2499 = vunpack.c.l.b16 %v2491
        %v2500 = vunpack.c.l.b16 %v2492
        %v2501 = vpack.c.b16 %v2498, %v2497
        %v2502 = vpack.c.b16 %v2500, %v2499
        %2503 = vrot.lane.b32.xlu0 %v264, 11
        %v2504 = vpop.permute.xlu0 %2503
        %2505 = vrot.lane.b32.xlu0 %v265, 11
        %v2506 = vpop.permute.xlu0 %2505
        %2507 = vrot.lane.b32.xlu0 %v340, 11
        %v2508 = vpop.permute.xlu0 %2507
        %vm2509 = vcmask 89088
        %v2510 = vsel %vm2509, %v2504, %v2506
        %v2511 = vsel %vm2509, %v2506, %v2508
        %v2515 = vsel %vm268, %v2501, 0
        %v2518 = vsel %vm268, %v2502, 0
        %2520 = vmatpush.bf16.msra.mxu0 0
        %2521 = vmatpush.bf16.msra.mxu0 0
        %2522 = vmatpush.bf16.msra.mxu0 0
        %2523 = vmatpush.bf16.msra.mxu0 0
        %2524 = vmatpush.bf16.msra.mxu0 0
        %2525 = vmatpush.bf16.msra.mxu0 0
        %2526 = vmatpush.bf16.msra.mxu0 0
        %2527 = vmatpush.bf16.msra.mxu0 %v2510
        %2528 = vmatmul.bf16.gmra.mxu0 %v2515
        %v2529 = vpop.f32.mrf.mxu0
        %v2530 = vadd.f32 0.0, %v2529
        %v2531 = vpop.f32.mrf.mxu0
        %v2532 = vadd.f32 0.0, %v2531
        %2533 = vmatmul.bf16.gmra.mxu0 %v2518
        %v2534 = vpop.f32.mrf.mxu0
        %v2535 = vadd.f32 0.0, %v2534
        %v2536 = vpop.f32.mrf.mxu0
        %v2537 = vadd.f32 0.0, %v2536
        %2538 = vdwg.mxu0
        %2539 = vmatpush.bf16.msra.mxu0 0
        %2540 = vmatpush.bf16.msra.mxu0 0
        %2541 = vmatpush.bf16.msra.mxu0 0
        %2542 = vmatpush.bf16.msra.mxu0 0
        %2543 = vmatpush.bf16.msra.mxu0 0
        %2544 = vmatpush.bf16.msra.mxu0 0
        %2545 = vmatpush.bf16.msra.mxu0 0
        %2546 = vmatpush.bf16.msra.mxu0 %v2511
        %2547 = vmatmul.bf16.gmra.mxu0 %v2515
        %v2548 = vpop.f32.mrf.mxu0
        %v2549 = vadd.f32 0.0, %v2548
        %v2550 = vpop.f32.mrf.mxu0
        %v2551 = vadd.f32 0.0, %v2550
        %2552 = vmatmul.bf16.gmra.mxu0 %v2518
        %v2553 = vpop.f32.mrf.mxu0
        %v2554 = vadd.f32 0.0, %v2553
        %v2555 = vpop.f32.mrf.mxu0
        %v2556 = vadd.f32 0.0, %v2555
        %2557 = vdwg.mxu0
        %v2558 = vld [vmem:[#allocation2] sm:$0xff]
        %v2559 = vld [vmem:[#allocation2 + $0x8] sm:$0xff]
        %v2560 = vld [vmem:[#allocation2 + $0x10] sm:$0xff]
        %v2561 = vld [vmem:[#allocation2 + $0x18] sm:$0xff]
        %v2562 = vld [vmem:[#allocation2 + $0x20] sm:$0xff]
        %v2563 = vld [vmem:[#allocation2 + $0x28] sm:$0xff]
        %v2564 = vld [vmem:[#allocation2 + $0x30] sm:$0xff]
        %v2565 = vld [vmem:[#allocation2 + $0x38] sm:$0xff]
        %v2566 = vadd.f32 %v2558, %v2530
        %v2567 = vadd.f32 %v2559, %v2549
        %v2568 = vadd.f32 %v2560, %v2532
        %v2569 = vadd.f32 %v2561, %v2551
        %v2570 = vadd.f32 %v2562, %v2535
        %v2571 = vadd.f32 %v2563, %v2554
        %v2572 = vadd.f32 %v2564, %v2537
        %v2573 = vadd.f32 %v2565, %v2556
        %2574 = vst [vmem:[#allocation2] sm:$0xff] %v2566
        %2575 = vst [vmem:[#allocation2 + $0x8] sm:$0xff] %v2567
        %2576 = vst [vmem:[#allocation2 + $0x10] sm:$0xff] %v2568
        %2577 = vst [vmem:[#allocation2 + $0x18] sm:$0xff] %v2569
        %2578 = vst [vmem:[#allocation2 + $0x20] sm:$0xff] %v2570
        %2579 = vst [vmem:[#allocation2 + $0x28] sm:$0xff] %v2571
        %2580 = vst [vmem:[#allocation2 + $0x30] sm:$0xff] %v2572
        %2581 = vst [vmem:[#allocation2 + $0x38] sm:$0xff] %v2573
        %s2582 = scalar_lea.vmem %s224, 400
        %v2583 = vld [vmem:[%s2582] sm:$0xf]
        %v2584 = vld [vmem:[%s2582 + $0x4] sm:$0xf]
        %v2585 = vld [vmem:[%s2582 + $0x8] sm:$0xf]
        %v2586 = vld [vmem:[%s2582 + $0xc] sm:$0xf]
        %v2591 = vunpack.c.l.b16 %v2583
        %v2592 = vunpack.c.l.b16 %v2584
        %v2593 = vunpack.c.l.b16 %v2585
        %v2594 = vunpack.c.l.b16 %v2586
        %v2595 = vpack.c.b16 %v2592, %v2591
        %v2596 = vpack.c.b16 %v2594, %v2593
        %2597 = vrot.lane.b32.xlu0 %v264, 10
        %v2598 = vpop.permute.xlu0 %2597
        %2599 = vrot.lane.b32.xlu0 %v265, 10
        %v2600 = vpop.permute.xlu0 %2599
        %2601 = vrot.lane.b32.xlu0 %v340, 10
        %v2602 = vpop.permute.xlu0 %2601
        %vm2603 = vcmask 80896
        %v2604 = vsel %vm2603, %v2598, %v2600
        %v2605 = vsel %vm2603, %v2600, %v2602
        %v2609 = vsel %vm268, %v2595, 0
        %v2612 = vsel %vm268, %v2596, 0
        %2614 = vmatpush.bf16.msra.mxu0 0
        %2615 = vmatpush.bf16.msra.mxu0 0
        %2616 = vmatpush.bf16.msra.mxu0 0
        %2617 = vmatpush.bf16.msra.mxu0 0
        %2618 = vmatpush.bf16.msra.mxu0 0
        %2619 = vmatpush.bf16.msra.mxu0 0
        %2620 = vmatpush.bf16.msra.mxu0 0
        %2621 = vmatpush.bf16.msra.mxu0 %v2604
        %2622 = vmatmul.bf16.gmra.mxu0 %v2609
        %v2623 = vpop.f32.mrf.mxu0
        %v2624 = vadd.f32 0.0, %v2623
        %v2625 = vpop.f32.mrf.mxu0
        %v2626 = vadd.f32 0.0, %v2625
        %2627 = vmatmul.bf16.gmra.mxu0 %v2612
        %v2628 = vpop.f32.mrf.mxu0
        %v2629 = vadd.f32 0.0, %v2628
        %v2630 = vpop.f32.mrf.mxu0
        %v2631 = vadd.f32 0.0, %v2630
        %2632 = vdwg.mxu0
        %2633 = vmatpush.bf16.msra.mxu0 0
        %2634 = vmatpush.bf16.msra.mxu0 0
        %2635 = vmatpush.bf16.msra.mxu0 0
        %2636 = vmatpush.bf16.msra.mxu0 0
        %2637 = vmatpush.bf16.msra.mxu0 0
        %2638 = vmatpush.bf16.msra.mxu0 0
        %2639 = vmatpush.bf16.msra.mxu0 0
        %2640 = vmatpush.bf16.msra.mxu0 %v2605
        %2641 = vmatmul.bf16.gmra.mxu0 %v2609
        %v2642 = vpop.f32.mrf.mxu0
        %v2643 = vadd.f32 0.0, %v2642
        %v2644 = vpop.f32.mrf.mxu0
        %v2645 = vadd.f32 0.0, %v2644
        %2646 = vmatmul.bf16.gmra.mxu0 %v2612
        %v2647 = vpop.f32.mrf.mxu0
        %v2648 = vadd.f32 0.0, %v2647
        %v2649 = vpop.f32.mrf.mxu0
        %v2650 = vadd.f32 0.0, %v2649
        %2651 = vdwg.mxu0
        %v2652 = vld [vmem:[#allocation2] sm:$0xff]
        %v2653 = vld [vmem:[#allocation2 + $0x8] sm:$0xff]
        %v2654 = vld [vmem:[#allocation2 + $0x10] sm:$0xff]
        %v2655 = vld [vmem:[#allocation2 + $0x18] sm:$0xff]
        %v2656 = vld [vmem:[#allocation2 + $0x20] sm:$0xff]
        %v2657 = vld [vmem:[#allocation2 + $0x28] sm:$0xff]
        %v2658 = vld [vmem:[#allocation2 + $0x30] sm:$0xff]
        %v2659 = vld [vmem:[#allocation2 + $0x38] sm:$0xff]
        %v2660 = vadd.f32 %v2652, %v2624
        %v2661 = vadd.f32 %v2653, %v2643
        %v2662 = vadd.f32 %v2654, %v2626
        %v2663 = vadd.f32 %v2655, %v2645
        %v2664 = vadd.f32 %v2656, %v2629
        %v2665 = vadd.f32 %v2657, %v2648
        %v2666 = vadd.f32 %v2658, %v2631
        %v2667 = vadd.f32 %v2659, %v2650
        %2668 = vst [vmem:[#allocation2] sm:$0xff] %v2660
        %2669 = vst [vmem:[#allocation2 + $0x8] sm:$0xff] %v2661
        %2670 = vst [vmem:[#allocation2 + $0x10] sm:$0xff] %v2662
        %2671 = vst [vmem:[#allocation2 + $0x18] sm:$0xff] %v2663
        %2672 = vst [vmem:[#allocation2 + $0x20] sm:$0xff] %v2664
        %2673 = vst [vmem:[#allocation2 + $0x28] sm:$0xff] %v2665
        %2674 = vst [vmem:[#allocation2 + $0x30] sm:$0xff] %v2666
        %2675 = vst [vmem:[#allocation2 + $0x38] sm:$0xff] %v2667
        %s2676 = scalar_lea.vmem %s224, 416
        %v2677 = vld [vmem:[%s2676] sm:$0xf]
        %v2678 = vld [vmem:[%s2676 + $0x4] sm:$0xf]
        %v2679 = vld [vmem:[%s2676 + $0x8] sm:$0xf]
        %v2680 = vld [vmem:[%s2676 + $0xc] sm:$0xf]
        %v2685 = vunpack.c.l.b16 %v2677
        %v2686 = vunpack.c.l.b16 %v2678
        %v2687 = vunpack.c.l.b16 %v2679
        %v2688 = vunpack.c.l.b16 %v2680
        %v2689 = vpack.c.b16 %v2686, %v2685
        %v2690 = vpack.c.b16 %v2688, %v2687
        %2691 = vrot.lane.b32.xlu0 %v264, 9
        %v2692 = vpop.permute.xlu0 %2691
        %2693 = vrot.lane.b32.xlu0 %v265, 9
        %v2694 = vpop.permute.xlu0 %2693
        %2695 = vrot.lane.b32.xlu0 %v340, 9
        %v2696 = vpop.permute.xlu0 %2695
        %vm2697 = vcmask 72704
        %v2698 = vsel %vm2697, %v2692, %v2694
        %v2699 = vsel %vm2697, %v2694, %v2696
        %v2703 = vsel %vm268, %v2689, 0
        %v2706 = vsel %vm268, %v2690, 0
        %2708 = vmatpush.bf16.msra.mxu0 0
        %2709 = vmatpush.bf16.msra.mxu0 0
        %2710 = vmatpush.bf16.msra.mxu0 0
        %2711 = vmatpush.bf16.msra.mxu0 0
        %2712 = vmatpush.bf16.msra.mxu0 0
        %2713 = vmatpush.bf16.msra.mxu0 0
        %2714 = vmatpush.bf16.msra.mxu0 0
        %2715 = vmatpush.bf16.msra.mxu0 %v2698
        %2716 = vmatmul.bf16.gmra.mxu0 %v2703
        %v2717 = vpop.f32.mrf.mxu0
        %v2718 = vadd.f32 0.0, %v2717
        %v2719 = vpop.f32.mrf.mxu0
        %v2720 = vadd.f32 0.0, %v2719
        %2721 = vmatmul.bf16.gmra.mxu0 %v2706
        %v2722 = vpop.f32.mrf.mxu0
        %v2723 = vadd.f32 0.0, %v2722
        %v2724 = vpop.f32.mrf.mxu0
        %v2725 = vadd.f32 0.0, %v2724
        %2726 = vdwg.mxu0
        %2727 = vmatpush.bf16.msra.mxu0 0
        %2728 = vmatpush.bf16.msra.mxu0 0
        %2729 = vmatpush.bf16.msra.mxu0 0
        %2730 = vmatpush.bf16.msra.mxu0 0
        %2731 = vmatpush.bf16.msra.mxu0 0
        %2732 = vmatpush.bf16.msra.mxu0 0
        %2733 = vmatpush.bf16.msra.mxu0 0
        %2734 = vmatpush.bf16.msra.mxu0 %v2699
        %2735 = vmatmul.bf16.gmra.mxu0 %v2703
        %v2736 = vpop.f32.mrf.mxu0
        %v2737 = vadd.f32 0.0, %v2736
        %v2738 = vpop.f32.mrf.mxu0
        %v2739 = vadd.f32 0.0, %v2738
        %2740 = vmatmul.bf16.gmra.mxu0 %v2706
        %v2741 = vpop.f32.mrf.mxu0
        %v2742 = vadd.f32 0.0, %v2741
        %v2743 = vpop.f32.mrf.mxu0
        %v2744 = vadd.f32 0.0, %v2743
        %2745 = vdwg.mxu0
        %v2746 = vld [vmem:[#allocation2] sm:$0xff]
        %v2747 = vld [vmem:[#allocation2 + $0x8] sm:$0xff]
        %v2748 = vld [vmem:[#allocation2 + $0x10] sm:$0xff]
        %v2749 = vld [vmem:[#allocation2 + $0x18] sm:$0xff]
        %v2750 = vld [vmem:[#allocation2 + $0x20] sm:$0xff]
        %v2751 = vld [vmem:[#allocation2 + $0x28] sm:$0xff]
        %v2752 = vld [vmem:[#allocation2 + $0x30] sm:$0xff]
        %v2753 = vld [vmem:[#allocation2 + $0x38] sm:$0xff]
        %v2754 = vadd.f32 %v2746, %v2718
        %v2755 = vadd.f32 %v2747, %v2737
        %v2756 = vadd.f32 %v2748, %v2720
        %v2757 = vadd.f32 %v2749, %v2739
        %v2758 = vadd.f32 %v2750, %v2723
        %v2759 = vadd.f32 %v2751, %v2742
        %v2760 = vadd.f32 %v2752, %v2725
        %v2761 = vadd.f32 %v2753, %v2744
        %2762 = vst [vmem:[#allocation2] sm:$0xff] %v2754
        %2763 = vst [vmem:[#allocation2 + $0x8] sm:$0xff] %v2755
        %2764 = vst [vmem:[#allocation2 + $0x10] sm:$0xff] %v2756
        %2765 = vst [vmem:[#allocation2 + $0x18] sm:$0xff] %v2757
        %2766 = vst [vmem:[#allocation2 + $0x20] sm:$0xff] %v2758
        %2767 = vst [vmem:[#allocation2 + $0x28] sm:$0xff] %v2759
        %2768 = vst [vmem:[#allocation2 + $0x30] sm:$0xff] %v2760
        %2769 = vst [vmem:[#allocation2 + $0x38] sm:$0xff] %v2761
        %s2770 = scalar_lea.vmem %s224, 432
        %v2771 = vld [vmem:[%s2770] sm:$0xf]
        %v2772 = vld [vmem:[%s2770 + $0x4] sm:$0xf]
        %v2773 = vld [vmem:[%s2770 + $0x8] sm:$0xf]
        %v2774 = vld [vmem:[%s2770 + $0xc] sm:$0xf]
        %v2779 = vunpack.c.l.b16 %v2771
        %v2780 = vunpack.c.l.b16 %v2772
        %v2781 = vunpack.c.l.b16 %v2773
        %v2782 = vunpack.c.l.b16 %v2774
        %v2783 = vpack.c.b16 %v2780, %v2779
        %v2784 = vpack.c.b16 %v2782, %v2781
        %2785 = vrot.lane.b32.xlu0 %v264, 8
        %v2786 = vpop.permute.xlu0 %2785
        %2787 = vrot.lane.b32.xlu0 %v265, 8
        %v2788 = vpop.permute.xlu0 %2787
        %2789 = vrot.lane.b32.xlu0 %v340, 8
        %v2790 = vpop.permute.xlu0 %2789
        %vm2791 = vcmask 64512
        %v2792 = vsel %vm2791, %v2786, %v2788
        %v2793 = vsel %vm2791, %v2788, %v2790
        %v2797 = vsel %vm268, %v2783, 0
        %v2800 = vsel %vm268, %v2784, 0
        %2802 = vmatpush.bf16.msra.mxu0 0
        %2803 = vmatpush.bf16.msra.mxu0 0
        %2804 = vmatpush.bf16.msra.mxu0 0
        %2805 = vmatpush.bf16.msra.mxu0 0
        %2806 = vmatpush.bf16.msra.mxu0 0
        %2807 = vmatpush.bf16.msra.mxu0 0
        %2808 = vmatpush.bf16.msra.mxu0 0
        %2809 = vmatpush.bf16.msra.mxu0 %v2792
        %2810 = vmatmul.bf16.gmra.mxu0 %v2797
        %v2811 = vpop.f32.mrf.mxu0
        %v2812 = vadd.f32 0.0, %v2811
        %v2813 = vpop.f32.mrf.mxu0
        %v2814 = vadd.f32 0.0, %v2813
        %2815 = vmatmul.bf16.gmra.mxu0 %v2800
        %v2816 = vpop.f32.mrf.mxu0
        %v2817 = vadd.f32 0.0, %v2816
        %v2818 = vpop.f32.mrf.mxu0
        %v2819 = vadd.f32 0.0, %v2818
        %2820 = vdwg.mxu0
        %2821 = vmatpush.bf16.msra.mxu0 0
        %2822 = vmatpush.bf16.msra.mxu0 0
        %2823 = vmatpush.bf16.msra.mxu0 0
        %2824 = vmatpush.bf16.msra.mxu0 0
        %2825 = vmatpush.bf16.msra.mxu0 0
        %2826 = vmatpush.bf16.msra.mxu0 0
        %2827 = vmatpush.bf16.msra.mxu0 0
        %2828 = vmatpush.bf16.msra.mxu0 %v2793
        %2829 = vmatmul.bf16.gmra.mxu0 %v2797
        %v2830 = vpop.f32.mrf.mxu0
        %v2831 = vadd.f32 0.0, %v2830
        %v2832 = vpop.f32.mrf.mxu0
        %v2833 = vadd.f32 0.0, %v2832
        %2834 = vmatmul.bf16.gmra.mxu0 %v2800
        %v2835 = vpop.f32.mrf.mxu0
        %v2836 = vadd.f32 0.0, %v2835
        %v2837 = vpop.f32.mrf.mxu0
        %v2838 = vadd.f32 0.0, %v2837
        %2839 = vdwg.mxu0
        %v2840 = vld [vmem:[#allocation2] sm:$0xff]
        %v2841 = vld [vmem:[#allocation2 + $0x8] sm:$0xff]
        %v2842 = vld [vmem:[#allocation2 + $0x10] sm:$0xff]
        %v2843 = vld [vmem:[#allocation2 + $0x18] sm:$0xff]
        %v2844 = vld [vmem:[#allocation2 + $0x20] sm:$0xff]
        %v2845 = vld [vmem:[#allocation2 + $0x28] sm:$0xff]
        %v2846 = vld [vmem:[#allocation2 + $0x30] sm:$0xff]
        %v2847 = vld [vmem:[#allocation2 + $0x38] sm:$0xff]
        %v2848 = vadd.f32 %v2840, %v2812
        %v2849 = vadd.f32 %v2841, %v2831
        %v2850 = vadd.f32 %v2842, %v2814
        %v2851 = vadd.f32 %v2843, %v2833
        %v2852 = vadd.f32 %v2844, %v2817
        %v2853 = vadd.f32 %v2845, %v2836
        %v2854 = vadd.f32 %v2846, %v2819
        %v2855 = vadd.f32 %v2847, %v2838
        %2856 = vst [vmem:[#allocation2] sm:$0xff] %v2848
        %2857 = vst [vmem:[#allocation2 + $0x8] sm:$0xff] %v2849
        %2858 = vst [vmem:[#allocation2 + $0x10] sm:$0xff] %v2850
        %2859 = vst [vmem:[#allocation2 + $0x18] sm:$0xff] %v2851
        %2860 = vst [vmem:[#allocation2 + $0x20] sm:$0xff] %v2852
        %2861 = vst [vmem:[#allocation2 + $0x28] sm:$0xff] %v2853
        %2862 = vst [vmem:[#allocation2 + $0x30] sm:$0xff] %v2854
        %2863 = vst [vmem:[#allocation2 + $0x38] sm:$0xff] %v2855
        %s2864 = scalar_lea.vmem %s224, 448
        %v2865 = vld [vmem:[%s2864] sm:$0xf]
        %v2866 = vld [vmem:[%s2864 + $0x4] sm:$0xf]
        %v2867 = vld [vmem:[%s2864 + $0x8] sm:$0xf]
        %v2868 = vld [vmem:[%s2864 + $0xc] sm:$0xf]
        %v2873 = vunpack.c.l.b16 %v2865
        %v2874 = vunpack.c.l.b16 %v2866
        %v2875 = vunpack.c.l.b16 %v2867
        %v2876 = vunpack.c.l.b16 %v2868
        %v2877 = vpack.c.b16 %v2874, %v2873
        %v2878 = vpack.c.b16 %v2876, %v2875
        %v2879 = vunpack.c.h.b16 %v241
        %v2880 = vunpack.c.h.b16 %v243
        %v2881 = vpack.c.b16 %v2880, %v2879
        %2882 = vrot.lane.b32.xlu0 %v265, 104
        %v2883 = vpop.permute.xlu0 %2882
        %2884 = vrot.lane.b32.xlu0 %v340, 104
        %v2885 = vpop.permute.xlu0 %2884
        %2886 = vrot.lane.b32.xlu0 %v2881, 104
        %v2887 = vpop.permute.xlu0 %2886
        %vm2888 = vcmask 850944
        %v2889 = vsel %vm2888, %v2883, %v2885
        %v2890 = vsel %vm2888, %v2885, %v2887
        %v2894 = vsel %vm268, %v2877, 0
        %v2897 = vsel %vm268, %v2878, 0
        %2899 = vmatpush.bf16.msra.mxu0 0
        %2900 = vmatpush.bf16.msra.mxu0 0
        %2901 = vmatpush.bf16.msra.mxu0 0
        %2902 = vmatpush.bf16.msra.mxu0 0
        %2903 = vmatpush.bf16.msra.mxu0 0
        %2904 = vmatpush.bf16.msra.mxu0 0
        %2905 = vmatpush.bf16.msra.mxu0 0
        %2906 = vmatpush.bf16.msra.mxu0 %v2889
        %2907 = vmatmul.bf16.gmra.mxu0 %v2894
        %v2908 = vpop.f32.mrf.mxu0
        %v2909 = vadd.f32 0.0, %v2908
        %v2910 = vpop.f32.mrf.mxu0
        %v2911 = vadd.f32 0.0, %v2910
        %2912 = vmatmul.bf16.gmra.mxu0 %v2897
        %v2913 = vpop.f32.mrf.mxu0
        %v2914 = vadd.f32 0.0, %v2913
        %v2915 = vpop.f32.mrf.mxu0
        %v2916 = vadd.f32 0.0, %v2915
        %2917 = vdwg.mxu0
        %2918 = vmatpush.bf16.msra.mxu0 0
        %2919 = vmatpush.bf16.msra.mxu0 0
        %2920 = vmatpush.bf16.msra.mxu0 0
        %2921 = vmatpush.bf16.msra.mxu0 0
        %2922 = vmatpush.bf16.msra.mxu0 0
        %2923 = vmatpush.bf16.msra.mxu0 0
        %2924 = vmatpush.bf16.msra.mxu0 0
        %2925 = vmatpush.bf16.msra.mxu0 %v2890
        %2926 = vmatmul.bf16.gmra.mxu0 %v2894
        %v2927 = vpop.f32.mrf.mxu0
        %v2928 = vadd.f32 0.0, %v2927
        %v2929 = vpop.f32.mrf.mxu0
        %v2930 = vadd.f32 0.0, %v2929
        %2931 = vmatmul.bf16.gmra.mxu0 %v2897
        %v2932 = vpop.f32.mrf.mxu0
        %v2933 = vadd.f32 0.0, %v2932
        %v2934 = vpop.f32.mrf.mxu0
        %v2935 = vadd.f32 0.0, %v2934
        %2936 = vdwg.mxu0
        %v2937 = vld [vmem:[#allocation2] sm:$0xff]
        %v2938 = vld [vmem:[#allocation2 + $0x8] sm:$0xff]
        %v2939 = vld [vmem:[#allocation2 + $0x10] sm:$0xff]
        %v2940 = vld [vmem:[#allocation2 + $0x18] sm:$0xff]
        %v2941 = vld [vmem:[#allocation2 + $0x20] sm:$0xff]
        %v2942 = vld [vmem:[#allocation2 + $0x28] sm:$0xff]
        %v2943 = vld [vmem:[#allocation2 + $0x30] sm:$0xff]
        %v2944 = vld [vmem:[#allocation2 + $0x38] sm:$0xff]
        %v2945 = vadd.f32 %v2937, %v2909
        %v2946 = vadd.f32 %v2938, %v2928
        %v2947 = vadd.f32 %v2939, %v2911
        %v2948 = vadd.f32 %v2940, %v2930
        %v2949 = vadd.f32 %v2941, %v2914
        %v2950 = vadd.f32 %v2942, %v2933
        %v2951 = vadd.f32 %v2943, %v2916
        %v2952 = vadd.f32 %v2944, %v2935
        %2953 = vst [vmem:[#allocation2] sm:$0xff] %v2945
        %2954 = vst [vmem:[#allocation2 + $0x8] sm:$0xff] %v2946
        %2955 = vst [vmem:[#allocation2 + $0x10] sm:$0xff] %v2947
        %2956 = vst [vmem:[#allocation2 + $0x18] sm:$0xff] %v2948
        %2957 = vst [vmem:[#allocation2 + $0x20] sm:$0xff] %v2949
        %2958 = vst [vmem:[#allocation2 + $0x28] sm:$0xff] %v2950
        %2959 = vst [vmem:[#allocation2 + $0x30] sm:$0xff] %v2951
        %2960 = vst [vmem:[#allocation2 + $0x38] sm:$0xff] %v2952
        %s2961 = scalar_lea.vmem %s224, 464
        %v2962 = vld [vmem:[%s2961] sm:$0xf]
        %v2963 = vld [vmem:[%s2961 + $0x4] sm:$0xf]
        %v2964 = vld [vmem:[%s2961 + $0x8] sm:$0xf]
        %v2965 = vld [vmem:[%s2961 + $0xc] sm:$0xf]
        %v2970 = vunpack.c.l.b16 %v2962
        %v2971 = vunpack.c.l.b16 %v2963
        %v2972 = vunpack.c.l.b16 %v2964
        %v2973 = vunpack.c.l.b16 %v2965
        %v2974 = vpack.c.b16 %v2971, %v2970
        %v2975 = vpack.c.b16 %v2973, %v2972
        %2976 = vrot.lane.b32.xlu0 %v265, 103
        %v2977 = vpop.permute.xlu0 %2976
        %2978 = vrot.lane.b32.xlu0 %v340, 103
        %v2979 = vpop.permute.xlu0 %2978
        %2980 = vrot.lane.b32.xlu0 %v2881, 103
        %v2981 = vpop.permute.xlu0 %2980
        %vm2982 = vcmask 842752
        %v2983 = vsel %vm2982, %v2977, %v2979
        %v2984 = vsel %vm2982, %v2979, %v2981
        %v2988 = vsel %vm268, %v2974, 0
        %v2991 = vsel %vm268, %v2975, 0
        %2993 = vmatpush.bf16.msra.mxu0 0
        %2994 = vmatpush.bf16.msra.mxu0 0
        %2995 = vmatpush.bf16.msra.mxu0 0
        %2996 = vmatpush.bf16.msra.mxu0 0
        %2997 = vmatpush.bf16.msra.mxu0 0
        %2998 = vmatpush.bf16.msra.mxu0 0
        %2999 = vmatpush.bf16.msra.mxu0 0
        %3000 = vmatpush.bf16.msra.mxu0 %v2983
        %3001 = vmatmul.bf16.gmra.mxu0 %v2988
        %v3002 = vpop.f32.mrf.mxu0
        %v3003 = vadd.f32 0.0, %v3002
        %v3004 = vpop.f32.mrf.mxu0
        %v3005 = vadd.f32 0.0, %v3004
        %3006 = vmatmul.bf16.gmra.mxu0 %v2991
        %v3007 = vpop.f32.mrf.mxu0
        %v3008 = vadd.f32 0.0, %v3007
        %v3009 = vpop.f32.mrf.mxu0
        %v3010 = vadd.f32 0.0, %v3009
        %3011 = vdwg.mxu0
        %3012 = vmatpush.bf16.msra.mxu0 0
        %3013 = vmatpush.bf16.msra.mxu0 0
        %3014 = vmatpush.bf16.msra.mxu0 0
        %3015 = vmatpush.bf16.msra.mxu0 0
        %3016 = vmatpush.bf16.msra.mxu0 0
        %3017 = vmatpush.bf16.msra.mxu0 0
        %3018 = vmatpush.bf16.msra.mxu0 0
        %3019 = vmatpush.bf16.msra.mxu0 %v2984
        %3020 = vmatmul.bf16.gmra.mxu0 %v2988
        %v3021 = vpop.f32.mrf.mxu0
        %v3022 = vadd.f32 0.0, %v3021
        %v3023 = vpop.f32.mrf.mxu0
        %v3024 = vadd.f32 0.0, %v3023
        %3025 = vmatmul.bf16.gmra.mxu0 %v2991
        %v3026 = vpop.f32.mrf.mxu0
        %v3027 = vadd.f32 0.0, %v3026
        %v3028 = vpop.f32.mrf.mxu0
        %v3029 = vadd.f32 0.0, %v3028
        %3030 = vdwg.mxu0
        %v3031 = vld [vmem:[#allocation2] sm:$0xff]
        %v3032 = vld [vmem:[#allocation2 + $0x8] sm:$0xff]
        %v3033 = vld [vmem:[#allocation2 + $0x10] sm:$0xff]
        %v3034 = vld [vmem:[#allocation2 + $0x18] sm:$0xff]
        %v3035 = vld [vmem:[#allocation2 + $0x20] sm:$0xff]
        %v3036 = vld [vmem:[#allocation2 + $0x28] sm:$0xff]
        %v3037 = vld [vmem:[#allocation2 + $0x30] sm:$0xff]
        %v3038 = vld [vmem:[#allocation2 + $0x38] sm:$0xff]
        %v3039 = vadd.f32 %v3031, %v3003
        %v3040 = vadd.f32 %v3032, %v3022
        %v3041 = vadd.f32 %v3033, %v3005
        %v3042 = vadd.f32 %v3034, %v3024
        %v3043 = vadd.f32 %v3035, %v3008
        %v3044 = vadd.f32 %v3036, %v3027
        %v3045 = vadd.f32 %v3037, %v3010
        %v3046 = vadd.f32 %v3038, %v3029
        %3047 = vst [vmem:[#allocation2] sm:$0xff] %v3039
        %3048 = vst [vmem:[#allocation2 + $0x8] sm:$0xff] %v3040
        %3049 = vst [vmem:[#allocation2 + $0x10] sm:$0xff] %v3041
        %3050 = vst [vmem:[#allocation2 + $0x18] sm:$0xff] %v3042
        %3051 = vst [vmem:[#allocation2 + $0x20] sm:$0xff] %v3043
        %3052 = vst [vmem:[#allocation2 + $0x28] sm:$0xff] %v3044
        %3053 = vst [vmem:[#allocation2 + $0x30] sm:$0xff] %v3045
        %3054 = vst [vmem:[#allocation2 + $0x38] sm:$0xff] %v3046
        %s3055 = scalar_lea.vmem %s224, 480
        %v3056 = vld [vmem:[%s3055] sm:$0xf]
        %v3057 = vld [vmem:[%s3055 + $0x4] sm:$0xf]
        %v3058 = vld [vmem:[%s3055 + $0x8] sm:$0xf]
        %v3059 = vld [vmem:[%s3055 + $0xc] sm:$0xf]
        %v3064 = vunpack.c.l.b16 %v3056
        %v3065 = vunpack.c.l.b16 %v3057
        %v3066 = vunpack.c.l.b16 %v3058
        %v3067 = vunpack.c.l.b16 %v3059
        %v3068 = vpack.c.b16 %v3065, %v3064
        %v3069 = vpack.c.b16 %v3067, %v3066
        %3070 = vrot.lane.b32.xlu0 %v265, 102
        %v3071 = vpop.permute.xlu0 %3070
        %3072 = vrot.lane.b32.xlu0 %v340, 102
        %v3073 = vpop.permute.xlu0 %3072
        %3074 = vrot.lane.b32.xlu0 %v2881, 102
        %v3075 = vpop.permute.xlu0 %3074
        %vm3076 = vcmask 834560
        %v3077 = vsel %vm3076, %v3071, %v3073
        %v3078 = vsel %vm3076, %v3073, %v3075
        %v3082 = vsel %vm268, %v3068, 0
        %v3085 = vsel %vm268, %v3069, 0
        %3087 = vmatpush.bf16.msra.mxu0 0
        %3088 = vmatpush.bf16.msra.mxu0 0
        %3089 = vmatpush.bf16.msra.mxu0 0
        %3090 = vmatpush.bf16.msra.mxu0 0
        %3091 = vmatpush.bf16.msra.mxu0 0
        %3092 = vmatpush.bf16.msra.mxu0 0
        %3093 = vmatpush.bf16.msra.mxu0 0
        %3094 = vmatpush.bf16.msra.mxu0 %v3077
        %3095 = vmatmul.bf16.gmra.mxu0 %v3082
        %v3096 = vpop.f32.mrf.mxu0
        %v3097 = vadd.f32 0.0, %v3096
        %v3098 = vpop.f32.mrf.mxu0
        %v3099 = vadd.f32 0.0, %v3098
        %3100 = vmatmul.bf16.gmra.mxu0 %v3085
        %v3101 = vpop.f32.mrf.mxu0
        %v3102 = vadd.f32 0.0, %v3101
        %v3103 = vpop.f32.mrf.mxu0
        %v3104 = vadd.f32 0.0, %v3103
        %3105 = vdwg.mxu0
        %3106 = vmatpush.bf16.msra.mxu0 0
        %3107 = vmatpush.bf16.msra.mxu0 0
        %3108 = vmatpush.bf16.msra.mxu0 0
        %3109 = vmatpush.bf16.msra.mxu0 0
        %3110 = vmatpush.bf16.msra.mxu0 0
        %3111 = vmatpush.bf16.msra.mxu0 0
        %3112 = vmatpush.bf16.msra.mxu0 0
        %3113 = vmatpush.bf16.msra.mxu0 %v3078
        %3114 = vmatmul.bf16.gmra.mxu0 %v3082
        %v3115 = vpop.f32.mrf.mxu0
        %v3116 = vadd.f32 0.0, %v3115
        %v3117 = vpop.f32.mrf.mxu0
        %v3118 = vadd.f32 0.0, %v3117
        %3119 = vmatmul.bf16.gmra.mxu0 %v3085
        %v3120 = vpop.f32.mrf.mxu0
        %v3121 = vadd.f32 0.0, %v3120
        %v3122 = vpop.f32.mrf.mxu0
        %v3123 = vadd.f32 0.0, %v3122
        %3124 = vdwg.mxu0
        %v3125 = vld [vmem:[#allocation2] sm:$0xff]
        %v3126 = vld [vmem:[#allocation2 + $0x8] sm:$0xff]
        %v3127 = vld [vmem:[#allocation2 + $0x10] sm:$0xff]
        %v3128 = vld [vmem:[#allocation2 + $0x18] sm:$0xff]
        %v3129 = vld [vmem:[#allocation2 + $0x20] sm:$0xff]
        %v3130 = vld [vmem:[#allocation2 + $0x28] sm:$0xff]
        %v3131 = vld [vmem:[#allocation2 + $0x30] sm:$0xff]
        %v3132 = vld [vmem:[#allocation2 + $0x38] sm:$0xff]
        %v3133 = vadd.f32 %v3125, %v3097
        %v3134 = vadd.f32 %v3126, %v3116
        %v3135 = vadd.f32 %v3127, %v3099
        %v3136 = vadd.f32 %v3128, %v3118
        %v3137 = vadd.f32 %v3129, %v3102
        %v3138 = vadd.f32 %v3130, %v3121
        %v3139 = vadd.f32 %v3131, %v3104
        %v3140 = vadd.f32 %v3132, %v3123
        %3141 = vst [vmem:[#allocation2] sm:$0xff] %v3133
        %3142 = vst [vmem:[#allocation2 + $0x8] sm:$0xff] %v3134
        %3143 = vst [vmem:[#allocation2 + $0x10] sm:$0xff] %v3135
        %3144 = vst [vmem:[#allocation2 + $0x18] sm:$0xff] %v3136
        %3145 = vst [vmem:[#allocation2 + $0x20] sm:$0xff] %v3137
        %3146 = vst [vmem:[#allocation2 + $0x28] sm:$0xff] %v3138
        %3147 = vst [vmem:[#allocation2 + $0x30] sm:$0xff] %v3139
        %3148 = vst [vmem:[#allocation2 + $0x38] sm:$0xff] %v3140
        %s3149 = scalar_lea.vmem %s224, 496
        %v3150 = vld [vmem:[%s3149] sm:$0xf]
        %v3151 = vld [vmem:[%s3149 + $0x4] sm:$0xf]
        %v3152 = vld [vmem:[%s3149 + $0x8] sm:$0xf]
        %v3153 = vld [vmem:[%s3149 + $0xc] sm:$0xf]
        %v3158 = vunpack.c.l.b16 %v3150
        %v3159 = vunpack.c.l.b16 %v3151
        %v3160 = vunpack.c.l.b16 %v3152
        %v3161 = vunpack.c.l.b16 %v3153
        %v3162 = vpack.c.b16 %v3159, %v3158
        %v3163 = vpack.c.b16 %v3161, %v3160
        %3164 = vrot.lane.b32.xlu0 %v265, 101
        %v3165 = vpop.permute.xlu0 %3164
        %3166 = vrot.lane.b32.xlu0 %v340, 101
        %v3167 = vpop.permute.xlu0 %3166
        %3168 = vrot.lane.b32.xlu0 %v2881, 101
        %v3169 = vpop.permute.xlu0 %3168
        %vm3170 = vcmask 826368
        %v3171 = vsel %vm3170, %v3165, %v3167
        %v3172 = vsel %vm3170, %v3167, %v3169
        %v3176 = vsel %vm268, %v3162, 0
        %v3179 = vsel %vm268, %v3163, 0
        %3181 = vmatpush.bf16.msra.mxu0 0
        %3182 = vmatpush.bf16.msra.mxu0 0
        %3183 = vmatpush.bf16.msra.mxu0 0
        %3184 = vmatpush.bf16.msra.mxu0 0
        %3185 = vmatpush.bf16.msra.mxu0 0
        %3186 = vmatpush.bf16.msra.mxu0 0
        %3187 = vmatpush.bf16.msra.mxu0 0
        %3188 = vmatpush.bf16.msra.mxu0 %v3171
        %3189 = vmatmul.bf16.gmra.mxu0 %v3176
        %v3190 = vpop.f32.mrf.mxu0
        %v3191 = vadd.f32 0.0, %v3190
        %v3192 = vpop.f32.mrf.mxu0
        %v3193 = vadd.f32 0.0, %v3192
        %3194 = vmatmul.bf16.gmra.mxu0 %v3179
        %v3195 = vpop.f32.mrf.mxu0
        %v3196 = vadd.f32 0.0, %v3195
        %v3197 = vpop.f32.mrf.mxu0
        %v3198 = vadd.f32 0.0, %v3197
        %3199 = vdwg.mxu0
        %3200 = vmatpush.bf16.msra.mxu0 0
        %3201 = vmatpush.bf16.msra.mxu0 0
        %3202 = vmatpush.bf16.msra.mxu0 0
        %3203 = vmatpush.bf16.msra.mxu0 0
        %3204 = vmatpush.bf16.msra.mxu0 0
        %3205 = vmatpush.bf16.msra.mxu0 0
        %3206 = vmatpush.bf16.msra.mxu0 0
        %3207 = vmatpush.bf16.msra.mxu0 %v3172
        %3208 = vmatmul.bf16.gmra.mxu0 %v3176
        %v3209 = vpop.f32.mrf.mxu0
        %v3210 = vadd.f32 0.0, %v3209
        %v3211 = vpop.f32.mrf.mxu0
        %v3212 = vadd.f32 0.0, %v3211
        %3213 = vmatmul.bf16.gmra.mxu0 %v3179
        %v3214 = vpop.f32.mrf.mxu0
        %v3215 = vadd.f32 0.0, %v3214
        %v3216 = vpop.f32.mrf.mxu0
        %v3217 = vadd.f32 0.0, %v3216
        %3218 = vdwg.mxu0
        %v3219 = vld [vmem:[#allocation2] sm:$0xff]
        %v3220 = vld [vmem:[#allocation2 + $0x8] sm:$0xff]
        %v3221 = vld [vmem:[#allocation2 + $0x10] sm:$0xff]
        %v3222 = vld [vmem:[#allocation2 + $0x18] sm:$0xff]
        %v3223 = vld [vmem:[#allocation2 + $0x20] sm:$0xff]
        %v3224 = vld [vmem:[#allocation2 + $0x28] sm:$0xff]
        %v3225 = vld [vmem:[#allocation2 + $0x30] sm:$0xff]
        %v3226 = vld [vmem:[#allocation2 + $0x38] sm:$0xff]
        %v3227 = vadd.f32 %v3219, %v3191
        %v3228 = vadd.f32 %v3220, %v3210
        %v3229 = vadd.f32 %v3221, %v3193
        %v3230 = vadd.f32 %v3222, %v3212
        %v3231 = vadd.f32 %v3223, %v3196
        %v3232 = vadd.f32 %v3224, %v3215
        %v3233 = vadd.f32 %v3225, %v3198
        %v3234 = vadd.f32 %v3226, %v3217
        %3235 = vst [vmem:[#allocation2] sm:$0xff] %v3227
        %3236 = vst [vmem:[#allocation2 + $0x8] sm:$0xff] %v3228
        %3237 = vst [vmem:[#allocation2 + $0x10] sm:$0xff] %v3229
        %3238 = vst [vmem:[#allocation2 + $0x18] sm:$0xff] %v3230
        %3239 = vst [vmem:[#allocation2 + $0x20] sm:$0xff] %v3231
        %3240 = vst [vmem:[#allocation2 + $0x28] sm:$0xff] %v3232
        %3241 = vst [vmem:[#allocation2 + $0x30] sm:$0xff] %v3233
        %3242 = vst [vmem:[#allocation2 + $0x38] sm:$0xff] %v3234
        %s3243 = scalar_lea.vmem %s224, 512
        %v3244 = vld [vmem:[%s3243] sm:$0xf]
        %v3245 = vld [vmem:[%s3243 + $0x4] sm:$0xf]
        %v3246 = vld [vmem:[%s3243 + $0x8] sm:$0xf]
        %v3247 = vld [vmem:[%s3243 + $0xc] sm:$0xf]
        %v3252 = vunpack.c.l.b16 %v3244
        %v3253 = vunpack.c.l.b16 %v3245
        %v3254 = vunpack.c.l.b16 %v3246
        %v3255 = vunpack.c.l.b16 %v3247
        %v3256 = vpack.c.b16 %v3253, %v3252
        %v3257 = vpack.c.b16 %v3255, %v3254
        %3258 = vrot.lane.b32.xlu0 %v265, 100
        %v3259 = vpop.permute.xlu0 %3258
        %3260 = vrot.lane.b32.xlu0 %v340, 100
        %v3261 = vpop.permute.xlu0 %3260
        %3262 = vrot.lane.b32.xlu0 %v2881, 100
        %v3263 = vpop.permute.xlu0 %3262
        %vm3264 = vcmask 818176
        %v3265 = vsel %vm3264, %v3259, %v3261
        %v3266 = vsel %vm3264, %v3261, %v3263
        %v3270 = vsel %vm268, %v3256, 0
        %v3273 = vsel %vm268, %v3257, 0
        %3275 = vmatpush.bf16.msra.mxu0 0
        %3276 = vmatpush.bf16.msra.mxu0 0
        %3277 = vmatpush.bf16.msra.mxu0 0
        %3278 = vmatpush.bf16.msra.mxu0 0
        %3279 = vmatpush.bf16.msra.mxu0 0
        %3280 = vmatpush.bf16.msra.mxu0 0
        %3281 = vmatpush.bf16.msra.mxu0 0
        %3282 = vmatpush.bf16.msra.mxu0 %v3265
        %3283 = vmatmul.bf16.gmra.mxu0 %v3270
        %v3284 = vpop.f32.mrf.mxu0
        %v3285 = vadd.f32 0.0, %v3284
        %v3286 = vpop.f32.mrf.mxu0
        %v3287 = vadd.f32 0.0, %v3286
        %3288 = vmatmul.bf16.gmra.mxu0 %v3273
        %v3289 = vpop.f32.mrf.mxu0
        %v3290 = vadd.f32 0.0, %v3289
        %v3291 = vpop.f32.mrf.mxu0
        %v3292 = vadd.f32 0.0, %v3291
        %3293 = vdwg.mxu0
        %3294 = vmatpush.bf16.msra.mxu0 0
        %3295 = vmatpush.bf16.msra.mxu0 0
        %3296 = vmatpush.bf16.msra.mxu0 0
        %3297 = vmatpush.bf16.msra.mxu0 0
        %3298 = vmatpush.bf16.msra.mxu0 0
        %3299 = vmatpush.bf16.msra.mxu0 0
        %3300 = vmatpush.bf16.msra.mxu0 0
        %3301 = vmatpush.bf16.msra.mxu0 %v3266
        %3302 = vmatmul.bf16.gmra.mxu0 %v3270
        %v3303 = vpop.f32.mrf.mxu0
        %v3304 = vadd.f32 0.0, %v3303
        %v3305 = vpop.f32.mrf.mxu0
        %v3306 = vadd.f32 0.0, %v3305
        %3307 = vmatmul.bf16.gmra.mxu0 %v3273
        %v3308 = vpop.f32.mrf.mxu0
        %v3309 = vadd.f32 0.0, %v3308
        %v3310 = vpop.f32.mrf.mxu0
        %v3311 = vadd.f32 0.0, %v3310
        %3312 = vdwg.mxu0
        %v3313 = vld [vmem:[#allocation2] sm:$0xff]
        %v3314 = vld [vmem:[#allocation2 + $0x8] sm:$0xff]
        %v3315 = vld [vmem:[#allocation2 + $0x10] sm:$0xff]
        %v3316 = vld [vmem:[#allocation2 + $0x18] sm:$0xff]
        %v3317 = vld [vmem:[#allocation2 + $0x20] sm:$0xff]
        %v3318 = vld [vmem:[#allocation2 + $0x28] sm:$0xff]
        %v3319 = vld [vmem:[#allocation2 + $0x30] sm:$0xff]
        %v3320 = vld [vmem:[#allocation2 + $0x38] sm:$0xff]
        %v3321 = vadd.f32 %v3313, %v3285
        %v3322 = vadd.f32 %v3314, %v3304
        %v3323 = vadd.f32 %v3315, %v3287
        %v3324 = vadd.f32 %v3316, %v3306
        %v3325 = vadd.f32 %v3317, %v3290
        %v3326 = vadd.f32 %v3318, %v3309
        %v3327 = vadd.f32 %v3319, %v3292
        %v3328 = vadd.f32 %v3320, %v3311
        %3329 = vst [vmem:[#allocation2] sm:$0xff] %v3321
        %3330 = vst [vmem:[#allocation2 + $0x8] sm:$0xff] %v3322
        %3331 = vst [vmem:[#allocation2 + $0x10] sm:$0xff] %v3323
        %3332 = vst [vmem:[#allocation2 + $0x18] sm:$0xff] %v3324
        %3333 = vst [vmem:[#allocation2 + $0x20] sm:$0xff] %v3325
        %3334 = vst [vmem:[#allocation2 + $0x28] sm:$0xff] %v3326
        %3335 = vst [vmem:[#allocation2 + $0x30] sm:$0xff] %v3327
        %3336 = vst [vmem:[#allocation2 + $0x38] sm:$0xff] %v3328
        %s3337 = scalar_lea.vmem %s224, 528
        %v3338 = vld [vmem:[%s3337] sm:$0xf]
        %v3339 = vld [vmem:[%s3337 + $0x4] sm:$0xf]
        %v3340 = vld [vmem:[%s3337 + $0x8] sm:$0xf]
        %v3341 = vld [vmem:[%s3337 + $0xc] sm:$0xf]
        %v3346 = vunpack.c.l.b16 %v3338
        %v3347 = vunpack.c.l.b16 %v3339
        %v3348 = vunpack.c.l.b16 %v3340
        %v3349 = vunpack.c.l.b16 %v3341
        %v3350 = vpack.c.b16 %v3347, %v3346
        %v3351 = vpack.c.b16 %v3349, %v3348
        %3352 = vrot.lane.b32.xlu0 %v265, 99
        %v3353 = vpop.permute.xlu0 %3352
        %3354 = vrot.lane.b32.xlu0 %v340, 99
        %v3355 = vpop.permute.xlu0 %3354
        %3356 = vrot.lane.b32.xlu0 %v2881, 99
        %v3357 = vpop.permute.xlu0 %3356
        %vm3358 = vcmask 809984
        %v3359 = vsel %vm3358, %v3353, %v3355
        %v3360 = vsel %vm3358, %v3355, %v3357
        %v3364 = vsel %vm268, %v3350, 0
        %v3367 = vsel %vm268, %v3351, 0
        %3369 = vmatpush.bf16.msra.mxu0 0
        %3370 = vmatpush.bf16.msra.mxu0 0
        %3371 = vmatpush.bf16.msra.mxu0 0
        %3372 = vmatpush.bf16.msra.mxu0 0
        %3373 = vmatpush.bf16.msra.mxu0 0
        %3374 = vmatpush.bf16.msra.mxu0 0
        %3375 = vmatpush.bf16.msra.mxu0 0
        %3376 = vmatpush.bf16.msra.mxu0 %v3359
        %3377 = vmatmul.bf16.gmra.mxu0 %v3364
        %v3378 = vpop.f32.mrf.mxu0
        %v3379 = vadd.f32 0.0, %v3378
        %v3380 = vpop.f32.mrf.mxu0
        %v3381 = vadd.f32 0.0, %v3380
        %3382 = vmatmul.bf16.gmra.mxu0 %v3367
        %v3383 = vpop.f32.mrf.mxu0
        %v3384 = vadd.f32 0.0, %v3383
        %v3385 = vpop.f32.mrf.mxu0
        %v3386 = vadd.f32 0.0, %v3385
        %3387 = vdwg.mxu0
        %3388 = vmatpush.bf16.msra.mxu0 0
        %3389 = vmatpush.bf16.msra.mxu0 0
        %3390 = vmatpush.bf16.msra.mxu0 0
        %3391 = vmatpush.bf16.msra.mxu0 0
        %3392 = vmatpush.bf16.msra.mxu0 0
        %3393 = vmatpush.bf16.msra.mxu0 0
        %3394 = vmatpush.bf16.msra.mxu0 0
        %3395 = vmatpush.bf16.msra.mxu0 %v3360
        %3396 = vmatmul.bf16.gmra.mxu0 %v3364
        %v3397 = vpop.f32.mrf.mxu0
        %v3398 = vadd.f32 0.0, %v3397
        %v3399 = vpop.f32.mrf.mxu0
        %v3400 = vadd.f32 0.0, %v3399
        %3401 = vmatmul.bf16.gmra.mxu0 %v3367
        %v3402 = vpop.f32.mrf.mxu0
        %v3403 = vadd.f32 0.0, %v3402
        %v3404 = vpop.f32.mrf.mxu0
        %v3405 = vadd.f32 0.0, %v3404
        %3406 = vdwg.mxu0
        %v3407 = vld [vmem:[#allocation2] sm:$0xff]
        %v3408 = vld [vmem:[#allocation2 + $0x8] sm:$0xff]
        %v3409 = vld [vmem:[#allocation2 + $0x10] sm:$0xff]
        %v3410 = vld [vmem:[#allocation2 + $0x18] sm:$0xff]
        %v3411 = vld [vmem:[#allocation2 + $0x20] sm:$0xff]
        %v3412 = vld [vmem:[#allocation2 + $0x28] sm:$0xff]
        %v3413 = vld [vmem:[#allocation2 + $0x30] sm:$0xff]
        %v3414 = vld [vmem:[#allocation2 + $0x38] sm:$0xff]
        %v3415 = vadd.f32 %v3407, %v3379
        %v3416 = vadd.f32 %v3408, %v3398
        %v3417 = vadd.f32 %v3409, %v3381
        %v3418 = vadd.f32 %v3410, %v3400
        %v3419 = vadd.f32 %v3411, %v3384
        %v3420 = vadd.f32 %v3412, %v3403
        %v3421 = vadd.f32 %v3413, %v3386
        %v3422 = vadd.f32 %v3414, %v3405
        %3423 = vst [vmem:[#allocation2] sm:$0xff] %v3415
        %3424 = vst [vmem:[#allocation2 + $0x8] sm:$0xff] %v3416
        %3425 = vst [vmem:[#allocation2 + $0x10] sm:$0xff] %v3417
        %3426 = vst [vmem:[#allocation2 + $0x18] sm:$0xff] %v3418
        %3427 = vst [vmem:[#allocation2 + $0x20] sm:$0xff] %v3419
        %3428 = vst [vmem:[#allocation2 + $0x28] sm:$0xff] %v3420
        %3429 = vst [vmem:[#allocation2 + $0x30] sm:$0xff] %v3421
        %3430 = vst [vmem:[#allocation2 + $0x38] sm:$0xff] %v3422
        %s3431 = scalar_lea.vmem %s224, 544
        %v3432 = vld [vmem:[%s3431] sm:$0xf]
        %v3433 = vld [vmem:[%s3431 + $0x4] sm:$0xf]
        %v3434 = vld [vmem:[%s3431 + $0x8] sm:$0xf]
        %v3435 = vld [vmem:[%s3431 + $0xc] sm:$0xf]
        %v3440 = vunpack.c.l.b16 %v3432
        %v3441 = vunpack.c.l.b16 %v3433
        %v3442 = vunpack.c.l.b16 %v3434
        %v3443 = vunpack.c.l.b16 %v3435
        %v3444 = vpack.c.b16 %v3441, %v3440
        %v3445 = vpack.c.b16 %v3443, %v3442
        %3446 = vrot.lane.b32.xlu0 %v265, 98
        %v3447 = vpop.permute.xlu0 %3446
        %3448 = vrot.lane.b32.xlu0 %v340, 98
        %v3449 = vpop.permute.xlu0 %3448
        %3450 = vrot.lane.b32.xlu0 %v2881, 98
        %v3451 = vpop.permute.xlu0 %3450
        %vm3452 = vcmask 801792
        %v3453 = vsel %vm3452, %v3447, %v3449
        %v3454 = vsel %vm3452, %v3449, %v3451
        %v3458 = vsel %vm268, %v3444, 0
        %v3461 = vsel %vm268, %v3445, 0
        %3463 = vmatpush.bf16.msra.mxu0 0
        %3464 = vmatpush.bf16.msra.mxu0 0
        %3465 = vmatpush.bf16.msra.mxu0 0
        %3466 = vmatpush.bf16.msra.mxu0 0
        %3467 = vmatpush.bf16.msra.mxu0 0
        %3468 = vmatpush.bf16.msra.mxu0 0
        %3469 = vmatpush.bf16.msra.mxu0 0
        %3470 = vmatpush.bf16.msra.mxu0 %v3453
        %3471 = vmatmul.bf16.gmra.mxu0 %v3458
        %v3472 = vpop.f32.mrf.mxu0
        %v3473 = vadd.f32 0.0, %v3472
        %v3474 = vpop.f32.mrf.mxu0
        %v3475 = vadd.f32 0.0, %v3474
        %3476 = vmatmul.bf16.gmra.mxu0 %v3461
        %v3477 = vpop.f32.mrf.mxu0
        %v3478 = vadd.f32 0.0, %v3477
        %v3479 = vpop.f32.mrf.mxu0
        %v3480 = vadd.f32 0.0, %v3479
        %3481 = vdwg.mxu0
        %3482 = vmatpush.bf16.msra.mxu0 0
        %3483 = vmatpush.bf16.msra.mxu0 0
        %3484 = vmatpush.bf16.msra.mxu0 0
        %3485 = vmatpush.bf16.msra.mxu0 0
        %3486 = vmatpush.bf16.msra.mxu0 0
        %3487 = vmatpush.bf16.msra.mxu0 0
        %3488 = vmatpush.bf16.msra.mxu0 0
        %3489 = vmatpush.bf16.msra.mxu0 %v3454
        %3490 = vmatmul.bf16.gmra.mxu0 %v3458
        %v3491 = vpop.f32.mrf.mxu0
        %v3492 = vadd.f32 0.0, %v3491
        %v3493 = vpop.f32.mrf.mxu0
        %v3494 = vadd.f32 0.0, %v3493
        %3495 = vmatmul.bf16.gmra.mxu0 %v3461
        %v3496 = vpop.f32.mrf.mxu0
        %v3497 = vadd.f32 0.0, %v3496
        %v3498 = vpop.f32.mrf.mxu0
        %v3499 = vadd.f32 0.0, %v3498
        %3500 = vdwg.mxu0
        %v3501 = vld [vmem:[#allocation2] sm:$0xff]
        %v3502 = vld [vmem:[#allocation2 + $0x8] sm:$0xff]
        %v3503 = vld [vmem:[#allocation2 + $0x10] sm:$0xff]
        %v3504 = vld [vmem:[#allocation2 + $0x18] sm:$0xff]
        %v3505 = vld [vmem:[#allocation2 + $0x20] sm:$0xff]
        %v3506 = vld [vmem:[#allocation2 + $0x28] sm:$0xff]
        %v3507 = vld [vmem:[#allocation2 + $0x30] sm:$0xff]
        %v3508 = vld [vmem:[#allocation2 + $0x38] sm:$0xff]
        %v3509 = vadd.f32 %v3501, %v3473
        %v3510 = vadd.f32 %v3502, %v3492
        %v3511 = vadd.f32 %v3503, %v3475
        %v3512 = vadd.f32 %v3504, %v3494
        %v3513 = vadd.f32 %v3505, %v3478
        %v3514 = vadd.f32 %v3506, %v3497
        %v3515 = vadd.f32 %v3507, %v3480
        %v3516 = vadd.f32 %v3508, %v3499
        %3517 = vst [vmem:[#allocation2] sm:$0xff] %v3509
        %3518 = vst [vmem:[#allocation2 + $0x8] sm:$0xff] %v3510
        %3519 = vst [vmem:[#allocation2 + $0x10] sm:$0xff] %v3511
        %3520 = vst [vmem:[#allocation2 + $0x18] sm:$0xff] %v3512
        %3521 = vst [vmem:[#allocation2 + $0x20] sm:$0xff] %v3513
        %3522 = vst [vmem:[#allocation2 + $0x28] sm:$0xff] %v3514
        %3523 = vst [vmem:[#allocation2 + $0x30] sm:$0xff] %v3515
        %3524 = vst [vmem:[#allocation2 + $0x38] sm:$0xff] %v3516
        %s3525 = scalar_lea.vmem %s224, 560
        %v3526 = vld [vmem:[%s3525] sm:$0xf]
        %v3527 = vld [vmem:[%s3525 + $0x4] sm:$0xf]
        %v3528 = vld [vmem:[%s3525 + $0x8] sm:$0xf]
        %v3529 = vld [vmem:[%s3525 + $0xc] sm:$0xf]
        %v3534 = vunpack.c.l.b16 %v3526
        %v3535 = vunpack.c.l.b16 %v3527
        %v3536 = vunpack.c.l.b16 %v3528
        %v3537 = vunpack.c.l.b16 %v3529
        %v3538 = vpack.c.b16 %v3535, %v3534
        %v3539 = vpack.c.b16 %v3537, %v3536
        %3540 = vrot.lane.b32.xlu0 %v265, 66
        %v3541 = vpop.permute.xlu0 %3540
        %3542 = vrot.lane.b32.xlu0 %v340, 66
        %v3543 = vpop.permute.xlu0 %3542
        %3544 = vrot.lane.b32.xlu0 %v2881, 66
        %v3545 = vpop.permute.xlu0 %3544
        %vm3546 = vcmask 539648
        %v3547 = vsel %vm3546, %v3541, %v3543
        %v3548 = vsel %vm3546, %v3543, %v3545
        %v3552 = vsel %vm268, %v3538, 0
        %v3555 = vsel %vm268, %v3539, 0
        %3557 = vmatpush.bf16.msra.mxu0 0
        %3558 = vmatpush.bf16.msra.mxu0 0
        %3559 = vmatpush.bf16.msra.mxu0 0
        %3560 = vmatpush.bf16.msra.mxu0 0
        %3561 = vmatpush.bf16.msra.mxu0 0
        %3562 = vmatpush.bf16.msra.mxu0 0
        %3563 = vmatpush.bf16.msra.mxu0 0
        %3564 = vmatpush.bf16.msra.mxu0 %v3547
        %3565 = vmatmul.bf16.gmra.mxu0 %v3552
        %v3566 = vpop.f32.mrf.mxu0
        %v3567 = vadd.f32 0.0, %v3566
        %v3568 = vpop.f32.mrf.mxu0
        %v3569 = vadd.f32 0.0, %v3568
        %3570 = vmatmul.bf16.gmra.mxu0 %v3555
        %v3571 = vpop.f32.mrf.mxu0
        %v3572 = vadd.f32 0.0, %v3571
        %v3573 = vpop.f32.mrf.mxu0
        %v3574 = vadd.f32 0.0, %v3573
        %3575 = vdwg.mxu0
        %3576 = vmatpush.bf16.msra.mxu0 0
        %3577 = vmatpush.bf16.msra.mxu0 0
        %3578 = vmatpush.bf16.msra.mxu0 0
        %3579 = vmatpush.bf16.msra.mxu0 0
        %3580 = vmatpush.bf16.msra.mxu0 0
        %3581 = vmatpush.bf16.msra.mxu0 0
        %3582 = vmatpush.bf16.msra.mxu0 0
        %3583 = vmatpush.bf16.msra.mxu0 %v3548
        %3584 = vmatmul.bf16.gmra.mxu0 %v3552
        %v3585 = vpop.f32.mrf.mxu0
        %v3586 = vadd.f32 0.0, %v3585
        %v3587 = vpop.f32.mrf.mxu0
        %v3588 = vadd.f32 0.0, %v3587
        %3589 = vmatmul.bf16.gmra.mxu0 %v3555
        %v3590 = vpop.f32.mrf.mxu0
        %v3591 = vadd.f32 0.0, %v3590
        %v3592 = vpop.f32.mrf.mxu0
        %v3593 = vadd.f32 0.0, %v3592
        %3594 = vdwg.mxu0
        %v3595 = vld [vmem:[#allocation2] sm:$0xff]
        %v3596 = vld [vmem:[#allocation2 + $0x8] sm:$0xff]
        %v3597 = vld [vmem:[#allocation2 + $0x10] sm:$0xff]
        %v3598 = vld [vmem:[#allocation2 + $0x18] sm:$0xff]
        %v3599 = vld [vmem:[#allocation2 + $0x20] sm:$0xff]
        %v3600 = vld [vmem:[#allocation2 + $0x28] sm:$0xff]
        %v3601 = vld [vmem:[#allocation2 + $0x30] sm:$0xff]
        %v3602 = vld [vmem:[#allocation2 + $0x38] sm:$0xff]
        %v3603 = vadd.f32 %v3595, %v3567
        %v3604 = vadd.f32 %v3596, %v3586
        %v3605 = vadd.f32 %v3597, %v3569
        %v3606 = vadd.f32 %v3598, %v3588
        %v3607 = vadd.f32 %v3599, %v3572
        %v3608 = vadd.f32 %v3600, %v3591
        %v3609 = vadd.f32 %v3601, %v3574
        %v3610 = vadd.f32 %v3602, %v3593
        %3611 = vst [vmem:[#allocation2] sm:$0xff] %v3603
        %3612 = vst [vmem:[#allocation2 + $0x8] sm:$0xff] %v3604
        %3613 = vst [vmem:[#allocation2 + $0x10] sm:$0xff] %v3605
        %3614 = vst [vmem:[#allocation2 + $0x18] sm:$0xff] %v3606
        %3615 = vst [vmem:[#allocation2 + $0x20] sm:$0xff] %v3607
        %3616 = vst [vmem:[#allocation2 + $0x28] sm:$0xff] %v3608
        %3617 = vst [vmem:[#allocation2 + $0x30] sm:$0xff] %v3609
        %3618 = vst [vmem:[#allocation2 + $0x38] sm:$0xff] %v3610
        %s3619 = scalar_lea.vmem %s224, 576
        %v3620 = vld [vmem:[%s3619] sm:$0xf]
        %v3621 = vld [vmem:[%s3619 + $0x4] sm:$0xf]
        %v3622 = vld [vmem:[%s3619 + $0x8] sm:$0xf]
        %v3623 = vld [vmem:[%s3619 + $0xc] sm:$0xf]
        %v3628 = vunpack.c.l.b16 %v3620
        %v3629 = vunpack.c.l.b16 %v3621
        %v3630 = vunpack.c.l.b16 %v3622
        %v3631 = vunpack.c.l.b16 %v3623
        %v3632 = vpack.c.b16 %v3629, %v3628
        %v3633 = vpack.c.b16 %v3631, %v3630
        %3634 = vrot.lane.b32.xlu0 %v265, 65
        %v3635 = vpop.permute.xlu0 %3634
        %3636 = vrot.lane.b32.xlu0 %v340, 65
        %v3637 = vpop.permute.xlu0 %3636
        %3638 = vrot.lane.b32.xlu0 %v2881, 65
        %v3639 = vpop.permute.xlu0 %3638
        %vm3640 = vcmask 531456
        %v3641 = vsel %vm3640, %v3635, %v3637
        %v3642 = vsel %vm3640, %v3637, %v3639
        %v3646 = vsel %vm268, %v3632, 0
        %v3649 = vsel %vm268, %v3633, 0
        %3651 = vmatpush.bf16.msra.mxu0 0
        %3652 = vmatpush.bf16.msra.mxu0 0
        %3653 = vmatpush.bf16.msra.mxu0 0
        %3654 = vmatpush.bf16.msra.mxu0 0
        %3655 = vmatpush.bf16.msra.mxu0 0
        %3656 = vmatpush.bf16.msra.mxu0 0
        %3657 = vmatpush.bf16.msra.mxu0 0
        %3658 = vmatpush.bf16.msra.mxu0 %v3641
        %3659 = vmatmul.bf16.gmra.mxu0 %v3646
        %v3660 = vpop.f32.mrf.mxu0
        %v3661 = vadd.f32 0.0, %v3660
        %v3662 = vpop.f32.mrf.mxu0
        %v3663 = vadd.f32 0.0, %v3662
        %3664 = vmatmul.bf16.gmra.mxu0 %v3649
        %v3665 = vpop.f32.mrf.mxu0
        %v3666 = vadd.f32 0.0, %v3665
        %v3667 = vpop.f32.mrf.mxu0
        %v3668 = vadd.f32 0.0, %v3667
        %3669 = vdwg.mxu0
        %3670 = vmatpush.bf16.msra.mxu0 0
        %3671 = vmatpush.bf16.msra.mxu0 0
        %3672 = vmatpush.bf16.msra.mxu0 0
        %3673 = vmatpush.bf16.msra.mxu0 0
        %3674 = vmatpush.bf16.msra.mxu0 0
        %3675 = vmatpush.bf16.msra.mxu0 0
        %3676 = vmatpush.bf16.msra.mxu0 0
        %3677 = vmatpush.bf16.msra.mxu0 %v3642
        %3678 = vmatmul.bf16.gmra.mxu0 %v3646
        %v3679 = vpop.f32.mrf.mxu0
        %v3680 = vadd.f32 0.0, %v3679
        %v3681 = vpop.f32.mrf.mxu0
        %v3682 = vadd.f32 0.0, %v3681
        %3683 = vmatmul.bf16.gmra.mxu0 %v3649
        %v3684 = vpop.f32.mrf.mxu0
        %v3685 = vadd.f32 0.0, %v3684
        %v3686 = vpop.f32.mrf.mxu0
        %v3687 = vadd.f32 0.0, %v3686
        %3688 = vdwg.mxu0
        %v3689 = vld [vmem:[#allocation2] sm:$0xff]
        %v3690 = vld [vmem:[#allocation2 + $0x8] sm:$0xff]
        %v3691 = vld [vmem:[#allocation2 + $0x10] sm:$0xff]
        %v3692 = vld [vmem:[#allocation2 + $0x18] sm:$0xff]
        %v3693 = vld [vmem:[#allocation2 + $0x20] sm:$0xff]
        %v3694 = vld [vmem:[#allocation2 + $0x28] sm:$0xff]
        %v3695 = vld [vmem:[#allocation2 + $0x30] sm:$0xff]
        %v3696 = vld [vmem:[#allocation2 + $0x38] sm:$0xff]
        %v3697 = vadd.f32 %v3689, %v3661
        %v3698 = vadd.f32 %v3690, %v3680
        %v3699 = vadd.f32 %v3691, %v3663
        %v3700 = vadd.f32 %v3692, %v3682
        %v3701 = vadd.f32 %v3693, %v3666
        %v3702 = vadd.f32 %v3694, %v3685
        %v3703 = vadd.f32 %v3695, %v3668
        %v3704 = vadd.f32 %v3696, %v3687
        %3705 = vst [vmem:[#allocation2] sm:$0xff] %v3697
        %3706 = vst [vmem:[#allocation2 + $0x8] sm:$0xff] %v3698
        %3707 = vst [vmem:[#allocation2 + $0x10] sm:$0xff] %v3699
        %3708 = vst [vmem:[#allocation2 + $0x18] sm:$0xff] %v3700
        %3709 = vst [vmem:[#allocation2 + $0x20] sm:$0xff] %v3701
        %3710 = vst [vmem:[#allocation2 + $0x28] sm:$0xff] %v3702
        %3711 = vst [vmem:[#allocation2 + $0x30] sm:$0xff] %v3703
        %3712 = vst [vmem:[#allocation2 + $0x38] sm:$0xff] %v3704
        %s3713 = scalar_lea.vmem %s224, 592
        %v3714 = vld [vmem:[%s3713] sm:$0xf]
        %v3715 = vld [vmem:[%s3713 + $0x4] sm:$0xf]
        %v3716 = vld [vmem:[%s3713 + $0x8] sm:$0xf]
        %v3717 = vld [vmem:[%s3713 + $0xc] sm:$0xf]
        %v3722 = vunpack.c.l.b16 %v3714
        %v3723 = vunpack.c.l.b16 %v3715
        %v3724 = vunpack.c.l.b16 %v3716
        %v3725 = vunpack.c.l.b16 %v3717
        %v3726 = vpack.c.b16 %v3723, %v3722
        %v3727 = vpack.c.b16 %v3725, %v3724
        %3728 = vrot.lane.b32.xlu0 %v265, 64
        %v3729 = vpop.permute.xlu0 %3728
        %3730 = vrot.lane.b32.xlu0 %v340, 64
        %v3731 = vpop.permute.xlu0 %3730
        %3732 = vrot.lane.b32.xlu0 %v2881, 64
        %v3733 = vpop.permute.xlu0 %3732
        %vm3734 = vcmask 523264
        %v3735 = vsel %vm3734, %v3729, %v3731
        %v3736 = vsel %vm3734, %v3731, %v3733
        %v3740 = vsel %vm268, %v3726, 0
        %v3743 = vsel %vm268, %v3727, 0
        %3745 = vmatpush.bf16.msra.mxu0 0
        %3746 = vmatpush.bf16.msra.mxu0 0
        %3747 = vmatpush.bf16.msra.mxu0 0
        %3748 = vmatpush.bf16.msra.mxu0 0
        %3749 = vmatpush.bf16.msra.mxu0 0
        %3750 = vmatpush.bf16.msra.mxu0 0
        %3751 = vmatpush.bf16.msra.mxu0 0
        %3752 = vmatpush.bf16.msra.mxu0 %v3735
        %3753 = vmatmul.bf16.gmra.mxu0 %v3740
        %v3754 = vpop.f32.mrf.mxu0
        %v3755 = vadd.f32 0.0, %v3754
        %v3756 = vpop.f32.mrf.mxu0
        %v3757 = vadd.f32 0.0, %v3756
        %3758 = vmatmul.bf16.gmra.mxu0 %v3743
        %v3759 = vpop.f32.mrf.mxu0
        %v3760 = vadd.f32 0.0, %v3759
        %v3761 = vpop.f32.mrf.mxu0
        %v3762 = vadd.f32 0.0, %v3761
        %3763 = vdwg.mxu0
        %3764 = vmatpush.bf16.msra.mxu0 0
        %3765 = vmatpush.bf16.msra.mxu0 0
        %3766 = vmatpush.bf16.msra.mxu0 0
        %3767 = vmatpush.bf16.msra.mxu0 0
        %3768 = vmatpush.bf16.msra.mxu0 0
        %3769 = vmatpush.bf16.msra.mxu0 0
        %3770 = vmatpush.bf16.msra.mxu0 0
        %3771 = vmatpush.bf16.msra.mxu0 %v3736
        %3772 = vmatmul.bf16.gmra.mxu0 %v3740
        %v3773 = vpop.f32.mrf.mxu0
        %v3774 = vadd.f32 0.0, %v3773
        %v3775 = vpop.f32.mrf.mxu0
        %v3776 = vadd.f32 0.0, %v3775
        %3777 = vmatmul.bf16.gmra.mxu0 %v3743
        %v3778 = vpop.f32.mrf.mxu0
        %v3779 = vadd.f32 0.0, %v3778
        %v3780 = vpop.f32.mrf.mxu0
        %v3781 = vadd.f32 0.0, %v3780
        %3782 = vdwg.mxu0
        %v3783 = vld [vmem:[#allocation2] sm:$0xff]
        %v3784 = vld [vmem:[#allocation2 + $0x8] sm:$0xff]
        %v3785 = vld [vmem:[#allocation2 + $0x10] sm:$0xff]
        %v3786 = vld [vmem:[#allocation2 + $0x18] sm:$0xff]
        %v3787 = vld [vmem:[#allocation2 + $0x20] sm:$0xff]
        %v3788 = vld [vmem:[#allocation2 + $0x28] sm:$0xff]
        %v3789 = vld [vmem:[#allocation2 + $0x30] sm:$0xff]
        %v3790 = vld [vmem:[#allocation2 + $0x38] sm:$0xff]
        %v3791 = vadd.f32 %v3783, %v3755
        %v3792 = vadd.f32 %v3784, %v3774
        %v3793 = vadd.f32 %v3785, %v3757
        %v3794 = vadd.f32 %v3786, %v3776
        %v3795 = vadd.f32 %v3787, %v3760
        %v3796 = vadd.f32 %v3788, %v3779
        %v3797 = vadd.f32 %v3789, %v3762
        %v3798 = vadd.f32 %v3790, %v3781
        %3799 = vst [vmem:[#allocation2] sm:$0xff] %v3791
        %3800 = vst [vmem:[#allocation2 + $0x8] sm:$0xff] %v3792
        %3801 = vst [vmem:[#allocation2 + $0x10] sm:$0xff] %v3793
        %3802 = vst [vmem:[#allocation2 + $0x18] sm:$0xff] %v3794
        %3803 = vst [vmem:[#allocation2 + $0x20] sm:$0xff] %v3795
        %3804 = vst [vmem:[#allocation2 + $0x28] sm:$0xff] %v3796
        %3805 = vst [vmem:[#allocation2 + $0x30] sm:$0xff] %v3797
        %3806 = vst [vmem:[#allocation2 + $0x38] sm:$0xff] %v3798
        %s3807 = scalar_lea.vmem %s224, 608
        %v3808 = vld [vmem:[%s3807] sm:$0xf]
        %v3809 = vld [vmem:[%s3807 + $0x4] sm:$0xf]
        %v3810 = vld [vmem:[%s3807 + $0x8] sm:$0xf]
        %v3811 = vld [vmem:[%s3807 + $0xc] sm:$0xf]
        %v3816 = vunpack.c.l.b16 %v3808
        %v3817 = vunpack.c.l.b16 %v3809
        %v3818 = vunpack.c.l.b16 %v3810
        %v3819 = vunpack.c.l.b16 %v3811
        %v3820 = vpack.c.b16 %v3817, %v3816
        %v3821 = vpack.c.b16 %v3819, %v3818
        %3822 = vrot.lane.b32.xlu0 %v265, 63
        %v3823 = vpop.permute.xlu0 %3822
        %3824 = vrot.lane.b32.xlu0 %v340, 63
        %v3825 = vpop.permute.xlu0 %3824
        %3826 = vrot.lane.b32.xlu0 %v2881, 63
        %v3827 = vpop.permute.xlu0 %3826
        %vm3828 = vcmask 515072
        %v3829 = vsel %vm3828, %v3823, %v3825
        %v3830 = vsel %vm3828, %v3825, %v3827
        %v3834 = vsel %vm268, %v3820, 0
        %v3837 = vsel %vm268, %v3821, 0
        %3839 = vmatpush.bf16.msra.mxu0 0
        %3840 = vmatpush.bf16.msra.mxu0 0
        %3841 = vmatpush.bf16.msra.mxu0 0
        %3842 = vmatpush.bf16.msra.mxu0 0
        %3843 = vmatpush.bf16.msra.mxu0 0
        %3844 = vmatpush.bf16.msra.mxu0 0
        %3845 = vmatpush.bf16.msra.mxu0 0
        %3846 = vmatpush.bf16.msra.mxu0 %v3829
        %3847 = vmatmul.bf16.gmra.mxu0 %v3834
        %v3848 = vpop.f32.mrf.mxu0
        %v3849 = vadd.f32 0.0, %v3848
        %v3850 = vpop.f32.mrf.mxu0
        %v3851 = vadd.f32 0.0, %v3850
        %3852 = vmatmul.bf16.gmra.mxu0 %v3837
        %v3853 = vpop.f32.mrf.mxu0
        %v3854 = vadd.f32 0.0, %v3853
        %v3855 = vpop.f32.mrf.mxu0
        %v3856 = vadd.f32 0.0, %v3855
        %3857 = vdwg.mxu0
        %3858 = vmatpush.bf16.msra.mxu0 0
        %3859 = vmatpush.bf16.msra.mxu0 0
        %3860 = vmatpush.bf16.msra.mxu0 0
        %3861 = vmatpush.bf16.msra.mxu0 0
        %3862 = vmatpush.bf16.msra.mxu0 0
        %3863 = vmatpush.bf16.msra.mxu0 0
        %3864 = vmatpush.bf16.msra.mxu0 0
        %3865 = vmatpush.bf16.msra.mxu0 %v3830
        %3866 = vmatmul.bf16.gmra.mxu0 %v3834
        %v3867 = vpop.f32.mrf.mxu0
        %v3868 = vadd.f32 0.0, %v3867
        %v3869 = vpop.f32.mrf.mxu0
        %v3870 = vadd.f32 0.0, %v3869
        %3871 = vmatmul.bf16.gmra.mxu0 %v3837
        %v3872 = vpop.f32.mrf.mxu0
        %v3873 = vadd.f32 0.0, %v3872
        %v3874 = vpop.f32.mrf.mxu0
        %v3875 = vadd.f32 0.0, %v3874
        %3876 = vdwg.mxu0
        %v3877 = vld [vmem:[#allocation2] sm:$0xff]
        %v3878 = vld [vmem:[#allocation2 + $0x8] sm:$0xff]
        %v3879 = vld [vmem:[#allocation2 + $0x10] sm:$0xff]
        %v3880 = vld [vmem:[#allocation2 + $0x18] sm:$0xff]
        %v3881 = vld [vmem:[#allocation2 + $0x20] sm:$0xff]
        %v3882 = vld [vmem:[#allocation2 + $0x28] sm:$0xff]
        %v3883 = vld [vmem:[#allocation2 + $0x30] sm:$0xff]
        %v3884 = vld [vmem:[#allocation2 + $0x38] sm:$0xff]
        %v3885 = vadd.f32 %v3877, %v3849
        %v3886 = vadd.f32 %v3878, %v3868
        %v3887 = vadd.f32 %v3879, %v3851
        %v3888 = vadd.f32 %v3880, %v3870
        %v3889 = vadd.f32 %v3881, %v3854
        %v3890 = vadd.f32 %v3882, %v3873
        %v3891 = vadd.f32 %v3883, %v3856
        %v3892 = vadd.f32 %v3884, %v3875
        %3893 = vst [vmem:[#allocation2] sm:$0xff] %v3885
        %3894 = vst [vmem:[#allocation2 + $0x8] sm:$0xff] %v3886
        %3895 = vst [vmem:[#allocation2 + $0x10] sm:$0xff] %v3887
        %3896 = vst [vmem:[#allocation2 + $0x18] sm:$0xff] %v3888
        %3897 = vst [vmem:[#allocation2 + $0x20] sm:$0xff] %v3889
        %3898 = vst [vmem:[#allocation2 + $0x28] sm:$0xff] %v3890
        %3899 = vst [vmem:[#allocation2 + $0x30] sm:$0xff] %v3891
        %3900 = vst [vmem:[#allocation2 + $0x38] sm:$0xff] %v3892
        %s3901 = scalar_lea.vmem %s224, 624
        %v3902 = vld [vmem:[%s3901] sm:$0xf]
        %v3903 = vld [vmem:[%s3901 + $0x4] sm:$0xf]
        %v3904 = vld [vmem:[%s3901 + $0x8] sm:$0xf]
        %v3905 = vld [vmem:[%s3901 + $0xc] sm:$0xf]
        %v3910 = vunpack.c.l.b16 %v3902
        %v3911 = vunpack.c.l.b16 %v3903
        %v3912 = vunpack.c.l.b16 %v3904
        %v3913 = vunpack.c.l.b16 %v3905
        %v3914 = vpack.c.b16 %v3911, %v3910
        %v3915 = vpack.c.b16 %v3913, %v3912
        %3916 = vrot.lane.b32.xlu0 %v265, 62
        %v3917 = vpop.permute.xlu0 %3916
        %3918 = vrot.lane.b32.xlu0 %v340, 62
        %v3919 = vpop.permute.xlu0 %3918
        %3920 = vrot.lane.b32.xlu0 %v2881, 62
        %v3921 = vpop.permute.xlu0 %3920
        %vm3922 = vcmask 506880
        %v3923 = vsel %vm3922, %v3917, %v3919
        %v3924 = vsel %vm3922, %v3919, %v3921
        %v3928 = vsel %vm268, %v3914, 0
        %v3931 = vsel %vm268, %v3915, 0
        %3933 = vmatpush.bf16.msra.mxu0 0
        %3934 = vmatpush.bf16.msra.mxu0 0
        %3935 = vmatpush.bf16.msra.mxu0 0
        %3936 = vmatpush.bf16.msra.mxu0 0
        %3937 = vmatpush.bf16.msra.mxu0 0
        %3938 = vmatpush.bf16.msra.mxu0 0
        %3939 = vmatpush.bf16.msra.mxu0 0
        %3940 = vmatpush.bf16.msra.mxu0 %v3923
        %3941 = vmatmul.bf16.gmra.mxu0 %v3928
        %v3942 = vpop.f32.mrf.mxu0
        %v3943 = vadd.f32 0.0, %v3942
        %v3944 = vpop.f32.mrf.mxu0
        %v3945 = vadd.f32 0.0, %v3944
        %3946 = vmatmul.bf16.gmra.mxu0 %v3931
        %v3947 = vpop.f32.mrf.mxu0
        %v3948 = vadd.f32 0.0, %v3947
        %v3949 = vpop.f32.mrf.mxu0
        %v3950 = vadd.f32 0.0, %v3949
        %3951 = vdwg.mxu0
        %3952 = vmatpush.bf16.msra.mxu0 0
        %3953 = vmatpush.bf16.msra.mxu0 0
        %3954 = vmatpush.bf16.msra.mxu0 0
        %3955 = vmatpush.bf16.msra.mxu0 0
        %3956 = vmatpush.bf16.msra.mxu0 0
        %3957 = vmatpush.bf16.msra.mxu0 0
        %3958 = vmatpush.bf16.msra.mxu0 0
        %3959 = vmatpush.bf16.msra.mxu0 %v3924
        %3960 = vmatmul.bf16.gmra.mxu0 %v3928
        %v3961 = vpop.f32.mrf.mxu0
        %v3962 = vadd.f32 0.0, %v3961
        %v3963 = vpop.f32.mrf.mxu0
        %v3964 = vadd.f32 0.0, %v3963
        %3965 = vmatmul.bf16.gmra.mxu0 %v3931
        %v3966 = vpop.f32.mrf.mxu0
        %v3967 = vadd.f32 0.0, %v3966
        %v3968 = vpop.f32.mrf.mxu0
        %v3969 = vadd.f32 0.0, %v3968
        %3970 = vdwg.mxu0
        %v3971 = vld [vmem:[#allocation2] sm:$0xff]
        %v3972 = vld [vmem:[#allocation2 + $0x8] sm:$0xff]
        %v3973 = vld [vmem:[#allocation2 + $0x10] sm:$0xff]
        %v3974 = vld [vmem:[#allocation2 + $0x18] sm:$0xff]
        %v3975 = vld [vmem:[#allocation2 + $0x20] sm:$0xff]
        %v3976 = vld [vmem:[#allocation2 + $0x28] sm:$0xff]
        %v3977 = vld [vmem:[#allocation2 + $0x30] sm:$0xff]
        %v3978 = vld [vmem:[#allocation2 + $0x38] sm:$0xff]
        %v3979 = vadd.f32 %v3971, %v3943
        %v3980 = vadd.f32 %v3972, %v3962
        %v3981 = vadd.f32 %v3973, %v3945
        %v3982 = vadd.f32 %v3974, %v3964
        %v3983 = vadd.f32 %v3975, %v3948
        %v3984 = vadd.f32 %v3976, %v3967
        %v3985 = vadd.f32 %v3977, %v3950
        %v3986 = vadd.f32 %v3978, %v3969
        %3987 = vst [vmem:[#allocation2] sm:$0xff] %v3979
        %3988 = vst [vmem:[#allocation2 + $0x8] sm:$0xff] %v3980
        %3989 = vst [vmem:[#allocation2 + $0x10] sm:$0xff] %v3981
        %3990 = vst [vmem:[#allocation2 + $0x18] sm:$0xff] %v3982
        %3991 = vst [vmem:[#allocation2 + $0x20] sm:$0xff] %v3983
        %3992 = vst [vmem:[#allocation2 + $0x28] sm:$0xff] %v3984
        %3993 = vst [vmem:[#allocation2 + $0x30] sm:$0xff] %v3985
        %3994 = vst [vmem:[#allocation2 + $0x38] sm:$0xff] %v3986
        %s3995 = scalar_lea.vmem %s224, 640
        %v3996 = vld [vmem:[%s3995] sm:$0xf]
        %v3997 = vld [vmem:[%s3995 + $0x4] sm:$0xf]
        %v3998 = vld [vmem:[%s3995 + $0x8] sm:$0xf]
        %v3999 = vld [vmem:[%s3995 + $0xc] sm:$0xf]
        %v4004 = vunpack.c.l.b16 %v3996
        %v4005 = vunpack.c.l.b16 %v3997
        %v4006 = vunpack.c.l.b16 %v3998
        %v4007 = vunpack.c.l.b16 %v3999
        %v4008 = vpack.c.b16 %v4005, %v4004
        %v4009 = vpack.c.b16 %v4007, %v4006
        %4010 = vrot.lane.b32.xlu0 %v265, 61
        %v4011 = vpop.permute.xlu0 %4010
        %4012 = vrot.lane.b32.xlu0 %v340, 61
        %v4013 = vpop.permute.xlu0 %4012
        %4014 = vrot.lane.b32.xlu0 %v2881, 61
        %v4015 = vpop.permute.xlu0 %4014
        %vm4016 = vcmask 498688
        %v4017 = vsel %vm4016, %v4011, %v4013
        %v4018 = vsel %vm4016, %v4013, %v4015
        %v4022 = vsel %vm268, %v4008, 0
        %v4025 = vsel %vm268, %v4009, 0
        %4027 = vmatpush.bf16.msra.mxu0 0
        %4028 = vmatpush.bf16.msra.mxu0 0
        %4029 = vmatpush.bf16.msra.mxu0 0
        %4030 = vmatpush.bf16.msra.mxu0 0
        %4031 = vmatpush.bf16.msra.mxu0 0
        %4032 = vmatpush.bf16.msra.mxu0 0
        %4033 = vmatpush.bf16.msra.mxu0 0
        %4034 = vmatpush.bf16.msra.mxu0 %v4017
        %4035 = vmatmul.bf16.gmra.mxu0 %v4022
        %v4036 = vpop.f32.mrf.mxu0
        %v4037 = vadd.f32 0.0, %v4036
        %v4038 = vpop.f32.mrf.mxu0
        %v4039 = vadd.f32 0.0, %v4038
        %4040 = vmatmul.bf16.gmra.mxu0 %v4025
        %v4041 = vpop.f32.mrf.mxu0
        %v4042 = vadd.f32 0.0, %v4041
        %v4043 = vpop.f32.mrf.mxu0
        %v4044 = vadd.f32 0.0, %v4043
        %4045 = vdwg.mxu0
        %4046 = vmatpush.bf16.msra.mxu0 0
        %4047 = vmatpush.bf16.msra.mxu0 0
        %4048 = vmatpush.bf16.msra.mxu0 0
        %4049 = vmatpush.bf16.msra.mxu0 0
        %4050 = vmatpush.bf16.msra.mxu0 0
        %4051 = vmatpush.bf16.msra.mxu0 0
        %4052 = vmatpush.bf16.msra.mxu0 0
        %4053 = vmatpush.bf16.msra.mxu0 %v4018
        %4054 = vmatmul.bf16.gmra.mxu0 %v4022
        %v4055 = vpop.f32.mrf.mxu0
        %v4056 = vadd.f32 0.0, %v4055
        %v4057 = vpop.f32.mrf.mxu0
        %v4058 = vadd.f32 0.0, %v4057
        %4059 = vmatmul.bf16.gmra.mxu0 %v4025
        %v4060 = vpop.f32.mrf.mxu0
        %v4061 = vadd.f32 0.0, %v4060
        %v4062 = vpop.f32.mrf.mxu0
        %v4063 = vadd.f32 0.0, %v4062
        %4064 = vdwg.mxu0
        %v4065 = vld [vmem:[#allocation2] sm:$0xff]
        %v4066 = vld [vmem:[#allocation2 + $0x8] sm:$0xff]
        %v4067 = vld [vmem:[#allocation2 + $0x10] sm:$0xff]
        %v4068 = vld [vmem:[#allocation2 + $0x18] sm:$0xff]
        %v4069 = vld [vmem:[#allocation2 + $0x20] sm:$0xff]
        %v4070 = vld [vmem:[#allocation2 + $0x28] sm:$0xff]
        %v4071 = vld [vmem:[#allocation2 + $0x30] sm:$0xff]
        %v4072 = vld [vmem:[#allocation2 + $0x38] sm:$0xff]
        %v4073 = vadd.f32 %v4065, %v4037
        %v4074 = vadd.f32 %v4066, %v4056
        %v4075 = vadd.f32 %v4067, %v4039
        %v4076 = vadd.f32 %v4068, %v4058
        %v4077 = vadd.f32 %v4069, %v4042
        %v4078 = vadd.f32 %v4070, %v4061
        %v4079 = vadd.f32 %v4071, %v4044
        %v4080 = vadd.f32 %v4072, %v4063
        %4081 = vst [vmem:[#allocation2] sm:$0xff] %v4073
        %4082 = vst [vmem:[#allocation2 + $0x8] sm:$0xff] %v4074
        %4083 = vst [vmem:[#allocation2 + $0x10] sm:$0xff] %v4075
        %4084 = vst [vmem:[#allocation2 + $0x18] sm:$0xff] %v4076
        %4085 = vst [vmem:[#allocation2 + $0x20] sm:$0xff] %v4077
        %4086 = vst [vmem:[#allocation2 + $0x28] sm:$0xff] %v4078
        %4087 = vst [vmem:[#allocation2 + $0x30] sm:$0xff] %v4079
        %4088 = vst [vmem:[#allocation2 + $0x38] sm:$0xff] %v4080
        %s4089 = scalar_lea.vmem %s224, 656
        %v4090 = vld [vmem:[%s4089] sm:$0xf]
        %v4091 = vld [vmem:[%s4089 + $0x4] sm:$0xf]
        %v4092 = vld [vmem:[%s4089 + $0x8] sm:$0xf]
        %v4093 = vld [vmem:[%s4089 + $0xc] sm:$0xf]
        %v4098 = vunpack.c.l.b16 %v4090
        %v4099 = vunpack.c.l.b16 %v4091
        %v4100 = vunpack.c.l.b16 %v4092
        %v4101 = vunpack.c.l.b16 %v4093
        %v4102 = vpack.c.b16 %v4099, %v4098
        %v4103 = vpack.c.b16 %v4101, %v4100
        %4104 = vrot.lane.b32.xlu0 %v265, 60
        %v4105 = vpop.permute.xlu0 %4104
        %4106 = vrot.lane.b32.xlu0 %v340, 60
        %v4107 = vpop.permute.xlu0 %4106
        %4108 = vrot.lane.b32.xlu0 %v2881, 60
        %v4109 = vpop.permute.xlu0 %4108
        %vm4110 = vcmask 490496
        %v4111 = vsel %vm4110, %v4105, %v4107
        %v4112 = vsel %vm4110, %v4107, %v4109
        %v4116 = vsel %vm268, %v4102, 0
        %v4119 = vsel %vm268, %v4103, 0
        %4121 = vmatpush.bf16.msra.mxu0 0
        %4122 = vmatpush.bf16.msra.mxu0 0
        %4123 = vmatpush.bf16.msra.mxu0 0
        %4124 = vmatpush.bf16.msra.mxu0 0
        %4125 = vmatpush.bf16.msra.mxu0 0
        %4126 = vmatpush.bf16.msra.mxu0 0
        %4127 = vmatpush.bf16.msra.mxu0 0
        %4128 = vmatpush.bf16.msra.mxu0 %v4111
        %4129 = vmatmul.bf16.gmra.mxu0 %v4116
        %v4130 = vpop.f32.mrf.mxu0
        %v4131 = vadd.f32 0.0, %v4130
        %v4132 = vpop.f32.mrf.mxu0
        %v4133 = vadd.f32 0.0, %v4132
        %4134 = vmatmul.bf16.gmra.mxu0 %v4119
        %v4135 = vpop.f32.mrf.mxu0
        %v4136 = vadd.f32 0.0, %v4135
        %v4137 = vpop.f32.mrf.mxu0
        %v4138 = vadd.f32 0.0, %v4137
        %4139 = vdwg.mxu0
        %4140 = vmatpush.bf16.msra.mxu0 0
        %4141 = vmatpush.bf16.msra.mxu0 0
        %4142 = vmatpush.bf16.msra.mxu0 0
        %4143 = vmatpush.bf16.msra.mxu0 0
        %4144 = vmatpush.bf16.msra.mxu0 0
        %4145 = vmatpush.bf16.msra.mxu0 0
        %4146 = vmatpush.bf16.msra.mxu0 0
        %4147 = vmatpush.bf16.msra.mxu0 %v4112
        %4148 = vmatmul.bf16.gmra.mxu0 %v4116
        %v4149 = vpop.f32.mrf.mxu0
        %v4150 = vadd.f32 0.0, %v4149
        %v4151 = vpop.f32.mrf.mxu0
        %v4152 = vadd.f32 0.0, %v4151
        %4153 = vmatmul.bf16.gmra.mxu0 %v4119
        %v4154 = vpop.f32.mrf.mxu0
        %v4155 = vadd.f32 0.0, %v4154
        %v4156 = vpop.f32.mrf.mxu0
        %v4157 = vadd.f32 0.0, %v4156
        %4158 = vdwg.mxu0
        %v4159 = vld [vmem:[#allocation2] sm:$0xff]
        %v4160 = vld [vmem:[#allocation2 + $0x8] sm:$0xff]
        %v4161 = vld [vmem:[#allocation2 + $0x10] sm:$0xff]
        %v4162 = vld [vmem:[#allocation2 + $0x18] sm:$0xff]
        %v4163 = vld [vmem:[#allocation2 + $0x20] sm:$0xff]
        %v4164 = vld [vmem:[#allocation2 + $0x28] sm:$0xff]
        %v4165 = vld [vmem:[#allocation2 + $0x30] sm:$0xff]
        %v4166 = vld [vmem:[#allocation2 + $0x38] sm:$0xff]
        %v4167 = vadd.f32 %v4159, %v4131
        %v4168 = vadd.f32 %v4160, %v4150
        %v4169 = vadd.f32 %v4161, %v4133
        %v4170 = vadd.f32 %v4162, %v4152
        %v4171 = vadd.f32 %v4163, %v4136
        %v4172 = vadd.f32 %v4164, %v4155
        %v4173 = vadd.f32 %v4165, %v4138
        %v4174 = vadd.f32 %v4166, %v4157
        %4175 = vst [vmem:[#allocation2] sm:$0xff] %v4167
        %4176 = vst [vmem:[#allocation2 + $0x8] sm:$0xff] %v4168
        %4177 = vst [vmem:[#allocation2 + $0x10] sm:$0xff] %v4169
        %4178 = vst [vmem:[#allocation2 + $0x18] sm:$0xff] %v4170
        %4179 = vst [vmem:[#allocation2 + $0x20] sm:$0xff] %v4171
        %4180 = vst [vmem:[#allocation2 + $0x28] sm:$0xff] %v4172
        %4181 = vst [vmem:[#allocation2 + $0x30] sm:$0xff] %v4173
        %4182 = vst [vmem:[#allocation2 + $0x38] sm:$0xff] %v4174
        %s4183 = scalar_lea.vmem %s224, 672
        %v4184 = vld [vmem:[%s4183] sm:$0xf]
        %v4185 = vld [vmem:[%s4183 + $0x4] sm:$0xf]
        %v4186 = vld [vmem:[%s4183 + $0x8] sm:$0xf]
        %v4187 = vld [vmem:[%s4183 + $0xc] sm:$0xf]
        %v4192 = vunpack.c.l.b16 %v4184
        %v4193 = vunpack.c.l.b16 %v4185
        %v4194 = vunpack.c.l.b16 %v4186
        %v4195 = vunpack.c.l.b16 %v4187
        %v4196 = vpack.c.b16 %v4193, %v4192
        %v4197 = vpack.c.b16 %v4195, %v4194
        %4198 = vrot.lane.b32.xlu0 %v265, 28
        %v4199 = vpop.permute.xlu0 %4198
        %4200 = vrot.lane.b32.xlu0 %v340, 28
        %v4201 = vpop.permute.xlu0 %4200
        %4202 = vrot.lane.b32.xlu0 %v2881, 28
        %v4203 = vpop.permute.xlu0 %4202
        %vm4204 = vcmask 228352
        %v4205 = vsel %vm4204, %v4199, %v4201
        %v4206 = vsel %vm4204, %v4201, %v4203
        %v4210 = vsel %vm268, %v4196, 0
        %v4213 = vsel %vm268, %v4197, 0
        %4215 = vmatpush.bf16.msra.mxu0 0
        %4216 = vmatpush.bf16.msra.mxu0 0
        %4217 = vmatpush.bf16.msra.mxu0 0
        %4218 = vmatpush.bf16.msra.mxu0 0
        %4219 = vmatpush.bf16.msra.mxu0 0
        %4220 = vmatpush.bf16.msra.mxu0 0
        %4221 = vmatpush.bf16.msra.mxu0 0
        %4222 = vmatpush.bf16.msra.mxu0 %v4205
        %4223 = vmatmul.bf16.gmra.mxu0 %v4210
        %v4224 = vpop.f32.mrf.mxu0
        %v4225 = vadd.f32 0.0, %v4224
        %v4226 = vpop.f32.mrf.mxu0
        %v4227 = vadd.f32 0.0, %v4226
        %4228 = vmatmul.bf16.gmra.mxu0 %v4213
        %v4229 = vpop.f32.mrf.mxu0
        %v4230 = vadd.f32 0.0, %v4229
        %v4231 = vpop.f32.mrf.mxu0
        %v4232 = vadd.f32 0.0, %v4231
        %4233 = vdwg.mxu0
        %4234 = vmatpush.bf16.msra.mxu0 0
        %4235 = vmatpush.bf16.msra.mxu0 0
        %4236 = vmatpush.bf16.msra.mxu0 0
        %4237 = vmatpush.bf16.msra.mxu0 0
        %4238 = vmatpush.bf16.msra.mxu0 0
        %4239 = vmatpush.bf16.msra.mxu0 0
        %4240 = vmatpush.bf16.msra.mxu0 0
        %4241 = vmatpush.bf16.msra.mxu0 %v4206
        %4242 = vmatmul.bf16.gmra.mxu0 %v4210
        %v4243 = vpop.f32.mrf.mxu0
        %v4244 = vadd.f32 0.0, %v4243
        %v4245 = vpop.f32.mrf.mxu0
        %v4246 = vadd.f32 0.0, %v4245
        %4247 = vmatmul.bf16.gmra.mxu0 %v4213
        %v4248 = vpop.f32.mrf.mxu0
        %v4249 = vadd.f32 0.0, %v4248
        %v4250 = vpop.f32.mrf.mxu0
        %v4251 = vadd.f32 0.0, %v4250
        %4252 = vdwg.mxu0
        %v4253 = vld [vmem:[#allocation2] sm:$0xff]
        %v4254 = vld [vmem:[#allocation2 + $0x8] sm:$0xff]
        %v4255 = vld [vmem:[#allocation2 + $0x10] sm:$0xff]
        %v4256 = vld [vmem:[#allocation2 + $0x18] sm:$0xff]
        %v4257 = vld [vmem:[#allocation2 + $0x20] sm:$0xff]
        %v4258 = vld [vmem:[#allocation2 + $0x28] sm:$0xff]
        %v4259 = vld [vmem:[#allocation2 + $0x30] sm:$0xff]
        %v4260 = vld [vmem:[#allocation2 + $0x38] sm:$0xff]
        %v4261 = vadd.f32 %v4253, %v4225
        %v4262 = vadd.f32 %v4254, %v4244
        %v4263 = vadd.f32 %v4255, %v4227
        %v4264 = vadd.f32 %v4256, %v4246
        %v4265 = vadd.f32 %v4257, %v4230
        %v4266 = vadd.f32 %v4258, %v4249
        %v4267 = vadd.f32 %v4259, %v4232
        %v4268 = vadd.f32 %v4260, %v4251
        %4269 = vst [vmem:[#allocation2] sm:$0xff] %v4261
        %4270 = vst [vmem:[#allocation2 + $0x8] sm:$0xff] %v4262
        %4271 = vst [vmem:[#allocation2 + $0x10] sm:$0xff] %v4263
        %4272 = vst [vmem:[#allocation2 + $0x18] sm:$0xff] %v4264
        %4273 = vst [vmem:[#allocation2 + $0x20] sm:$0xff] %v4265
        %4274 = vst [vmem:[#allocation2 + $0x28] sm:$0xff] %v4266
        %4275 = vst [vmem:[#allocation2 + $0x30] sm:$0xff] %v4267
        %4276 = vst [vmem:[#allocation2 + $0x38] sm:$0xff] %v4268
        %s4277 = scalar_lea.vmem %s224, 688
        %v4278 = vld [vmem:[%s4277] sm:$0xf]
        %v4279 = vld [vmem:[%s4277 + $0x4] sm:$0xf]
        %v4280 = vld [vmem:[%s4277 + $0x8] sm:$0xf]
        %v4281 = vld [vmem:[%s4277 + $0xc] sm:$0xf]
        %v4286 = vunpack.c.l.b16 %v4278
        %v4287 = vunpack.c.l.b16 %v4279
        %v4288 = vunpack.c.l.b16 %v4280
        %v4289 = vunpack.c.l.b16 %v4281
        %v4290 = vpack.c.b16 %v4287, %v4286
        %v4291 = vpack.c.b16 %v4289, %v4288
        %4292 = vrot.lane.b32.xlu0 %v265, 27
        %v4293 = vpop.permute.xlu0 %4292
        %4294 = vrot.lane.b32.xlu0 %v340, 27
        %v4295 = vpop.permute.xlu0 %4294
        %4296 = vrot.lane.b32.xlu0 %v2881, 27
        %v4297 = vpop.permute.xlu0 %4296
        %vm4298 = vcmask 220160
        %v4299 = vsel %vm4298, %v4293, %v4295
        %v4300 = vsel %vm4298, %v4295, %v4297
        %v4304 = vsel %vm268, %v4290, 0
        %v4307 = vsel %vm268, %v4291, 0
        %4309 = vmatpush.bf16.msra.mxu0 0
        %4310 = vmatpush.bf16.msra.mxu0 0
        %4311 = vmatpush.bf16.msra.mxu0 0
        %4312 = vmatpush.bf16.msra.mxu0 0
        %4313 = vmatpush.bf16.msra.mxu0 0
        %4314 = vmatpush.bf16.msra.mxu0 0
        %4315 = vmatpush.bf16.msra.mxu0 0
        %4316 = vmatpush.bf16.msra.mxu0 %v4299
        %4317 = vmatmul.bf16.gmra.mxu0 %v4304
        %v4318 = vpop.f32.mrf.mxu0
        %v4319 = vadd.f32 0.0, %v4318
        %v4320 = vpop.f32.mrf.mxu0
        %v4321 = vadd.f32 0.0, %v4320
        %4322 = vmatmul.bf16.gmra.mxu0 %v4307
        %v4323 = vpop.f32.mrf.mxu0
        %v4324 = vadd.f32 0.0, %v4323
        %v4325 = vpop.f32.mrf.mxu0
        %v4326 = vadd.f32 0.0, %v4325
        %4327 = vdwg.mxu0
        %4328 = vmatpush.bf16.msra.mxu0 0
        %4329 = vmatpush.bf16.msra.mxu0 0
        %4330 = vmatpush.bf16.msra.mxu0 0
        %4331 = vmatpush.bf16.msra.mxu0 0
        %4332 = vmatpush.bf16.msra.mxu0 0
        %4333 = vmatpush.bf16.msra.mxu0 0
        %4334 = vmatpush.bf16.msra.mxu0 0
        %4335 = vmatpush.bf16.msra.mxu0 %v4300
        %4336 = vmatmul.bf16.gmra.mxu0 %v4304
        %v4337 = vpop.f32.mrf.mxu0
        %v4338 = vadd.f32 0.0, %v4337
        %v4339 = vpop.f32.mrf.mxu0
        %v4340 = vadd.f32 0.0, %v4339
        %4341 = vmatmul.bf16.gmra.mxu0 %v4307
        %v4342 = vpop.f32.mrf.mxu0
        %v4343 = vadd.f32 0.0, %v4342
        %v4344 = vpop.f32.mrf.mxu0
        %v4345 = vadd.f32 0.0, %v4344
        %4346 = vdwg.mxu0
        %v4347 = vld [vmem:[#allocation2] sm:$0xff]
        %v4348 = vld [vmem:[#allocation2 + $0x8] sm:$0xff]
        %v4349 = vld [vmem:[#allocation2 + $0x10] sm:$0xff]
        %v4350 = vld [vmem:[#allocation2 + $0x18] sm:$0xff]
        %v4351 = vld [vmem:[#allocation2 + $0x20] sm:$0xff]
        %v4352 = vld [vmem:[#allocation2 + $0x28] sm:$0xff]
        %v4353 = vld [vmem:[#allocation2 + $0x30] sm:$0xff]
        %v4354 = vld [vmem:[#allocation2 + $0x38] sm:$0xff]
        %v4355 = vadd.f32 %v4347, %v4319
        %v4356 = vadd.f32 %v4348, %v4338
        %v4357 = vadd.f32 %v4349, %v4321
        %v4358 = vadd.f32 %v4350, %v4340
        %v4359 = vadd.f32 %v4351, %v4324
        %v4360 = vadd.f32 %v4352, %v4343
        %v4361 = vadd.f32 %v4353, %v4326
        %v4362 = vadd.f32 %v4354, %v4345
        %4363 = vst [vmem:[#allocation2] sm:$0xff] %v4355
        %4364 = vst [vmem:[#allocation2 + $0x8] sm:$0xff] %v4356
        %4365 = vst [vmem:[#allocation2 + $0x10] sm:$0xff] %v4357
        %4366 = vst [vmem:[#allocation2 + $0x18] sm:$0xff] %v4358
        %4367 = vst [vmem:[#allocation2 + $0x20] sm:$0xff] %v4359
        %4368 = vst [vmem:[#allocation2 + $0x28] sm:$0xff] %v4360
        %4369 = vst [vmem:[#allocation2 + $0x30] sm:$0xff] %v4361
        %4370 = vst [vmem:[#allocation2 + $0x38] sm:$0xff] %v4362
        %s4371 = scalar_lea.vmem %s224, 704
        %v4372 = vld [vmem:[%s4371] sm:$0xf]
        %v4373 = vld [vmem:[%s4371 + $0x4] sm:$0xf]
        %v4374 = vld [vmem:[%s4371 + $0x8] sm:$0xf]
        %v4375 = vld [vmem:[%s4371 + $0xc] sm:$0xf]
        %v4380 = vunpack.c.l.b16 %v4372
        %v4381 = vunpack.c.l.b16 %v4373
        %v4382 = vunpack.c.l.b16 %v4374
        %v4383 = vunpack.c.l.b16 %v4375
        %v4384 = vpack.c.b16 %v4381, %v4380
        %v4385 = vpack.c.b16 %v4383, %v4382
        %4386 = vrot.lane.b32.xlu0 %v265, 26
        %v4387 = vpop.permute.xlu0 %4386
        %4388 = vrot.lane.b32.xlu0 %v340, 26
        %v4389 = vpop.permute.xlu0 %4388
        %4390 = vrot.lane.b32.xlu0 %v2881, 26
        %v4391 = vpop.permute.xlu0 %4390
        %vm4392 = vcmask 211968
        %v4393 = vsel %vm4392, %v4387, %v4389
        %v4394 = vsel %vm4392, %v4389, %v4391
        %v4398 = vsel %vm268, %v4384, 0
        %v4401 = vsel %vm268, %v4385, 0
        %4403 = vmatpush.bf16.msra.mxu0 0
        %4404 = vmatpush.bf16.msra.mxu0 0
        %4405 = vmatpush.bf16.msra.mxu0 0
        %4406 = vmatpush.bf16.msra.mxu0 0
        %4407 = vmatpush.bf16.msra.mxu0 0
        %4408 = vmatpush.bf16.msra.mxu0 0
        %4409 = vmatpush.bf16.msra.mxu0 0
        %4410 = vmatpush.bf16.msra.mxu0 %v4393
        %4411 = vmatmul.bf16.gmra.mxu0 %v4398
        %v4412 = vpop.f32.mrf.mxu0
        %v4413 = vadd.f32 0.0, %v4412
        %v4414 = vpop.f32.mrf.mxu0
        %v4415 = vadd.f32 0.0, %v4414
        %4416 = vmatmul.bf16.gmra.mxu0 %v4401
        %v4417 = vpop.f32.mrf.mxu0
        %v4418 = vadd.f32 0.0, %v4417
        %v4419 = vpop.f32.mrf.mxu0
        %v4420 = vadd.f32 0.0, %v4419
        %4421 = vdwg.mxu0
        %4422 = vmatpush.bf16.msra.mxu0 0
        %4423 = vmatpush.bf16.msra.mxu0 0
        %4424 = vmatpush.bf16.msra.mxu0 0
        %4425 = vmatpush.bf16.msra.mxu0 0
        %4426 = vmatpush.bf16.msra.mxu0 0
        %4427 = vmatpush.bf16.msra.mxu0 0
        %4428 = vmatpush.bf16.msra.mxu0 0
        %4429 = vmatpush.bf16.msra.mxu0 %v4394
        %4430 = vmatmul.bf16.gmra.mxu0 %v4398
        %v4431 = vpop.f32.mrf.mxu0
        %v4432 = vadd.f32 0.0, %v4431
        %v4433 = vpop.f32.mrf.mxu0
        %v4434 = vadd.f32 0.0, %v4433
        %4435 = vmatmul.bf16.gmra.mxu0 %v4401
        %v4436 = vpop.f32.mrf.mxu0
        %v4437 = vadd.f32 0.0, %v4436
        %v4438 = vpop.f32.mrf.mxu0
        %v4439 = vadd.f32 0.0, %v4438
        %4440 = vdwg.mxu0
        %v4441 = vld [vmem:[#allocation2] sm:$0xff]
        %v4442 = vld [vmem:[#allocation2 + $0x8] sm:$0xff]
        %v4443 = vld [vmem:[#allocation2 + $0x10] sm:$0xff]
        %v4444 = vld [vmem:[#allocation2 + $0x18] sm:$0xff]
        %v4445 = vld [vmem:[#allocation2 + $0x20] sm:$0xff]
        %v4446 = vld [vmem:[#allocation2 + $0x28] sm:$0xff]
        %v4447 = vld [vmem:[#allocation2 + $0x30] sm:$0xff]
        %v4448 = vld [vmem:[#allocation2 + $0x38] sm:$0xff]
        %v4449 = vadd.f32 %v4441, %v4413
        %v4450 = vadd.f32 %v4442, %v4432
        %v4451 = vadd.f32 %v4443, %v4415
        %v4452 = vadd.f32 %v4444, %v4434
        %v4453 = vadd.f32 %v4445, %v4418
        %v4454 = vadd.f32 %v4446, %v4437
        %v4455 = vadd.f32 %v4447, %v4420
        %v4456 = vadd.f32 %v4448, %v4439
        %4457 = vst [vmem:[#allocation2] sm:$0xff] %v4449
        %4458 = vst [vmem:[#allocation2 + $0x8] sm:$0xff] %v4450
        %4459 = vst [vmem:[#allocation2 + $0x10] sm:$0xff] %v4451
        %4460 = vst [vmem:[#allocation2 + $0x18] sm:$0xff] %v4452
        %4461 = vst [vmem:[#allocation2 + $0x20] sm:$0xff] %v4453
        %4462 = vst [vmem:[#allocation2 + $0x28] sm:$0xff] %v4454
        %4463 = vst [vmem:[#allocation2 + $0x30] sm:$0xff] %v4455
        %4464 = vst [vmem:[#allocation2 + $0x38] sm:$0xff] %v4456
        %s4465 = scalar_lea.vmem %s224, 720
        %v4466 = vld [vmem:[%s4465] sm:$0xf]
        %v4467 = vld [vmem:[%s4465 + $0x4] sm:$0xf]
        %v4468 = vld [vmem:[%s4465 + $0x8] sm:$0xf]
        %v4469 = vld [vmem:[%s4465 + $0xc] sm:$0xf]
        %v4474 = vunpack.c.l.b16 %v4466
        %v4475 = vunpack.c.l.b16 %v4467
        %v4476 = vunpack.c.l.b16 %v4468
        %v4477 = vunpack.c.l.b16 %v4469
        %v4478 = vpack.c.b16 %v4475, %v4474
        %v4479 = vpack.c.b16 %v4477, %v4476
        %4480 = vrot.lane.b32.xlu0 %v265, 25
        %v4481 = vpop.permute.xlu0 %4480
        %4482 = vrot.lane.b32.xlu0 %v340, 25
        %v4483 = vpop.permute.xlu0 %4482
        %4484 = vrot.lane.b32.xlu0 %v2881, 25
        %v4485 = vpop.permute.xlu0 %4484
        %vm4486 = vcmask 203776
        %v4487 = vsel %vm4486, %v4481, %v4483
        %v4488 = vsel %vm4486, %v4483, %v4485
        %v4492 = vsel %vm268, %v4478, 0
        %v4495 = vsel %vm268, %v4479, 0
        %4497 = vmatpush.bf16.msra.mxu0 0
        %4498 = vmatpush.bf16.msra.mxu0 0
        %4499 = vmatpush.bf16.msra.mxu0 0
        %4500 = vmatpush.bf16.msra.mxu0 0
        %4501 = vmatpush.bf16.msra.mxu0 0
        %4502 = vmatpush.bf16.msra.mxu0 0
        %4503 = vmatpush.bf16.msra.mxu0 0
        %4504 = vmatpush.bf16.msra.mxu0 %v4487
        %4505 = vmatmul.bf16.gmra.mxu0 %v4492
        %v4506 = vpop.f32.mrf.mxu0
        %v4507 = vadd.f32 0.0, %v4506
        %v4508 = vpop.f32.mrf.mxu0
        %v4509 = vadd.f32 0.0, %v4508
        %4510 = vmatmul.bf16.gmra.mxu0 %v4495
        %v4511 = vpop.f32.mrf.mxu0
        %v4512 = vadd.f32 0.0, %v4511
        %v4513 = vpop.f32.mrf.mxu0
        %v4514 = vadd.f32 0.0, %v4513
        %4515 = vdwg.mxu0
        %4516 = vmatpush.bf16.msra.mxu0 0
        %4517 = vmatpush.bf16.msra.mxu0 0
        %4518 = vmatpush.bf16.msra.mxu0 0
        %4519 = vmatpush.bf16.msra.mxu0 0
        %4520 = vmatpush.bf16.msra.mxu0 0
        %4521 = vmatpush.bf16.msra.mxu0 0
        %4522 = vmatpush.bf16.msra.mxu0 0
        %4523 = vmatpush.bf16.msra.mxu0 %v4488
        %4524 = vmatmul.bf16.gmra.mxu0 %v4492
        %v4525 = vpop.f32.mrf.mxu0
        %v4526 = vadd.f32 0.0, %v4525
        %v4527 = vpop.f32.mrf.mxu0
        %v4528 = vadd.f32 0.0, %v4527
        %4529 = vmatmul.bf16.gmra.mxu0 %v4495
        %v4530 = vpop.f32.mrf.mxu0
        %v4531 = vadd.f32 0.0, %v4530
        %v4532 = vpop.f32.mrf.mxu0
        %v4533 = vadd.f32 0.0, %v4532
        %4534 = vdwg.mxu0
        %v4535 = vld [vmem:[#allocation2] sm:$0xff]
        %v4536 = vld [vmem:[#allocation2 + $0x8] sm:$0xff]
        %v4537 = vld [vmem:[#allocation2 + $0x10] sm:$0xff]
        %v4538 = vld [vmem:[#allocation2 + $0x18] sm:$0xff]
        %v4539 = vld [vmem:[#allocation2 + $0x20] sm:$0xff]
        %v4540 = vld [vmem:[#allocation2 + $0x28] sm:$0xff]
        %v4541 = vld [vmem:[#allocation2 + $0x30] sm:$0xff]
        %v4542 = vld [vmem:[#allocation2 + $0x38] sm:$0xff]
        %v4543 = vadd.f32 %v4535, %v4507
        %v4544 = vadd.f32 %v4536, %v4526
        %v4545 = vadd.f32 %v4537, %v4509
        %v4546 = vadd.f32 %v4538, %v4528
        %v4547 = vadd.f32 %v4539, %v4512
        %v4548 = vadd.f32 %v4540, %v4531
        %v4549 = vadd.f32 %v4541, %v4514
        %v4550 = vadd.f32 %v4542, %v4533
        %4551 = vst [vmem:[#allocation2] sm:$0xff] %v4543
        %4552 = vst [vmem:[#allocation2 + $0x8] sm:$0xff] %v4544
        %4553 = vst [vmem:[#allocation2 + $0x10] sm:$0xff] %v4545
        %4554 = vst [vmem:[#allocation2 + $0x18] sm:$0xff] %v4546
        %4555 = vst [vmem:[#allocation2 + $0x20] sm:$0xff] %v4547
        %4556 = vst [vmem:[#allocation2 + $0x28] sm:$0xff] %v4548
        %4557 = vst [vmem:[#allocation2 + $0x30] sm:$0xff] %v4549
        %4558 = vst [vmem:[#allocation2 + $0x38] sm:$0xff] %v4550
        %s4559 = scalar_lea.vmem %s224, 736
        %v4560 = vld [vmem:[%s4559] sm:$0xf]
        %v4561 = vld [vmem:[%s4559 + $0x4] sm:$0xf]
        %v4562 = vld [vmem:[%s4559 + $0x8] sm:$0xf]
        %v4563 = vld [vmem:[%s4559 + $0xc] sm:$0xf]
        %v4568 = vunpack.c.l.b16 %v4560
        %v4569 = vunpack.c.l.b16 %v4561
        %v4570 = vunpack.c.l.b16 %v4562
        %v4571 = vunpack.c.l.b16 %v4563
        %v4572 = vpack.c.b16 %v4569, %v4568
        %v4573 = vpack.c.b16 %v4571, %v4570
        %4574 = vrot.lane.b32.xlu0 %v265, 24
        %v4575 = vpop.permute.xlu0 %4574
        %4576 = vrot.lane.b32.xlu0 %v340, 24
        %v4577 = vpop.permute.xlu0 %4576
        %4578 = vrot.lane.b32.xlu0 %v2881, 24
        %v4579 = vpop.permute.xlu0 %4578
        %vm4580 = vcmask 195584
        %v4581 = vsel %vm4580, %v4575, %v4577
        %v4582 = vsel %vm4580, %v4577, %v4579
        %v4586 = vsel %vm268, %v4572, 0
        %v4589 = vsel %vm268, %v4573, 0
        %4591 = vmatpush.bf16.msra.mxu0 0
        %4592 = vmatpush.bf16.msra.mxu0 0
        %4593 = vmatpush.bf16.msra.mxu0 0
        %4594 = vmatpush.bf16.msra.mxu0 0
        %4595 = vmatpush.bf16.msra.mxu0 0
        %4596 = vmatpush.bf16.msra.mxu0 0
        %4597 = vmatpush.bf16.msra.mxu0 0
        %4598 = vmatpush.bf16.msra.mxu0 %v4581
        %4599 = vmatmul.bf16.gmra.mxu0 %v4586
        %v4600 = vpop.f32.mrf.mxu0
        %v4601 = vadd.f32 0.0, %v4600
        %v4602 = vpop.f32.mrf.mxu0
        %v4603 = vadd.f32 0.0, %v4602
        %4604 = vmatmul.bf16.gmra.mxu0 %v4589
        %v4605 = vpop.f32.mrf.mxu0
        %v4606 = vadd.f32 0.0, %v4605
        %v4607 = vpop.f32.mrf.mxu0
        %v4608 = vadd.f32 0.0, %v4607
        %4609 = vdwg.mxu0
        %4610 = vmatpush.bf16.msra.mxu0 0
        %4611 = vmatpush.bf16.msra.mxu0 0
        %4612 = vmatpush.bf16.msra.mxu0 0
        %4613 = vmatpush.bf16.msra.mxu0 0
        %4614 = vmatpush.bf16.msra.mxu0 0
        %4615 = vmatpush.bf16.msra.mxu0 0
        %4616 = vmatpush.bf16.msra.mxu0 0
        %4617 = vmatpush.bf16.msra.mxu0 %v4582
        %4618 = vmatmul.bf16.gmra.mxu0 %v4586
        %v4619 = vpop.f32.mrf.mxu0
        %v4620 = vadd.f32 0.0, %v4619
        %v4621 = vpop.f32.mrf.mxu0
        %v4622 = vadd.f32 0.0, %v4621
        %4623 = vmatmul.bf16.gmra.mxu0 %v4589
        %v4624 = vpop.f32.mrf.mxu0
        %v4625 = vadd.f32 0.0, %v4624
        %v4626 = vpop.f32.mrf.mxu0
        %v4627 = vadd.f32 0.0, %v4626
        %4628 = vdwg.mxu0
        %v4629 = vld [vmem:[#allocation2] sm:$0xff]
        %v4630 = vld [vmem:[#allocation2 + $0x8] sm:$0xff]
        %v4631 = vld [vmem:[#allocation2 + $0x10] sm:$0xff]
        %v4632 = vld [vmem:[#allocation2 + $0x18] sm:$0xff]
        %v4633 = vld [vmem:[#allocation2 + $0x20] sm:$0xff]
        %v4634 = vld [vmem:[#allocation2 + $0x28] sm:$0xff]
        %v4635 = vld [vmem:[#allocation2 + $0x30] sm:$0xff]
        %v4636 = vld [vmem:[#allocation2 + $0x38] sm:$0xff]
        %v4637 = vadd.f32 %v4629, %v4601
        %v4638 = vadd.f32 %v4630, %v4620
        %v4639 = vadd.f32 %v4631, %v4603
        %v4640 = vadd.f32 %v4632, %v4622
        %v4641 = vadd.f32 %v4633, %v4606
        %v4642 = vadd.f32 %v4634, %v4625
        %v4643 = vadd.f32 %v4635, %v4608
        %v4644 = vadd.f32 %v4636, %v4627
        %4645 = vst [vmem:[#allocation2] sm:$0xff] %v4637
        %4646 = vst [vmem:[#allocation2 + $0x8] sm:$0xff] %v4638
        %4647 = vst [vmem:[#allocation2 + $0x10] sm:$0xff] %v4639
        %4648 = vst [vmem:[#allocation2 + $0x18] sm:$0xff] %v4640
        %4649 = vst [vmem:[#allocation2 + $0x20] sm:$0xff] %v4641
        %4650 = vst [vmem:[#allocation2 + $0x28] sm:$0xff] %v4642
        %4651 = vst [vmem:[#allocation2 + $0x30] sm:$0xff] %v4643
        %4652 = vst [vmem:[#allocation2 + $0x38] sm:$0xff] %v4644
        %s4653 = scalar_lea.vmem %s224, 752
        %v4654 = vld [vmem:[%s4653] sm:$0xf]
        %v4655 = vld [vmem:[%s4653 + $0x4] sm:$0xf]
        %v4656 = vld [vmem:[%s4653 + $0x8] sm:$0xf]
        %v4657 = vld [vmem:[%s4653 + $0xc] sm:$0xf]
        %v4662 = vunpack.c.l.b16 %v4654
        %v4663 = vunpack.c.l.b16 %v4655
        %v4664 = vunpack.c.l.b16 %v4656
        %v4665 = vunpack.c.l.b16 %v4657
        %v4666 = vpack.c.b16 %v4663, %v4662
        %v4667 = vpack.c.b16 %v4665, %v4664
        %4668 = vrot.lane.b32.xlu0 %v265, 23
        %v4669 = vpop.permute.xlu0 %4668
        %4670 = vrot.lane.b32.xlu0 %v340, 23
        %v4671 = vpop.permute.xlu0 %4670
        %4672 = vrot.lane.b32.xlu0 %v2881, 23
        %v4673 = vpop.permute.xlu0 %4672
        %vm4674 = vcmask 187392
        %v4675 = vsel %vm4674, %v4669, %v4671
        %v4676 = vsel %vm4674, %v4671, %v4673
        %v4680 = vsel %vm268, %v4666, 0
        %v4683 = vsel %vm268, %v4667, 0
        %4685 = vmatpush.bf16.msra.mxu0 0
        %4686 = vmatpush.bf16.msra.mxu0 0
        %4687 = vmatpush.bf16.msra.mxu0 0
        %4688 = vmatpush.bf16.msra.mxu0 0
        %4689 = vmatpush.bf16.msra.mxu0 0
        %4690 = vmatpush.bf16.msra.mxu0 0
        %4691 = vmatpush.bf16.msra.mxu0 0
        %4692 = vmatpush.bf16.msra.mxu0 %v4675
        %4693 = vmatmul.bf16.gmra.mxu0 %v4680
        %v4694 = vpop.f32.mrf.mxu0
        %v4695 = vadd.f32 0.0, %v4694
        %v4696 = vpop.f32.mrf.mxu0
        %v4697 = vadd.f32 0.0, %v4696
        %4698 = vmatmul.bf16.gmra.mxu0 %v4683
        %v4699 = vpop.f32.mrf.mxu0
        %v4700 = vadd.f32 0.0, %v4699
        %v4701 = vpop.f32.mrf.mxu0
        %v4702 = vadd.f32 0.0, %v4701
        %4703 = vdwg.mxu0
        %4704 = vmatpush.bf16.msra.mxu0 0
        %4705 = vmatpush.bf16.msra.mxu0 0
        %4706 = vmatpush.bf16.msra.mxu0 0
        %4707 = vmatpush.bf16.msra.mxu0 0
        %4708 = vmatpush.bf16.msra.mxu0 0
        %4709 = vmatpush.bf16.msra.mxu0 0
        %4710 = vmatpush.bf16.msra.mxu0 0
        %4711 = vmatpush.bf16.msra.mxu0 %v4676
        %4712 = vmatmul.bf16.gmra.mxu0 %v4680
        %v4713 = vpop.f32.mrf.mxu0
        %v4714 = vadd.f32 0.0, %v4713
        %v4715 = vpop.f32.mrf.mxu0
        %v4716 = vadd.f32 0.0, %v4715
        %4717 = vmatmul.bf16.gmra.mxu0 %v4683
        %v4718 = vpop.f32.mrf.mxu0
        %v4719 = vadd.f32 0.0, %v4718
        %v4720 = vpop.f32.mrf.mxu0
        %v4721 = vadd.f32 0.0, %v4720
        %4722 = vdwg.mxu0
        %v4723 = vld [vmem:[#allocation2] sm:$0xff]
        %v4724 = vld [vmem:[#allocation2 + $0x8] sm:$0xff]
        %v4725 = vld [vmem:[#allocation2 + $0x10] sm:$0xff]
        %v4726 = vld [vmem:[#allocation2 + $0x18] sm:$0xff]
        %v4727 = vld [vmem:[#allocation2 + $0x20] sm:$0xff]
        %v4728 = vld [vmem:[#allocation2 + $0x28] sm:$0xff]
        %v4729 = vld [vmem:[#allocation2 + $0x30] sm:$0xff]
        %v4730 = vld [vmem:[#allocation2 + $0x38] sm:$0xff]
        %v4731 = vadd.f32 %v4723, %v4695
        %v4732 = vadd.f32 %v4724, %v4714
        %v4733 = vadd.f32 %v4725, %v4697
        %v4734 = vadd.f32 %v4726, %v4716
        %v4735 = vadd.f32 %v4727, %v4700
        %v4736 = vadd.f32 %v4728, %v4719
        %v4737 = vadd.f32 %v4729, %v4702
        %v4738 = vadd.f32 %v4730, %v4721
        %4739 = vst [vmem:[#allocation2] sm:$0xff] %v4731
        %4740 = vst [vmem:[#allocation2 + $0x8] sm:$0xff] %v4732
        %4741 = vst [vmem:[#allocation2 + $0x10] sm:$0xff] %v4733
        %4742 = vst [vmem:[#allocation2 + $0x18] sm:$0xff] %v4734
        %4743 = vst [vmem:[#allocation2 + $0x20] sm:$0xff] %v4735
        %4744 = vst [vmem:[#allocation2 + $0x28] sm:$0xff] %v4736
        %4745 = vst [vmem:[#allocation2 + $0x30] sm:$0xff] %v4737
        %4746 = vst [vmem:[#allocation2 + $0x38] sm:$0xff] %v4738
        %s4747 = scalar_lea.vmem %s224, 768
        %v4748 = vld [vmem:[%s4747] sm:$0xf]
        %v4749 = vld [vmem:[%s4747 + $0x4] sm:$0xf]
        %v4750 = vld [vmem:[%s4747 + $0x8] sm:$0xf]
        %v4751 = vld [vmem:[%s4747 + $0xc] sm:$0xf]
        %v4756 = vunpack.c.l.b16 %v4748
        %v4757 = vunpack.c.l.b16 %v4749
        %v4758 = vunpack.c.l.b16 %v4750
        %v4759 = vunpack.c.l.b16 %v4751
        %v4760 = vpack.c.b16 %v4757, %v4756
        %v4761 = vpack.c.b16 %v4759, %v4758
        %4762 = vrot.lane.b32.xlu0 %v265, 22
        %v4763 = vpop.permute.xlu0 %4762
        %4764 = vrot.lane.b32.xlu0 %v340, 22
        %v4765 = vpop.permute.xlu0 %4764
        %4766 = vrot.lane.b32.xlu0 %v2881, 22
        %v4767 = vpop.permute.xlu0 %4766
        %vm4768 = vcmask 179200
        %v4769 = vsel %vm4768, %v4763, %v4765
        %v4770 = vsel %vm4768, %v4765, %v4767
        %v4774 = vsel %vm268, %v4760, 0
        %v4777 = vsel %vm268, %v4761, 0
        %4779 = vmatpush.bf16.msra.mxu0 0
        %4780 = vmatpush.bf16.msra.mxu0 0
        %4781 = vmatpush.bf16.msra.mxu0 0
        %4782 = vmatpush.bf16.msra.mxu0 0
        %4783 = vmatpush.bf16.msra.mxu0 0
        %4784 = vmatpush.bf16.msra.mxu0 0
        %4785 = vmatpush.bf16.msra.mxu0 0
        %4786 = vmatpush.bf16.msra.mxu0 %v4769
        %4787 = vmatmul.bf16.gmra.mxu0 %v4774
        %v4788 = vpop.f32.mrf.mxu0
        %v4789 = vadd.f32 0.0, %v4788
        %v4790 = vpop.f32.mrf.mxu0
        %v4791 = vadd.f32 0.0, %v4790
        %4792 = vmatmul.bf16.gmra.mxu0 %v4777
        %v4793 = vpop.f32.mrf.mxu0
        %v4794 = vadd.f32 0.0, %v4793
        %v4795 = vpop.f32.mrf.mxu0
        %v4796 = vadd.f32 0.0, %v4795
        %4797 = vdwg.mxu0
        %4798 = vmatpush.bf16.msra.mxu0 0
        %4799 = vmatpush.bf16.msra.mxu0 0
        %4800 = vmatpush.bf16.msra.mxu0 0
        %4801 = vmatpush.bf16.msra.mxu0 0
        %4802 = vmatpush.bf16.msra.mxu0 0
        %4803 = vmatpush.bf16.msra.mxu0 0
        %4804 = vmatpush.bf16.msra.mxu0 0
        %4805 = vmatpush.bf16.msra.mxu0 %v4770
        %4806 = vmatmul.bf16.gmra.mxu0 %v4774
        %v4807 = vpop.f32.mrf.mxu0
        %v4808 = vadd.f32 0.0, %v4807
        %v4809 = vpop.f32.mrf.mxu0
        %v4810 = vadd.f32 0.0, %v4809
        %4811 = vmatmul.bf16.gmra.mxu0 %v4777
        %v4812 = vpop.f32.mrf.mxu0
        %v4813 = vadd.f32 0.0, %v4812
        %v4814 = vpop.f32.mrf.mxu0
        %v4815 = vadd.f32 0.0, %v4814
        %4816 = vdwg.mxu0
        %v4817 = vld [vmem:[#allocation2] sm:$0xff]
        %v4818 = vld [vmem:[#allocation2 + $0x8] sm:$0xff]
        %v4819 = vld [vmem:[#allocation2 + $0x10] sm:$0xff]
        %v4820 = vld [vmem:[#allocation2 + $0x18] sm:$0xff]
        %v4821 = vld [vmem:[#allocation2 + $0x20] sm:$0xff]
        %v4822 = vld [vmem:[#allocation2 + $0x28] sm:$0xff]
        %v4823 = vld [vmem:[#allocation2 + $0x30] sm:$0xff]
        %v4824 = vld [vmem:[#allocation2 + $0x38] sm:$0xff]
        %v4825 = vadd.f32 %v4817, %v4789
        %v4826 = vadd.f32 %v4818, %v4808
        %v4827 = vadd.f32 %v4819, %v4791
        %v4828 = vadd.f32 %v4820, %v4810
        %v4829 = vadd.f32 %v4821, %v4794
        %v4830 = vadd.f32 %v4822, %v4813
        %v4831 = vadd.f32 %v4823, %v4796
        %v4832 = vadd.f32 %v4824, %v4815
        %4833 = vst [vmem:[#allocation2] sm:$0xff] %v4825
        %4834 = vst [vmem:[#allocation2 + $0x8] sm:$0xff] %v4826
        %4835 = vst [vmem:[#allocation2 + $0x10] sm:$0xff] %v4827
        %4836 = vst [vmem:[#allocation2 + $0x18] sm:$0xff] %v4828
        %4837 = vst [vmem:[#allocation2 + $0x20] sm:$0xff] %v4829
        %4838 = vst [vmem:[#allocation2 + $0x28] sm:$0xff] %v4830
        %4839 = vst [vmem:[#allocation2 + $0x30] sm:$0xff] %v4831
        %4840 = vst [vmem:[#allocation2 + $0x38] sm:$0xff] %v4832
        %v4841 = vld [vmem:[#allocation2] sm:$0xff]
        %v4842 = vld [vmem:[#allocation2 + $0x8] sm:$0xff]
        %v4843 = vld [vmem:[#allocation2 + $0x10] sm:$0xff]
        %v4844 = vld [vmem:[#allocation2 + $0x18] sm:$0xff]
        %v4845 = vld [vmem:[#allocation2 + $0x20] sm:$0xff]
        %v4846 = vld [vmem:[#allocation2 + $0x28] sm:$0xff]
        %v4847 = vld [vmem:[#allocation2 + $0x30] sm:$0xff]
        %v4848 = vld [vmem:[#allocation2 + $0x38] sm:$0xff]
        %v4849 = vld [vmem:[%s230] sm:$0xff]
        %v4850 = vld [vmem:[%s230 + $0x8] sm:$0xff]
        %v4851 = vld [vmem:[%s230 + $0x10] sm:$0xff]
        %v4852 = vld [vmem:[%s230 + $0x18] sm:$0xff]
        %4854 = vset.pattern.permute.xlu0 0
        %4855 = vperm.xlu0 %4854, %v4849
        %v4856 = vpop.permute.xlu0 %4855
        %4859 = vset.pattern.permute.xlu0 0
        %4860 = vperm.xlu0 %4859, %v4850
        %v4861 = vpop.permute.xlu0 %4860
        %4864 = vset.pattern.permute.xlu0 0
        %4865 = vperm.xlu0 %4864, %v4851
        %v4866 = vpop.permute.xlu0 %4865
        %4869 = vset.pattern.permute.xlu0 0
        %4870 = vperm.xlu0 %4869, %v4852
        %v4871 = vpop.permute.xlu0 %4870
        %v4873 = vadd.f32 %v4841, %v4856
        %v4874 = vadd.f32 %v4842, %v4856
        %v4875 = vadd.f32 %v4843, %v4861
        %v4876 = vadd.f32 %v4844, %v4861
        %v4877 = vadd.f32 %v4845, %v4866
        %v4878 = vadd.f32 %v4846, %v4866
        %v4879 = vadd.f32 %v4847, %v4871
        %v4880 = vadd.f32 %v4848, %v4871
        %vm4881 = vcmp.ge.f32.partialorder %v4873, 0.0
        %vm4882 = vcmp.ge.f32.partialorder %v4874, 0.0
        %vm4883 = vcmp.ge.f32.partialorder %v4875, 0.0
        %vm4884 = vcmp.ge.f32.partialorder %v4876, 0.0
        %vm4885 = vcmp.ge.f32.partialorder %v4877, 0.0
        %vm4886 = vcmp.ge.f32.partialorder %v4878, 0.0
        %vm4887 = vcmp.ge.f32.partialorder %v4879, 0.0
        %vm4888 = vcmp.ge.f32.partialorder %v4880, 0.0
        %v4889 = vmul.f32 %v4873, 0.2
        %v4890 = vmul.f32 %v4874, 0.2
        %v4891 = vmul.f32 %v4875, 0.2
        %v4892 = vmul.f32 %v4876, 0.2
        %v4893 = vmul.f32 %v4877, 0.2
        %v4894 = vmul.f32 %v4878, 0.2
        %v4895 = vmul.f32 %v4879, 0.2
        %v4896 = vmul.f32 %v4880, 0.2
        %v4897 = vsel %vm4881, %v4873, %v4889
        %v4898 = vsel %vm4882, %v4874, %v4890
        %v4899 = vsel %vm4883, %v4875, %v4891
        %v4900 = vsel %vm4884, %v4876, %v4892
        %v4901 = vsel %vm4885, %v4877, %v4893
        %v4902 = vsel %vm4886, %v4878, %v4894
        %v4903 = vsel %vm4887, %v4879, %v4895
        %v4904 = vsel %vm4888, %v4880, %v4896
        %v4905 = vpack.c.bf16 %v4898, %v4897
        %v4906 = vpack.c.bf16 %v4900, %v4899
        %v4907 = vpack.c.bf16 %v4902, %v4901
        %v4908 = vpack.c.bf16 %v4904, %v4903
        %4909 = vst [vmem:[%s214] sm:$0xff] %v4905
        %4910 = vst [vmem:[%s214 + $0x8] sm:$0xff] %v4906
        %4911 = vst [vmem:[%s214 + $0x10] sm:$0xff] %v4907
        %4912 = vst [vmem:[%s214 + $0x18] sm:$0xff] %v4908
        %s4913 = sand.u32 %s123, 1
        %s4914 = sand.u32 %s123, 1
        %s4915 = smul.addr %s4914, 32
        %s4916 = scalar_lea.vmem [#allocation3], %s4915
        // Predicated region
        $region33: #{age_encoder_forward.4} parent=31 // pred_check
          %p4917 = pneg %p133
        $region34: #{age_encoder_forward.4} parent=31 // pred_check_branch
          %4919 = sbr.rel (%p4917) target = $region36
        $region35: #{age_encoder_forward.4} parent=31 // pred_region
          %s4920 = smul.u32 4, %s19
          %s4921 = smul.u32 2, %s21
          %s4922 = smul.addr %s4920, 10
          %s4923 = sadd.s32 %s4921, %s4922
          %s4924 = smul.addr %s20, 40
          %s4925 = sadd.s32 %s4923, %s4924
          %s4926 = smul.addr %s4925, 4
          %s4927 = scalar_lea.vmem %s3, %s4926
          // Predicated region
          $region37: #{age_encoder_forward.4} parent=35 // pred_check
            _
          $region38: #{age_encoder_forward.4} parent=35 // pred_check_branch
            %4929 = sbr.rel (0) target = $region40
          $region39: #{age_encoder_forward.4} parent=35 // pred_region
            // Predicated region
            $region41: #{age_encoder_forward.4} parent=39 // pred_check
              _
            $region42: #{age_encoder_forward.4} parent=39 // pred_check_branch
              %4931 = sbr.rel (0) target = $region44
            $region43: #{age_encoder_forward.4} parent=39 // pred_region
              // Predicated region
              $region56: #{age_encoder_forward.4} parent=43 // pred_check
                _
              $region57: #{age_encoder_forward.4} parent=43 // pred_check_branch
                %4953 = sbr.rel (0) target = $region59
              $region58: #{age_encoder_forward.4} parent=43 // pred_region
                loop: start=0, step=1, limit=1
                $region60: #{age_encoder_forward.4} parent=58 // loop_pre_header
                  _
                $region61: #{age_encoder_forward.4} parent=58 // loop_header
                  %s4955 = sphi 0, %s4959
                  %p4956 = scmp.ge.s32.totalorder %s4955, 1
                  %s4960 = sphi %s4916, %s4916
                  %s4961 = sphi %s4927, %s4927
                $region62: #{age_encoder_forward.4} parent=58 // loop_header_branch
                  %4958 = sbr.rel (%p4956) target = $region66
                $region63: #{age_encoder_forward.4} parent=58 // loop_body
                  %v4962 = vld [vmem:[%s4960] sm:$0xff]
                  %4963 = vst [vmem:[%s4961] sm:$0xff] %v4962
                  %v4964 = vld [vmem:[%s4960 + $0x8] sm:$0xff]
                  %4965 = vst [vmem:[%s4961 + $0x28] sm:$0xff] %v4964
                  %v4966 = vld [vmem:[%s4960 + $0x10] sm:$0xff]
                  %4967 = vst [vmem:[%s4961 + $0x50] sm:$0xff] %v4966
                  %v4968 = vld [vmem:[%s4960 + $0x18] sm:$0xff]
                  %4969 = vst [vmem:[%s4961 + $0x78] sm:$0xff] %v4968
                $region64: #{age_encoder_forward.4} parent=58 // loop_footer
                  %s4959 = sadd.s32 1, %s4955
                $region65: #{age_encoder_forward.4} parent=58 // loop_footer_branch
                  %4954 = sbr.rel target = $region61
                $region66: #{age_encoder_forward.4} parent=58 // loop_exit
                  _
              $region59: #{age_encoder_forward.4} parent=43 // pred_fallthru
                _
              // Predicated region
              $region67: #{age_encoder_forward.4} parent=43 // pred_check
                _
              $region68: #{age_encoder_forward.4} parent=43 // pred_check_branch
                %4971 = sbr.rel target = $region70
              $region69: #{age_encoder_forward.4} parent=43 // pred_region
                _
              $region70: #{age_encoder_forward.4} parent=43 // pred_fallthru
                _
            $region44: #{age_encoder_forward.4} parent=39 // pred_fallthru
              _
            // Predicated region
            $region45: #{age_encoder_forward.4} parent=39 // pred_check
              _
            $region46: #{age_encoder_forward.4} parent=39 // pred_check_branch
              %4933 = sbr.rel target = $region48
            $region47: #{age_encoder_forward.4} parent=39 // pred_region
              %s4935 = ssub.s32 256, 1
              loop: start=0, step=1, limit=1
              $region49: #{age_encoder_forward.4} parent=47 // loop_pre_header
                _
              $region50: #{age_encoder_forward.4} parent=47 // loop_header
                %s4937 = sphi 0, %s4941
                %p4938 = scmp.ge.s32.totalorder %s4937, 1
                %s4942 = sphi %s4916, %s4916
                %s4943 = sphi %s4927, %s4927
              $region51: #{age_encoder_forward.4} parent=47 // loop_header_branch
                %4940 = sbr.rel (%p4938) target = $region55
              $region52: #{age_encoder_forward.4} parent=47 // loop_body
                %v4944 = vld [vmem:[%s4942] sm:%s4935]
                %4945 = vst [vmem:[%s4943] sm:%s4935] %v4944
                %v4946 = vld [vmem:[%s4942 + $0x8] sm:%s4935]
                %4947 = vst [vmem:[%s4943 + $0x28] sm:%s4935] %v4946
                %v4948 = vld [vmem:[%s4942 + $0x10] sm:%s4935]
                %4949 = vst [vmem:[%s4943 + $0x50] sm:%s4935] %v4948
                %v4950 = vld [vmem:[%s4942 + $0x18] sm:%s4935]
                %4951 = vst [vmem:[%s4943 + $0x78] sm:%s4935] %v4950
              $region53: #{age_encoder_forward.4} parent=47 // loop_footer
                %s4941 = sadd.s32 1, %s4937
              $region54: #{age_encoder_forward.4} parent=47 // loop_footer_branch
                %4936 = sbr.rel target = $region50
              $region55: #{age_encoder_forward.4} parent=47 // loop_exit
                _
            $region48: #{age_encoder_forward.4} parent=39 // pred_fallthru
              _
          $region40: #{age_encoder_forward.4} parent=35 // pred_fallthru
            _
          %4972 = vnop
        $region36: #{age_encoder_forward.4} parent=31 // pred_fallthru
          _
      $region32: #{age_encoder_forward.4} parent=5 // pred_fallthru
        _
      %p4973 = scmp.le.s32.totalorder 2, %s9
      // Predicated region
      $region71: #{age_encoder_forward.4} parent=5 // pred_check
        %p4974 = pneg %p4973
      $region72: #{age_encoder_forward.4} parent=5 // pred_check_branch
        %4976 = sbr.rel (%p4974) target = $region74
      $region73: #{age_encoder_forward.4} parent=5 // pred_region
        %s4977 = ssub.s32 %s9, 2
        // Predicated region
        $region75: #{age_encoder_forward.4} parent=73 // pred_check
          %p4978 = pneg %p139
        $region76: #{age_encoder_forward.4} parent=73 // pred_check_branch
          %4980 = sbr.rel (%p4978) target = $region78
        $region77: #{age_encoder_forward.4} parent=73 // pred_region
          %s4981 = sand.u32 %s124, 1
          %s4982 = sand.u32 %s124, 1
          %s4983 = smul.addr %s4982, 32
          %s4984 = scalar_lea.vmem [#allocation3], %s4983
        $region78: #{age_encoder_forward.4} parent=73 // pred_fallthru
          _
      $region74: #{age_encoder_forward.4} parent=5 // pred_fallthru
        _
    $region6: #{age_encoder_forward.4} parent=1 // loop_footer
      %s13 = sadd.s32 1, %s9
    $region7: #{age_encoder_forward.4} parent=1 // loop_footer_branch
      %8 = sbr.rel target = $region3
    $region8: #{age_encoder_forward.4} parent=1 // loop_exit
      _

// kernel: age_encoder_forward.5
$region0: #{age_encoder_forward.5}
  #allocation0 [shape = 'u32[]', space=smem, size = 0x4, offset = 0x4, fixed_abs, tag = 'smem constant byte address 0x4 - core index']
  #allocation1 [shape = 'u32[72,128]{1,0:T(1,128)}', space=vmem, size = 0x9000, scoped, tag = 'internal scratch']
  %s0 = inlined_call_operand.vmem [shape: bf16[2,128,640], index: 0, kind: input, shape index: {}]
  %s1 = inlined_call_operand.vmem [shape: bf16[64,512], index: 1, kind: input, shape index: {}]
  %s2 = inlined_call_operand.vmem [shape: f32[64,1], index: 2, kind: input, shape index: {}]
  %s3 = inlined_call_operand.vmem [shape: bf16[2,64,512], index: 3, kind: output, shape index: {}]
  %s4 = sld [smem:[#allocation0]]
  $region79: #{age_encoder_forward.5} parent=0
    _
  %s6 = ssub.s32 1, %s4
  %s7 = scalar_select 0, %s6, %s4
  $region1: #{age_encoder_forward.5} parent=0
    #allocation2 [shape = 'u8[65536]{0}', space=vmem, size = 0x10000, scoped, tag = 'output window, operand 0']
    loop: start=0, step=1, limit=6
    $region2: #{age_encoder_forward.5} parent=1 // loop_pre_header
      _
    $region3: #{age_encoder_forward.5} parent=1 // loop_header
      %s9 = sphi 0, %s13
      %p10 = scmp.ge.s32.totalorder %s9, 6
      %s16 = sphi 0, %s35
      %s17 = sphi 0, %s31
      %s18 = sphi 0, %s27
      %s19 = sphi 0, %s16
      %s20 = sphi 0, %s17
      %s21 = sphi 0, %s18
      %s22 = sphi 0, %s19
      %s23 = sphi 0, %s20
      %s24 = sphi 0, %s21
      %s38 = sphi 0, %s40
      %s41 = sphi 0, %s38
      %s42 = sphi 0, %s41
      %s58 = sphi 0, %s42
      %s64 = sphi 0, %s66
      %s67 = sphi 0, %s64
      %s68 = sphi 0, %s67
      %s84 = sphi 0, %s68
      %s90 = sphi 0, %s92
      %s93 = sphi 0, %s90
      %s94 = sphi 0, %s93
      %s110 = sphi 0, %s94
      %s120 = sphi 0, %s122
      %s123 = sphi 0, %s120
      %s124 = sphi 0, %s123
      %s140 = sphi 0, %s124
    $region4: #{age_encoder_forward.5} parent=1 // loop_header_branch
      %12 = sbr.rel (%p10) target = $region8
    $region5: #{age_encoder_forward.5} parent=1 // loop_body
      %s14 = ssub.s32 %s9, 1
      %s15 = ssub.s32 %s9, 2
      %s25 = sadd.s32 1, %s18
      %p26 = scmp.ge.s32.totalorder %s25, 2
      %s27 = scalar_select %p26, 0, %s25
      %s28 = sadd.s32 1, %s17
      %s29 = scalar_select %p26, %s28, %s17
      %p30 = scmp.ge.s32.totalorder %s29, 1
      %s31 = scalar_select %p30, 0, %s29
      %s32 = sadd.s32 1, %s16
      %s33 = scalar_select %p30, %s32, %s16
      %p34 = scmp.ge.s32.totalorder %s33, 2
      %s35 = scalar_select %p34, 0, %s33
      %s36 = ssub.s32 %s16, %s35
      %p37 = scmp.eq.s32.totalorder %s36, 0
      %s39 = sadd.s32 %s38, 1
      %s40 = scalar_select %p37, %s38, %s39
      %p43 = pneg %p37
      %p44 = scmp.eq.s32.totalorder %s9, 3
      %p45 = por %p43, %p44
      %p46 = scmp.ne.s32.totalorder %s38, %s41
      %p47 = scmp.eq.s32.totalorder %s9, 0
      %p48 = por %p46, %p47
      %p49 = scmp.ne.s32.totalorder %s38, %s41
      %p50 = scmp.eq.s32.totalorder %s14, 3
      %p51 = por %p49, %p50
      %p52 = scmp.ne.s32.totalorder %s41, %s42
      %p53 = scmp.eq.s32.totalorder %s14, 0
      %p54 = por %p52, %p53
      %p55 = scmp.ne.s32.totalorder %s41, %s42
      %p56 = scmp.eq.s32.totalorder %s15, 3
      %p57 = por %p55, %p56
      %p59 = scmp.ne.s32.totalorder %s42, %s58
      %p60 = scmp.eq.s32.totalorder %s15, 0
      %p61 = por %p59, %p60
      %s62 = ssub.s32 %s17, %s31
      %p63 = scmp.eq.s32.totalorder %s62, 0
      %s65 = sadd.s32 %s64, 1
      %s66 = scalar_select %p63, %s64, %s65
      %p69 = pneg %p63
      %p70 = scmp.eq.s32.totalorder %s9, 3
      %p71 = por %p69, %p70
      %p72 = scmp.ne.s32.totalorder %s64, %s67
      %p73 = scmp.eq.s32.totalorder %s9, 0
      %p74 = por %p72, %p73
      %p75 = scmp.ne.s32.totalorder %s64, %s67
      %p76 = scmp.eq.s32.totalorder %s14, 3
      %p77 = por %p75, %p76
      %p78 = scmp.ne.s32.totalorder %s67, %s68
      %p79 = scmp.eq.s32.totalorder %s14, 0
      %p80 = por %p78, %p79
      %p81 = scmp.ne.s32.totalorder %s67, %s68
      %p82 = scmp.eq.s32.totalorder %s15, 3
      %p83 = por %p81, %p82
      %p85 = scmp.ne.s32.totalorder %s68, %s84
      %p86 = scmp.eq.s32.totalorder %s15, 0
      %p87 = por %p85, %p86
      %s88 = ssub.s32 %s17, %s31
      %p89 = scmp.eq.s32.totalorder %s88, 0
      %s91 = sadd.s32 %s90, 1
      %s92 = scalar_select %p89, %s90, %s91
      %p95 = pneg %p89
      %p96 = scmp.eq.s32.totalorder %s9, 3
      %p97 = por %p95, %p96
      %p98 = scmp.ne.s32.totalorder %s90, %s93
      %p99 = scmp.eq.s32.totalorder %s9, 0
      %p100 = por %p98, %p99
      %p101 = scmp.ne.s32.totalorder %s90, %s93
      %p102 = scmp.eq.s32.totalorder %s14, 3
      %p103 = por %p101, %p102
      %p104 = scmp.ne.s32.totalorder %s93, %s94
      %p105 = scmp.eq.s32.totalorder %s14, 0
      %p106 = por %p104, %p105
      %p107 = scmp.ne.s32.totalorder %s93, %s94
      %p108 = scmp.eq.s32.totalorder %s15, 3
      %p109 = por %p107, %p108
      %p111 = scmp.ne.s32.totalorder %s94, %s110
      %p112 = scmp.eq.s32.totalorder %s15, 0
      %p113 = por %p111, %p112
      %s114 = ssub.s32 %s16, %s35
      %s115 = ssub.s32 %s17, %s31
      %s116 = sor.u32 %s114, %s115
      %s117 = ssub.s32 %s18, %s27
      %s118 = sor.u32 %s116, %s117
      %p119 = scmp.eq.s32.totalorder %s118, 0
      %s121 = sadd.s32 %s120, 1
      %s122 = scalar_select %p119, %s120, %s121
      %p125 = pneg %p119
      %p126 = scmp.eq.s32.totalorder %s9, 3
      %p127 = por %p125, %p126
      %p128 = scmp.ne.s32.totalorder %s120, %s123
      %p129 = scmp.eq.s32.totalorder %s9, 0
      %p130 = por %p128, %p129
      %p131 = scmp.ne.s32.totalorder %s120, %s123
      %p132 = scmp.eq.s32.totalorder %s14, 3
      %p133 = por %p131, %p132
      %p134 = scmp.ne.s32.totalorder %s123, %s124
      %p135 = scmp.eq.s32.totalorder %s14, 0
      %p136 = por %p134, %p135
      %p137 = scmp.ne.s32.totalorder %s123, %s124
      %p138 = scmp.eq.s32.totalorder %s15, 3
      %p139 = por %p137, %p138
      %p141 = scmp.ne.s32.totalorder %s124, %s140
      %p142 = scmp.eq.s32.totalorder %s15, 0
      %p143 = por %p141, %p142
      %p144 = scmp.le.s32.totalorder 1, %s9
      %p145 = scmp.lt.s32.totalorder %s9, 5
      %p146 = pnand %p144, %p145
      %p147 = pneg %p146
      // Predicated region
      $region9: #{age_encoder_forward.5} parent=5 // pred_check
        _
      $region10: #{age_encoder_forward.5} parent=5 // pred_check_branch
        %149 = sbr.rel (%p146) target = $region12
      $region11: #{age_encoder_forward.5} parent=5 // pred_region
        %s150 = ssub.s32 %s9, 1
        // Predicated region
        $region13: #{age_encoder_forward.5} parent=11 // pred_check
          %p151 = pneg %p80
        $region14: #{age_encoder_forward.5} parent=11 // pred_check_branch
          %153 = sbr.rel (%p151) target = $region16
        $region15: #{age_encoder_forward.5} parent=11 // pred_region
          %s154 = smul.u32 8, %s20
          %p155 = scmp.lt.s32.totalorder %s154, 7
          %s156 = scalar_select %p155, %s154, 7
          %s157 = smul.addr %s156, 4
          %s158 = smul.addr %s157, 4
          %s159 = scalar_lea.vmem %s1, %s158
          %s160 = smul.u32 8, %s20
        $region16: #{age_encoder_forward.5} parent=11 // pred_fallthru
          _
        // Predicated region
        $region17: #{age_encoder_forward.5} parent=11 // pred_check
          %p161 = pneg %p106
        $region18: #{age_encoder_forward.5} parent=11 // pred_check_branch
          %163 = sbr.rel (%p161) target = $region20
        $region19: #{age_encoder_forward.5} parent=11 // pred_region
          %s164 = smul.u32 8, %s20
          %p165 = scmp.lt.s32.totalorder %s164, 7
          %s166 = scalar_select %p165, %s164, 7
          %s167 = smul.addr %s166, 8
          %s168 = scalar_lea.vmem %s2, %s167
          %s169 = smul.u32 8, %s20
        $region20: #{age_encoder_forward.5} parent=11 // pred_fallthru
          _
      $region12: #{age_encoder_forward.5} parent=5 // pred_fallthru
        _
      %p170 = scmp.lt.s32.totalorder %s9, 4
      // Predicated region
      $region21: #{age_encoder_forward.5} parent=5 // pred_check
        %p171 = pneg %p170
      $region22: #{age_encoder_forward.5} parent=5 // pred_check_branch
        %173 = sbr.rel (%p171) target = $region24
      $region23: #{age_encoder_forward.5} parent=5 // pred_region
        // Predicated region
        $region25: #{age_encoder_forward.5} parent=23 // pred_check
          %p174 = pneg %p48
        $region26: #{age_encoder_forward.5} parent=23 // pred_check_branch
          %176 = sbr.rel (%p174) target = $region28
        $region27: #{age_encoder_forward.5} parent=23 // pred_region
          %p177 = scmp.lt.s32.totalorder %s16, 1
          %s178 = scalar_select %p177, %s16, 1
          %s179 = smul.addr %s178, 80
          %s180 = smul.addr %s179, 4
          %s181 = scalar_lea.vmem %s0, %s180
        $region28: #{age_encoder_forward.5} parent=23 // pred_fallthru
          _
      $region24: #{age_encoder_forward.5} parent=5 // pred_fallthru
        _
      %p182 = scmp.le.s32.totalorder 1, %s9
      %p183 = scmp.lt.s32.totalorder %s9, 5
      %p184 = pnand %p182, %p183
      %p185 = pneg %p184
      // Predicated region
      $region29: #{age_encoder_forward.5} parent=5 // pred_check
        _
      $region30: #{age_encoder_forward.5} parent=5 // pred_check_branch
        %187 = sbr.rel (%p184) target = $region32
      $region31: #{age_encoder_forward.5} parent=5 // pred_region
        %s188 = ssub.s32 %s9, 1
        %p189 = scmp.lt.s32.totalorder %s19, 1
        %s190 = scalar_select %p189, %s19, 1
        %s191 = smul.addr %s190, 80
        %s192 = smul.addr %s191, 4
        %s193 = scalar_lea.vmem %s0, %s192
        %p194 = pneg %p54
        %p195 = pneg %p51
        %s196 = smul.u32 8, %s20
        %p197 = scmp.lt.s32.totalorder %s196, 7
        %s198 = scalar_select %p197, %s196, 7
        %s199 = smul.addr %s198, 4
        %s200 = smul.addr %s199, 4
        %s201 = scalar_lea.vmem %s1, %s200
        %p202 = pneg %p80
        %p203 = pneg %p77
        %s204 = smul.u32 8, %s20
        %p205 = scmp.lt.s32.totalorder %s204, 7
        %s206 = scalar_select %p205, %s204, 7
        %s207 = smul.addr %s206, 8
        %s208 = scalar_lea.vmem %s2, %s207
        %p209 = pneg %p106
        %p210 = pneg %p103
        %p211 = pneg %p136
        %p212 = pneg %p133
        %s213 = sand.u32 %s123, 1
        %s214 = sand.u32 %s123, 1
        %s215 = smul.addr %s214, 64
        %s216 = scalar_lea.vmem [#allocation2], %s215
        %p217 = scmp.lt.s32.totalorder %s19, 1
        %s218 = scalar_select %p217, %s19, 1
        %s219 = smul.addr %s218, 80
        %s220 = smul.addr %s219, 4
        %s221 = scalar_lea.vmem %s0, %s220
        %s222 = smul.u32 8, %s20
        %p223 = scmp.lt.s32.totalorder %s222, 7
        %s224 = scalar_select %p223, %s222, 7
        %s225 = smul.addr %s224, 4
        %s226 = smul.addr %s225, 4
        %s227 = scalar_lea.vmem %s1, %s226
        %s228 = smul.u32 8, %s20
        %s229 = smul.u32 8, %s20
        %p230 = scmp.lt.s32.totalorder %s229, 7
        %s231 = scalar_select %p230, %s229, 7
        %s232 = smul.addr %s231, 8
        %s233 = scalar_lea.vmem %s2, %s232
        %s234 = smul.u32 8, %s20
        %s235 = smul.u32 8, %s20
        %s236 = smul.u32 2, %s21
        %s237 = smul.u32 %s21, 256
        %s238 = sshra.s32 %s237, 7
        %s239 = sand.u32 %s237, 127
        %s240 = smul.addr %s238, 4
        %s241 = scalar_lea.vmem %s221, %s240
        %v242 = vld [vmem:[%s241] sm:$0xff]
        %v243 = vld [vmem:[%s241 + $0x8] sm:$0xf]
        %v244 = vld [vmem:[%s241 + $0x14] sm:$0xff]
        %v245 = vld [vmem:[%s241 + $0x1c] sm:$0xf]
        %v246 = vld [vmem:[%s241 + $0x28] sm:$0xff]
        %v247 = vld [vmem:[%s241 + $0x30] sm:$0xf]
        %v248 = vld [vmem:[%s241 + $0x3c] sm:$0xff]
        %v249 = vld [vmem:[%s241 + $0x44] sm:$0xf]
        %v250 = vld [vmem:[%s241 + $0x50] sm:$0xff]
        %v251 = vld [vmem:[%s241 + $0x58] sm:$0xf]
        %v252 = vld [vmem:[%s241 + $0x64] sm:$0xff]
        %v253 = vld [vmem:[%s241 + $0x6c] sm:$0xf]
        %v254 = vld [vmem:[%s241 + $0x78] sm:$0xff]
        %v255 = vld [vmem:[%s241 + $0x80] sm:$0xf]
        %v256 = vld [vmem:[%s241 + $0x8c] sm:$0xff]
        %v257 = vld [vmem:[%s241 + $0x94] sm:$0xf]
        %v258 = vld [vmem:[%s241 + $0xa0] sm:$0xff]
        %v259 = vld [vmem:[%s241 + $0xa8] sm:$0xf]
        %v260 = vld [vmem:[%s241 + $0xb4] sm:$0xff]
        %v261 = vld [vmem:[%s241 + $0xbc] sm:$0xf]
        %v262 = vld [vmem:[%s241 + $0xc8] sm:$0xff]
        %v263 = vld [vmem:[%s241 + $0xd0] sm:$0xf]
        %v264 = vld [vmem:[%s241 + $0xdc] sm:$0xff]
        %v265 = vld [vmem:[%s241 + $0xe4] sm:$0xf]
        %v266 = vld [vmem:[%s241 + $0xf0] sm:$0xff]
        %v267 = vld [vmem:[%s241 + $0xf8] sm:$0xf]
        %v268 = vld [vmem:[%s241 + $0x104] sm:$0xff]
        %v269 = vld [vmem:[%s241 + $0x10c] sm:$0xf]
        %v270 = vld [vmem:[%s241 + $0x118] sm:$0xff]
        %v271 = vld [vmem:[%s241 + $0x120] sm:$0xf]
        %v272 = vld [vmem:[%s241 + $0x12c] sm:$0xff]
        %v273 = vld [vmem:[%s241 + $0x134] sm:$0xf]
        %v290 = vunpack.c.l.b16 %v242
        %v291 = vunpack.c.h.b16 %v242
        %v292 = vunpack.c.l.b16 %v244
        %v293 = vunpack.c.h.b16 %v244
        %v294 = vunpack.c.l.b16 %v246
        %v295 = vunpack.c.h.b16 %v246
        %v296 = vunpack.c.l.b16 %v248
        %v297 = vunpack.c.h.b16 %v248
        %v298 = vunpack.c.l.b16 %v250
        %v299 = vunpack.c.h.b16 %v250
        %v300 = vunpack.c.l.b16 %v252
        %v301 = vunpack.c.h.b16 %v252
        %v302 = vunpack.c.l.b16 %v254
        %v303 = vunpack.c.h.b16 %v254
        %v304 = vunpack.c.l.b16 %v256
        %v305 = vunpack.c.h.b16 %v256
        %v306 = vunpack.c.l.b16 %v258
        %v307 = vunpack.c.h.b16 %v258
        %v308 = vunpack.c.l.b16 %v260
        %v309 = vunpack.c.h.b16 %v260
        %v310 = vunpack.c.l.b16 %v262
        %v311 = vunpack.c.h.b16 %v262
        %v312 = vunpack.c.l.b16 %v264
        %v313 = vunpack.c.h.b16 %v264
        %v314 = vunpack.c.l.b16 %v266
        %v315 = vunpack.c.h.b16 %v266
        %v316 = vunpack.c.l.b16 %v268
        %v317 = vunpack.c.h.b16 %v268
        %v318 = vunpack.c.l.b16 %v270
        %v319 = vunpack.c.h.b16 %v270
        %v320 = vunpack.c.l.b16 %v272
        %v321 = vunpack.c.h.b16 %v272
        %v322 = vpack.c.b16 %v292, %v290
        %v323 = vpack.c.b16 %v293, %v291
        %v324 = vpack.c.b16 %v296, %v294
        %v325 = vpack.c.b16 %v297, %v295
        %v326 = vpack.c.b16 %v300, %v298
        %v327 = vpack.c.b16 %v301, %v299
        %v328 = vpack.c.b16 %v304, %v302
        %v329 = vpack.c.b16 %v305, %v303
        %v330 = vpack.c.b16 %v308, %v306
        %v331 = vpack.c.b16 %v309, %v307
        %v332 = vpack.c.b16 %v312, %v310
        %v333 = vpack.c.b16 %v313, %v311
        %v334 = vpack.c.b16 %v316, %v314
        %v335 = vpack.c.b16 %v317, %v315
        %v336 = vpack.c.b16 %v320, %v318
        %v337 = vpack.c.b16 %v321, %v319
        %v370 = vunpack.c.l.b16 %v243
        %v371 = vunpack.c.l.b16 %v245
        %v372 = vunpack.c.l.b16 %v247
        %v373 = vunpack.c.l.b16 %v249
        %v374 = vunpack.c.l.b16 %v251
        %v375 = vunpack.c.l.b16 %v253
        %v376 = vunpack.c.l.b16 %v255
        %v377 = vunpack.c.l.b16 %v257
        %v378 = vunpack.c.l.b16 %v259
        %v379 = vunpack.c.l.b16 %v261
        %v380 = vunpack.c.l.b16 %v263
        %v381 = vunpack.c.l.b16 %v265
        %v382 = vunpack.c.l.b16 %v267
        %v383 = vunpack.c.l.b16 %v269
        %v384 = vunpack.c.l.b16 %v271
        %v385 = vunpack.c.l.b16 %v273
        %v386 = vpack.c.b16 %v371, %v370
        %v387 = vpack.c.b16 %v373, %v372
        %v388 = vpack.c.b16 %v375, %v374
        %v389 = vpack.c.b16 %v377, %v376
        %v390 = vpack.c.b16 %v379, %v378
        %v391 = vpack.c.b16 %v381, %v380
        %v392 = vpack.c.b16 %v383, %v382
        %v393 = vpack.c.b16 %v385, %v384
        %394 = vrot.lane.b32.xlu0 %v322, 127
        %v395 = vpop.permute.xlu0 %394
        %396 = vrot.lane.b32.xlu0 %v323, 127
        %v397 = vpop.permute.xlu0 %396
        %398 = vrot.lane.b32.xlu0 %v386, 127
        %v399 = vpop.permute.xlu0 %398
        %400 = vrot.lane.b32.xlu0 %v324, 127
        %v401 = vpop.permute.xlu0 %400
        %402 = vrot.lane.b32.xlu0 %v325, 127
        %v403 = vpop.permute.xlu0 %402
        %404 = vrot.lane.b32.xlu0 %v387, 127
        %v405 = vpop.permute.xlu0 %404
        %406 = vrot.lane.b32.xlu0 %v326, 127
        %v407 = vpop.permute.xlu0 %406
        %408 = vrot.lane.b32.xlu0 %v327, 127
        %v409 = vpop.permute.xlu0 %408
        %410 = vrot.lane.b32.xlu0 %v388, 127
        %v411 = vpop.permute.xlu0 %410
        %412 = vrot.lane.b32.xlu0 %v328, 127
        %v413 = vpop.permute.xlu0 %412
        %414 = vrot.lane.b32.xlu0 %v329, 127
        %v415 = vpop.permute.xlu0 %414
        %416 = vrot.lane.b32.xlu0 %v389, 127
        %v417 = vpop.permute.xlu0 %416
        %418 = vrot.lane.b32.xlu0 %v330, 127
        %v419 = vpop.permute.xlu0 %418
        %420 = vrot.lane.b32.xlu0 %v331, 127
        %v421 = vpop.permute.xlu0 %420
        %422 = vrot.lane.b32.xlu0 %v390, 127
        %v423 = vpop.permute.xlu0 %422
        %424 = vrot.lane.b32.xlu0 %v332, 127
        %v425 = vpop.permute.xlu0 %424
        %426 = vrot.lane.b32.xlu0 %v333, 127
        %v427 = vpop.permute.xlu0 %426
        %428 = vrot.lane.b32.xlu0 %v391, 127
        %v429 = vpop.permute.xlu0 %428
        %430 = vrot.lane.b32.xlu0 %v334, 127
        %v431 = vpop.permute.xlu0 %430
        %432 = vrot.lane.b32.xlu0 %v335, 127
        %v433 = vpop.permute.xlu0 %432
        %434 = vrot.lane.b32.xlu0 %v392, 127
        %v435 = vpop.permute.xlu0 %434
        %436 = vrot.lane.b32.xlu0 %v336, 127
        %v437 = vpop.permute.xlu0 %436
        %438 = vrot.lane.b32.xlu0 %v337, 127
        %v439 = vpop.permute.xlu0 %438
        %440 = vrot.lane.b32.xlu0 %v393, 127
        %v441 = vpop.permute.xlu0 %440
        %vm442 = vcmask 1039360
        %v443 = vsel %vm442, %v395, %v397
        %v444 = vsel %vm442, %v397, %v399
        %v445 = vsel %vm442, %v401, %v403
        %v446 = vsel %vm442, %v403, %v405
        %v447 = vsel %vm442, %v407, %v409
        %v448 = vsel %vm442, %v409, %v411
        %v449 = vsel %vm442, %v413, %v415
        %v450 = vsel %vm442, %v415, %v417
        %v451 = vsel %vm442, %v419, %v421
        %v452 = vsel %vm442, %v421, %v423
        %v453 = vsel %vm442, %v425, %v427
        %v454 = vsel %vm442, %v427, %v429
        %v455 = vsel %vm442, %v431, %v433
        %v456 = vsel %vm442, %v433, %v435
        %v457 = vsel %vm442, %v437, %v439
        %v458 = vsel %vm442, %v439, %v441
        %475 = vrot.lane.b32.xlu0 %v322, 111
        %v476 = vpop.permute.xlu0 %475
        %477 = vrot.lane.b32.xlu0 %v323, 111
        %v478 = vpop.permute.xlu0 %477
        %479 = vrot.lane.b32.xlu0 %v386, 111
        %v480 = vpop.permute.xlu0 %479
        %481 = vrot.lane.b32.xlu0 %v324, 111
        %v482 = vpop.permute.xlu0 %481
        %483 = vrot.lane.b32.xlu0 %v325, 111
        %v484 = vpop.permute.xlu0 %483
        %485 = vrot.lane.b32.xlu0 %v387, 111
        %v486 = vpop.permute.xlu0 %485
        %487 = vrot.lane.b32.xlu0 %v326, 111
        %v488 = vpop.permute.xlu0 %487
        %489 = vrot.lane.b32.xlu0 %v327, 111
        %v490 = vpop.permute.xlu0 %489
        %491 = vrot.lane.b32.xlu0 %v388, 111
        %v492 = vpop.permute.xlu0 %491
        %493 = vrot.lane.b32.xlu0 %v328, 111
        %v494 = vpop.permute.xlu0 %493
        %495 = vrot.lane.b32.xlu0 %v329, 111
        %v496 = vpop.permute.xlu0 %495
        %497 = vrot.lane.b32.xlu0 %v389, 111
        %v498 = vpop.permute.xlu0 %497
        %499 = vrot.lane.b32.xlu0 %v330, 111
        %v500 = vpop.permute.xlu0 %499
        %501 = vrot.lane.b32.xlu0 %v331, 111
        %v502 = vpop.permute.xlu0 %501
        %503 = vrot.lane.b32.xlu0 %v390, 111
        %v504 = vpop.permute.xlu0 %503
        %505 = vrot.lane.b32.xlu0 %v332, 111
        %v506 = vpop.permute.xlu0 %505
        %507 = vrot.lane.b32.xlu0 %v333, 111
        %v508 = vpop.permute.xlu0 %507
        %509 = vrot.lane.b32.xlu0 %v391, 111
        %v510 = vpop.permute.xlu0 %509
        %511 = vrot.lane.b32.xlu0 %v334, 111
        %v512 = vpop.permute.xlu0 %511
        %513 = vrot.lane.b32.xlu0 %v335, 111
        %v514 = vpop.permute.xlu0 %513
        %515 = vrot.lane.b32.xlu0 %v392, 111
        %v516 = vpop.permute.xlu0 %515
        %517 = vrot.lane.b32.xlu0 %v336, 111
        %v518 = vpop.permute.xlu0 %517
        %519 = vrot.lane.b32.xlu0 %v337, 111
        %v520 = vpop.permute.xlu0 %519
        %521 = vrot.lane.b32.xlu0 %v393, 111
        %v522 = vpop.permute.xlu0 %521
        %vm523 = vcmask 908288
        %v524 = vsel %vm523, %v476, %v478
        %v525 = vsel %vm523, %v478, %v480
        %v526 = vsel %vm523, %v482, %v484
        %v527 = vsel %vm523, %v484, %v486
        %v528 = vsel %vm523, %v488, %v490
        %v529 = vsel %vm523, %v490, %v492
        %v530 = vsel %vm523, %v494, %v496
        %v531 = vsel %vm523, %v496, %v498
        %v532 = vsel %vm523, %v500, %v502
        %v533 = vsel %vm523, %v502, %v504
        %v534 = vsel %vm523, %v506, %v508
        %v535 = vsel %vm523, %v508, %v510
        %v536 = vsel %vm523, %v512, %v514
        %v537 = vsel %vm523, %v514, %v516
        %v538 = vsel %vm523, %v518, %v520
        %v539 = vsel %vm523, %v520, %v522
        %556 = vrot.lane.b32.xlu0 %v322, 110
        %v557 = vpop.permute.xlu0 %556
        %558 = vrot.lane.b32.xlu0 %v323, 110
        %v559 = vpop.permute.xlu0 %558
        %560 = vrot.lane.b32.xlu0 %v386, 110
        %v561 = vpop.permute.xlu0 %560
        %562 = vrot.lane.b32.xlu0 %v324, 110
        %v563 = vpop.permute.xlu0 %562
        %564 = vrot.lane.b32.xlu0 %v325, 110
        %v565 = vpop.permute.xlu0 %564
        %566 = vrot.lane.b32.xlu0 %v387, 110
        %v567 = vpop.permute.xlu0 %566
        %568 = vrot.lane.b32.xlu0 %v326, 110
        %v569 = vpop.permute.xlu0 %568
        %570 = vrot.lane.b32.xlu0 %v327, 110
        %v571 = vpop.permute.xlu0 %570
        %572 = vrot.lane.b32.xlu0 %v388, 110
        %v573 = vpop.permute.xlu0 %572
        %574 = vrot.lane.b32.xlu0 %v328, 110
        %v575 = vpop.permute.xlu0 %574
        %576 = vrot.lane.b32.xlu0 %v329, 110
        %v577 = vpop.permute.xlu0 %576
        %578 = vrot.lane.b32.xlu0 %v389, 110
        %v579 = vpop.permute.xlu0 %578
        %580 = vrot.lane.b32.xlu0 %v330, 110
        %v581 = vpop.permute.xlu0 %580
        %582 = vrot.lane.b32.xlu0 %v331, 110
        %v583 = vpop.permute.xlu0 %582
        %584 = vrot.lane.b32.xlu0 %v390, 110
        %v585 = vpop.permute.xlu0 %584
        %586 = vrot.lane.b32.xlu0 %v332, 110
        %v587 = vpop.permute.xlu0 %586
        %588 = vrot.lane.b32.xlu0 %v333, 110
        %v589 = vpop.permute.xlu0 %588
        %590 = vrot.lane.b32.xlu0 %v391, 110
        %v591 = vpop.permute.xlu0 %590
        %592 = vrot.lane.b32.xlu0 %v334, 110
        %v593 = vpop.permute.xlu0 %592
        %594 = vrot.lane.b32.xlu0 %v335, 110
        %v595 = vpop.permute.xlu0 %594
        %596 = vrot.lane.b32.xlu0 %v392, 110
        %v597 = vpop.permute.xlu0 %596
        %598 = vrot.lane.b32.xlu0 %v336, 110
        %v599 = vpop.permute.xlu0 %598
        %600 = vrot.lane.b32.xlu0 %v337, 110
        %v601 = vpop.permute.xlu0 %600
        %602 = vrot.lane.b32.xlu0 %v393, 110
        %v603 = vpop.permute.xlu0 %602
        %vm604 = vcmask 900096
        %v605 = vsel %vm604, %v557, %v559
        %v606 = vsel %vm604, %v559, %v561
        %v607 = vsel %vm604, %v563, %v565
        %v608 = vsel %vm604, %v565, %v567
        %v609 = vsel %vm604, %v569, %v571
        %v610 = vsel %vm604, %v571, %v573
        %v611 = vsel %vm604, %v575, %v577
        %v612 = vsel %vm604, %v577, %v579
        %v613 = vsel %vm604, %v581, %v583
        %v614 = vsel %vm604, %v583, %v585
        %v615 = vsel %vm604, %v587, %v589
        %v616 = vsel %vm604, %v589, %v591
        %v617 = vsel %vm604, %v593, %v595
        %v618 = vsel %vm604, %v595, %v597
        %v619 = vsel %vm604, %v599, %v601
        %v620 = vsel %vm604, %v601, %v603
        %v637 = vld [vmem:[%s227] sm:$0xff]
        %v638 = vld [vmem:[%s227 + $0x8] sm:$0xff]
        %v639 = vld [vmem:[%s227 + $0x10] sm:$0xff]
        %v640 = vld [vmem:[%s227 + $0x18] sm:$0xff]
        %v641 = vld [vmem:[%s227 + $0x20] sm:$0xff]
        %v642 = vld [vmem:[%s227 + $0x28] sm:$0xff]
        %v643 = vld [vmem:[%s227 + $0x30] sm:$0xff]
        %v644 = vld [vmem:[%s227 + $0x38] sm:$0xff]
        %v645 = vld [vmem:[%s227 + $0x40] sm:$0xff]
        %v646 = vld [vmem:[%s227 + $0x48] sm:$0xff]
        %v647 = vld [vmem:[%s227 + $0x50] sm:$0xff]
        %v648 = vld [vmem:[%s227 + $0x58] sm:$0xff]
        %v649 = vld [vmem:[%s227 + $0x60] sm:$0xff]
        %v650 = vld [vmem:[%s227 + $0x68] sm:$0xff]
        %v651 = vld [vmem:[%s227 + $0x70] sm:$0xff]
        %v652 = vld [vmem:[%s227 + $0x78] sm:$0xff]
        %v653 = vld [vmem:[%s233] sm:$0xff]
        %v654 = vld [vmem:[%s233 + $0x8] sm:$0xff]
        %v655 = vld [vmem:[%s233 + $0x10] sm:$0xff]
        %v656 = vld [vmem:[%s233 + $0x18] sm:$0xff]
        %v657 = vld [vmem:[%s233 + $0x20] sm:$0xff]
        %v658 = vld [vmem:[%s233 + $0x28] sm:$0xff]
        %v659 = vld [vmem:[%s233 + $0x30] sm:$0xff]
        %v660 = vld [vmem:[%s233 + $0x38] sm:$0xff]
        %662 = vset.pattern.permute.xlu0 0
        %663 = vperm.xlu0 %662, %v653
        %v664 = vpop.permute.xlu0 %663
        %667 = vset.pattern.permute.xlu0 0
        %668 = vperm.xlu0 %667, %v654
        %v669 = vpop.permute.xlu0 %668
        %672 = vset.pattern.permute.xlu0 0
        %673 = vperm.xlu0 %672, %v655
        %v674 = vpop.permute.xlu0 %673
        %677 = vset.pattern.permute.xlu0 0
        %678 = vperm.xlu0 %677, %v656
        %v679 = vpop.permute.xlu0 %678
        %682 = vset.pattern.permute.xlu0 0
        %683 = vperm.xlu0 %682, %v657
        %v684 = vpop.permute.xlu0 %683
        %687 = vset.pattern.permute.xlu0 0
        %688 = vperm.xlu0 %687, %v658
        %v689 = vpop.permute.xlu0 %688
        %692 = vset.pattern.permute.xlu0 0
        %693 = vperm.xlu0 %692, %v659
        %v694 = vpop.permute.xlu0 %693
        %697 = vset.pattern.permute.xlu0 0
        %698 = vperm.xlu0 %697, %v660
        %v699 = vpop.permute.xlu0 %698
        %v717 = vunpack.c.l.b16 %v637
        %v718 = vunpack.c.h.b16 %v637
        %v719 = vunpack.c.l.b16 %v638
        %v720 = vunpack.c.h.b16 %v638
        %v721 = vunpack.c.l.b16 %v639
        %v722 = vunpack.c.h.b16 %v639
        %v723 = vunpack.c.l.b16 %v640
        %v724 = vunpack.c.h.b16 %v640
        %v725 = vunpack.c.l.b16 %v641
        %v726 = vunpack.c.h.b16 %v641
        %v727 = vunpack.c.l.b16 %v642
        %v728 = vunpack.c.h.b16 %v642
        %v729 = vunpack.c.l.b16 %v643
        %v730 = vunpack.c.h.b16 %v643
        %v731 = vunpack.c.l.b16 %v644
        %v732 = vunpack.c.h.b16 %v644
        %v733 = vunpack.c.l.b16 %v645
        %v734 = vunpack.c.h.b16 %v645
        %v735 = vunpack.c.l.b16 %v646
        %v736 = vunpack.c.h.b16 %v646
        %v737 = vunpack.c.l.b16 %v647
        %v738 = vunpack.c.h.b16 %v647
        %v739 = vunpack.c.l.b16 %v648
        %v740 = vunpack.c.h.b16 %v648
        %v741 = vunpack.c.l.b16 %v649
        %v742 = vunpack.c.h.b16 %v649
        %v743 = vunpack.c.l.b16 %v650
        %v744 = vunpack.c.h.b16 %v650
        %v745 = vunpack.c.l.b16 %v651
        %v746 = vunpack.c.h.b16 %v651
        %v747 = vunpack.c.l.b16 %v652
        %v748 = vunpack.c.h.b16 %v652
        %v749 = vpack.c.b16 %v721, %v717
        %v750 = vpack.c.b16 %v722, %v718
        %v751 = vpack.c.b16 %v723, %v719
        %v752 = vpack.c.b16 %v724, %v720
        %v753 = vpack.c.b16 %v729, %v725
        %v754 = vpack.c.b16 %v730, %v726
        %v755 = vpack.c.b16 %v731, %v727
        %v756 = vpack.c.b16 %v732, %v728
        %v757 = vpack.c.b16 %v737, %v733
        %v758 = vpack.c.b16 %v738, %v734
        %v759 = vpack.c.b16 %v739, %v735
        %v760 = vpack.c.b16 %v740, %v736
        %v761 = vpack.c.b16 %v745, %v741
        %v762 = vpack.c.b16 %v746, %v742
        %v763 = vpack.c.b16 %v747, %v743
        %v764 = vpack.c.b16 %v748, %v744
        %781 = vmatpush.bf16.msra.mxu0 %v336
        %782 = vmatpush.bf16.msra.mxu0 %v334
        %783 = vmatpush.bf16.msra.mxu0 %v332
        %784 = vmatpush.bf16.msra.mxu0 %v330
        %785 = vmatpush.bf16.msra.mxu0 %v328
        %786 = vmatpush.bf16.msra.mxu0 %v326
        %787 = vmatpush.bf16.msra.mxu0 %v324
        %788 = vmatpush.bf16.msra.mxu0 %v322
        %789 = vmatmul.bf16.gmra.mxu0 %v749
        %v790 = vpop.f32.mrf.mxu0
        %v791 = vadd.f32 %v664, %v790
        %v792 = vpop.f32.mrf.mxu0
        %v793 = vadd.f32 %v669, %v792
        %794 = vmatmul.bf16.gmra.mxu0 %v753
        %v795 = vpop.f32.mrf.mxu0
        %v796 = vadd.f32 %v674, %v795
        %v797 = vpop.f32.mrf.mxu0
        %v798 = vadd.f32 %v679, %v797
        %799 = vmatmul.bf16.gmra.mxu0 %v757
        %v800 = vpop.f32.mrf.mxu0
        %v801 = vadd.f32 %v684, %v800
        %v802 = vpop.f32.mrf.mxu0
        %v803 = vadd.f32 %v689, %v802
        %804 = vmatmul.bf16.gmra.mxu0 %v761
        %v805 = vpop.f32.mrf.mxu0
        %v806 = vadd.f32 %v694, %v805
        %v807 = vpop.f32.mrf.mxu0
        %v808 = vadd.f32 %v699, %v807
        %809 = vdwg.mxu0
        %810 = vmatpush.bf16.msra.mxu0 %v457
        %811 = vmatpush.bf16.msra.mxu0 %v455
        %812 = vmatpush.bf16.msra.mxu0 %v453
        %813 = vmatpush.bf16.msra.mxu0 %v451
        %814 = vmatpush.bf16.msra.mxu0 %v449
        %815 = vmatpush.bf16.msra.mxu0 %v447
        %816 = vmatpush.bf16.msra.mxu0 %v445
        %817 = vmatpush.bf16.msra.mxu0 %v443
        %818 = vmatmul.bf16.gmra.mxu0 %v750
        %v819 = vpop.f32.mrf.mxu0
        %v820 = vadd.f32 %v791, %v819
        %v821 = vpop.f32.mrf.mxu0
        %v822 = vadd.f32 %v793, %v821
        %823 = vmatmul.bf16.gmra.mxu0 %v754
        %v824 = vpop.f32.mrf.mxu0
        %v825 = vadd.f32 %v796, %v824
        %v826 = vpop.f32.mrf.mxu0
        %v827 = vadd.f32 %v798, %v826
        %828 = vmatmul.bf16.gmra.mxu0 %v758
        %v829 = vpop.f32.mrf.mxu0
        %v830 = vadd.f32 %v801, %v829
        %v831 = vpop.f32.mrf.mxu0
        %v832 = vadd.f32 %v803, %v831
        %833 = vmatmul.bf16.gmra.mxu0 %v762
        %v834 = vpop.f32.mrf.mxu0
        %v835 = vadd.f32 %v806, %v834
        %v836 = vpop.f32.mrf.mxu0
        %v837 = vadd.f32 %v808, %v836
        %838 = vdwg.mxu0
        %839 = vmatpush.bf16.msra.mxu0 %v538
        %840 = vmatpush.bf16.msra.mxu0 %v536
        %841 = vmatpush.bf16.msra.mxu0 %v534
        %842 = vmatpush.bf16.msra.mxu0 %v532
        %843 = vmatpush.bf16.msra.mxu0 %v530
        %844 = vmatpush.bf16.msra.mxu0 %v528
        %845 = vmatpush.bf16.msra.mxu0 %v526
        %846 = vmatpush.bf16.msra.mxu0 %v524
        %847 = vmatmul.bf16.gmra.mxu0 %v751
        %v848 = vpop.f32.mrf.mxu0
        %v849 = vadd.f32 %v820, %v848
        %v850 = vpop.f32.mrf.mxu0
        %v851 = vadd.f32 %v822, %v850
        %852 = vmatmul.bf16.gmra.mxu0 %v755
        %v853 = vpop.f32.mrf.mxu0
        %v854 = vadd.f32 %v825, %v853
        %v855 = vpop.f32.mrf.mxu0
        %v856 = vadd.f32 %v827, %v855
        %857 = vmatmul.bf16.gmra.mxu0 %v759
        %v858 = vpop.f32.mrf.mxu0
        %v859 = vadd.f32 %v830, %v858
        %v860 = vpop.f32.mrf.mxu0
        %v861 = vadd.f32 %v832, %v860
        %862 = vmatmul.bf16.gmra.mxu0 %v763
        %v863 = vpop.f32.mrf.mxu0
        %v864 = vadd.f32 %v835, %v863
        %v865 = vpop.f32.mrf.mxu0
        %v866 = vadd.f32 %v837, %v865
        %867 = vdwg.mxu0
        %868 = vmatpush.bf16.msra.mxu0 %v619
        %869 = vmatpush.bf16.msra.mxu0 %v617
        %870 = vmatpush.bf16.msra.mxu0 %v615
        %871 = vmatpush.bf16.msra.mxu0 %v613
        %872 = vmatpush.bf16.msra.mxu0 %v611
        %873 = vmatpush.bf16.msra.mxu0 %v609
        %874 = vmatpush.bf16.msra.mxu0 %v607
        %875 = vmatpush.bf16.msra.mxu0 %v605
        %876 = vmatmul.bf16.gmra.mxu0 %v752
        %v877 = vpop.f32.mrf.mxu0
        %v878 = vadd.f32 %v849, %v877
        %v879 = vpop.f32.mrf.mxu0
        %v880 = vadd.f32 %v851, %v879
        %881 = vmatmul.bf16.gmra.mxu0 %v756
        %v882 = vpop.f32.mrf.mxu0
        %v883 = vadd.f32 %v854, %v882
        %v884 = vpop.f32.mrf.mxu0
        %v885 = vadd.f32 %v856, %v884
        %886 = vmatmul.bf16.gmra.mxu0 %v760
        %v887 = vpop.f32.mrf.mxu0
        %v888 = vadd.f32 %v859, %v887
        %v889 = vpop.f32.mrf.mxu0
        %v890 = vadd.f32 %v861, %v889
        %891 = vmatmul.bf16.gmra.mxu0 %v764
        %v892 = vpop.f32.mrf.mxu0
        %v893 = vadd.f32 %v864, %v892
        %v894 = vpop.f32.mrf.mxu0
        %v895 = vadd.f32 %v866, %v894
        %896 = vdwg.mxu0
        %897 = vmatpush.bf16.msra.mxu0 %v337
        %898 = vmatpush.bf16.msra.mxu0 %v335
        %899 = vmatpush.bf16.msra.mxu0 %v333
        %900 = vmatpush.bf16.msra.mxu0 %v331
        %901 = vmatpush.bf16.msra.mxu0 %v329
        %902 = vmatpush.bf16.msra.mxu0 %v327
        %903 = vmatpush.bf16.msra.mxu0 %v325
        %904 = vmatpush.bf16.msra.mxu0 %v323
        %905 = vmatmul.bf16.gmra.mxu0 %v749
        %v906 = vpop.f32.mrf.mxu0
        %v907 = vadd.f32 %v664, %v906
        %v908 = vpop.f32.mrf.mxu0
        %v909 = vadd.f32 %v669, %v908
        %910 = vmatmul.bf16.gmra.mxu0 %v753
        %v911 = vpop.f32.mrf.mxu0
        %v912 = vadd.f32 %v674, %v911
        %v913 = vpop.f32.mrf.mxu0
        %v914 = vadd.f32 %v679, %v913
        %915 = vmatmul.bf16.gmra.mxu0 %v757
        %v916 = vpop.f32.mrf.mxu0
        %v917 = vadd.f32 %v684, %v916
        %v918 = vpop.f32.mrf.mxu0
        %v919 = vadd.f32 %v689, %v918
        %920 = vmatmul.bf16.gmra.mxu0 %v761
        %v921 = vpop.f32.mrf.mxu0
        %v922 = vadd.f32 %v694, %v921
        %v923 = vpop.f32.mrf.mxu0
        %v924 = vadd.f32 %v699, %v923
        %925 = vdwg.mxu0
        %926 = vmatpush.bf16.msra.mxu0 %v458
        %927 = vmatpush.bf16.msra.mxu0 %v456
        %928 = vmatpush.bf16.msra.mxu0 %v454
        %929 = vmatpush.bf16.msra.mxu0 %v452
        %930 = vmatpush.bf16.msra.mxu0 %v450
        %931 = vmatpush.bf16.msra.mxu0 %v448
        %932 = vmatpush.bf16.msra.mxu0 %v446
        %933 = vmatpush.bf16.msra.mxu0 %v444
        %934 = vmatmul.bf16.gmra.mxu0 %v750
        %v935 = vpop.f32.mrf.mxu0
        %v936 = vadd.f32 %v907, %v935
        %v937 = vpop.f32.mrf.mxu0
        %v938 = vadd.f32 %v909, %v937
        %939 = vmatmul.bf16.gmra.mxu0 %v754
        %v940 = vpop.f32.mrf.mxu0
        %v941 = vadd.f32 %v912, %v940
        %v942 = vpop.f32.mrf.mxu0
        %v943 = vadd.f32 %v914, %v942
        %944 = vmatmul.bf16.gmra.mxu0 %v758
        %v945 = vpop.f32.mrf.mxu0
        %v946 = vadd.f32 %v917, %v945
        %v947 = vpop.f32.mrf.mxu0
        %v948 = vadd.f32 %v919, %v947
        %949 = vmatmul.bf16.gmra.mxu0 %v762
        %v950 = vpop.f32.mrf.mxu0
        %v951 = vadd.f32 %v922, %v950
        %v952 = vpop.f32.mrf.mxu0
        %v953 = vadd.f32 %v924, %v952
        %954 = vdwg.mxu0
        %955 = vmatpush.bf16.msra.mxu0 %v539
        %956 = vmatpush.bf16.msra.mxu0 %v537
        %957 = vmatpush.bf16.msra.mxu0 %v535
        %958 = vmatpush.bf16.msra.mxu0 %v533
        %959 = vmatpush.bf16.msra.mxu0 %v531
        %960 = vmatpush.bf16.msra.mxu0 %v529
        %961 = vmatpush.bf16.msra.mxu0 %v527
        %962 = vmatpush.bf16.msra.mxu0 %v525
        %963 = vmatmul.bf16.gmra.mxu0 %v751
        %v964 = vpop.f32.mrf.mxu0
        %v965 = vadd.f32 %v936, %v964
        %v966 = vpop.f32.mrf.mxu0
        %v967 = vadd.f32 %v938, %v966
        %968 = vmatmul.bf16.gmra.mxu0 %v755
        %v969 = vpop.f32.mrf.mxu0
        %v970 = vadd.f32 %v941, %v969
        %v971 = vpop.f32.mrf.mxu0
        %v972 = vadd.f32 %v943, %v971
        %973 = vmatmul.bf16.gmra.mxu0 %v759
        %v974 = vpop.f32.mrf.mxu0
        %v975 = vadd.f32 %v946, %v974
        %v976 = vpop.f32.mrf.mxu0
        %v977 = vadd.f32 %v948, %v976
        %978 = vmatmul.bf16.gmra.mxu0 %v763
        %v979 = vpop.f32.mrf.mxu0
        %v980 = vadd.f32 %v951, %v979
        %v981 = vpop.f32.mrf.mxu0
        %v982 = vadd.f32 %v953, %v981
        %983 = vdwg.mxu0
        %984 = vmatpush.bf16.msra.mxu0 %v620
        %985 = vmatpush.bf16.msra.mxu0 %v618
        %986 = vmatpush.bf16.msra.mxu0 %v616
        %987 = vmatpush.bf16.msra.mxu0 %v614
        %988 = vmatpush.bf16.msra.mxu0 %v612
        %989 = vmatpush.bf16.msra.mxu0 %v610
        %990 = vmatpush.bf16.msra.mxu0 %v608
        %991 = vmatpush.bf16.msra.mxu0 %v606
        %992 = vmatmul.bf16.gmra.mxu0 %v752
        %v993 = vpop.f32.mrf.mxu0
        %v994 = vadd.f32 %v965, %v993
        %v995 = vpop.f32.mrf.mxu0
        %v996 = vadd.f32 %v967, %v995
        %997 = vmatmul.bf16.gmra.mxu0 %v756
        %v998 = vpop.f32.mrf.mxu0
        %v999 = vadd.f32 %v970, %v998
        %v1000 = vpop.f32.mrf.mxu0
        %v1001 = vadd.f32 %v972, %v1000
        %1002 = vmatmul.bf16.gmra.mxu0 %v760
        %v1003 = vpop.f32.mrf.mxu0
        %v1004 = vadd.f32 %v975, %v1003
        %v1005 = vpop.f32.mrf.mxu0
        %v1006 = vadd.f32 %v977, %v1005
        %1007 = vmatmul.bf16.gmra.mxu0 %v764
        %v1008 = vpop.f32.mrf.mxu0
        %v1009 = vadd.f32 %v980, %v1008
        %v1010 = vpop.f32.mrf.mxu0
        %v1011 = vadd.f32 %v982, %v1010
        %1012 = vdwg.mxu0
        %vm1013 = vcmp.ge.f32.partialorder %v878, 0.0
        %vm1014 = vcmp.ge.f32.partialorder %v994, 0.0
        %vm1015 = vcmp.ge.f32.partialorder %v880, 0.0
        %vm1016 = vcmp.ge.f32.partialorder %v996, 0.0
        %vm1017 = vcmp.ge.f32.partialorder %v883, 0.0
        %vm1018 = vcmp.ge.f32.partialorder %v999, 0.0
        %vm1019 = vcmp.ge.f32.partialorder %v885, 0.0
        %vm1020 = vcmp.ge.f32.partialorder %v1001, 0.0
        %vm1021 = vcmp.ge.f32.partialorder %v888, 0.0
        %vm1022 = vcmp.ge.f32.partialorder %v1004, 0.0
        %vm1023 = vcmp.ge.f32.partialorder %v890, 0.0
        %vm1024 = vcmp.ge.f32.partialorder %v1006, 0.0
        %vm1025 = vcmp.ge.f32.partialorder %v893, 0.0
        %vm1026 = vcmp.ge.f32.partialorder %v1009, 0.0
        %vm1027 = vcmp.ge.f32.partialorder %v895, 0.0
        %vm1028 = vcmp.ge.f32.partialorder %v1011, 0.0
        %v1029 = vmul.f32 %v878, 0.2
        %v1030 = vmul.f32 %v994, 0.2
        %v1031 = vmul.f32 %v880, 0.2
        %v1032 = vmul.f32 %v996, 0.2
        %v1033 = vmul.f32 %v883, 0.2
        %v1034 = vmul.f32 %v999, 0.2
        %v1035 = vmul.f32 %v885, 0.2
        %v1036 = vmul.f32 %v1001, 0.2
        %v1037 = vmul.f32 %v888, 0.2
        %v1038 = vmul.f32 %v1004, 0.2
        %v1039 = vmul.f32 %v890, 0.2
        %v1040 = vmul.f32 %v1006, 0.2
        %v1041 = vmul.f32 %v893, 0.2
        %v1042 = vmul.f32 %v1009, 0.2
        %v1043 = vmul.f32 %v895, 0.2
        %v1044 = vmul.f32 %v1011, 0.2
        %v1045 = vsel %vm1013, %v878, %v1029
        %v1046 = vsel %vm1014, %v994, %v1030
        %v1047 = vsel %vm1015, %v880, %v1031
        %v1048 = vsel %vm1016, %v996, %v1032
        %v1049 = vsel %vm1017, %v883, %v1033
        %v1050 = vsel %vm1018, %v999, %v1034
        %v1051 = vsel %vm1019, %v885, %v1035
        %v1052 = vsel %vm1020, %v1001, %v1036
        %v1053 = vsel %vm1021, %v888, %v1037
        %v1054 = vsel %vm1022, %v1004, %v1038
        %v1055 = vsel %vm1023, %v890, %v1039
        %v1056 = vsel %vm1024, %v1006, %v1040
        %v1057 = vsel %vm1025, %v893, %v1041
        %v1058 = vsel %vm1026, %v1009, %v1042
        %v1059 = vsel %vm1027, %v895, %v1043
        %v1060 = vsel %vm1028, %v1011, %v1044
        %v1061 = vpack.c.bf16 %v1046, %v1045
        %v1062 = vpack.c.bf16 %v1048, %v1047
        %v1063 = vpack.c.bf16 %v1050, %v1049
        %v1064 = vpack.c.bf16 %v1052, %v1051
        %v1065 = vpack.c.bf16 %v1054, %v1053
        %v1066 = vpack.c.bf16 %v1056, %v1055
        %v1067 = vpack.c.bf16 %v1058, %v1057
        %v1068 = vpack.c.bf16 %v1060, %v1059
        %1069 = vst [vmem:[%s216] sm:$0xff] %v1061
        %1070 = vst [vmem:[%s216 + $0x8] sm:$0xff] %v1062
        %1071 = vst [vmem:[%s216 + $0x10] sm:$0xff] %v1063
        %1072 = vst [vmem:[%s216 + $0x18] sm:$0xff] %v1064
        %1073 = vst [vmem:[%s216 + $0x20] sm:$0xff] %v1065
        %1074 = vst [vmem:[%s216 + $0x28] sm:$0xff] %v1066
        %1075 = vst [vmem:[%s216 + $0x30] sm:$0xff] %v1067
        %1076 = vst [vmem:[%s216 + $0x38] sm:$0xff] %v1068
        %s1077 = sand.u32 %s123, 1
        %s1078 = sand.u32 %s123, 1
        %s1079 = smul.addr %s1078, 64
        %s1080 = scalar_lea.vmem [#allocation2], %s1079
        // Predicated region
        $region33: #{age_encoder_forward.5} parent=31 // pred_check
          %p1081 = pneg %p133
        $region34: #{age_encoder_forward.5} parent=31 // pred_check_branch
          %1083 = sbr.rel (%p1081) target = $region36
        $region35: #{age_encoder_forward.5} parent=31 // pred_region
          %s1084 = smul.u32 8, %s20
          %s1085 = smul.u32 2, %s21
          %s1086 = smul.addr %s1084, 4
          %s1087 = sadd.s32 %s1085, %s1086
          %s1088 = smul.addr %s19, 32
          %s1089 = sadd.s32 %s1087, %s1088
          %s1090 = smul.addr %s1089, 4
          %s1091 = scalar_lea.vmem %s3, %s1090
          // Predicated region
          $region37: #{age_encoder_forward.5} parent=35 // pred_check
            _
          $region38: #{age_encoder_forward.5} parent=35 // pred_check_branch
            %1093 = sbr.rel (0) target = $region40
          $region39: #{age_encoder_forward.5} parent=35 // pred_region
            // Predicated region
            $region41: #{age_encoder_forward.5} parent=39 // pred_check
              _
            $region42: #{age_encoder_forward.5} parent=39 // pred_check_branch
              %1095 = sbr.rel (0) target = $region44
            $region43: #{age_encoder_forward.5} parent=39 // pred_region
              // Predicated region
              $region56: #{age_encoder_forward.5} parent=43 // pred_check
                _
              $region57: #{age_encoder_forward.5} parent=43 // pred_check_branch
                %1125 = sbr.rel (0) target = $region59
              $region58: #{age_encoder_forward.5} parent=43 // pred_region
                loop: start=0, step=1, limit=1
                $region60: #{age_encoder_forward.5} parent=58 // loop_pre_header
                  _
                $region61: #{age_encoder_forward.5} parent=58 // loop_header
                  %s1127 = sphi 0, %s1131
                  %p1128 = scmp.ge.s32.totalorder %s1127, 1
                  %s1132 = sphi %s1080, %s1080
                  %s1133 = sphi %s1091, %s1091
                $region62: #{age_encoder_forward.5} parent=58 // loop_header_branch
                  %1130 = sbr.rel (%p1128) target = $region66
                $region63: #{age_encoder_forward.5} parent=58 // loop_body
                  %v1134 = vld [vmem:[%s1132] sm:$0xff]
                  %1135 = vst [vmem:[%s1133] sm:$0xff] %v1134
                  %v1136 = vld [vmem:[%s1132 + $0x8] sm:$0xff]
                  %1137 = vst [vmem:[%s1133 + $0x10] sm:$0xff] %v1136
                  %v1138 = vld [vmem:[%s1132 + $0x10] sm:$0xff]
                  %1139 = vst [vmem:[%s1133 + $0x20] sm:$0xff] %v1138
                  %v1140 = vld [vmem:[%s1132 + $0x18] sm:$0xff]
                  %1141 = vst [vmem:[%s1133 + $0x30] sm:$0xff] %v1140
                  %v1142 = vld [vmem:[%s1132 + $0x20] sm:$0xff]
                  %1143 = vst [vmem:[%s1133 + $0x40] sm:$0xff] %v1142
                  %v1144 = vld [vmem:[%s1132 + $0x28] sm:$0xff]
                  %1145 = vst [vmem:[%s1133 + $0x50] sm:$0xff] %v1144
                  %v1146 = vld [vmem:[%s1132 + $0x30] sm:$0xff]
                  %1147 = vst [vmem:[%s1133 + $0x60] sm:$0xff] %v1146
                  %v1148 = vld [vmem:[%s1132 + $0x38] sm:$0xff]
                  %1149 = vst [vmem:[%s1133 + $0x70] sm:$0xff] %v1148
                $region64: #{age_encoder_forward.5} parent=58 // loop_footer
                  %s1131 = sadd.s32 1, %s1127
                $region65: #{age_encoder_forward.5} parent=58 // loop_footer_branch
                  %1126 = sbr.rel target = $region61
                $region66: #{age_encoder_forward.5} parent=58 // loop_exit
                  _
              $region59: #{age_encoder_forward.5} parent=43 // pred_fallthru
                _
              // Predicated region
              $region67: #{age_encoder_forward.5} parent=43 // pred_check
                _
              $region68: #{age_encoder_forward.5} parent=43 // pred_check_branch
                %1151 = sbr.rel target = $region70
              $region69: #{age_encoder_forward.5} parent=43 // pred_region
                _
              $region70: #{age_encoder_forward.5} parent=43 // pred_fallthru
                _
            $region44: #{age_encoder_forward.5} parent=39 // pred_fallthru
              _
            // Predicated region
            $region45: #{age_encoder_forward.5} parent=39 // pred_check
              _
            $region46: #{age_encoder_forward.5} parent=39 // pred_check_branch
              %1097 = sbr.rel target = $region48
            $region47: #{age_encoder_forward.5} parent=39 // pred_region
              %s1099 = ssub.s32 256, 1
              loop: start=0, step=1, limit=1
              $region49: #{age_encoder_forward.5} parent=47 // loop_pre_header
                _
              $region50: #{age_encoder_forward.5} parent=47 // loop_header
                %s1101 = sphi 0, %s1105
                %p1102 = scmp.ge.s32.totalorder %s1101, 1
                %s1106 = sphi %s1080, %s1080
                %s1107 = sphi %s1091, %s1091
              $region51: #{age_encoder_forward.5} parent=47 // loop_header_branch
                %1104 = sbr.rel (%p1102) target = $region55
              $region52: #{age_encoder_forward.5} parent=47 // loop_body
                %v1108 = vld [vmem:[%s1106] sm:%s1099]
                %1109 = vst [vmem:[%s1107] sm:%s1099] %v1108
                %v1110 = vld [vmem:[%s1106 + $0x8] sm:%s1099]
                %1111 = vst [vmem:[%s1107 + $0x10] sm:%s1099] %v1110
                %v1112 = vld [vmem:[%s1106 + $0x10] sm:%s1099]
                %1113 = vst [vmem:[%s1107 + $0x20] sm:%s1099] %v1112
                %v1114 = vld [vmem:[%s1106 + $0x18] sm:%s1099]
                %1115 = vst [vmem:[%s1107 + $0x30] sm:%s1099] %v1114
                %v1116 = vld [vmem:[%s1106 + $0x20] sm:%s1099]
                %1117 = vst [vmem:[%s1107 + $0x40] sm:%s1099] %v1116
                %v1118 = vld [vmem:[%s1106 + $0x28] sm:%s1099]
                %1119 = vst [vmem:[%s1107 + $0x50] sm:%s1099] %v1118
                %v1120 = vld [vmem:[%s1106 + $0x30] sm:%s1099]
                %1121 = vst [vmem:[%s1107 + $0x60] sm:%s1099] %v1120
                %v1122 = vld [vmem:[%s1106 + $0x38] sm:%s1099]
                %1123 = vst [vmem:[%s1107 + $0x70] sm:%s1099] %v1122
              $region53: #{age_encoder_forward.5} parent=47 // loop_footer
                %s1105 = sadd.s32 1, %s1101
              $region54: #{age_encoder_forward.5} parent=47 // loop_footer_branch
                %1100 = sbr.rel target = $region50
              $region55: #{age_encoder_forward.5} parent=47 // loop_exit
                _
            $region48: #{age_encoder_forward.5} parent=39 // pred_fallthru
              _
          $region40: #{age_encoder_forward.5} parent=35 // pred_fallthru
            _
          %1152 = vnop
        $region36: #{age_encoder_forward.5} parent=31 // pred_fallthru
          _
      $region32: #{age_encoder_forward.5} parent=5 // pred_fallthru
        _
      %p1153 = scmp.le.s32.totalorder 2, %s9
      // Predicated region
      $region71: #{age_encoder_forward.5} parent=5 // pred_check
        %p1154 = pneg %p1153
      $region72: #{age_encoder_forward.5} parent=5 // pred_check_branch
        %1156 = sbr.rel (%p1154) target = $region74
      $region73: #{age_encoder_forward.5} parent=5 // pred_region
        %s1157 = ssub.s32 %s9, 2
        // Predicated region
        $region75: #{age_encoder_forward.5} parent=73 // pred_check
          %p1158 = pneg %p139
        $region76: #{age_encoder_forward.5} parent=73 // pred_check_branch
          %1160 = sbr.rel (%p1158) target = $region78
        $region77: #{age_encoder_forward.5} parent=73 // pred_region
          %s1161 = sand.u32 %s124, 1
          %s1162 = sand.u32 %s124, 1
          %s1163 = smul.addr %s1162, 64
          %s1164 = scalar_lea.vmem [#allocation2], %s1163
        $region78: #{age_encoder_forward.5} parent=73 // pred_fallthru
          _
      $region74: #{age_encoder_forward.5} parent=5 // pred_fallthru
        _
    $region6: #{age_encoder_forward.5} parent=1 // loop_footer
      %s13 = sadd.s32 1, %s9
    $region7: #{age_encoder_forward.5} parent=1 // loop_footer_branch
      %8 = sbr.rel target = $region3
    $region8: #{age_encoder_forward.5} parent=1 // loop_exit
      _

// kernel: age_encoder_forward.6
$region0: #{age_encoder_forward.6}
  #allocation0 [shape = 'u32[]', space=smem, size = 0x4, offset = 0x4, fixed_abs, tag = 'smem constant byte address 0x4 - core index']
  #allocation1 [shape = 'u32[72,128]{1,0:T(1,128)}', space=vmem, size = 0x9000, scoped, tag = 'internal scratch']
  #allocation2 [shape = 'f32[128,128]{1,0:T(8,128)}', space=vmem, size = 0x10000, scoped, tag = 'scratch operand']
  %s0 = inlined_call_operand.vmem [shape: bf16[2,256,256], index: 0, kind: input, shape index: {}]
  %s1 = inlined_call_operand.vmem [shape: bf16[4,128,256], index: 1, kind: input, shape index: {}]
  %s2 = inlined_call_operand.vmem [shape: f32[128,1], index: 2, kind: input, shape index: {}]
  %s3 = inlined_call_operand.vmem [shape: bf16[2,128,128], index: 3, kind: output, shape index: {}]
  %s4 = sld [smem:[#allocation0]]
  $region45: #{age_encoder_forward.6} parent=0
    _
  %s6 = ssub.s32 1, %s4
  %s7 = scalar_select 0, %s6, %s4
  loop: start=0, step=1, limit=4
  $region2: #{age_encoder_forward.6} parent=0 // loop_pre_header
    _
  $region3: #{age_encoder_forward.6} parent=0 // loop_header
    %s9 = sphi 0, %s13
    %p10 = scmp.ge.s32.totalorder %s9, 4
    %s16 = sphi 0, %s35
    %s17 = sphi 0, %s31
    %s18 = sphi 0, %s27
    %s19 = sphi 0, %s16
    %s20 = sphi 0, %s17
    %s21 = sphi 0, %s18
    %s22 = sphi 0, %s19
    %s23 = sphi 0, %s20
    %s24 = sphi 0, %s21
    %s38 = sphi 0, %s40
    %s41 = sphi 0, %s38
    %s42 = sphi 0, %s41
    %s58 = sphi 0, %s42
    %s64 = sphi 0, %s66
    %s67 = sphi 0, %s64
    %s68 = sphi 0, %s67
    %s84 = sphi 0, %s68
    %s90 = sphi 0, %s92
    %s93 = sphi 0, %s90
    %s94 = sphi 0, %s93
    %s110 = sphi 0, %s94
    %s120 = sphi 0, %s122
    %s123 = sphi 0, %s120
    %s124 = sphi 0, %s123
    %s140 = sphi 0, %s124
  $region4: #{age_encoder_forward.6} parent=0 // loop_header_branch
    %12 = sbr.rel (%p10) target = $region8
  $region5: #{age_encoder_forward.6} parent=0 // loop_body
    %s14 = ssub.s32 %s9, 1
    %s15 = ssub.s32 %s9, 2
    %s25 = sadd.s32 1, %s18
    %p26 = scmp.ge.s32.totalorder %s25, 1
    %s27 = scalar_select %p26, 0, %s25
    %s28 = sadd.s32 1, %s17
    %s29 = scalar_select %p26, %s28, %s17
    %p30 = scmp.ge.s32.totalorder %s29, 2
    %s31 = scalar_select %p30, 0, %s29
    %s32 = sadd.s32 1, %s16
    %s33 = scalar_select %p30, %s32, %s16
    %p34 = scmp.ge.s32.totalorder %s33, 1
    %s35 = scalar_select %p34, 0, %s33
    %s36 = ssub.s32 %s17, %s31
    %p37 = scmp.eq.s32.totalorder %s36, 0
    %s39 = sadd.s32 %s38, 1
    %s40 = scalar_select %p37, %s38, %s39
    %p43 = pneg %p37
    %p44 = scmp.eq.s32.totalorder %s9, 1
    %p45 = por %p43, %p44
    %p46 = scmp.ne.s32.totalorder %s38, %s41
    %p47 = scmp.eq.s32.totalorder %s9, 0
    %p48 = por %p46, %p47
    %p49 = scmp.ne.s32.totalorder %s38, %s41
    %p50 = scmp.eq.s32.totalorder %s14, 1
    %p51 = por %p49, %p50
    %p52 = scmp.ne.s32.totalorder %s41, %s42
    %p53 = scmp.eq.s32.totalorder %s14, 0
    %p54 = por %p52, %p53
    %p55 = scmp.ne.s32.totalorder %s41, %s42
    %p56 = scmp.eq.s32.totalorder %s15, 1
    %p57 = por %p55, %p56
    %p59 = scmp.ne.s32.totalorder %s42, %s58
    %p60 = scmp.eq.s32.totalorder %s15, 0
    %p61 = por %p59, %p60
    %s62 = ssub.s32 %s16, %s35
    %p63 = scmp.eq.s32.totalorder %s62, 0
    %s65 = sadd.s32 %s64, 1
    %s66 = scalar_select %p63, %s64, %s65
    %p69 = pneg %p63
    %p70 = scmp.eq.s32.totalorder %s9, 1
    %p71 = por %p69, %p70
    %p72 = scmp.ne.s32.totalorder %s64, %s67
    %p73 = scmp.eq.s32.totalorder %s9, 0
    %p74 = por %p72, %p73
    %p75 = scmp.ne.s32.totalorder %s64, %s67
    %p76 = scmp.eq.s32.totalorder %s14, 1
    %p77 = por %p75, %p76
    %p78 = scmp.ne.s32.totalorder %s67, %s68
    %p79 = scmp.eq.s32.totalorder %s14, 0
    %p80 = por %p78, %p79
    %p81 = scmp.ne.s32.totalorder %s67, %s68
    %p82 = scmp.eq.s32.totalorder %s15, 1
    %p83 = por %p81, %p82
    %p85 = scmp.ne.s32.totalorder %s68, %s84
    %p86 = scmp.eq.s32.totalorder %s15, 0
    %p87 = por %p85, %p86
    %s88 = ssub.s32 %s16, %s35
    %p89 = scmp.eq.s32.totalorder %s88, 0
    %s91 = sadd.s32 %s90, 1
    %s92 = scalar_select %p89, %s90, %s91
    %p95 = pneg %p89
    %p96 = scmp.eq.s32.totalorder %s9, 1
    %p97 = por %p95, %p96
    %p98 = scmp.ne.s32.totalorder %s90, %s93
    %p99 = scmp.eq.s32.totalorder %s9, 0
    %p100 = por %p98, %p99
    %p101 = scmp.ne.s32.totalorder %s90, %s93
    %p102 = scmp.eq.s32.totalorder %s14, 1
    %p103 = por %p101, %p102
    %p104 = scmp.ne.s32.totalorder %s93, %s94
    %p105 = scmp.eq.s32.totalorder %s14, 0
    %p106 = por %p104, %p105
    %p107 = scmp.ne.s32.totalorder %s93, %s94
    %p108 = scmp.eq.s32.totalorder %s15, 1
    %p109 = por %p107, %p108
    %p111 = scmp.ne.s32.totalorder %s94, %s110
    %p112 = scmp.eq.s32.totalorder %s15, 0
    %p113 = por %p111, %p112
    %s114 = ssub.s32 %s17, %s31
    %s115 = ssub.s32 %s16, %s35
    %s116 = sor.u32 %s114, %s115
    %s117 = ssub.s32 %s18, %s27
    %s118 = sor.u32 %s116, %s117
    %p119 = scmp.eq.s32.totalorder %s118, 0
    %s121 = sadd.s32 %s120, 1
    %s122 = scalar_select %p119, %s120, %s121
    %p125 = pneg %p119
    %p126 = scmp.eq.s32.totalorder %s9, 1
    %p127 = por %p125, %p126
    %p128 = scmp.ne.s32.totalorder %s120, %s123
    %p129 = scmp.eq.s32.totalorder %s9, 0
    %p130 = por %p128, %p129
    %p131 = scmp.ne.s32.totalorder %s120, %s123
    %p132 = scmp.eq.s32.totalorder %s14, 1
    %p133 = por %p131, %p132
    %p134 = scmp.ne.s32.totalorder %s123, %s124
    %p135 = scmp.eq.s32.totalorder %s14, 0
    %p136 = por %p134, %p135
    %p137 = scmp.ne.s32.totalorder %s123, %s124
    %p138 = scmp.eq.s32.totalorder %s15, 1
    %p139 = por %p137, %p138
    %p141 = scmp.ne.s32.totalorder %s124, %s140
    %p142 = scmp.eq.s32.totalorder %s15, 0
    %p143 = por %p141, %p142
    %p144 = scmp.le.s32.totalorder 1, %s9
    %p145 = scmp.lt.s32.totalorder %s9, 3
    %p146 = pnand %p144, %p145
    %p147 = pneg %p146
    // Predicated region
    $region9: #{age_encoder_forward.6} parent=5 // pred_check
      _
    $region10: #{age_encoder_forward.6} parent=5 // pred_check_branch
      %149 = sbr.rel (%p146) target = $region12
    $region11: #{age_encoder_forward.6} parent=5 // pred_region
      %s150 = ssub.s32 %s9, 1
      // Predicated region
      $region13: #{age_encoder_forward.6} parent=11 // pred_check
        %p151 = pneg %p80
      $region14: #{age_encoder_forward.6} parent=11 // pred_check_branch
        %153 = sbr.rel (%p151) target = $region16
      $region15: #{age_encoder_forward.6} parent=11 // pred_region
        %s154 = smul.u32 16, %s19
        %p155 = scmp.lt.s32.totalorder %s154, 15
        %s156 = scalar_select %p155, %s154, 15
        %s157 = smul.addr %s156, 2
        %s158 = smul.addr %s157, 4
        %s159 = scalar_lea.vmem %s1, %s158
        %s160 = smul.u32 16, %s19
      $region16: #{age_encoder_forward.6} parent=11 // pred_fallthru
        _
      // Predicated region
      $region17: #{age_encoder_forward.6} parent=11 // pred_check
        %p161 = pneg %p106
      $region18: #{age_encoder_forward.6} parent=11 // pred_check_branch
        %163 = sbr.rel (%p161) target = $region20
      $region19: #{age_encoder_forward.6} parent=11 // pred_region
        %s164 = smul.u32 16, %s19
        %p165 = scmp.lt.s32.totalorder %s164, 15
        %s166 = scalar_select %p165, %s164, 15
        %s167 = smul.addr %s166, 8
        %s168 = scalar_lea.vmem %s2, %s167
        %s169 = smul.u32 16, %s19
      $region20: #{age_encoder_forward.6} parent=11 // pred_fallthru
        _
    $region12: #{age_encoder_forward.6} parent=5 // pred_fallthru
      _
    %p170 = scmp.lt.s32.totalorder %s9, 2
    // Predicated region
    $region21: #{age_encoder_forward.6} parent=5 // pred_check
      %p171 = pneg %p170
    $region22: #{age_encoder_forward.6} parent=5 // pred_check_branch
      %173 = sbr.rel (%p171) target = $region24
    $region23: #{age_encoder_forward.6} parent=5 // pred_region
      // Predicated region
      $region25: #{age_encoder_forward.6} parent=23 // pred_check
        %p174 = pneg %p48
      $region26: #{age_encoder_forward.6} parent=23 // pred_check_branch
        %176 = sbr.rel (%p174) target = $region28
      $region27: #{age_encoder_forward.6} parent=23 // pred_region
        %p177 = scmp.lt.s32.totalorder %s17, 1
        %s178 = scalar_select %p177, %s17, 1
        %s179 = smul.addr %s178, 64
        %s180 = smul.addr %s179, 4
        %s181 = scalar_lea.vmem %s0, %s180
      $region28: #{age_encoder_forward.6} parent=23 // pred_fallthru
        _
    $region24: #{age_encoder_forward.6} parent=5 // pred_fallthru
      _
    %p182 = scmp.le.s32.totalorder 1, %s9
    %p183 = scmp.lt.s32.totalorder %s9, 3
    %p184 = pnand %p182, %p183
    %p185 = pneg %p184
    // Predicated region
    $region29: #{age_encoder_forward.6} parent=5 // pred_check
      _
    $region30: #{age_encoder_forward.6} parent=5 // pred_check_branch
      %187 = sbr.rel (%p184) target = $region32
    $region31: #{age_encoder_forward.6} parent=5 // pred_region
      %s188 = ssub.s32 %s9, 1
      %p189 = scmp.lt.s32.totalorder %s20, 1
      %s190 = scalar_select %p189, %s20, 1
      %s191 = smul.addr %s190, 64
      %s192 = smul.addr %s191, 4
      %s193 = scalar_lea.vmem %s0, %s192
      %p194 = pneg %p54
      %p195 = pneg %p51
      %s196 = smul.u32 16, %s19
      %p197 = scmp.lt.s32.totalorder %s196, 15
      %s198 = scalar_select %p197, %s196, 15
      %s199 = smul.addr %s198, 2
      %s200 = smul.addr %s199, 4
      %s201 = scalar_lea.vmem %s1, %s200
      %p202 = pneg %p80
      %p203 = pneg %p77
      %s204 = smul.u32 16, %s19
      %p205 = scmp.lt.s32.totalorder %s204, 15
      %s206 = scalar_select %p205, %s204, 15
      %s207 = smul.addr %s206, 8
      %s208 = scalar_lea.vmem %s2, %s207
      %p209 = pneg %p106
      %p210 = pneg %p103
      %p211 = pneg %p136
      %p212 = pneg %p133
      %s213 = smul.u32 16, %s19
      %p214 = scmp.lt.s32.totalorder %s20, 1
      %s215 = scalar_select %p214, %s20, 1
      %p216 = scmp.lt.s32.totalorder %s213, 15
      %s217 = scalar_select %p216, %s213, 15
      %p218 = scmp.lt.s32.totalorder %s21, 0
      %s219 = scalar_select %p218, %s21, 0
      %s220 = sadd.s32 %s219, %s217
      %s221 = smul.addr %s215, 16
      %s222 = sadd.s32 %s220, %s221
      %s223 = smul.addr %s222, 4
      %s224 = scalar_lea.vmem %s3, %s223
      %p225 = scmp.lt.s32.totalorder %s20, 1
      %s226 = scalar_select %p225, %s20, 1
      %s227 = smul.addr %s226, 64
      %s228 = smul.addr %s227, 4
      %s229 = scalar_lea.vmem %s0, %s228
      %s230 = smul.u32 16, %s19
      %p231 = scmp.lt.s32.totalorder %s230, 15
      %s232 = scalar_select %p231, %s230, 15
      %s233 = smul.addr %s232, 2
      %s234 = smul.addr %s233, 4
      %s235 = scalar_lea.vmem %s1, %s234
      %s236 = smul.u32 16, %s19
      %s237 = smul.u32 16, %s19
      %p238 = scmp.lt.s32.totalorder %s237, 15
      %s239 = scalar_select %p238, %s237, 15
      %s240 = smul.addr %s239, 8
      %s241 = scalar_lea.vmem %s2, %s240
      %s242 = smul.u32 16, %s19
      %s243 = smul.u32 16, %s19
      %p244 = scmp.lt.s32.totalorder %s20, 1
      %s245 = scalar_select %p244, %s20, 1
      %p246 = scmp.lt.s32.totalorder %s243, 15
      %s247 = scalar_select %p246, %s243, 15
      %p248 = scmp.lt.s32.totalorder %s21, 0
      %s249 = scalar_select %p248, %s21, 0
      %s250 = sadd.s32 %s249, %s247
      %s251 = smul.addr %s245, 16
      %s252 = sadd.s32 %s250, %s251
      %s253 = smul.addr %s252, 4
      %s254 = scalar_lea.vmem %s3, %s253
      %s255 = smul.u32 16, %s19
      %s256 = smul.u32 %s21, 128
      %s257 = sshra.s32 %s256, 7
      %s258 = sand.u32 %s256, 127
      %s259 = smul.addr %s257, 4
      %s260 = scalar_lea.vmem %s229, %s259
      %v261 = vld [vmem:[%s260] sm:$0xff]
      %v262 = vld [vmem:[%s260 + $0x8] sm:$0xff]
      %v263 = vld [vmem:[%s260 + $0x10] sm:$0xff]
      %v264 = vld [vmem:[%s260 + $0x18] sm:$0xff]
      %v265 = vld [vmem:[%s260 + $0x20] sm:$0xff]
      %v266 = vld [vmem:[%s260 + $0x28] sm:$0xff]
      %v267 = vld [vmem:[%s260 + $0x30] sm:$0xff]
      %v268 = vld [vmem:[%s260 + $0x38] sm:$0xff]
      %v269 = vld [vmem:[%s260 + $0x40] sm:$0xff]
      %v270 = vld [vmem:[%s260 + $0x48] sm:$0xff]
      %v271 = vld [vmem:[%s260 + $0x50] sm:$0xff]
      %v272 = vld [vmem:[%s260 + $0x58] sm:$0xff]
      %v273 = vld [vmem:[%s260 + $0x60] sm:$0xff]
      %v274 = vld [vmem:[%s260 + $0x68] sm:$0xff]
      %v275 = vld [vmem:[%s260 + $0x70] sm:$0xff]
      %v276 = vld [vmem:[%s260 + $0x78] sm:$0xff]
      %v277 = vld [vmem:[%s260 + $0x80] sm:$0xff]
      %v278 = vld [vmem:[%s260 + $0x88] sm:$0xff]
      %v279 = vld [vmem:[%s260 + $0x90] sm:$0xff]
      %v280 = vld [vmem:[%s260 + $0x98] sm:$0xff]
      %v281 = vld [vmem:[%s260 + $0xa0] sm:$0xff]
      %v282 = vld [vmem:[%s260 + $0xa8] sm:$0xff]
      %v283 = vld [vmem:[%s260 + $0xb0] sm:$0xff]
      %v284 = vld [vmem:[%s260 + $0xb8] sm:$0xff]
      %v285 = vld [vmem:[%s260 + $0xc0] sm:$0xff]
      %v286 = vld [vmem:[%s260 + $0xc8] sm:$0xff]
      %v287 = vld [vmem:[%s260 + $0xd0] sm:$0xff]
      %v288 = vld [vmem:[%s260 + $0xd8] sm:$0xff]
      %v289 = vld [vmem:[%s260 + $0xe0] sm:$0xff]
      %v290 = vld [vmem:[%s260 + $0xe8] sm:$0xff]
      %v291 = vld [vmem:[%s260 + $0xf0] sm:$0xff]
      %v292 = vld [vmem:[%s260 + $0xf8] sm:$0xff]
      %v293 = vld [vmem:[%s235] sm:$0xff]
      %v294 = vld [vmem:[%s235 + $0x8] sm:$0xff]
      %v295 = vld [vmem:[%s235 + $0x10] sm:$0xff]
      %v296 = vld [vmem:[%s235 + $0x18] sm:$0xff]
      %v297 = vld [vmem:[%s235 + $0x20] sm:$0xff]
      %v298 = vld [vmem:[%s235 + $0x28] sm:$0xff]
      %v299 = vld [vmem:[%s235 + $0x30] sm:$0xff]
      %v300 = vld [vmem:[%s235 + $0x38] sm:$0xff]
      %v301 = vld [vmem:[%s235 + $0x40] sm:$0xff]
      %v302 = vld [vmem:[%s235 + $0x48] sm:$0xff]
      %v303 = vld [vmem:[%s235 + $0x50] sm:$0xff]
      %v304 = vld [vmem:[%s235 + $0x58] sm:$0xff]
      %v305 = vld [vmem:[%s235 + $0x60] sm:$0xff]
      %v306 = vld [vmem:[%s235 + $0x68] sm:$0xff]
      %v307 = vld [vmem:[%s235 + $0x70] sm:$0xff]
      %v308 = vld [vmem:[%s235 + $0x78] sm:$0xff]
      %v325 = vunpack.c.l.b16 %v293
      %v326 = vunpack.c.h.b16 %v293
      %v327 = vunpack.c.l.b16 %v294
      %v328 = vunpack.c.h.b16 %v294
      %v329 = vunpack.c.l.b16 %v295
      %v330 = vunpack.c.h.b16 %v295
      %v331 = vunpack.c.l.b16 %v296
      %v332 = vunpack.c.h.b16 %v296
      %v333 = vunpack.c.l.b16 %v297
      %v334 = vunpack.c.h.b16 %v297
      %v335 = vunpack.c.l.b16 %v298
      %v336 = vunpack.c.h.b16 %v298
      %v337 = vunpack.c.l.b16 %v299
      %v338 = vunpack.c.h.b16 %v299
      %v339 = vunpack.c.l.b16 %v300
      %v340 = vunpack.c.h.b16 %v300
      %v341 = vunpack.c.l.b16 %v301
      %v342 = vunpack.c.h.b16 %v301
      %v343 = vunpack.c.l.b16 %v302
      %v344 = vunpack.c.h.b16 %v302
      %v345 = vunpack.c.l.b16 %v303
      %v346 = vunpack.c.h.b16 %v303
      %v347 = vunpack.c.l.b16 %v304
      %v348 = vunpack.c.h.b16 %v304
      %v349 = vunpack.c.l.b16 %v305
      %v350 = vunpack.c.h.b16 %v305
      %v351 = vunpack.c.l.b16 %v306
      %v352 = vunpack.c.h.b16 %v306
      %v353 = vunpack.c.l.b16 %v307
      %v354 = vunpack.c.h.b16 %v307
      %v355 = vunpack.c.l.b16 %v308
      %v356 = vunpack.c.h.b16 %v308
      %v357 = vpack.c.b16 %v327, %v325
      %v358 = vpack.c.b16 %v328, %v326
      %v359 = vpack.c.b16 %v331, %v329
      %v360 = vpack.c.b16 %v332, %v330
      %v361 = vpack.c.b16 %v335, %v333
      %v362 = vpack.c.b16 %v336, %v334
      %v363 = vpack.c.b16 %v339, %v337
      %v364 = vpack.c.b16 %v340, %v338
      %v365 = vpack.c.b16 %v343, %v341
      %v366 = vpack.c.b16 %v344, %v342
      %v367 = vpack.c.b16 %v347, %v345
      %v368 = vpack.c.b16 %v348, %v346
      %v369 = vpack.c.b16 %v351, %v349
      %v370 = vpack.c.b16 %v352, %v350
      %v371 = vpack.c.b16 %v355, %v353
      %v372 = vpack.c.b16 %v356, %v354
      %v421 = vunpack.c.l.b16 %v261
      %v422 = vunpack.c.l.b16 %v262
      %v423 = vunpack.c.l.b16 %v263
      %v424 = vunpack.c.l.b16 %v264
      %v425 = vunpack.c.l.b16 %v265
      %v426 = vunpack.c.l.b16 %v266
      %v427 = vunpack.c.l.b16 %v267
      %v428 = vunpack.c.l.b16 %v268
      %v429 = vunpack.c.l.b16 %v269
      %v430 = vunpack.c.l.b16 %v270
      %v431 = vunpack.c.l.b16 %v271
      %v432 = vunpack.c.l.b16 %v272
      %v433 = vunpack.c.l.b16 %v273
      %v434 = vunpack.c.l.b16 %v274
      %v435 = vunpack.c.l.b16 %v275
      %v436 = vunpack.c.l.b16 %v276
      %v437 = vunpack.c.l.b16 %v277
      %v438 = vunpack.c.l.b16 %v278
      %v439 = vunpack.c.l.b16 %v279
      %v440 = vunpack.c.l.b16 %v280
      %v441 = vunpack.c.l.b16 %v281
      %v442 = vunpack.c.l.b16 %v282
      %v443 = vunpack.c.l.b16 %v283
      %v444 = vunpack.c.l.b16 %v284
      %v445 = vunpack.c.l.b16 %v285
      %v446 = vunpack.c.l.b16 %v286
      %v447 = vunpack.c.l.b16 %v287
      %v448 = vunpack.c.l.b16 %v288
      %v449 = vunpack.c.l.b16 %v289
      %v450 = vunpack.c.l.b16 %v290
      %v451 = vunpack.c.l.b16 %v291
      %v452 = vunpack.c.l.b16 %v292
      %v453 = vpack.c.b16 %v422, %v421
      %v454 = vpack.c.b16 %v424, %v423
      %v455 = vpack.c.b16 %v426, %v425
      %v456 = vpack.c.b16 %v428, %v427
      %v457 = vpack.c.b16 %v430, %v429
      %v458 = vpack.c.b16 %v432, %v431
      %v459 = vpack.c.b16 %v434, %v433
      %v460 = vpack.c.b16 %v436, %v435
      %v461 = vpack.c.b16 %v438, %v437
      %v462 = vpack.c.b16 %v440, %v439
      %v463 = vpack.c.b16 %v442, %v441
      %v464 = vpack.c.b16 %v444, %v443
      %v465 = vpack.c.b16 %v446, %v445
      %v466 = vpack.c.b16 %v448, %v447
      %v467 = vpack.c.b16 %v450, %v449
      %v468 = vpack.c.b16 %v452, %v451
      %485 = vmatpush.bf16.msra.mxu0 %v460
      %486 = vmatpush.bf16.msra.mxu0 %v459
      %487 = vmatpush.bf16.msra.mxu0 %v458
      %488 = vmatpush.bf16.msra.mxu0 %v457
      %489 = vmatpush.bf16.msra.mxu0 %v456
      %490 = vmatpush.bf16.msra.mxu0 %v455
      %491 = vmatpush.bf16.msra.mxu0 %v454
      %492 = vmatpush.bf16.msra.mxu0 %v453
      %493 = vmatmul.bf16.gmra.mxu0 %v357
      %v494 = vpop.f32.mrf.mxu0
      %v495 = vadd.f32 0.0, %v494
      %v496 = vpop.f32.mrf.mxu0
      %v497 = vadd.f32 0.0, %v496
      %498 = vmatmul.bf16.gmra.mxu0 %v359
      %v499 = vpop.f32.mrf.mxu0
      %v500 = vadd.f32 0.0, %v499
      %v501 = vpop.f32.mrf.mxu0
      %v502 = vadd.f32 0.0, %v501
      %503 = vmatmul.bf16.gmra.mxu0 %v361
      %v504 = vpop.f32.mrf.mxu0
      %v505 = vadd.f32 0.0, %v504
      %v506 = vpop.f32.mrf.mxu0
      %v507 = vadd.f32 0.0, %v506
      %508 = vmatmul.bf16.gmra.mxu0 %v363
      %v509 = vpop.f32.mrf.mxu0
      %v510 = vadd.f32 0.0, %v509
      %v511 = vpop.f32.mrf.mxu0
      %v512 = vadd.f32 0.0, %v511
      %513 = vmatmul.bf16.gmra.mxu0 %v365
      %v514 = vpop.f32.mrf.mxu0
      %v515 = vadd.f32 0.0, %v514
      %v516 = vpop.f32.mrf.mxu0
      %v517 = vadd.f32 0.0, %v516
      %518 = vmatmul.bf16.gmra.mxu0 %v367
      %v519 = vpop.f32.mrf.mxu0
      %v520 = vadd.f32 0.0, %v519
      %v521 = vpop.f32.mrf.mxu0
      %v522 = vadd.f32 0.0, %v521
      %523 = vmatmul.bf16.gmra.mxu0 %v369
      %v524 = vpop.f32.mrf.mxu0
      %v525 = vadd.f32 0.0, %v524
      %v526 = vpop.f32.mrf.mxu0
      %v527 = vadd.f32 0.0, %v526
      %528 = vmatmul.bf16.gmra.mxu0 %v371
      %v529 = vpop.f32.mrf.mxu0
      %v530 = vadd.f32 0.0, %v529
      %v531 = vpop.f32.mrf.mxu0
      %v532 = vadd.f32 0.0, %v531
      %533 = vdwg.mxu0
      %534 = vmatpush.bf16.msra.mxu0 %v468
      %535 = vmatpush.bf16.msra.mxu0 %v467
      %536 = vmatpush.bf16.msra.mxu0 %v466
      %537 = vmatpush.bf16.msra.mxu0 %v465
      %538 = vmatpush.bf16.msra.mxu0 %v464
      %539 = vmatpush.bf16.msra.mxu0 %v463
      %540 = vmatpush.bf16.msra.mxu0 %v462
      %541 = vmatpush.bf16.msra.mxu0 %v461
      %542 = vmatmul.bf16.gmra.mxu0 %v358
      %v543 = vpop.f32.mrf.mxu0
      %v544 = vadd.f32 %v495, %v543
      %v545 = vpop.f32.mrf.mxu0
      %v546 = vadd.f32 %v497, %v545
      %547 = vmatmul.bf16.gmra.mxu0 %v360
      %v548 = vpop.f32.mrf.mxu0
      %v549 = vadd.f32 %v500, %v548
      %v550 = vpop.f32.mrf.mxu0
      %v551 = vadd.f32 %v502, %v550
      %552 = vmatmul.bf16.gmra.mxu0 %v362
      %v553 = vpop.f32.mrf.mxu0
      %v554 = vadd.f32 %v505, %v553
      %v555 = vpop.f32.mrf.mxu0
      %v556 = vadd.f32 %v507, %v555
      %557 = vmatmul.bf16.gmra.mxu0 %v364
      %v558 = vpop.f32.mrf.mxu0
      %v559 = vadd.f32 %v510, %v558
      %v560 = vpop.f32.mrf.mxu0
      %v561 = vadd.f32 %v512, %v560
      %562 = vmatmul.bf16.gmra.mxu0 %v366
      %v563 = vpop.f32.mrf.mxu0
      %v564 = vadd.f32 %v515, %v563
      %v565 = vpop.f32.mrf.mxu0
      %v566 = vadd.f32 %v517, %v565
      %567 = vmatmul.bf16.gmra.mxu0 %v368
      %v568 = vpop.f32.mrf.mxu0
      %v569 = vadd.f32 %v520, %v568
      %v570 = vpop.f32.mrf.mxu0
      %v571 = vadd.f32 %v522, %v570
      %572 = vmatmul.bf16.gmra.mxu0 %v370
      %v573 = vpop.f32.mrf.mxu0
      %v574 = vadd.f32 %v525, %v573
      %v575 = vpop.f32.mrf.mxu0
      %v576 = vadd.f32 %v527, %v575
      %577 = vmatmul.bf16.gmra.mxu0 %v372
      %v578 = vpop.f32.mrf.mxu0
      %v579 = vadd.f32 %v530, %v578
      %v580 = vpop.f32.mrf.mxu0
      %v581 = vadd.f32 %v532, %v580
      %582 = vdwg.mxu0
      %583 = vst [vmem:[#allocation2] sm:$0xff] %v544
      %584 = vst [vmem:[#allocation2 + $0x8] sm:$0xff] %v546
      %585 = vst [vmem:[#allocation2 + $0x10] sm:$0xff] %v549
      %586 = vst [vmem:[#allocation2 + $0x18] sm:$0xff] %v551
      %587 = vst [vmem:[#allocation2 + $0x20] sm:$0xff] %v554
      %588 = vst [vmem:[#allocation2 + $0x28] sm:$0xff] %v556
      %589 = vst [vmem:[#allocation2 + $0x30] sm:$0xff] %v559
      %590 = vst [vmem:[#allocation2 + $0x38] sm:$0xff] %v561
      %591 = vst [vmem:[#allocation2 + $0x40] sm:$0xff] %v564
      %592 = vst [vmem:[#allocation2 + $0x48] sm:$0xff] %v566
      %593 = vst [vmem:[#allocation2 + $0x50] sm:$0xff] %v569
      %594 = vst [vmem:[#allocation2 + $0x58] sm:$0xff] %v571
      %595 = vst [vmem:[#allocation2 + $0x60] sm:$0xff] %v574
      %596 = vst [vmem:[#allocation2 + $0x68] sm:$0xff] %v576
      %597 = vst [vmem:[#allocation2 + $0x70] sm:$0xff] %v579
      %598 = vst [vmem:[#allocation2 + $0x78] sm:$0xff] %v581
      %s599 = scalar_lea.vmem %s235, 128
      %v600 = vld [vmem:[%s599] sm:$0xff]
      %v601 = vld [vmem:[%s599 + $0x8] sm:$0xff]
      %v602 = vld [vmem:[%s599 + $0x10] sm:$0xff]
      %v603 = vld [vmem:[%s599 + $0x18] sm:$0xff]
      %v604 = vld [vmem:[%s599 + $0x20] sm:$0xff]
      %v605 = vld [vmem:[%s599 + $0x28] sm:$0xff]
      %v606 = vld [vmem:[%s599 + $0x30] sm:$0xff]
      %v607 = vld [vmem:[%s599 + $0x38] sm:$0xff]
      %v608 = vld [vmem:[%s599 + $0x40] sm:$0xff]
      %v609 = vld [vmem:[%s599 + $0x48] sm:$0xff]
      %v610 = vld [vmem:[%s599 + $0x50] sm:$0xff]
      %v611 = vld [vmem:[%s599 + $0x58] sm:$0xff]
      %v612 = vld [vmem:[%s599 + $0x60] sm:$0xff]
      %v613 = vld [vmem:[%s599 + $0x68] sm:$0xff]
      %v614 = vld [vmem:[%s599 + $0x70] sm:$0xff]
      %v615 = vld [vmem:[%s599 + $0x78] sm:$0xff]
      %v632 = vunpack.c.l.b16 %v600
      %v633 = vunpack.c.h.b16 %v600
      %v634 = vunpack.c.l.b16 %v601
      %v635 = vunpack.c.h.b16 %v601
      %v636 = vunpack.c.l.b16 %v602
      %v637 = vunpack.c.h.b16 %v602
      %v638 = vunpack.c.l.b16 %v603
      %v639 = vunpack.c.h.b16 %v603
      %v640 = vunpack.c.l.b16 %v604
      %v641 = vunpack.c.h.b16 %v604
      %v642 = vunpack.c.l.b16 %v605
      %v643 = vunpack.c.h.b16 %v605
      %v644 = vunpack.c.l.b16 %v606
      %v645 = vunpack.c.h.b16 %v606
      %v646 = vunpack.c.l.b16 %v607
      %v647 = vunpack.c.h.b16 %v607
      %v648 = vunpack.c.l.b16 %v608
      %v649 = vunpack.c.h.b16 %v608
      %v650 = vunpack.c.l.b16 %v609
      %v651 = vunpack.c.h.b16 %v609
      %v652 = vunpack.c.l.b16 %v610
      %v653 = vunpack.c.h.b16 %v610
      %v654 = vunpack.c.l.b16 %v611
      %v655 = vunpack.c.h.b16 %v611
      %v656 = vunpack.c.l.b16 %v612
      %v657 = vunpack.c.h.b16 %v612
      %v658 = vunpack.c.l.b16 %v613
      %v659 = vunpack.c.h.b16 %v613
      %v660 = vunpack.c.l.b16 %v614
      %v661 = vunpack.c.h.b16 %v614
      %v662 = vunpack.c.l.b16 %v615
      %v663 = vunpack.c.h.b16 %v615
      %v664 = vpack.c.b16 %v634, %v632
      %v665 = vpack.c.b16 %v635, %v633
      %v666 = vpack.c.b16 %v638, %v636
      %v667 = vpack.c.b16 %v639, %v637
      %v668 = vpack.c.b16 %v642, %v640
      %v669 = vpack.c.b16 %v643, %v641
      %v670 = vpack.c.b16 %v646, %v644
      %v671 = vpack.c.b16 %v647, %v645
      %v672 = vpack.c.b16 %v650, %v648
      %v673 = vpack.c.b16 %v651, %v649
      %v674 = vpack.c.b16 %v654, %v652
      %v675 = vpack.c.b16 %v655, %v653
      %v676 = vpack.c.b16 %v658, %v656
      %v677 = vpack.c.b16 %v659, %v657
      %v678 = vpack.c.b16 %v662, %v660
      %v679 = vpack.c.b16 %v663, %v661
      %v696 = vunpack.c.h.b16 %v261
      %v697 = vunpack.c.h.b16 %v262
      %v698 = vunpack.c.h.b16 %v263
      %v699 = vunpack.c.h.b16 %v264
      %v700 = vunpack.c.h.b16 %v265
      %v701 = vunpack.c.h.b16 %v266
      %v702 = vunpack.c.h.b16 %v267
      %v703 = vunpack.c.h.b16 %v268
      %v704 = vunpack.c.h.b16 %v269
      %v705 = vunpack.c.h.b16 %v270
      %v706 = vunpack.c.h.b16 %v271
      %v707 = vunpack.c.h.b16 %v272
      %v708 = vunpack.c.h.b16 %v273
      %v709 = vunpack.c.h.b16 %v274
      %v710 = vunpack.c.h.b16 %v275
      %v711 = vunpack.c.h.b16 %v276
      %v712 = vunpack.c.h.b16 %v277
      %v713 = vunpack.c.h.b16 %v278
      %v714 = vunpack.c.h.b16 %v279
      %v715 = vunpack.c.h.b16 %v280
      %v716 = vunpack.c.h.b16 %v281
      %v717 = vunpack.c.h.b16 %v282
      %v718 = vunpack.c.h.b16 %v283
      %v719 = vunpack.c.h.b16 %v284
      %v720 = vunpack.c.h.b16 %v285
      %v721 = vunpack.c.h.b16 %v286
      %v722 = vunpack.c.h.b16 %v287
      %v723 = vunpack.c.h.b16 %v288
      %v724 = vunpack.c.h.b16 %v289
      %v725 = vunpack.c.h.b16 %v290
      %v726 = vunpack.c.h.b16 %v291
      %v727 = vunpack.c.h.b16 %v292
      %v728 = vpack.c.b16 %v697, %v696
      %v729 = vpack.c.b16 %v699, %v698
      %v730 = vpack.c.b16 %v701, %v700
      %v731 = vpack.c.b16 %v703, %v702
      %v732 = vpack.c.b16 %v705, %v704
      %v733 = vpack.c.b16 %v707, %v706
      %v734 = vpack.c.b16 %v709, %v708
      %v735 = vpack.c.b16 %v711, %v710
      %v736 = vpack.c.b16 %v713, %v712
      %v737 = vpack.c.b16 %v715, %v714
      %v738 = vpack.c.b16 %v717, %v716
      %v739 = vpack.c.b16 %v719, %v718
      %v740 = vpack.c.b16 %v721, %v720
      %v741 = vpack.c.b16 %v723, %v722
      %v742 = vpack.c.b16 %v725, %v724
      %v743 = vpack.c.b16 %v727, %v726
      %744 = vrot.lane.b32.xlu0 %v453, 127
      %v745 = vpop.permute.xlu0 %744
      %746 = vrot.lane.b32.xlu0 %v728, 127
      %v747 = vpop.permute.xlu0 %746
      %748 = vrot.lane.b32.xlu0 %v454, 127
      %v749 = vpop.permute.xlu0 %748
      %750 = vrot.lane.b32.xlu0 %v729, 127
      %v751 = vpop.permute.xlu0 %750
      %752 = vrot.lane.b32.xlu0 %v455, 127
      %v753 = vpop.permute.xlu0 %752
      %754 = vrot.lane.b32.xlu0 %v730, 127
      %v755 = vpop.permute.xlu0 %754
      %756 = vrot.lane.b32.xlu0 %v456, 127
      %v757 = vpop.permute.xlu0 %756
      %758 = vrot.lane.b32.xlu0 %v731, 127
      %v759 = vpop.permute.xlu0 %758
      %760 = vrot.lane.b32.xlu0 %v457, 127
      %v761 = vpop.permute.xlu0 %760
      %762 = vrot.lane.b32.xlu0 %v732, 127
      %v763 = vpop.permute.xlu0 %762
      %764 = vrot.lane.b32.xlu0 %v458, 127
      %v765 = vpop.permute.xlu0 %764
      %766 = vrot.lane.b32.xlu0 %v733, 127
      %v767 = vpop.permute.xlu0 %766
      %768 = vrot.lane.b32.xlu0 %v459, 127
      %v769 = vpop.permute.xlu0 %768
      %770 = vrot.lane.b32.xlu0 %v734, 127
      %v771 = vpop.permute.xlu0 %770
      %772 = vrot.lane.b32.xlu0 %v460, 127
      %v773 = vpop.permute.xlu0 %772
      %774 = vrot.lane.b32.xlu0 %v735, 127
      %v775 = vpop.permute.xlu0 %774
      %776 = vrot.lane.b32.xlu0 %v461, 127
      %v777 = vpop.permute.xlu0 %776
      %778 = vrot.lane.b32.xlu0 %v736, 127
      %v779 = vpop.permute.xlu0 %778
      %780 = vrot.lane.b32.xlu0 %v462, 127
      %v781 = vpop.permute.xlu0 %780
      %782 = vrot.lane.b32.xlu0 %v737, 127
      %v783 = vpop.permute.xlu0 %782
      %784 = vrot.lane.b32.xlu0 %v463, 127
      %v785 = vpop.permute.xlu0 %784
      %786 = vrot.lane.b32.xlu0 %v738, 127
      %v787 = vpop.permute.xlu0 %786
      %788 = vrot.lane.b32.xlu0 %v464, 127
      %v789 = vpop.permute.xlu0 %788
      %790 = vrot.lane.b32.xlu0 %v739, 127
      %v791 = vpop.permute.xlu0 %790
      %792 = vrot.lane.b32.xlu0 %v465, 127
      %v793 = vpop.permute.xlu0 %792
      %794 = vrot.lane.b32.xlu0 %v740, 127
      %v795 = vpop.permute.xlu0 %794
      %796 = vrot.lane.b32.xlu0 %v466, 127
      %v797 = vpop.permute.xlu0 %796
      %798 = vrot.lane.b32.xlu0 %v741, 127
      %v799 = vpop.permute.xlu0 %798
      %800 = vrot.lane.b32.xlu0 %v467, 127
      %v801 = vpop.permute.xlu0 %800
      %802 = vrot.lane.b32.xlu0 %v742, 127
      %v803 = vpop.permute.xlu0 %802
      %804 = vrot.lane.b32.xlu0 %v468, 127
      %v805 = vpop.permute.xlu0 %804
      %806 = vrot.lane.b32.xlu0 %v743, 127
      %v807 = vpop.permute.xlu0 %806
      %vm808 = vcmask 1039360
      %v809 = vsel %vm808, %v745, %v747
      %v810 = vsel %vm808, %v749, %v751
      %v811 = vsel %vm808, %v753, %v755
      %v812 = vsel %vm808, %v757, %v759
      %v813 = vsel %vm808, %v761, %v763
      %v814 = vsel %vm808, %v765, %v767
      %v815 = vsel %vm808, %v769, %v771
      %v816 = vsel %vm808, %v773, %v775
      %v817 = vsel %vm808, %v777, %v779
      %v818 = vsel %vm808, %v781, %v783
      %v819 = vsel %vm808, %v785, %v787
      %v820 = vsel %vm808, %v789, %v791
      %v821 = vsel %vm808, %v793, %v795
      %v822 = vsel %vm808, %v797, %v799
      %v823 = vsel %vm808, %v801, %v803
      %v824 = vsel %vm808, %v805, %v807
      %841 = vmatpush.bf16.msra.mxu0 %v816
      %842 = vmatpush.bf16.msra.mxu0 %v815
      %843 = vmatpush.bf16.msra.mxu0 %v814
      %844 = vmatpush.bf16.msra.mxu0 %v813
      %845 = vmatpush.bf16.msra.mxu0 %v812
      %846 = vmatpush.bf16.msra.mxu0 %v811
      %847 = vmatpush.bf16.msra.mxu0 %v810
      %848 = vmatpush.bf16.msra.mxu0 %v809
      %849 = vmatmul.bf16.gmra.mxu0 %v664
      %v850 = vpop.f32.mrf.mxu0
      %v851 = vadd.f32 0.0, %v850
      %v852 = vpop.f32.mrf.mxu0
      %v853 = vadd.f32 0.0, %v852
      %854 = vmatmul.bf16.gmra.mxu0 %v666
      %v855 = vpop.f32.mrf.mxu0
      %v856 = vadd.f32 0.0, %v855
      %v857 = vpop.f32.mrf.mxu0
      %v858 = vadd.f32 0.0, %v857
      %859 = vmatmul.bf16.gmra.mxu0 %v668
      %v860 = vpop.f32.mrf.mxu0
      %v861 = vadd.f32 0.0, %v860
      %v862 = vpop.f32.mrf.mxu0
      %v863 = vadd.f32 0.0, %v862
      %864 = vmatmul.bf16.gmra.mxu0 %v670
      %v865 = vpop.f32.mrf.mxu0
      %v866 = vadd.f32 0.0, %v865
      %v867 = vpop.f32.mrf.mxu0
      %v868 = vadd.f32 0.0, %v867
      %869 = vmatmul.bf16.gmra.mxu0 %v672
      %v870 = vpop.f32.mrf.mxu0
      %v871 = vadd.f32 0.0, %v870
      %v872 = vpop.f32.mrf.mxu0
      %v873 = vadd.f32 0.0, %v872
      %874 = vmatmul.bf16.gmra.mxu0 %v674
      %v875 = vpop.f32.mrf.mxu0
      %v876 = vadd.f32 0.0, %v875
      %v877 = vpop.f32.mrf.mxu0
      %v878 = vadd.f32 0.0, %v877
      %879 = vmatmul.bf16.gmra.mxu0 %v676
      %v880 = vpop.f32.mrf.mxu0
      %v881 = vadd.f32 0.0, %v880
      %v882 = vpop.f32.mrf.mxu0
      %v883 = vadd.f32 0.0, %v882
      %884 = vmatmul.bf16.gmra.mxu0 %v678
      %v885 = vpop.f32.mrf.mxu0
      %v886 = vadd.f32 0.0, %v885
      %v887 = vpop.f32.mrf.mxu0
      %v888 = vadd.f32 0.0, %v887
      %889 = vdwg.mxu0
      %890 = vmatpush.bf16.msra.mxu0 %v824
      %891 = vmatpush.bf16.msra.mxu0 %v823
      %892 = vmatpush.bf16.msra.mxu0 %v822
      %893 = vmatpush.bf16.msra.mxu0 %v821
      %894 = vmatpush.bf16.msra.mxu0 %v820
      %895 = vmatpush.bf16.msra.mxu0 %v819
      %896 = vmatpush.bf16.msra.mxu0 %v818
      %897 = vmatpush.bf16.msra.mxu0 %v817
      %898 = vmatmul.bf16.gmra.mxu0 %v665
      %v899 = vpop.f32.mrf.mxu0
      %v900 = vadd.f32 %v851, %v899
      %v901 = vpop.f32.mrf.mxu0
      %v902 = vadd.f32 %v853, %v901
      %903 = vmatmul.bf16.gmra.mxu0 %v667
      %v904 = vpop.f32.mrf.mxu0
      %v905 = vadd.f32 %v856, %v904
      %v906 = vpop.f32.mrf.mxu0
      %v907 = vadd.f32 %v858, %v906
      %908 = vmatmul.bf16.gmra.mxu0 %v669
      %v909 = vpop.f32.mrf.mxu0
      %v910 = vadd.f32 %v861, %v909
      %v911 = vpop.f32.mrf.mxu0
      %v912 = vadd.f32 %v863, %v911
      %913 = vmatmul.bf16.gmra.mxu0 %v671
      %v914 = vpop.f32.mrf.mxu0
      %v915 = vadd.f32 %v866, %v914
      %v916 = vpop.f32.mrf.mxu0
      %v917 = vadd.f32 %v868, %v916
      %918 = vmatmul.bf16.gmra.mxu0 %v673
      %v919 = vpop.f32.mrf.mxu0
      %v920 = vadd.f32 %v871, %v919
      %v921 = vpop.f32.mrf.mxu0
      %v922 = vadd.f32 %v873, %v921
      %923 = vmatmul.bf16.gmra.mxu0 %v675
      %v924 = vpop.f32.mrf.mxu0
      %v925 = vadd.f32 %v876, %v924
      %v926 = vpop.f32.mrf.mxu0
      %v927 = vadd.f32 %v878, %v926
      %928 = vmatmul.bf16.gmra.mxu0 %v677
      %v929 = vpop.f32.mrf.mxu0
      %v930 = vadd.f32 %v881, %v929
      %v931 = vpop.f32.mrf.mxu0
      %v932 = vadd.f32 %v883, %v931
      %933 = vmatmul.bf16.gmra.mxu0 %v679
      %v934 = vpop.f32.mrf.mxu0
      %v935 = vadd.f32 %v886, %v934
      %v936 = vpop.f32.mrf.mxu0
      %v937 = vadd.f32 %v888, %v936
      %938 = vdwg.mxu0
      %v939 = vld [vmem:[#allocation2] sm:$0xff]
      %v940 = vld [vmem:[#allocation2 + $0x8] sm:$0xff]
      %v941 = vld [vmem:[#allocation2 + $0x10] sm:$0xff]
      %v942 = vld [vmem:[#allocation2 + $0x18] sm:$0xff]
      %v943 = vld [vmem:[#allocation2 + $0x20] sm:$0xff]
      %v944 = vld [vmem:[#allocation2 + $0x28] sm:$0xff]
      %v945 = vld [vmem:[#allocation2 + $0x30] sm:$0xff]
      %v946 = vld [vmem:[#allocation2 + $0x38] sm:$0xff]
      %v947 = vld [vmem:[#allocation2 + $0x40] sm:$0xff]
      %v948 = vld [vmem:[#allocation2 + $0x48] sm:$0xff]
      %v949 = vld [vmem:[#allocation2 + $0x50] sm:$0xff]
      %v950 = vld [vmem:[#allocation2 + $0x58] sm:$0xff]
      %v951 = vld [vmem:[#allocation2 + $0x60] sm:$0xff]
      %v952 = vld [vmem:[#allocation2 + $0x68] sm:$0xff]
      %v953 = vld [vmem:[#allocation2 + $0x70] sm:$0xff]
      %v954 = vld [vmem:[#allocation2 + $0x78] sm:$0xff]
      %v955 = vadd.f32 %v939, %v900
      %v956 = vadd.f32 %v940, %v902
      %v957 = vadd.f32 %v941, %v905
      %v958 = vadd.f32 %v942, %v907
      %v959 = vadd.f32 %v943, %v910
      %v960 = vadd.f32 %v944, %v912
      %v961 = vadd.f32 %v945, %v915
      %v962 = vadd.f32 %v946, %v917
      %v963 = vadd.f32 %v947, %v920
      %v964 = vadd.f32 %v948, %v922
      %v965 = vadd.f32 %v949, %v925
      %v966 = vadd.f32 %v950, %v927
      %v967 = vadd.f32 %v951, %v930
      %v968 = vadd.f32 %v952, %v932
      %v969 = vadd.f32 %v953, %v935
      %v970 = vadd.f32 %v954, %v937
      %971 = vst [vmem:[#allocation2] sm:$0xff] %v955
      %972 = vst [vmem:[#allocation2 + $0x8] sm:$0xff] %v956
      %973 = vst [vmem:[#allocation2 + $0x10] sm:$0xff] %v957
      %974 = vst [vmem:[#allocation2 + $0x18] sm:$0xff] %v958
      %975 = vst [vmem:[#allocation2 + $0x20] sm:$0xff] %v959
      %976 = vst [vmem:[#allocation2 + $0x28] sm:$0xff] %v960
      %977 = vst [vmem:[#allocation2 + $0x30] sm:$0xff] %v961
      %978 = vst [vmem:[#allocation2 + $0x38] sm:$0xff] %v962
      %979 = vst [vmem:[#allocation2 + $0x40] sm:$0xff] %v963
      %980 = vst [vmem:[#allocation2 + $0x48] sm:$0xff] %v964
      %981 = vst [vmem:[#allocation2 + $0x50] sm:$0xff] %v965
      %982 = vst [vmem:[#allocation2 + $0x58] sm:$0xff] %v966
      %983 = vst [vmem:[#allocation2 + $0x60] sm:$0xff] %v967
      %984 = vst [vmem:[#allocation2 + $0x68] sm:$0xff] %v968
      %985 = vst [vmem:[#allocation2 + $0x70] sm:$0xff] %v969
      %986 = vst [vmem:[#allocation2 + $0x78] sm:$0xff] %v970
      %s987 = scalar_lea.vmem %s235, 256
      %v988 = vld [vmem:[%s987] sm:$0xff]
      %v989 = vld [vmem:[%s987 + $0x8] sm:$0xff]
      %v990 = vld [vmem:[%s987 + $0x10] sm:$0xff]
      %v991 = vld [vmem:[%s987 + $0x18] sm:$0xff]
      %v992 = vld [vmem:[%s987 + $0x20] sm:$0xff]
      %v993 = vld [vmem:[%s987 + $0x28] sm:$0xff]
      %v994 = vld [vmem:[%s987 + $0x30] sm:$0xff]
      %v995 = vld [vmem:[%s987 + $0x38] sm:$0xff]
      %v996 = vld [vmem:[%s987 + $0x40] sm:$0xff]
      %v997 = vld [vmem:[%s987 + $0x48] sm:$0xff]
      %v998 = vld [vmem:[%s987 + $0x50] sm:$0xff]
      %v999 = vld [vmem:[%s987 + $0x58] sm:$0xff]
      %v1000 = vld [vmem:[%s987 + $0x60] sm:$0xff]
      %v1001 = vld [vmem:[%s987 + $0x68] sm:$0xff]
      %v1002 = vld [vmem:[%s987 + $0x70] sm:$0xff]
      %v1003 = vld [vmem:[%s987 + $0x78] sm:$0xff]
      %v1020 = vunpack.c.l.b16 %v988
      %v1021 = vunpack.c.h.b16 %v988
      %v1022 = vunpack.c.l.b16 %v989
      %v1023 = vunpack.c.h.b16 %v989
      %v1024 = vunpack.c.l.b16 %v990
      %v1025 = vunpack.c.h.b16 %v990
      %v1026 = vunpack.c.l.b16 %v991
      %v1027 = vunpack.c.h.b16 %v991
      %v1028 = vunpack.c.l.b16 %v992
      %v1029 = vunpack.c.h.b16 %v992
      %v1030 = vunpack.c.l.b16 %v993
      %v1031 = vunpack.c.h.b16 %v993
      %v1032 = vunpack.c.l.b16 %v994
      %v1033 = vunpack.c.h.b16 %v994
      %v1034 = vunpack.c.l.b16 %v995
      %v1035 = vunpack.c.h.b16 %v995
      %v1036 = vunpack.c.l.b16 %v996
      %v1037 = vunpack.c.h.b16 %v996
      %v1038 = vunpack.c.l.b16 %v997
      %v1039 = vunpack.c.h.b16 %v997
      %v1040 = vunpack.c.l.b16 %v998
      %v1041 = vunpack.c.h.b16 %v998
      %v1042 = vunpack.c.l.b16 %v999
      %v1043 = vunpack.c.h.b16 %v999
      %v1044 = vunpack.c.l.b16 %v1000
      %v1045 = vunpack.c.h.b16 %v1000
      %v1046 = vunpack.c.l.b16 %v1001
      %v1047 = vunpack.c.h.b16 %v1001
      %v1048 = vunpack.c.l.b16 %v1002
      %v1049 = vunpack.c.h.b16 %v1002
      %v1050 = vunpack.c.l.b16 %v1003
      %v1051 = vunpack.c.h.b16 %v1003
      %v1052 = vpack.c.b16 %v1022, %v1020
      %v1053 = vpack.c.b16 %v1023, %v1021
      %v1054 = vpack.c.b16 %v1026, %v1024
      %v1055 = vpack.c.b16 %v1027, %v1025
      %v1056 = vpack.c.b16 %v1030, %v1028
      %v1057 = vpack.c.b16 %v1031, %v1029
      %v1058 = vpack.c.b16 %v1034, %v1032
      %v1059 = vpack.c.b16 %v1035, %v1033
      %v1060 = vpack.c.b16 %v1038, %v1036
      %v1061 = vpack.c.b16 %v1039, %v1037
      %v1062 = vpack.c.b16 %v1042, %v1040
      %v1063 = vpack.c.b16 %v1043, %v1041
      %v1064 = vpack.c.b16 %v1046, %v1044
      %v1065 = vpack.c.b16 %v1047, %v1045
      %v1066 = vpack.c.b16 %v1050, %v1048
      %v1067 = vpack.c.b16 %v1051, %v1049
      %1084 = vrot.lane.b32.xlu0 %v453, 119
      %v1085 = vpop.permute.xlu0 %1084
      %1086 = vrot.lane.b32.xlu0 %v728, 119
      %v1087 = vpop.permute.xlu0 %1086
      %1088 = vrot.lane.b32.xlu0 %v454, 119
      %v1089 = vpop.permute.xlu0 %1088
      %1090 = vrot.lane.b32.xlu0 %v729, 119
      %v1091 = vpop.permute.xlu0 %1090
      %1092 = vrot.lane.b32.xlu0 %v455, 119
      %v1093 = vpop.permute.xlu0 %1092
      %1094 = vrot.lane.b32.xlu0 %v730, 119
      %v1095 = vpop.permute.xlu0 %1094
      %1096 = vrot.lane.b32.xlu0 %v456, 119
      %v1097 = vpop.permute.xlu0 %1096
      %1098 = vrot.lane.b32.xlu0 %v731, 119
      %v1099 = vpop.permute.xlu0 %1098
      %1100 = vrot.lane.b32.xlu0 %v457, 119
      %v1101 = vpop.permute.xlu0 %1100
      %1102 = vrot.lane.b32.xlu0 %v732, 119
      %v1103 = vpop.permute.xlu0 %1102
      %1104 = vrot.lane.b32.xlu0 %v458, 119
      %v1105 = vpop.permute.xlu0 %1104
      %1106 = vrot.lane.b32.xlu0 %v733, 119
      %v1107 = vpop.permute.xlu0 %1106
      %1108 = vrot.lane.b32.xlu0 %v459, 119
      %v1109 = vpop.permute.xlu0 %1108
      %1110 = vrot.lane.b32.xlu0 %v734, 119
      %v1111 = vpop.permute.xlu0 %1110
      %1112 = vrot.lane.b32.xlu0 %v460, 119
      %v1113 = vpop.permute.xlu0 %1112
      %1114 = vrot.lane.b32.xlu0 %v735, 119
      %v1115 = vpop.permute.xlu0 %1114
      %1116 = vrot.lane.b32.xlu0 %v461, 119
      %v1117 = vpop.permute.xlu0 %1116
      %1118 = vrot.lane.b32.xlu0 %v736, 119
      %v1119 = vpop.permute.xlu0 %1118
      %1120 = vrot.lane.b32.xlu0 %v462, 119
      %v1121 = vpop.permute.xlu0 %1120
      %1122 = vrot.lane.b32.xlu0 %v737, 119
      %v1123 = vpop.permute.xlu0 %1122
      %1124 = vrot.lane.b32.xlu0 %v463, 119
      %v1125 = vpop.permute.xlu0 %1124
      %1126 = vrot.lane.b32.xlu0 %v738, 119
      %v1127 = vpop.permute.xlu0 %1126
      %1128 = vrot.lane.b32.xlu0 %v464, 119
      %v1129 = vpop.permute.xlu0 %1128
      %1130 = vrot.lane.b32.xlu0 %v739, 119
      %v1131 = vpop.permute.xlu0 %1130
      %1132 = vrot.lane.b32.xlu0 %v465, 119
      %v1133 = vpop.permute.xlu0 %1132
      %1134 = vrot.lane.b32.xlu0 %v740, 119
      %v1135 = vpop.permute.xlu0 %1134
      %1136 = vrot.lane.b32.xlu0 %v466, 119
      %v1137 = vpop.permute.xlu0 %1136
      %1138 = vrot.lane.b32.xlu0 %v741, 119
      %v1139 = vpop.permute.xlu0 %1138
      %1140 = vrot.lane.b32.xlu0 %v467, 119
      %v1141 = vpop.permute.xlu0 %1140
      %1142 = vrot.lane.b32.xlu0 %v742, 119
      %v1143 = vpop.permute.xlu0 %1142
      %1144 = vrot.lane.b32.xlu0 %v468, 119
      %v1145 = vpop.permute.xlu0 %1144
      %1146 = vrot.lane.b32.xlu0 %v743, 119
      %v1147 = vpop.permute.xlu0 %1146
      %vm1148 = vcmask 973824
      %v1149 = vsel %vm1148, %v1085, %v1087
      %v1150 = vsel %vm1148, %v1089, %v1091
      %v1151 = vsel %vm1148, %v1093, %v1095
      %v1152 = vsel %vm1148, %v1097, %v1099
      %v1153 = vsel %vm1148, %v1101, %v1103
      %v1154 = vsel %vm1148, %v1105, %v1107
      %v1155 = vsel %vm1148, %v1109, %v1111
      %v1156 = vsel %vm1148, %v1113, %v1115
      %v1157 = vsel %vm1148, %v1117, %v1119
      %v1158 = vsel %vm1148, %v1121, %v1123
      %v1159 = vsel %vm1148, %v1125, %v1127
      %v1160 = vsel %vm1148, %v1129, %v1131
      %v1161 = vsel %vm1148, %v1133, %v1135
      %v1162 = vsel %vm1148, %v1137, %v1139
      %v1163 = vsel %vm1148, %v1141, %v1143
      %v1164 = vsel %vm1148, %v1145, %v1147
      %1181 = vmatpush.bf16.msra.mxu0 %v1156
      %1182 = vmatpush.bf16.msra.mxu0 %v1155
      %1183 = vmatpush.bf16.msra.mxu0 %v1154
      %1184 = vmatpush.bf16.msra.mxu0 %v1153
      %1185 = vmatpush.bf16.msra.mxu0 %v1152
      %1186 = vmatpush.bf16.msra.mxu0 %v1151
      %1187 = vmatpush.bf16.msra.mxu0 %v1150
      %1188 = vmatpush.bf16.msra.mxu0 %v1149
      %1189 = vmatmul.bf16.gmra.mxu0 %v1052
      %v1190 = vpop.f32.mrf.mxu0
      %v1191 = vadd.f32 0.0, %v1190
      %v1192 = vpop.f32.mrf.mxu0
      %v1193 = vadd.f32 0.0, %v1192
      %1194 = vmatmul.bf16.gmra.mxu0 %v1054
      %v1195 = vpop.f32.mrf.mxu0
      %v1196 = vadd.f32 0.0, %v1195
      %v1197 = vpop.f32.mrf.mxu0
      %v1198 = vadd.f32 0.0, %v1197
      %1199 = vmatmul.bf16.gmra.mxu0 %v1056
      %v1200 = vpop.f32.mrf.mxu0
      %v1201 = vadd.f32 0.0, %v1200
      %v1202 = vpop.f32.mrf.mxu0
      %v1203 = vadd.f32 0.0, %v1202
      %1204 = vmatmul.bf16.gmra.mxu0 %v1058
      %v1205 = vpop.f32.mrf.mxu0
      %v1206 = vadd.f32 0.0, %v1205
      %v1207 = vpop.f32.mrf.mxu0
      %v1208 = vadd.f32 0.0, %v1207
      %1209 = vmatmul.bf16.gmra.mxu0 %v1060
      %v1210 = vpop.f32.mrf.mxu0
      %v1211 = vadd.f32 0.0, %v1210
      %v1212 = vpop.f32.mrf.mxu0
      %v1213 = vadd.f32 0.0, %v1212
      %1214 = vmatmul.bf16.gmra.mxu0 %v1062
      %v1215 = vpop.f32.mrf.mxu0
      %v1216 = vadd.f32 0.0, %v1215
      %v1217 = vpop.f32.mrf.mxu0
      %v1218 = vadd.f32 0.0, %v1217
      %1219 = vmatmul.bf16.gmra.mxu0 %v1064
      %v1220 = vpop.f32.mrf.mxu0
      %v1221 = vadd.f32 0.0, %v1220
      %v1222 = vpop.f32.mrf.mxu0
      %v1223 = vadd.f32 0.0, %v1222
      %1224 = vmatmul.bf16.gmra.mxu0 %v1066
      %v1225 = vpop.f32.mrf.mxu0
      %v1226 = vadd.f32 0.0, %v1225
      %v1227 = vpop.f32.mrf.mxu0
      %v1228 = vadd.f32 0.0, %v1227
      %1229 = vdwg.mxu0
      %1230 = vmatpush.bf16.msra.mxu0 %v1164
      %1231 = vmatpush.bf16.msra.mxu0 %v1163
      %1232 = vmatpush.bf16.msra.mxu0 %v1162
      %1233 = vmatpush.bf16.msra.mxu0 %v1161
      %1234 = vmatpush.bf16.msra.mxu0 %v1160
      %1235 = vmatpush.bf16.msra.mxu0 %v1159
      %1236 = vmatpush.bf16.msra.mxu0 %v1158
      %1237 = vmatpush.bf16.msra.mxu0 %v1157
      %1238 = vmatmul.bf16.gmra.mxu0 %v1053
      %v1239 = vpop.f32.mrf.mxu0
      %v1240 = vadd.f32 %v1191, %v1239
      %v1241 = vpop.f32.mrf.mxu0
      %v1242 = vadd.f32 %v1193, %v1241
      %1243 = vmatmul.bf16.gmra.mxu0 %v1055
      %v1244 = vpop.f32.mrf.mxu0
      %v1245 = vadd.f32 %v1196, %v1244
      %v1246 = vpop.f32.mrf.mxu0
      %v1247 = vadd.f32 %v1198, %v1246
      %1248 = vmatmul.bf16.gmra.mxu0 %v1057
      %v1249 = vpop.f32.mrf.mxu0
      %v1250 = vadd.f32 %v1201, %v1249
      %v1251 = vpop.f32.mrf.mxu0
      %v1252 = vadd.f32 %v1203, %v1251
      %1253 = vmatmul.bf16.gmra.mxu0 %v1059
      %v1254 = vpop.f32.mrf.mxu0
      %v1255 = vadd.f32 %v1206, %v1254
      %v1256 = vpop.f32.mrf.mxu0
      %v1257 = vadd.f32 %v1208, %v1256
      %1258 = vmatmul.bf16.gmra.mxu0 %v1061
      %v1259 = vpop.f32.mrf.mxu0
      %v1260 = vadd.f32 %v1211, %v1259
      %v1261 = vpop.f32.mrf.mxu0
      %v1262 = vadd.f32 %v1213, %v1261
      %1263 = vmatmul.bf16.gmra.mxu0 %v1063
      %v1264 = vpop.f32.mrf.mxu0
      %v1265 = vadd.f32 %v1216, %v1264
      %v1266 = vpop.f32.mrf.mxu0
      %v1267 = vadd.f32 %v1218, %v1266
      %1268 = vmatmul.bf16.gmra.mxu0 %v1065
      %v1269 = vpop.f32.mrf.mxu0
      %v1270 = vadd.f32 %v1221, %v1269
      %v1271 = vpop.f32.mrf.mxu0
      %v1272 = vadd.f32 %v1223, %v1271
      %1273 = vmatmul.bf16.gmra.mxu0 %v1067
      %v1274 = vpop.f32.mrf.mxu0
      %v1275 = vadd.f32 %v1226, %v1274
      %v1276 = vpop.f32.mrf.mxu0
      %v1277 = vadd.f32 %v1228, %v1276
      %1278 = vdwg.mxu0
      %v1279 = vld [vmem:[#allocation2] sm:$0xff]
      %v1280 = vld [vmem:[#allocation2 + $0x8] sm:$0xff]
      %v1281 = vld [vmem:[#allocation2 + $0x10] sm:$0xff]
      %v1282 = vld [vmem:[#allocation2 + $0x18] sm:$0xff]
      %v1283 = vld [vmem:[#allocation2 + $0x20] sm:$0xff]
      %v1284 = vld [vmem:[#allocation2 + $0x28] sm:$0xff]
      %v1285 = vld [vmem:[#allocation2 + $0x30] sm:$0xff]
      %v1286 = vld [vmem:[#allocation2 + $0x38] sm:$0xff]
      %v1287 = vld [vmem:[#allocation2 + $0x40] sm:$0xff]
      %v1288 = vld [vmem:[#allocation2 + $0x48] sm:$0xff]
      %v1289 = vld [vmem:[#allocation2 + $0x50] sm:$0xff]
      %v1290 = vld [vmem:[#allocation2 + $0x58] sm:$0xff]
      %v1291 = vld [vmem:[#allocation2 + $0x60] sm:$0xff]
      %v1292 = vld [vmem:[#allocation2 + $0x68] sm:$0xff]
      %v1293 = vld [vmem:[#allocation2 + $0x70] sm:$0xff]
      %v1294 = vld [vmem:[#allocation2 + $0x78] sm:$0xff]
      %v1295 = vadd.f32 %v1279, %v1240
      %v1296 = vadd.f32 %v1280, %v1242
      %v1297 = vadd.f32 %v1281, %v1245
      %v1298 = vadd.f32 %v1282, %v1247
      %v1299 = vadd.f32 %v1283, %v1250
      %v1300 = vadd.f32 %v1284, %v1252
      %v1301 = vadd.f32 %v1285, %v1255
      %v1302 = vadd.f32 %v1286, %v1257
      %v1303 = vadd.f32 %v1287, %v1260
      %v1304 = vadd.f32 %v1288, %v1262
      %v1305 = vadd.f32 %v1289, %v1265
      %v1306 = vadd.f32 %v1290, %v1267
      %v1307 = vadd.f32 %v1291, %v1270
      %v1308 = vadd.f32 %v1292, %v1272
      %v1309 = vadd.f32 %v1293, %v1275
      %v1310 = vadd.f32 %v1294, %v1277
      %1311 = vst [vmem:[#allocation2] sm:$0xff] %v1295
      %1312 = vst [vmem:[#allocation2 + $0x8] sm:$0xff] %v1296
      %1313 = vst [vmem:[#allocation2 + $0x10] sm:$0xff] %v1297
      %1314 = vst [vmem:[#allocation2 + $0x18] sm:$0xff] %v1298
      %1315 = vst [vmem:[#allocation2 + $0x20] sm:$0xff] %v1299
      %1316 = vst [vmem:[#allocation2 + $0x28] sm:$0xff] %v1300
      %1317 = vst [vmem:[#allocation2 + $0x30] sm:$0xff] %v1301
      %1318 = vst [vmem:[#allocation2 + $0x38] sm:$0xff] %v1302
      %1319 = vst [vmem:[#allocation2 + $0x40] sm:$0xff] %v1303
      %1320 = vst [vmem:[#allocation2 + $0x48] sm:$0xff] %v1304
      %1321 = vst [vmem:[#allocation2 + $0x50] sm:$0xff] %v1305
      %1322 = vst [vmem:[#allocation2 + $0x58] sm:$0xff] %v1306
      %1323 = vst [vmem:[#allocation2 + $0x60] sm:$0xff] %v1307
      %1324 = vst [vmem:[#allocation2 + $0x68] sm:$0xff] %v1308
      %1325 = vst [vmem:[#allocation2 + $0x70] sm:$0xff] %v1309
      %1326 = vst [vmem:[#allocation2 + $0x78] sm:$0xff] %v1310
      %s1327 = scalar_lea.vmem %s235, 384
      %v1328 = vld [vmem:[%s1327] sm:$0xff]
      %v1329 = vld [vmem:[%s1327 + $0x8] sm:$0xff]
      %v1330 = vld [vmem:[%s1327 + $0x10] sm:$0xff]
      %v1331 = vld [vmem:[%s1327 + $0x18] sm:$0xff]
      %v1332 = vld [vmem:[%s1327 + $0x20] sm:$0xff]
      %v1333 = vld [vmem:[%s1327 + $0x28] sm:$0xff]
      %v1334 = vld [vmem:[%s1327 + $0x30] sm:$0xff]
      %v1335 = vld [vmem:[%s1327 + $0x38] sm:$0xff]
      %v1336 = vld [vmem:[%s1327 + $0x40] sm:$0xff]
      %v1337 = vld [vmem:[%s1327 + $0x48] sm:$0xff]
      %v1338 = vld [vmem:[%s1327 + $0x50] sm:$0xff]
      %v1339 = vld [vmem:[%s1327 + $0x58] sm:$0xff]
      %v1340 = vld [vmem:[%s1327 + $0x60] sm:$0xff]
      %v1341 = vld [vmem:[%s1327 + $0x68] sm:$0xff]
      %v1342 = vld [vmem:[%s1327 + $0x70] sm:$0xff]
      %v1343 = vld [vmem:[%s1327 + $0x78] sm:$0xff]
      %v1360 = vunpack.c.l.b16 %v1328
      %v1361 = vunpack.c.h.b16 %v1328
      %v1362 = vunpack.c.l.b16 %v1329
      %v1363 = vunpack.c.h.b16 %v1329
      %v1364 = vunpack.c.l.b16 %v1330
      %v1365 = vunpack.c.h.b16 %v1330
      %v1366 = vunpack.c.l.b16 %v1331
      %v1367 = vunpack.c.h.b16 %v1331
      %v1368 = vunpack.c.l.b16 %v1332
      %v1369 = vunpack.c.h.b16 %v1332
      %v1370 = vunpack.c.l.b16 %v1333
      %v1371 = vunpack.c.h.b16 %v1333
      %v1372 = vunpack.c.l.b16 %v1334
      %v1373 = vunpack.c.h.b16 %v1334
      %v1374 = vunpack.c.l.b16 %v1335
      %v1375 = vunpack.c.h.b16 %v1335
      %v1376 = vunpack.c.l.b16 %v1336
      %v1377 = vunpack.c.h.b16 %v1336
      %v1378 = vunpack.c.l.b16 %v1337
      %v1379 = vunpack.c.h.b16 %v1337
      %v1380 = vunpack.c.l.b16 %v1338
      %v1381 = vunpack.c.h.b16 %v1338
      %v1382 = vunpack.c.l.b16 %v1339
      %v1383 = vunpack.c.h.b16 %v1339
      %v1384 = vunpack.c.l.b16 %v1340
      %v1385 = vunpack.c.h.b16 %v1340
      %v1386 = vunpack.c.l.b16 %v1341
      %v1387 = vunpack.c.h.b16 %v1341
      %v1388 = vunpack.c.l.b16 %v1342
      %v1389 = vunpack.c.h.b16 %v1342
      %v1390 = vunpack.c.l.b16 %v1343
      %v1391 = vunpack.c.h.b16 %v1343
      %v1392 = vpack.c.b16 %v1362, %v1360
      %v1393 = vpack.c.b16 %v1363, %v1361
      %v1394 = vpack.c.b16 %v1366, %v1364
      %v1395 = vpack.c.b16 %v1367, %v1365
      %v1396 = vpack.c.b16 %v1370, %v1368
      %v1397 = vpack.c.b16 %v1371, %v1369
      %v1398 = vpack.c.b16 %v1374, %v1372
      %v1399 = vpack.c.b16 %v1375, %v1373
      %v1400 = vpack.c.b16 %v1378, %v1376
      %v1401 = vpack.c.b16 %v1379, %v1377
      %v1402 = vpack.c.b16 %v1382, %v1380
      %v1403 = vpack.c.b16 %v1383, %v1381
      %v1404 = vpack.c.b16 %v1386, %v1384
      %v1405 = vpack.c.b16 %v1387, %v1385
      %v1406 = vpack.c.b16 %v1390, %v1388
      %v1407 = vpack.c.b16 %v1391, %v1389
      %1424 = vrot.lane.b32.xlu0 %v453, 118
      %v1425 = vpop.permute.xlu0 %1424
      %1426 = vrot.lane.b32.xlu0 %v728, 118
      %v1427 = vpop.permute.xlu0 %1426
      %1428 = vrot.lane.b32.xlu0 %v454, 118
      %v1429 = vpop.permute.xlu0 %1428
      %1430 = vrot.lane.b32.xlu0 %v729, 118
      %v1431 = vpop.permute.xlu0 %1430
      %1432 = vrot.lane.b32.xlu0 %v455, 118
      %v1433 = vpop.permute.xlu0 %1432
      %1434 = vrot.lane.b32.xlu0 %v730, 118
      %v1435 = vpop.permute.xlu0 %1434
      %1436 = vrot.lane.b32.xlu0 %v456, 118
      %v1437 = vpop.permute.xlu0 %1436
      %1438 = vrot.lane.b32.xlu0 %v731, 118
      %v1439 = vpop.permute.xlu0 %1438
      %1440 = vrot.lane.b32.xlu0 %v457, 118
      %v1441 = vpop.permute.xlu0 %1440
      %1442 = vrot.lane.b32.xlu0 %v732, 118
      %v1443 = vpop.permute.xlu0 %1442
      %1444 = vrot.lane.b32.xlu0 %v458, 118
      %v1445 = vpop.permute.xlu0 %1444
      %1446 = vrot.lane.b32.xlu0 %v733, 118
      %v1447 = vpop.permute.xlu0 %1446
      %1448 = vrot.lane.b32.xlu0 %v459, 118
      %v1449 = vpop.permute.xlu0 %1448
      %1450 = vrot.lane.b32.xlu0 %v734, 118
      %v1451 = vpop.permute.xlu0 %1450
      %1452 = vrot.lane.b32.xlu0 %v460, 118
      %v1453 = vpop.permute.xlu0 %1452
      %1454 = vrot.lane.b32.xlu0 %v735, 118
      %v1455 = vpop.permute.xlu0 %1454
      %1456 = vrot.lane.b32.xlu0 %v461, 118
      %v1457 = vpop.permute.xlu0 %1456
      %1458 = vrot.lane.b32.xlu0 %v736, 118
      %v1459 = vpop.permute.xlu0 %1458
      %1460 = vrot.lane.b32.xlu0 %v462, 118
      %v1461 = vpop.permute.xlu0 %1460
      %1462 = vrot.lane.b32.xlu0 %v737, 118
      %v1463 = vpop.permute.xlu0 %1462
      %1464 = vrot.lane.b32.xlu0 %v463, 118
      %v1465 = vpop.permute.xlu0 %1464
      %1466 = vrot.lane.b32.xlu0 %v738, 118
      %v1467 = vpop.permute.xlu0 %1466
      %1468 = vrot.lane.b32.xlu0 %v464, 118
      %v1469 = vpop.permute.xlu0 %1468
      %1470 = vrot.lane.b32.xlu0 %v739, 118
      %v1471 = vpop.permute.xlu0 %1470
      %1472 = vrot.lane.b32.xlu0 %v465, 118
      %v1473 = vpop.permute.xlu0 %1472
      %1474 = vrot.lane.b32.xlu0 %v740, 118
      %v1475 = vpop.permute.xlu0 %1474
      %1476 = vrot.lane.b32.xlu0 %v466, 118
      %v1477 = vpop.permute.xlu0 %1476
      %1478 = vrot.lane.b32.xlu0 %v741, 118
      %v1479 = vpop.permute.xlu0 %1478
      %1480 = vrot.lane.b32.xlu0 %v467, 118
      %v1481 = vpop.permute.xlu0 %1480
      %1482 = vrot.lane.b32.xlu0 %v742, 118
      %v1483 = vpop.permute.xlu0 %1482
      %1484 = vrot.lane.b32.xlu0 %v468, 118
      %v1485 = vpop.permute.xlu0 %1484
      %1486 = vrot.lane.b32.xlu0 %v743, 118
      %v1487 = vpop.permute.xlu0 %1486
      %vm1488 = vcmask 965632
      %v1489 = vsel %vm1488, %v1425, %v1427
      %v1490 = vsel %vm1488, %v1429, %v1431
      %v1491 = vsel %vm1488, %v1433, %v1435
      %v1492 = vsel %vm1488, %v1437, %v1439
      %v1493 = vsel %vm1488, %v1441, %v1443
      %v1494 = vsel %vm1488, %v1445, %v1447
      %v1495 = vsel %vm1488, %v1449, %v1451
      %v1496 = vsel %vm1488, %v1453, %v1455
      %v1497 = vsel %vm1488, %v1457, %v1459
      %v1498 = vsel %vm1488, %v1461, %v1463
      %v1499 = vsel %vm1488, %v1465, %v1467
      %v1500 = vsel %vm1488, %v1469, %v1471
      %v1501 = vsel %vm1488, %v1473, %v1475
      %v1502 = vsel %vm1488, %v1477, %v1479
      %v1503 = vsel %vm1488, %v1481, %v1483
      %v1504 = vsel %vm1488, %v1485, %v1487
      %1521 = vmatpush.bf16.msra.mxu0 %v1496
      %1522 = vmatpush.bf16.msra.mxu0 %v1495
      %1523 = vmatpush.bf16.msra.mxu0 %v1494
      %1524 = vmatpush.bf16.msra.mxu0 %v1493
      %1525 = vmatpush.bf16.msra.mxu0 %v1492
      %1526 = vmatpush.bf16.msra.mxu0 %v1491
      %1527 = vmatpush.bf16.msra.mxu0 %v1490
      %1528 = vmatpush.bf16.msra.mxu0 %v1489
      %1529 = vmatmul.bf16.gmra.mxu0 %v1392
      %v1530 = vpop.f32.mrf.mxu0
      %v1531 = vadd.f32 0.0, %v1530
      %v1532 = vpop.f32.mrf.mxu0
      %v1533 = vadd.f32 0.0, %v1532
      %1534 = vmatmul.bf16.gmra.mxu0 %v1394
      %v1535 = vpop.f32.mrf.mxu0
      %v1536 = vadd.f32 0.0, %v1535
      %v1537 = vpop.f32.mrf.mxu0
      %v1538 = vadd.f32 0.0, %v1537
      %1539 = vmatmul.bf16.gmra.mxu0 %v1396
      %v1540 = vpop.f32.mrf.mxu0
      %v1541 = vadd.f32 0.0, %v1540
      %v1542 = vpop.f32.mrf.mxu0
      %v1543 = vadd.f32 0.0, %v1542
      %1544 = vmatmul.bf16.gmra.mxu0 %v1398
      %v1545 = vpop.f32.mrf.mxu0
      %v1546 = vadd.f32 0.0, %v1545
      %v1547 = vpop.f32.mrf.mxu0
      %v1548 = vadd.f32 0.0, %v1547
      %1549 = vmatmul.bf16.gmra.mxu0 %v1400
      %v1550 = vpop.f32.mrf.mxu0
      %v1551 = vadd.f32 0.0, %v1550
      %v1552 = vpop.f32.mrf.mxu0
      %v1553 = vadd.f32 0.0, %v1552
      %1554 = vmatmul.bf16.gmra.mxu0 %v1402
      %v1555 = vpop.f32.mrf.mxu0
      %v1556 = vadd.f32 0.0, %v1555
      %v1557 = vpop.f32.mrf.mxu0
      %v1558 = vadd.f32 0.0, %v1557
      %1559 = vmatmul.bf16.gmra.mxu0 %v1404
      %v1560 = vpop.f32.mrf.mxu0
      %v1561 = vadd.f32 0.0, %v1560
      %v1562 = vpop.f32.mrf.mxu0
      %v1563 = vadd.f32 0.0, %v1562
      %1564 = vmatmul.bf16.gmra.mxu0 %v1406
      %v1565 = vpop.f32.mrf.mxu0
      %v1566 = vadd.f32 0.0, %v1565
      %v1567 = vpop.f32.mrf.mxu0
      %v1568 = vadd.f32 0.0, %v1567
      %1569 = vdwg.mxu0
      %1570 = vmatpush.bf16.msra.mxu0 %v1504
      %1571 = vmatpush.bf16.msra.mxu0 %v1503
      %1572 = vmatpush.bf16.msra.mxu0 %v1502
      %1573 = vmatpush.bf16.msra.mxu0 %v1501
      %1574 = vmatpush.bf16.msra.mxu0 %v1500
      %1575 = vmatpush.bf16.msra.mxu0 %v1499
      %1576 = vmatpush.bf16.msra.mxu0 %v1498
      %1577 = vmatpush.bf16.msra.mxu0 %v1497
      %1578 = vmatmul.bf16.gmra.mxu0 %v1393
      %v1579 = vpop.f32.mrf.mxu0
      %v1580 = vadd.f32 %v1531, %v1579
      %v1581 = vpop.f32.mrf.mxu0
      %v1582 = vadd.f32 %v1533, %v1581
      %1583 = vmatmul.bf16.gmra.mxu0 %v1395
      %v1584 = vpop.f32.mrf.mxu0
      %v1585 = vadd.f32 %v1536, %v1584
      %v1586 = vpop.f32.mrf.mxu0
      %v1587 = vadd.f32 %v1538, %v1586
      %1588 = vmatmul.bf16.gmra.mxu0 %v1397
      %v1589 = vpop.f32.mrf.mxu0
      %v1590 = vadd.f32 %v1541, %v1589
      %v1591 = vpop.f32.mrf.mxu0
      %v1592 = vadd.f32 %v1543, %v1591
      %1593 = vmatmul.bf16.gmra.mxu0 %v1399
      %v1594 = vpop.f32.mrf.mxu0
      %v1595 = vadd.f32 %v1546, %v1594
      %v1596 = vpop.f32.mrf.mxu0
      %v1597 = vadd.f32 %v1548, %v1596
      %1598 = vmatmul.bf16.gmra.mxu0 %v1401
      %v1599 = vpop.f32.mrf.mxu0
      %v1600 = vadd.f32 %v1551, %v1599
      %v1601 = vpop.f32.mrf.mxu0
      %v1602 = vadd.f32 %v1553, %v1601
      %1603 = vmatmul.bf16.gmra.mxu0 %v1403
      %v1604 = vpop.f32.mrf.mxu0
      %v1605 = vadd.f32 %v1556, %v1604
      %v1606 = vpop.f32.mrf.mxu0
      %v1607 = vadd.f32 %v1558, %v1606
      %1608 = vmatmul.bf16.gmra.mxu0 %v1405
      %v1609 = vpop.f32.mrf.mxu0
      %v1610 = vadd.f32 %v1561, %v1609
      %v1611 = vpop.f32.mrf.mxu0
      %v1612 = vadd.f32 %v1563, %v1611
      %1613 = vmatmul.bf16.gmra.mxu0 %v1407
      %v1614 = vpop.f32.mrf.mxu0
      %v1615 = vadd.f32 %v1566, %v1614
      %v1616 = vpop.f32.mrf.mxu0
      %v1617 = vadd.f32 %v1568, %v1616
      %1618 = vdwg.mxu0
      %v1619 = vld [vmem:[#allocation2] sm:$0xff]
      %v1620 = vld [vmem:[#allocation2 + $0x8] sm:$0xff]
      %v1621 = vld [vmem:[#allocation2 + $0x10] sm:$0xff]
      %v1622 = vld [vmem:[#allocation2 + $0x18] sm:$0xff]
      %v1623 = vld [vmem:[#allocation2 + $0x20] sm:$0xff]
      %v1624 = vld [vmem:[#allocation2 + $0x28] sm:$0xff]
      %v1625 = vld [vmem:[#allocation2 + $0x30] sm:$0xff]
      %v1626 = vld [vmem:[#allocation2 + $0x38] sm:$0xff]
      %v1627 = vld [vmem:[#allocation2 + $0x40] sm:$0xff]
      %v1628 = vld [vmem:[#allocation2 + $0x48] sm:$0xff]
      %v1629 = vld [vmem:[#allocation2 + $0x50] sm:$0xff]
      %v1630 = vld [vmem:[#allocation2 + $0x58] sm:$0xff]
      %v1631 = vld [vmem:[#allocation2 + $0x60] sm:$0xff]
      %v1632 = vld [vmem:[#allocation2 + $0x68] sm:$0xff]
      %v1633 = vld [vmem:[#allocation2 + $0x70] sm:$0xff]
      %v1634 = vld [vmem:[#allocation2 + $0x78] sm:$0xff]
      %v1635 = vadd.f32 %v1619, %v1580
      %v1636 = vadd.f32 %v1620, %v1582
      %v1637 = vadd.f32 %v1621, %v1585
      %v1638 = vadd.f32 %v1622, %v1587
      %v1639 = vadd.f32 %v1623, %v1590
      %v1640 = vadd.f32 %v1624, %v1592
      %v1641 = vadd.f32 %v1625, %v1595
      %v1642 = vadd.f32 %v1626, %v1597
      %v1643 = vadd.f32 %v1627, %v1600
      %v1644 = vadd.f32 %v1628, %v1602
      %v1645 = vadd.f32 %v1629, %v1605
      %v1646 = vadd.f32 %v1630, %v1607
      %v1647 = vadd.f32 %v1631, %v1610
      %v1648 = vadd.f32 %v1632, %v1612
      %v1649 = vadd.f32 %v1633, %v1615
      %v1650 = vadd.f32 %v1634, %v1617
      %1651 = vst [vmem:[#allocation2] sm:$0xff] %v1635
      %1652 = vst [vmem:[#allocation2 + $0x8] sm:$0xff] %v1636
      %1653 = vst [vmem:[#allocation2 + $0x10] sm:$0xff] %v1637
      %1654 = vst [vmem:[#allocation2 + $0x18] sm:$0xff] %v1638
      %1655 = vst [vmem:[#allocation2 + $0x20] sm:$0xff] %v1639
      %1656 = vst [vmem:[#allocation2 + $0x28] sm:$0xff] %v1640
      %1657 = vst [vmem:[#allocation2 + $0x30] sm:$0xff] %v1641
      %1658 = vst [vmem:[#allocation2 + $0x38] sm:$0xff] %v1642
      %1659 = vst [vmem:[#allocation2 + $0x40] sm:$0xff] %v1643
      %1660 = vst [vmem:[#allocation2 + $0x48] sm:$0xff] %v1644
      %1661 = vst [vmem:[#allocation2 + $0x50] sm:$0xff] %v1645
      %1662 = vst [vmem:[#allocation2 + $0x58] sm:$0xff] %v1646
      %1663 = vst [vmem:[#allocation2 + $0x60] sm:$0xff] %v1647
      %1664 = vst [vmem:[#allocation2 + $0x68] sm:$0xff] %v1648
      %1665 = vst [vmem:[#allocation2 + $0x70] sm:$0xff] %v1649
      %1666 = vst [vmem:[#allocation2 + $0x78] sm:$0xff] %v1650
      %v1667 = vld [vmem:[#allocation2] sm:$0xff]
      %v1668 = vld [vmem:[#allocation2 + $0x8] sm:$0xff]
      %v1669 = vld [vmem:[#allocation2 + $0x10] sm:$0xff]
      %v1670 = vld [vmem:[#allocation2 + $0x18] sm:$0xff]
      %v1671 = vld [vmem:[#allocation2 + $0x20] sm:$0xff]
      %v1672 = vld [vmem:[#allocation2 + $0x28] sm:$0xff]
      %v1673 = vld [vmem:[#allocation2 + $0x30] sm:$0xff]
      %v1674 = vld [vmem:[#allocation2 + $0x38] sm:$0xff]
      %v1675 = vld [vmem:[#allocation2 + $0x40] sm:$0xff]
      %v1676 = vld [vmem:[#allocation2 + $0x48] sm:$0xff]
      %v1677 = vld [vmem:[#allocation2 + $0x50] sm:$0xff]
      %v1678 = vld [vmem:[#allocation2 + $0x58] sm:$0xff]
      %v1679 = vld [vmem:[#allocation2 + $0x60] sm:$0xff]
      %v1680 = vld [vmem:[#allocation2 + $0x68] sm:$0xff]
      %v1681 = vld [vmem:[#allocation2 + $0x70] sm:$0xff]
      %v1682 = vld [vmem:[#allocation2 + $0x78] sm:$0xff]
      %v1683 = vld [vmem:[%s241] sm:$0xff]
      %v1684 = vld [vmem:[%s241 + $0x8] sm:$0xff]
      %v1685 = vld [vmem:[%s241 + $0x10] sm:$0xff]
      %v1686 = vld [vmem:[%s241 + $0x18] sm:$0xff]
      %v1687 = vld [vmem:[%s241 + $0x20] sm:$0xff]
      %v1688 = vld [vmem:[%s241 + $0x28] sm:$0xff]
      %v1689 = vld [vmem:[%s241 + $0x30] sm:$0xff]
      %v1690 = vld [vmem:[%s241 + $0x38] sm:$0xff]
      %v1691 = vld [vmem:[%s241 + $0x40] sm:$0xff]
      %v1692 = vld [vmem:[%s241 + $0x48] sm:$0xff]
      %v1693 = vld [vmem:[%s241 + $0x50] sm:$0xff]
      %v1694 = vld [vmem:[%s241 + $0x58] sm:$0xff]
      %v1695 = vld [vmem:[%s241 + $0x60] sm:$0xff]
      %v1696 = vld [vmem:[%s241 + $0x68] sm:$0xff]
      %v1697 = vld [vmem:[%s241 + $0x70] sm:$0xff]
      %v1698 = vld [vmem:[%s241 + $0x78] sm:$0xff]
      %1700 = vset.pattern.permute.xlu0 0
      %1701 = vperm.xlu0 %1700, %v1683
      %v1702 = vpop.permute.xlu0 %1701
      %1705 = vset.pattern.permute.xlu0 0
      %1706 = vperm.xlu0 %1705, %v1684
      %v1707 = vpop.permute.xlu0 %1706
      %1710 = vset.pattern.permute.xlu0 0
      %1711 = vperm.xlu0 %1710, %v1685
      %v1712 = vpop.permute.xlu0 %1711
      %1715 = vset.pattern.permute.xlu0 0
      %1716 = vperm.xlu0 %1715, %v1686
      %v1717 = vpop.permute.xlu0 %1716
      %1720 = vset.pattern.permute.xlu0 0
      %1721 = vperm.xlu0 %1720, %v1687
      %v1722 = vpop.permute.xlu0 %1721
      %1725 = vset.pattern.permute.xlu0 0
      %1726 = vperm.xlu0 %1725, %v1688
      %v1727 = vpop.permute.xlu0 %1726
      %1730 = vset.pattern.permute.xlu0 0
      %1731 = vperm.xlu0 %1730, %v1689
      %v1732 = vpop.permute.xlu0 %1731
      %1735 = vset.pattern.permute.xlu0 0
      %1736 = vperm.xlu0 %1735, %v1690
      %v1737 = vpop.permute.xlu0 %1736
      %1740 = vset.pattern.permute.xlu0 0
      %1741 = vperm.xlu0 %1740, %v1691
      %v1742 = vpop.permute.xlu0 %1741
      %1745 = vset.pattern.permute.xlu0 0
      %1746 = vperm.xlu0 %1745, %v1692
      %v1747 = vpop.permute.xlu0 %1746
      %1750 = vset.pattern.permute.xlu0 0
      %1751 = vperm.xlu0 %1750, %v1693
      %v1752 = vpop.permute.xlu0 %1751
      %1755 = vset.pattern.permute.xlu0 0
      %1756 = vperm.xlu0 %1755, %v1694
      %v1757 = vpop.permute.xlu0 %1756
      %1760 = vset.pattern.permute.xlu0 0
      %1761 = vperm.xlu0 %1760, %v1695
      %v1762 = vpop.permute.xlu0 %1761
      %1765 = vset.pattern.permute.xlu0 0
      %1766 = vperm.xlu0 %1765, %v1696
      %v1767 = vpop.permute.xlu0 %1766
      %1770 = vset.pattern.permute.xlu0 0
      %1771 = vperm.xlu0 %1770, %v1697
      %v1772 = vpop.permute.xlu0 %1771
      %1775 = vset.pattern.permute.xlu0 0
      %1776 = vperm.xlu0 %1775, %v1698
      %v1777 = vpop.permute.xlu0 %1776
      %v1779 = vadd.f32 %v1667, %v1702
      %v1780 = vadd.f32 %v1668, %v1707
      %v1781 = vadd.f32 %v1669, %v1712
      %v1782 = vadd.f32 %v1670, %v1717
      %v1783 = vadd.f32 %v1671, %v1722
      %v1784 = vadd.f32 %v1672, %v1727
      %v1785 = vadd.f32 %v1673, %v1732
      %v1786 = vadd.f32 %v1674, %v1737
      %v1787 = vadd.f32 %v1675, %v1742
      %v1788 = vadd.f32 %v1676, %v1747
      %v1789 = vadd.f32 %v1677, %v1752
      %v1790 = vadd.f32 %v1678, %v1757
      %v1791 = vadd.f32 %v1679, %v1762
      %v1792 = vadd.f32 %v1680, %v1767
      %v1793 = vadd.f32 %v1681, %v1772
      %v1794 = vadd.f32 %v1682, %v1777
      %vm1795 = vcmp.ge.f32.partialorder %v1779, 0.0
      %vm1796 = vcmp.ge.f32.partialorder %v1780, 0.0
      %vm1797 = vcmp.ge.f32.partialorder %v1781, 0.0
      %vm1798 = vcmp.ge.f32.partialorder %v1782, 0.0
      %vm1799 = vcmp.ge.f32.partialorder %v1783, 0.0
      %vm1800 = vcmp.ge.f32.partialorder %v1784, 0.0
      %vm1801 = vcmp.ge.f32.partialorder %v1785, 0.0
      %vm1802 = vcmp.ge.f32.partialorder %v1786, 0.0
      %vm1803 = vcmp.ge.f32.partialorder %v1787, 0.0
      %vm1804 = vcmp.ge.f32.partialorder %v1788, 0.0
      %vm1805 = vcmp.ge.f32.partialorder %v1789, 0.0
      %vm1806 = vcmp.ge.f32.partialorder %v1790, 0.0
      %vm1807 = vcmp.ge.f32.partialorder %v1791, 0.0
      %vm1808 = vcmp.ge.f32.partialorder %v1792, 0.0
      %vm1809 = vcmp.ge.f32.partialorder %v1793, 0.0
      %vm1810 = vcmp.ge.f32.partialorder %v1794, 0.0
      %v1811 = vmul.f32 %v1779, 0.2
      %v1812 = vmul.f32 %v1780, 0.2
      %v1813 = vmul.f32 %v1781, 0.2
      %v1814 = vmul.f32 %v1782, 0.2
      %v1815 = vmul.f32 %v1783, 0.2
      %v1816 = vmul.f32 %v1784, 0.2
      %v1817 = vmul.f32 %v1785, 0.2
      %v1818 = vmul.f32 %v1786, 0.2
      %v1819 = vmul.f32 %v1787, 0.2
      %v1820 = vmul.f32 %v1788, 0.2
      %v1821 = vmul.f32 %v1789, 0.2
      %v1822 = vmul.f32 %v1790, 0.2
      %v1823 = vmul.f32 %v1791, 0.2
      %v1824 = vmul.f32 %v1792, 0.2
      %v1825 = vmul.f32 %v1793, 0.2
      %v1826 = vmul.f32 %v1794, 0.2
      %v1827 = vsel %vm1795, %v1779, %v1811
      %v1828 = vsel %vm1796, %v1780, %v1812
      %v1829 = vsel %vm1797, %v1781, %v1813
      %v1830 = vsel %vm1798, %v1782, %v1814
      %v1831 = vsel %vm1799, %v1783, %v1815
      %v1832 = vsel %vm1800, %v1784, %v1816
      %v1833 = vsel %vm1801, %v1785, %v1817
      %v1834 = vsel %vm1802, %v1786, %v1818
      %v1835 = vsel %vm1803, %v1787, %v1819
      %v1836 = vsel %vm1804, %v1788, %v1820
      %v1837 = vsel %vm1805, %v1789, %v1821
      %v1838 = vsel %vm1806, %v1790, %v1822
      %v1839 = vsel %vm1807, %v1791, %v1823
      %v1840 = vsel %vm1808, %v1792, %v1824
      %v1841 = vsel %vm1809, %v1793, %v1825
      %v1842 = vsel %vm1810, %v1794, %v1826
      %v1843 = vpack.c.bf16 %v1827, %v1827
      %v1844 = vpack.c.bf16 %v1828, %v1828
      %v1845 = vpack.c.bf16 %v1829, %v1829
      %v1846 = vpack.c.bf16 %v1830, %v1830
      %v1847 = vpack.c.bf16 %v1831, %v1831
      %v1848 = vpack.c.bf16 %v1832, %v1832
      %v1849 = vpack.c.bf16 %v1833, %v1833
      %v1850 = vpack.c.bf16 %v1834, %v1834
      %v1851 = vpack.c.bf16 %v1835, %v1835
      %v1852 = vpack.c.bf16 %v1836, %v1836
      %v1853 = vpack.c.bf16 %v1837, %v1837
      %v1854 = vpack.c.bf16 %v1838, %v1838
      %v1855 = vpack.c.bf16 %v1839, %v1839
      %v1856 = vpack.c.bf16 %v1840, %v1840
      %v1857 = vpack.c.bf16 %v1841, %v1841
      %v1858 = vpack.c.bf16 %v1842, %v1842
      %1859 = vst [vmem:[%s254] sm:$0xf] %v1843
      %1860 = vst [vmem:[%s254 + $0x4] sm:$0xf] %v1844
      %1861 = vst [vmem:[%s254 + $0x8] sm:$0xf] %v1845
      %1862 = vst [vmem:[%s254 + $0xc] sm:$0xf] %v1846
      %1863 = vst [vmem:[%s254 + $0x10] sm:$0xf] %v1847
      %1864 = vst [vmem:[%s254 + $0x14] sm:$0xf] %v1848
      %1865 = vst [vmem:[%s254 + $0x18] sm:$0xf] %v1849
      %1866 = vst [vmem:[%s254 + $0x1c] sm:$0xf] %v1850
      %1867 = vst [vmem:[%s254 + $0x20] sm:$0xf] %v1851
      %1868 = vst [vmem:[%s254 + $0x24] sm:$0xf] %v1852
      %1869 = vst [vmem:[%s254 + $0x28] sm:$0xf] %v1853
      %1870 = vst [vmem:[%s254 + $0x2c] sm:$0xf] %v1854
      %1871 = vst [vmem:[%s254 + $0x30] sm:$0xf] %v1855
      %1872 = vst [vmem:[%s254 + $0x34] sm:$0xf] %v1856
      %1873 = vst [vmem:[%s254 + $0x38] sm:$0xf] %v1857
      %1874 = vst [vmem:[%s254 + $0x3c] sm:$0xf] %v1858
      %s1875 = smul.u32 16, %s19
      %p1876 = scmp.lt.s32.totalorder %s20, 1
      %s1877 = scalar_select %p1876, %s20, 1
      %p1878 = scmp.lt.s32.totalorder %s1875, 15
      %s1879 = scalar_select %p1878, %s1875, 15
      %p1880 = scmp.lt.s32.totalorder %s21, 0
      %s1881 = scalar_select %p1880, %s21, 0
      %s1882 = sadd.s32 %s1881, %s1879
      %s1883 = smul.addr %s1877, 16
      %s1884 = sadd.s32 %s1882, %s1883
      %s1885 = smul.addr %s1884, 4
      %s1886 = scalar_lea.vmem %s3, %s1885
      // Predicated region
      $region33: #{age_encoder_forward.6} parent=31 // pred_check
        %p1887 = pneg %p133
      $region34: #{age_encoder_forward.6} parent=31 // pred_check_branch
        %1889 = sbr.rel (%p1887) target = $region36
      $region35: #{age_encoder_forward.6} parent=31 // pred_region
        %s1890 = smul.u32 16, %s19
      $region36: #{age_encoder_forward.6} parent=31 // pred_fallthru
        _
    $region32: #{age_encoder_forward.6} parent=5 // pred_fallthru
      _
    %p1891 = scmp.le.s32.totalorder 2, %s9
    // Predicated region
    $region37: #{age_encoder_forward.6} parent=5 // pred_check
      %p1892 = pneg %p1891
    $region38: #{age_encoder_forward.6} parent=5 // pred_check_branch
      %1894 = sbr.rel (%p1892) target = $region40
    $region39: #{age_encoder_forward.6} parent=5 // pred_region
      %s1895 = ssub.s32 %s9, 2
      // Predicated region
      $region41: #{age_encoder_forward.6} parent=39 // pred_check
        %p1896 = pneg %p139
      $region42: #{age_encoder_forward.6} parent=39 // pred_check_branch
        %1898 = sbr.rel (%p1896) target = $region44
      $region43: #{age_encoder_forward.6} parent=39 // pred_region
        %s1899 = smul.u32 16, %s22
        %p1900 = scmp.lt.s32.totalorder %s23, 1
        %s1901 = scalar_select %p1900, %s23, 1
        %p1902 = scmp.lt.s32.totalorder %s1899, 15
        %s1903 = scalar_select %p1902, %s1899, 15
        %p1904 = scmp.lt.s32.totalorder %s24, 0
        %s1905 = scalar_select %p1904, %s24, 0
        %s1906 = sadd.s32 %s1905, %s1903
        %s1907 = smul.addr %s1901, 16
        %s1908 = sadd.s32 %s1906, %s1907
        %s1909 = smul.addr %s1908, 4
        %s1910 = scalar_lea.vmem %s3, %s1909
      $region44: #{age_encoder_forward.6} parent=39 // pred_fallthru
        _
    $region40: #{age_encoder_forward.6} parent=5 // pred_fallthru
      _
  $region6: #{age_encoder_forward.6} parent=0 // loop_footer
    %s13 = sadd.s32 1, %s9
  $region7: #{age_encoder_forward.6} parent=0 // loop_footer_branch
    %8 = sbr.rel target = $region3
  $region8: #{age_encoder_forward.6} parent=0 // loop_exit
    _

// kernel: age_encoder_forward.7
$region0: #{age_encoder_forward.7}
  #allocation0 [shape = 'u32[]', space=smem, size = 0x4, offset = 0x4, fixed_abs, tag = 'smem constant byte address 0x4 - core index']
  #allocation1 [shape = 'u32[72,128]{1,0:T(1,128)}', space=vmem, size = 0x9000, scoped, tag = 'internal scratch']
  %s0 = inlined_call_operand.vmem [shape: bf16[2,128,64], index: 0, kind: input, shape index: {}]
  %s1 = inlined_call_operand.vmem [shape: f32[128,8], index: 1, kind: input, shape index: {}]
  %s2 = inlined_call_operand.vmem [shape: f32[1,8], index: 2, kind: input, shape index: {}]
  %s3 = inlined_call_operand.hbm [shape: f32[2,8], index: 3, kind: output, shape index: {}]
  %s4 = sld [smem:[#allocation0]]
  $region22: #{age_encoder_forward.7} parent=0
    _
  %s6 = ssub.s32 1, %s4
  %s7 = scalar_select 0, %s6, %s4
  $region1: #{age_encoder_forward.7} parent=0
    #allocation2 [shape = 'u8[1024]{0}', space=vmem, size = 0x400, scoped, tag = 'output window, operand 0, single buffered']
    #allocation3 [shape = 's32[1]{0}', space=sflag, size = 0x4, scoped, tag = 'scoped memory for age_encoder_forward.7']
    %8 = vsyncpa [#allocation3], 0
    // Predicated region
    $region2: #{age_encoder_forward.7} parent=1 // pred_check
      _
    $region3: #{age_encoder_forward.7} parent=1 // pred_check_branch
      %10 = sbr.rel (0) target = $region5
    $region4: #{age_encoder_forward.7} parent=1 // pred_region
      _
    $region5: #{age_encoder_forward.7} parent=1 // pred_fallthru
      _
    // Predicated region
    $region6: #{age_encoder_forward.7} parent=1 // pred_check
      _
    $region7: #{age_encoder_forward.7} parent=1 // pred_check_branch
      %12 = sbr.rel (0) target = $region9
    $region8: #{age_encoder_forward.7} parent=1 // pred_region
      _
    $region9: #{age_encoder_forward.7} parent=1 // pred_fallthru
      _
    // Predicated region
    $region10: #{age_encoder_forward.7} parent=1 // pred_check
      _
    $region11: #{age_encoder_forward.7} parent=1 // pred_check_branch
      %14 = sbr.rel (0) target = $region13
    $region12: #{age_encoder_forward.7} parent=1 // pred_region
      _
    $region13: #{age_encoder_forward.7} parent=1 // pred_fallthru
      _
    %v15 = vld [vmem:[%s0] sm:$0xf]
    %v16 = vld [vmem:[%s0 + $0x4] sm:$0xf]
    %v17 = vld [vmem:[%s0 + $0x8] sm:$0xf]
    %v18 = vld [vmem:[%s0 + $0xc] sm:$0xf]
    %v19 = vld [vmem:[%s0 + $0x10] sm:$0xf]
    %v20 = vld [vmem:[%s0 + $0x14] sm:$0xf]
    %v21 = vld [vmem:[%s0 + $0x18] sm:$0xf]
    %v22 = vld [vmem:[%s0 + $0x1c] sm:$0xf]
    %v23 = vld [vmem:[%s0 + $0x20] sm:$0xf]
    %v24 = vld [vmem:[%s0 + $0x24] sm:$0xf]
    %v25 = vld [vmem:[%s0 + $0x28] sm:$0xf]
    %v26 = vld [vmem:[%s0 + $0x2c] sm:$0xf]
    %v27 = vld [vmem:[%s0 + $0x30] sm:$0xf]
    %v28 = vld [vmem:[%s0 + $0x34] sm:$0xf]
    %v29 = vld [vmem:[%s0 + $0x38] sm:$0xf]
    %v30 = vld [vmem:[%s0 + $0x3c] sm:$0xf]
    %v31 = vld [vmem:[%s0 + $0x40] sm:$0xf]
    %v32 = vld [vmem:[%s0 + $0x44] sm:$0xf]
    %v33 = vld [vmem:[%s0 + $0x48] sm:$0xf]
    %v34 = vld [vmem:[%s0 + $0x4c] sm:$0xf]
    %v35 = vld [vmem:[%s0 + $0x50] sm:$0xf]
    %v36 = vld [vmem:[%s0 + $0x54] sm:$0xf]
    %v37 = vld [vmem:[%s0 + $0x58] sm:$0xf]
    %v38 = vld [vmem:[%s0 + $0x5c] sm:$0xf]
    %v39 = vld [vmem:[%s0 + $0x60] sm:$0xf]
    %v40 = vld [vmem:[%s0 + $0x64] sm:$0xf]
    %v41 = vld [vmem:[%s0 + $0x68] sm:$0xf]
    %v42 = vld [vmem:[%s0 + $0x6c] sm:$0xf]
    %v43 = vld [vmem:[%s0 + $0x70] sm:$0xf]
    %v44 = vld [vmem:[%s0 + $0x74] sm:$0xf]
    %v45 = vld [vmem:[%s0 + $0x78] sm:$0xf]
    %v46 = vld [vmem:[%s0 + $0x7c] sm:$0xf]
    %v47 = vunpack.c.l.bf16 %v15
    %v48 = vunpack.c.l.bf16 %v16
    %v49 = vunpack.c.l.bf16 %v17
    %v50 = vunpack.c.l.bf16 %v18
    %v51 = vunpack.c.l.bf16 %v19
    %v52 = vunpack.c.l.bf16 %v20
    %v53 = vunpack.c.l.bf16 %v21
    %v54 = vunpack.c.l.bf16 %v22
    %v55 = vunpack.c.l.bf16 %v23
    %v56 = vunpack.c.l.bf16 %v24
    %v57 = vunpack.c.l.bf16 %v25
    %v58 = vunpack.c.l.bf16 %v26
    %v59 = vunpack.c.l.bf16 %v27
    %v60 = vunpack.c.l.bf16 %v28
    %v61 = vunpack.c.l.bf16 %v29
    %v62 = vunpack.c.l.bf16 %v30
    %v63 = vunpack.c.l.bf16 %v31
    %v64 = vunpack.c.l.bf16 %v32
    %v65 = vunpack.c.l.bf16 %v33
    %v66 = vunpack.c.l.bf16 %v34
    %v67 = vunpack.c.l.bf16 %v35
    %v68 = vunpack.c.l.bf16 %v36
    %v69 = vunpack.c.l.bf16 %v37
    %v70 = vunpack.c.l.bf16 %v38
    %v71 = vunpack.c.l.bf16 %v39
    %v72 = vunpack.c.l.bf16 %v40
    %v73 = vunpack.c.l.bf16 %v41
    %v74 = vunpack.c.l.bf16 %v42
    %v75 = vunpack.c.l.bf16 %v43
    %v76 = vunpack.c.l.bf16 %v44
    %v77 = vunpack.c.l.bf16 %v45
    %v78 = vunpack.c.l.bf16 %v46
    %vm79 = vcmask 523264
    %v80 = vsel %vm79, %v47, 0.0
    %81 = vadd.xlane.f32.xlu0 %v80
    %v82 = vpop.xlane.xlu0 %81
    %v83 = vsel %vm79, %v48, 0.0
    %84 = vadd.xlane.f32.xlu0 %v83
    %v85 = vpop.xlane.xlu0 %84
    %v86 = vsel %vm79, %v49, 0.0
    %87 = vadd.xlane.f32.xlu0 %v86
    %v88 = vpop.xlane.xlu0 %87
    %v89 = vsel %vm79, %v50, 0.0
    %90 = vadd.xlane.f32.xlu0 %v89
    %v91 = vpop.xlane.xlu0 %90
    %v92 = vsel %vm79, %v51, 0.0
    %93 = vadd.xlane.f32.xlu0 %v92
    %v94 = vpop.xlane.xlu0 %93
    %v95 = vsel %vm79, %v52, 0.0
    %96 = vadd.xlane.f32.xlu0 %v95
    %v97 = vpop.xlane.xlu0 %96
    %v98 = vsel %vm79, %v53, 0.0
    %99 = vadd.xlane.f32.xlu0 %v98
    %v100 = vpop.xlane.xlu0 %99
    %v101 = vsel %vm79, %v54, 0.0
    %102 = vadd.xlane.f32.xlu0 %v101
    %v103 = vpop.xlane.xlu0 %102
    %v104 = vsel %vm79, %v55, 0.0
    %105 = vadd.xlane.f32.xlu0 %v104
    %v106 = vpop.xlane.xlu0 %105
    %v107 = vsel %vm79, %v56, 0.0
    %108 = vadd.xlane.f32.xlu0 %v107
    %v109 = vpop.xlane.xlu0 %108
    %v110 = vsel %vm79, %v57, 0.0
    %111 = vadd.xlane.f32.xlu0 %v110
    %v112 = vpop.xlane.xlu0 %111
    %v113 = vsel %vm79, %v58, 0.0
    %114 = vadd.xlane.f32.xlu0 %v113
    %v115 = vpop.xlane.xlu0 %114
    %v116 = vsel %vm79, %v59, 0.0
    %117 = vadd.xlane.f32.xlu0 %v116
    %v118 = vpop.xlane.xlu0 %117
    %v119 = vsel %vm79, %v60, 0.0
    %120 = vadd.xlane.f32.xlu0 %v119
    %v121 = vpop.xlane.xlu0 %120
    %v122 = vsel %vm79, %v61, 0.0
    %123 = vadd.xlane.f32.xlu0 %v122
    %v124 = vpop.xlane.xlu0 %123
    %v125 = vsel %vm79, %v62, 0.0
    %126 = vadd.xlane.f32.xlu0 %v125
    %v127 = vpop.xlane.xlu0 %126
    %v128 = vsel %vm79, %v63, 0.0
    %129 = vadd.xlane.f32.xlu0 %v128
    %v130 = vpop.xlane.xlu0 %129
    %v131 = vsel %vm79, %v64, 0.0
    %132 = vadd.xlane.f32.xlu0 %v131
    %v133 = vpop.xlane.xlu0 %132
    %v134 = vsel %vm79, %v65, 0.0
    %135 = vadd.xlane.f32.xlu0 %v134
    %v136 = vpop.xlane.xlu0 %135
    %v137 = vsel %vm79, %v66, 0.0
    %138 = vadd.xlane.f32.xlu0 %v137
    %v139 = vpop.xlane.xlu0 %138
    %v140 = vsel %vm79, %v67, 0.0
    %141 = vadd.xlane.f32.xlu0 %v140
    %v142 = vpop.xlane.xlu0 %141
    %v143 = vsel %vm79, %v68, 0.0
    %144 = vadd.xlane.f32.xlu0 %v143
    %v145 = vpop.xlane.xlu0 %144
    %v146 = vsel %vm79, %v69, 0.0
    %147 = vadd.xlane.f32.xlu0 %v146
    %v148 = vpop.xlane.xlu0 %147
    %v149 = vsel %vm79, %v70, 0.0
    %150 = vadd.xlane.f32.xlu0 %v149
    %v151 = vpop.xlane.xlu0 %150
    %v152 = vsel %vm79, %v71, 0.0
    %153 = vadd.xlane.f32.xlu0 %v152
    %v154 = vpop.xlane.xlu0 %153
    %v155 = vsel %vm79, %v72, 0.0
    %156 = vadd.xlane.f32.xlu0 %v155
    %v157 = vpop.xlane.xlu0 %156
    %v158 = vsel %vm79, %v73, 0.0
    %159 = vadd.xlane.f32.xlu0 %v158
    %v160 = vpop.xlane.xlu0 %159
    %v161 = vsel %vm79, %v74, 0.0
    %162 = vadd.xlane.f32.xlu0 %v161
    %v163 = vpop.xlane.xlu0 %162
    %v164 = vsel %vm79, %v75, 0.0
    %165 = vadd.xlane.f32.xlu0 %v164
    %v166 = vpop.xlane.xlu0 %165
    %v167 = vsel %vm79, %v76, 0.0
    %168 = vadd.xlane.f32.xlu0 %v167
    %v169 = vpop.xlane.xlu0 %168
    %v170 = vsel %vm79, %v77, 0.0
    %171 = vadd.xlane.f32.xlu0 %v170
    %v172 = vpop.xlane.xlu0 %171
    %v173 = vsel %vm79, %v78, 0.0
    %174 = vadd.xlane.f32.xlu0 %v173
    %v175 = vpop.xlane.xlu0 %174
    %v176 = vmul.f32 %v82, 0.015625
    %v177 = vmul.f32 %v85, 0.015625
    %v178 = vmul.f32 %v88, 0.015625
    %v179 = vmul.f32 %v91, 0.015625
    %v180 = vmul.f32 %v94, 0.015625
    %v181 = vmul.f32 %v97, 0.015625
    %v182 = vmul.f32 %v100, 0.015625
    %v183 = vmul.f32 %v103, 0.015625
    %v184 = vmul.f32 %v106, 0.015625
    %v185 = vmul.f32 %v109, 0.015625
    %v186 = vmul.f32 %v112, 0.015625
    %v187 = vmul.f32 %v115, 0.015625
    %v188 = vmul.f32 %v118, 0.015625
    %v189 = vmul.f32 %v121, 0.015625
    %v190 = vmul.f32 %v124, 0.015625
    %v191 = vmul.f32 %v127, 0.015625
    %v192 = vmul.f32 %v130, 0.015625
    %v193 = vmul.f32 %v133, 0.015625
    %v194 = vmul.f32 %v136, 0.015625
    %v195 = vmul.f32 %v139, 0.015625
    %v196 = vmul.f32 %v142, 0.015625
    %v197 = vmul.f32 %v145, 0.015625
    %v198 = vmul.f32 %v148, 0.015625
    %v199 = vmul.f32 %v151, 0.015625
    %v200 = vmul.f32 %v154, 0.015625
    %v201 = vmul.f32 %v157, 0.015625
    %v202 = vmul.f32 %v160, 0.015625
    %v203 = vmul.f32 %v163, 0.015625
    %v204 = vmul.f32 %v166, 0.015625
    %v205 = vmul.f32 %v169, 0.015625
    %v206 = vmul.f32 %v172, 0.015625
    %v207 = vmul.f32 %v175, 0.015625
    %v208 = vld [vmem:[%s1] sm:$0xff]
    %v209 = vld [vmem:[%s1 + $0x8] sm:$0xff]
    %v210 = vld [vmem:[%s1 + $0x10] sm:$0xff]
    %v211 = vld [vmem:[%s1 + $0x18] sm:$0xff]
    %v212 = vld [vmem:[%s1 + $0x20] sm:$0xff]
    %v213 = vld [vmem:[%s1 + $0x28] sm:$0xff]
    %v214 = vld [vmem:[%s1 + $0x30] sm:$0xff]
    %v215 = vld [vmem:[%s1 + $0x38] sm:$0xff]
    %v216 = vld [vmem:[%s1 + $0x40] sm:$0xff]
    %v217 = vld [vmem:[%s1 + $0x48] sm:$0xff]
    %v218 = vld [vmem:[%s1 + $0x50] sm:$0xff]
    %v219 = vld [vmem:[%s1 + $0x58] sm:$0xff]
    %v220 = vld [vmem:[%s1 + $0x60] sm:$0xff]
    %v221 = vld [vmem:[%s1 + $0x68] sm:$0xff]
    %v222 = vld [vmem:[%s1 + $0x70] sm:$0xff]
    %v223 = vld [vmem:[%s1 + $0x78] sm:$0xff]
    %v224 = vld [vmem:[%s2] sm:$0x1]
    %v226 = vperm.slane %v224, 0
    %v260 = vlaneseq
    %v261 = vand.u32 %v260, 127
    %v262 = vperm.slane %v176, %v261
    %v263 = vadd.s32 %v261, 4294967288
    %v264 = vperm.slane %v177, %v263
    %vm265 = vcmask 130112
    %v266 = vsel %vm265, %v264, %v262
    %v267 = vadd.s32 %v261, 4294967280
    %v268 = vperm.slane %v178, %v267
    %vm269 = vcmask 195712
    %v270 = vsel %vm269, %v268, %v266
    %v271 = vadd.s32 %v261, 4294967272
    %v272 = vperm.slane %v179, %v271
    %vm273 = vcmask 261312
    %v274 = vsel %vm273, %v272, %v270
    %v275 = vadd.s32 %v261, 4294967264
    %v276 = vperm.slane %v180, %v275
    %vm277 = vcmask 326912
    %v278 = vsel %vm277, %v276, %v274
    %v279 = vadd.s32 %v261, 4294967256
    %v280 = vperm.slane %v181, %v279
    %vm281 = vcmask 392512
    %v282 = vsel %vm281, %v280, %v278
    %v283 = vadd.s32 %v261, 4294967248
    %v284 = vperm.slane %v182, %v283
    %vm285 = vcmask 458112
    %v286 = vsel %vm285, %v284, %v282
    %v287 = vadd.s32 %v261, 4294967240
    %v288 = vperm.slane %v183, %v287
    %vm289 = vcmask 523712
    %v290 = vsel %vm289, %v288, %v286
    %v291 = vadd.s32 %v261, 4294967232
    %v292 = vperm.slane %v184, %v291
    %vm293 = vcmask 589312
    %v294 = vsel %vm293, %v292, %v290
    %v295 = vadd.s32 %v261, 4294967224
    %v296 = vperm.slane %v185, %v295
    %vm297 = vcmask 654912
    %v298 = vsel %vm297, %v296, %v294
    %v299 = vadd.s32 %v261, 4294967216
    %v300 = vperm.slane %v186, %v299
    %vm301 = vcmask 720512
    %v302 = vsel %vm301, %v300, %v298
    %v303 = vadd.s32 %v261, 4294967208
    %v304 = vperm.slane %v187, %v303
    %vm305 = vcmask 786112
    %v306 = vsel %vm305, %v304, %v302
    %v307 = vadd.s32 %v261, 4294967200
    %v308 = vperm.slane %v188, %v307
    %vm309 = vcmask 851712
    %v310 = vsel %vm309, %v308, %v306
    %v311 = vadd.s32 %v261, 4294967192
    %v312 = vperm.slane %v189, %v311
    %vm313 = vcmask 917312
    %v314 = vsel %vm313, %v312, %v310
    %v315 = vadd.s32 %v261, 4294967184
    %v316 = vperm.slane %v190, %v315
    %vm317 = vcmask 982912
    %v318 = vsel %vm317, %v316, %v314
    %v319 = vadd.s32 %v261, 4294967176
    %v320 = vperm.slane %v191, %v319
    %vm321 = vcmask 1048512
    %v322 = vsel %vm321, %v320, %v318
    %v323 = vperm.slane %v192, %v261
    %v324 = vperm.slane %v193, %v263
    %v325 = vsel %vm265, %v324, %v323
    %v326 = vperm.slane %v194, %v267
    %v327 = vsel %vm269, %v326, %v325
    %v328 = vperm.slane %v195, %v271
    %v329 = vsel %vm273, %v328, %v327
    %v330 = vperm.slane %v196, %v275
    %v331 = vsel %vm277, %v330, %v329
    %v332 = vperm.slane %v197, %v279
    %v333 = vsel %vm281, %v332, %v331
    %v334 = vperm.slane %v198, %v283
    %v335 = vsel %vm285, %v334, %v333
    %v336 = vperm.slane %v199, %v287
    %v337 = vsel %vm289, %v336, %v335
    %v338 = vperm.slane %v200, %v291
    %v339 = vsel %vm293, %v338, %v337
    %v340 = vperm.slane %v201, %v295
    %v341 = vsel %vm297, %v340, %v339
    %v342 = vperm.slane %v202, %v299
    %v343 = vsel %vm301, %v342, %v341
    %v344 = vperm.slane %v203, %v303
    %v345 = vsel %vm305, %v344, %v343
    %v346 = vperm.slane %v204, %v307
    %v347 = vsel %vm309, %v346, %v345
    %v348 = vperm.slane %v205, %v311
    %v349 = vsel %vm313, %v348, %v347
    %v350 = vperm.slane %v206, %v315
    %v351 = vsel %vm317, %v350, %v349
    %v352 = vperm.slane %v207, %v319
    %v353 = vsel %vm321, %v352, %v351
    %vm354 = vcmask 1041409
    %v355 = vsel %vm354, %v353, %v322
    %v357 = vand.u32 %v223, 4294901760
    %358 = vmatpush.msra.mxu0 %v357
    %v359 = vand.u32 %v222, 4294901760
    %360 = vmatpush.msra.mxu0 %v359
    %v361 = vand.u32 %v221, 4294901760
    %362 = vmatpush.msra.mxu0 %v361
    %v363 = vand.u32 %v220, 4294901760
    %364 = vmatpush.msra.mxu0 %v363
    %v365 = vand.u32 %v219, 4294901760
    %366 = vmatpush.msra.mxu0 %v365
    %v367 = vand.u32 %v218, 4294901760
    %368 = vmatpush.msra.mxu0 %v367
    %v369 = vand.u32 %v217, 4294901760
    %370 = vmatpush.msra.mxu0 %v369
    %v371 = vand.u32 %v216, 4294901760
    %372 = vmatpush.msra.mxu0 %v371
    %v373 = vand.u32 %v215, 4294901760
    %374 = vmatpush.msra.mxu0 %v373
    %v375 = vand.u32 %v214, 4294901760
    %376 = vmatpush.msra.mxu0 %v375
    %v377 = vand.u32 %v213, 4294901760
    %378 = vmatpush.msra.mxu0 %v377
    %v379 = vand.u32 %v212, 4294901760
    %380 = vmatpush.msra.mxu0 %v379
    %v381 = vand.u32 %v211, 4294901760
    %382 = vmatpush.msra.mxu0 %v381
    %v383 = vand.u32 %v210, 4294901760
    %384 = vmatpush.msra.mxu0 %v383
    %v385 = vand.u32 %v209, 4294901760
    %386 = vmatpush.msra.mxu0 %v385
    %v387 = vand.u32 %v208, 4294901760
    %388 = vmatpush.msra.mxu0 %v387
    %v389 = vand.u32 %v355, 4294901760
    %v390 = vsub.f32 %v355, %v389
    %v391 = vand.u32 %v390, 4294901760
    %v392 = vsub.f32 %v390, %v391
    %v393 = vand.u32 %v392, 4294901760
    %394 = vmatmul.f32.gmra.mxu0 %v393
    %v395 = vpop.f32.mrf.mxu0
    %v396 = vadd.f32 %v226, %v395
    %397 = vdwg.mxu0
    %v398 = vand.u32 %v223, 4294901760
    %v399 = vsub.f32 %v223, %v398
    %v400 = vand.u32 %v399, 4294901760
    %v401 = vsub.f32 %v399, %v400
    %v402 = vand.u32 %v401, 4294901760
    %403 = vmatpush.msra.mxu0 %v402
    %v404 = vand.u32 %v222, 4294901760
    %v405 = vsub.f32 %v222, %v404
    %v406 = vand.u32 %v405, 4294901760
    %v407 = vsub.f32 %v405, %v406
    %v408 = vand.u32 %v407, 4294901760
    %409 = vmatpush.msra.mxu0 %v408
    %v410 = vand.u32 %v221, 4294901760
    %v411 = vsub.f32 %v221, %v410
    %v412 = vand.u32 %v411, 4294901760
    %v413 = vsub.f32 %v411, %v412
    %v414 = vand.u32 %v413, 4294901760
    %415 = vmatpush.msra.mxu0 %v414
    %v416 = vand.u32 %v220, 4294901760
    %v417 = vsub.f32 %v220, %v416
    %v418 = vand.u32 %v417, 4294901760
    %v419 = vsub.f32 %v417, %v418
    %v420 = vand.u32 %v419, 4294901760
    %421 = vmatpush.msra.mxu0 %v420
    %v422 = vand.u32 %v219, 4294901760
    %v423 = vsub.f32 %v219, %v422
    %v424 = vand.u32 %v423, 4294901760
    %v425 = vsub.f32 %v423, %v424
    %v426 = vand.u32 %v425, 4294901760
    %427 = vmatpush.msra.mxu0 %v426
    %v428 = vand.u32 %v218, 4294901760
    %v429 = vsub.f32 %v218, %v428
    %v430 = vand.u32 %v429, 4294901760
    %v431 = vsub.f32 %v429, %v430
    %v432 = vand.u32 %v431, 4294901760
    %433 = vmatpush.msra.mxu0 %v432
    %v434 = vand.u32 %v217, 4294901760
    %v435 = vsub.f32 %v217, %v434
    %v436 = vand.u32 %v435, 4294901760
    %v437 = vsub.f32 %v435, %v436
    %v438 = vand.u32 %v437, 4294901760
    %439 = vmatpush.msra.mxu0 %v438
    %v440 = vand.u32 %v216, 4294901760
    %v441 = vsub.f32 %v216, %v440
    %v442 = vand.u32 %v441, 4294901760
    %v443 = vsub.f32 %v441, %v442
    %v444 = vand.u32 %v443, 4294901760
    %445 = vmatpush.msra.mxu0 %v444
    %v446 = vand.u32 %v215, 4294901760
    %v447 = vsub.f32 %v215, %v446
    %v448 = vand.u32 %v447, 4294901760
    %v449 = vsub.f32 %v447, %v448
    %v450 = vand.u32 %v449, 4294901760
    %451 = vmatpush.msra.mxu0 %v450
    %v452 = vand.u32 %v214, 4294901760
    %v453 = vsub.f32 %v214, %v452
    %v454 = vand.u32 %v453, 4294901760
    %v455 = vsub.f32 %v453, %v454
    %v456 = vand.u32 %v455, 4294901760
    %457 = vmatpush.msra.mxu0 %v456
    %v458 = vand.u32 %v213, 4294901760
    %v459 = vsub.f32 %v213, %v458
    %v460 = vand.u32 %v459, 4294901760
    %v461 = vsub.f32 %v459, %v460
    %v462 = vand.u32 %v461, 4294901760
    %463 = vmatpush.msra.mxu0 %v462
    %v464 = vand.u32 %v212, 4294901760
    %v465 = vsub.f32 %v212, %v464
    %v466 = vand.u32 %v465, 4294901760
    %v467 = vsub.f32 %v465, %v466
    %v468 = vand.u32 %v467, 4294901760
    %469 = vmatpush.msra.mxu0 %v468
    %v470 = vand.u32 %v211, 4294901760
    %v471 = vsub.f32 %v211, %v470
    %v472 = vand.u32 %v471, 4294901760
    %v473 = vsub.f32 %v471, %v472
    %v474 = vand.u32 %v473, 4294901760
    %475 = vmatpush.msra.mxu0 %v474
    %v476 = vand.u32 %v210, 4294901760
    %v477 = vsub.f32 %v210, %v476
    %v478 = vand.u32 %v477, 4294901760
    %v479 = vsub.f32 %v477, %v478
    %v480 = vand.u32 %v479, 4294901760
    %481 = vmatpush.msra.mxu0 %v480
    %v482 = vand.u32 %v209, 4294901760
    %v483 = vsub.f32 %v209, %v482
    %v484 = vand.u32 %v483, 4294901760
    %v485 = vsub.f32 %v483, %v484
    %v486 = vand.u32 %v485, 4294901760
    %487 = vmatpush.msra.mxu0 %v486
    %v488 = vand.u32 %v208, 4294901760
    %v489 = vsub.f32 %v208, %v488
    %v490 = vand.u32 %v489, 4294901760
    %v491 = vsub.f32 %v489, %v490
    %v492 = vand.u32 %v491, 4294901760
    %493 = vmatpush.msra.mxu0 %v492
    %v494 = vand.u32 %v355, 4294901760
    %495 = vmatmul.f32.gmra.mxu0 %v494
    %v496 = vpop.f32.mrf.mxu0
    %v497 = vadd.f32 %v396, %v496
    %498 = vdwg.mxu0
    %v499 = vand.u32 %v223, 4294901760
    %v500 = vsub.f32 %v223, %v499
    %501 = vmatpush.msra.mxu0 %v500
    %v502 = vand.u32 %v222, 4294901760
    %v503 = vsub.f32 %v222, %v502
    %504 = vmatpush.msra.mxu0 %v503
    %v505 = vand.u32 %v221, 4294901760
    %v506 = vsub.f32 %v221, %v505
    %507 = vmatpush.msra.mxu0 %v506
    %v508 = vand.u32 %v220, 4294901760
    %v509 = vsub.f32 %v220, %v508
    %510 = vmatpush.msra.mxu0 %v509
    %v511 = vand.u32 %v219, 4294901760
    %v512 = vsub.f32 %v219, %v511
    %513 = vmatpush.msra.mxu0 %v512
    %v514 = vand.u32 %v218, 4294901760
    %v515 = vsub.f32 %v218, %v514
    %516 = vmatpush.msra.mxu0 %v515
    %v517 = vand.u32 %v217, 4294901760
    %v518 = vsub.f32 %v217, %v517
    %519 = vmatpush.msra.mxu0 %v518
    %v520 = vand.u32 %v216, 4294901760
    %v521 = vsub.f32 %v216, %v520
    %522 = vmatpush.msra.mxu0 %v521
    %v523 = vand.u32 %v215, 4294901760
    %v524 = vsub.f32 %v215, %v523
    %525 = vmatpush.msra.mxu0 %v524
    %v526 = vand.u32 %v214, 4294901760
    %v527 = vsub.f32 %v214, %v526
    %528 = vmatpush.msra.mxu0 %v527
    %v529 = vand.u32 %v213, 4294901760
    %v530 = vsub.f32 %v213, %v529
    %531 = vmatpush.msra.mxu0 %v530
    %v532 = vand.u32 %v212, 4294901760
    %v533 = vsub.f32 %v212, %v532
    %534 = vmatpush.msra.mxu0 %v533
    %v535 = vand.u32 %v211, 4294901760
    %v536 = vsub.f32 %v211, %v535
    %537 = vmatpush.msra.mxu0 %v536
    %v538 = vand.u32 %v210, 4294901760
    %v539 = vsub.f32 %v210, %v538
    %540 = vmatpush.msra.mxu0 %v539
    %v541 = vand.u32 %v209, 4294901760
    %v542 = vsub.f32 %v209, %v541
    %543 = vmatpush.msra.mxu0 %v542
    %v544 = vand.u32 %v208, 4294901760
    %v545 = vsub.f32 %v208, %v544
    %546 = vmatpush.msra.mxu0 %v545
    %v547 = vand.u32 %v355, 4294901760
    %v548 = vsub.f32 %v355, %v547
    %549 = vmatmul.f32.gmra.mxu0 %v548
    %v550 = vpop.f32.mrf.mxu0
    %v551 = vadd.f32 %v497, %v550
    %552 = vdwg.mxu0
    %v553 = vand.u32 %v223, 4294901760
    %554 = vmatpush.msra.mxu0 %v553
    %v555 = vand.u32 %v222, 4294901760
    %556 = vmatpush.msra.mxu0 %v555
    %v557 = vand.u32 %v221, 4294901760
    %558 = vmatpush.msra.mxu0 %v557
    %v559 = vand.u32 %v220, 4294901760
    %560 = vmatpush.msra.mxu0 %v559
    %v561 = vand.u32 %v219, 4294901760
    %562 = vmatpush.msra.mxu0 %v561
    %v563 = vand.u32 %v218, 4294901760
    %564 = vmatpush.msra.mxu0 %v563
    %v565 = vand.u32 %v217, 4294901760
    %566 = vmatpush.msra.mxu0 %v565
    %v567 = vand.u32 %v216, 4294901760
    %568 = vmatpush.msra.mxu0 %v567
    %v569 = vand.u32 %v215, 4294901760
    %570 = vmatpush.msra.mxu0 %v569
    %v571 = vand.u32 %v214, 4294901760
    %572 = vmatpush.msra.mxu0 %v571
    %v573 = vand.u32 %v213, 4294901760
    %574 = vmatpush.msra.mxu0 %v573
    %v575 = vand.u32 %v212, 4294901760
    %576 = vmatpush.msra.mxu0 %v575
    %v577 = vand.u32 %v211, 4294901760
    %578 = vmatpush.msra.mxu0 %v577
    %v579 = vand.u32 %v210, 4294901760
    %580 = vmatpush.msra.mxu0 %v579
    %v581 = vand.u32 %v209, 4294901760
    %582 = vmatpush.msra.mxu0 %v581
    %v583 = vand.u32 %v208, 4294901760
    %584 = vmatpush.msra.mxu0 %v583
    %v585 = vand.u32 %v355, 4294901760
    %v586 = vsub.f32 %v355, %v585
    %v587 = vand.u32 %v586, 4294901760
    %588 = vmatmul.f32.gmra.mxu0 %v587
    %v589 = vpop.f32.mrf.mxu0
    %v590 = vadd.f32 %v551, %v589
    %591 = vdwg.mxu0
    %v592 = vand.u32 %v223, 4294901760
    %v593 = vsub.f32 %v223, %v592
    %v594 = vand.u32 %v593, 4294901760
    %595 = vmatpush.msra.mxu0 %v594
    %v596 = vand.u32 %v222, 4294901760
    %v597 = vsub.f32 %v222, %v596
    %v598 = vand.u32 %v597, 4294901760
    %599 = vmatpush.msra.mxu0 %v598
    %v600 = vand.u32 %v221, 4294901760
    %v601 = vsub.f32 %v221, %v600
    %v602 = vand.u32 %v601, 4294901760
    %603 = vmatpush.msra.mxu0 %v602
    %v604 = vand.u32 %v220, 4294901760
    %v605 = vsub.f32 %v220, %v604
    %v606 = vand.u32 %v605, 4294901760
    %607 = vmatpush.msra.mxu0 %v606
    %v608 = vand.u32 %v219, 4294901760
    %v609 = vsub.f32 %v219, %v608
    %v610 = vand.u32 %v609, 4294901760
    %611 = vmatpush.msra.mxu0 %v610
    %v612 = vand.u32 %v218, 4294901760
    %v613 = vsub.f32 %v218, %v612
    %v614 = vand.u32 %v613, 4294901760
    %615 = vmatpush.msra.mxu0 %v614
    %v616 = vand.u32 %v217, 4294901760
    %v617 = vsub.f32 %v217, %v616
    %v618 = vand.u32 %v617, 4294901760
    %619 = vmatpush.msra.mxu0 %v618
    %v620 = vand.u32 %v216, 4294901760
    %v621 = vsub.f32 %v216, %v620
    %v622 = vand.u32 %v621, 4294901760
    %623 = vmatpush.msra.mxu0 %v622
    %v624 = vand.u32 %v215, 4294901760
    %v625 = vsub.f32 %v215, %v624
    %v626 = vand.u32 %v625, 4294901760
    %627 = vmatpush.msra.mxu0 %v626
    %v628 = vand.u32 %v214, 4294901760
    %v629 = vsub.f32 %v214, %v628
    %v630 = vand.u32 %v629, 4294901760
    %631 = vmatpush.msra.mxu0 %v630
    %v632 = vand.u32 %v213, 4294901760
    %v633 = vsub.f32 %v213, %v632
    %v634 = vand.u32 %v633, 4294901760
    %635 = vmatpush.msra.mxu0 %v634
    %v636 = vand.u32 %v212, 4294901760
    %v637 = vsub.f32 %v212, %v636
    %v638 = vand.u32 %v637, 4294901760
    %639 = vmatpush.msra.mxu0 %v638
    %v640 = vand.u32 %v211, 4294901760
    %v641 = vsub.f32 %v211, %v640
    %v642 = vand.u32 %v641, 4294901760
    %643 = vmatpush.msra.mxu0 %v642
    %v644 = vand.u32 %v210, 4294901760
    %v645 = vsub.f32 %v210, %v644
    %v646 = vand.u32 %v645, 4294901760
    %647 = vmatpush.msra.mxu0 %v646
    %v648 = vand.u32 %v209, 4294901760
    %v649 = vsub.f32 %v209, %v648
    %v650 = vand.u32 %v649, 4294901760
    %651 = vmatpush.msra.mxu0 %v650
    %v652 = vand.u32 %v208, 4294901760
    %v653 = vsub.f32 %v208, %v652
    %v654 = vand.u32 %v653, 4294901760
    %655 = vmatpush.msra.mxu0 %v654
    %v656 = vand.u32 %v355, 4294901760
    %657 = vmatmul.f32.gmra.mxu0 %v656
    %v658 = vpop.f32.mrf.mxu0
    %v659 = vadd.f32 %v590, %v658
    %660 = vdwg.mxu0
    %v661 = vand.u32 %v223, 4294901760
    %662 = vmatpush.msra.mxu0 %v661
    %v663 = vand.u32 %v222, 4294901760
    %664 = vmatpush.msra.mxu0 %v663
    %v665 = vand.u32 %v221, 4294901760
    %666 = vmatpush.msra.mxu0 %v665
    %v667 = vand.u32 %v220, 4294901760
    %668 = vmatpush.msra.mxu0 %v667
    %v669 = vand.u32 %v219, 4294901760
    %670 = vmatpush.msra.mxu0 %v669
    %v671 = vand.u32 %v218, 4294901760
    %672 = vmatpush.msra.mxu0 %v671
    %v673 = vand.u32 %v217, 4294901760
    %674 = vmatpush.msra.mxu0 %v673
    %v675 = vand.u32 %v216, 4294901760
    %676 = vmatpush.msra.mxu0 %v675
    %v677 = vand.u32 %v215, 4294901760
    %678 = vmatpush.msra.mxu0 %v677
    %v679 = vand.u32 %v214, 4294901760
    %680 = vmatpush.msra.mxu0 %v679
    %v681 = vand.u32 %v213, 4294901760
    %682 = vmatpush.msra.mxu0 %v681
    %v683 = vand.u32 %v212, 4294901760
    %684 = vmatpush.msra.mxu0 %v683
    %v685 = vand.u32 %v211, 4294901760
    %686 = vmatpush.msra.mxu0 %v685
    %v687 = vand.u32 %v210, 4294901760
    %688 = vmatpush.msra.mxu0 %v687
    %v689 = vand.u32 %v209, 4294901760
    %690 = vmatpush.msra.mxu0 %v689
    %v691 = vand.u32 %v208, 4294901760
    %692 = vmatpush.msra.mxu0 %v691
    %v693 = vand.u32 %v355, 4294901760
    %694 = vmatmul.f32.gmra.mxu0 %v693
    %v695 = vpop.f32.mrf.mxu0
    %v696 = vadd.f32 %v659, %v695
    %697 = vdwg.mxu0
    %vm698 = vcmask 58368
    %699 = vst.msk [vmem:[#allocation2] sm:$0x3] %vm698, %v696
    // Predicated region
    $region14: #{age_encoder_forward.7} parent=1 // pred_check
      _
    $region15: #{age_encoder_forward.7} parent=1 // pred_check_branch
      %701 = sbr.rel (0) target = $region17
    $region16: #{age_encoder_forward.7} parent=1 // pred_region
      %703 = vsyncadd [#allocation3], 0
      %s705 = sshll.u32 [#allocation2], 4
      %s706 = int_to_ptr.vmem [resolvable:$true] %s705
      %s707 = sshll.u32 %s3, 4
      %s708 = int_to_ptr.hbm [resolvable:$true] %s707
      %710 = dma.vmem_to_hbm [thread:$0]  %s706, 32, %s708, [#allocation3]
    $region17: #{age_encoder_forward.7} parent=1 // pred_fallthru
      _
    // Predicated region
    $region18: #{age_encoder_forward.7} parent=1 // pred_check
      _
    $region19: #{age_encoder_forward.7} parent=1 // pred_check_branch
      %712 = sbr.rel (0) target = $region21
    $region20: #{age_encoder_forward.7} parent=1 // pred_region
      %714 = dma.done [#allocation3], 32
    $region21: #{age_encoder_forward.7} parent=1 // pred_fallthru
      _
    %715 = vsyncpa [#allocation3], 1

</llo_original>
